<compile_context>
chip_gen: v7x
topology: tpu7x:2x2x1
jax: 0.10.0
libtpu: 0.0.40
codegen_flags: <defaults>
</compile_context>

<pallas_src>
import jax
import jax.numpy as jnp
import numpy as np
from jax.experimental import pallas as pl
from jax.experimental.pallas import tpu as pltpu

LANE = 128


def _round_up(x, m):
    return ((x + m - 1) // m) * m


# ---------------------------------------------------------------------------
# Pallas kernels (GEMM-shaped; grid axis 0 = branch, marked "parallel")
# ---------------------------------------------------------------------------

def _gemm_bias_relu_kernel(a_ref, w_ref, b_ref, o_ref):
    acc = jnp.dot(a_ref[0], w_ref[0], preferred_element_type=jnp.float32)
    o_ref[0] = jnp.maximum(acc + b_ref[0], 0.0)


def _gemm_residual_kernel(a_ref, w_ref, b_ref, x_ref, w3_ref, b3_ref, o_ref):
    # relu(conv2(h)) + conv3(x)   (1x1x1 shortcut fused as a second dot)
    acc = jnp.dot(a_ref[0], w_ref[0], preferred_element_type=jnp.float32)
    acc = jnp.maximum(acc + b_ref[0], 0.0)
    sc = jnp.dot(x_ref[0], w3_ref[0], preferred_element_type=jnp.float32)
    o_ref[0] = acc + sc + b3_ref[0]


def _fc_head_kernel(x_ref, w1_ref, b1_ref, w2_ref, b2_ref, o_ref):
    # relu(fc2(relu(fc1(x)))) in one kernel.
    h = jnp.dot(x_ref[...], w1_ref[...], preferred_element_type=jnp.float32)
    h = jnp.maximum(h + b1_ref[...], 0.0)
    out = jnp.dot(h, w2_ref[...], preferred_element_type=jnp.float32)
    o_ref[...] = jnp.maximum(out + b2_ref[...], 0.0)


# ---------------------------------------------------------------------------
# pallas_call wrappers
# ---------------------------------------------------------------------------

def _gemm_bias_relu(a, w, b):
    """a:[G,M,Kp] w:[G,Kp,N] b:[G,1,N] -> [G,M,N] = relu(a @ w + b)."""
    G, M, Kp = a.shape
    N = w.shape[-1]
    return pl.pallas_call(
        _gemm_bias_relu_kernel,
        out_shape=jax.ShapeDtypeStruct((G, M, N), jnp.float32),
        grid_spec=pltpu.PrefetchScalarGridSpec(
            num_scalar_prefetch=0,
            grid=(G,),
            in_specs=[
                pl.BlockSpec((1, M, Kp), lambda i: (i, 0, 0)),
                pl.BlockSpec((1, Kp, N), lambda i: (i, 0, 0)),
                pl.BlockSpec((1, 1, N), lambda i: (i, 0, 0)),
            ],
            out_specs=pl.BlockSpec((1, M, N), lambda i: (i, 0, 0)),
        ),
        compiler_params=pltpu.CompilerParams(
            dimension_semantics=("parallel",)),
    )(a, w, b)


def _gemm_residual(a, w, b, x, w3, b3):
    """[G,M,N] = relu(a @ w + b) + (x @ w3 + b3)."""
    G, M, Kp = a.shape
    N = w.shape[-1]
    Cp = x.shape[-1]
    return pl.pallas_call(
        _gemm_residual_kernel,
        out_shape=jax.ShapeDtypeStruct((G, M, N), jnp.float32),
        grid_spec=pltpu.PrefetchScalarGridSpec(
            num_scalar_prefetch=0,
            grid=(G,),
            in_specs=[
                pl.BlockSpec((1, M, Kp), lambda i: (i, 0, 0)),
                pl.BlockSpec((1, Kp, N), lambda i: (i, 0, 0)),
                pl.BlockSpec((1, 1, N), lambda i: (i, 0, 0)),
                pl.BlockSpec((1, M, Cp), lambda i: (i, 0, 0)),
                pl.BlockSpec((1, Cp, N), lambda i: (i, 0, 0)),
                pl.BlockSpec((1, 1, N), lambda i: (i, 0, 0)),
            ],
            out_specs=pl.BlockSpec((1, M, N), lambda i: (i, 0, 0)),
        ),
        compiler_params=pltpu.CompilerParams(
            dimension_semantics=("parallel",)),
    )(a, w, b, x, w3, b3)


def _fc_head(x, w1, b1, w2, b2):
    """[M,1] = relu(relu(x @ w1 + b1) @ w2 + b2)  (fc1 + fc2 fused)."""
    M = x.shape[0]
    N = w2.shape[-1]
    return pl.pallas_call(
        _fc_head_kernel,
        out_shape=jax.ShapeDtypeStruct((M, N), jnp.float32),
    )(x, w1, b1, w2, b2)


# ---------------------------------------------------------------------------
# Channels-last im2col glue (data movement only; GEMMs run in Pallas)
# ---------------------------------------------------------------------------

def _pad_k(a):
    """Zero-pad the last (contraction) dim of [G, M, K] to a 128 multiple."""
    k = a.shape[-1]
    kp = _round_up(k, LANE)
    if kp != k:
        a = jnp.pad(a, ((0, 0), (0, 0), (0, kp - k)))
    return a


def _im2col3d(x, k, pad):
    """x:[G,Nb,D,H,W,C] -> ([G, Nb*Do*Ho*Wo, round_up(k^3*C, 128)], (Do,Ho,Wo)).

    K ordering is (kd, kh, kw, Cin), matching _prep_conv weight layout."""
    G, Nb, D, H, W, C = x.shape
    if pad:
        x = jnp.pad(x, ((0, 0), (0, 0), (pad, pad), (pad, pad), (pad, pad),
                        (0, 0)))
    Do, Ho, Wo = D + 2 * pad - k + 1, H + 2 * pad - k + 1, W + 2 * pad - k + 1
    cols = [x[:, :, dz:dz + Do, dy:dy + Ho, dx:dx + Wo, :]
            for dz in range(k) for dy in range(k) for dx in range(k)]
    patches = jnp.stack(cols, axis=-2)               # [G,Nb,Do,Ho,Wo,k^3,C]
    a = patches.reshape(G, Nb * Do * Ho * Wo, k * k * k * C)
    return _pad_k(a), (Do, Ho, Wo)


def _im2col2d(x, k):
    """x:[Nb,H,W,C] -> ([1, Nb*Ho*Wo, round_up(k^2*C, 128)], (Ho,Wo))."""
    Nb, H, W, C = x.shape
    Ho, Wo = H - k + 1, W - k + 1
    cols = [x[:, dy:dy + Ho, dx:dx + Wo, :]
            for dy in range(k) for dx in range(k)]
    patches = jnp.stack(cols, axis=-2)               # [Nb,Ho,Wo,k^2,C]
    a = patches.reshape(1, Nb * Ho * Wo, k * k * C)
    return _pad_k(a), (Ho, Wo)


# ---------------------------------------------------------------------------
# Model forward (Pallas kernels + XLA data-movement glue)
# ---------------------------------------------------------------------------

def _residual_layer3(x, lp):
    """Fused-over-branches ResidualLayer.  x: [3, Nb, D, H, W, Cin]."""
    G, Nb, D, H, W, Cin = x.shape
    a1, _ = _im2col3d(x, 3, 1)
    h = _gemm_bias_relu(a1, lp["w1"], lp["b1"])          # relu(conv1(x))
    Cout = h.shape[-1]
    h = h.reshape(G, Nb, D, H, W, Cout)
    a2, _ = _im2col3d(h, 3, 1)
    xf = _pad_k(x.reshape(G, Nb * D * H * W, Cin))       # 1x1x1 shortcut input
    out = _gemm_residual(a2, lp["w2"], lp["b2"], xf, lp["w3"], lp["b3"])
    return out.reshape(G, Nb, D, H, W, Cout)


def _branch_head3(x, w, b):
    """Fused-over-branches valid 3x3x3 conv + relu; squeezes the depth dim."""
    G, Nb = x.shape[0], x.shape[1]
    a, (Do, Ho, Wo) = _im2col3d(x, 3, 0)
    out = _gemm_bias_relu(a, w, b)
    return out.reshape(G, Nb, Do, Ho, Wo, out.shape[-1])[:, :, 0]   # Do == 1


def _conv2d(x, w, b):
    """Valid 3x3 conv + relu, channels-last."""
    Nb = x.shape[0]
    a, (Ho, Wo) = _im2col2d(x, 3)
    out = _gemm_bias_relu(a, w, b)
    return out[0].reshape(Nb, Ho, Wo, out.shape[-1])


def forward(params, input1):
    """input1: [Nb, 3, D, H, W]  (NCDHW, same as the PyTorch module)."""
    # Stack ref/zdr/kdp branches on a leading axis, channels-last, C=1.
    xb = jnp.transpose(input1, (1, 0, 2, 3, 4))[..., None]     # [3,Nb,D,H,W,1]
    h = _residual_layer3(xb, params["res_a"])
    h = _residual_layer3(h, params["res_b"])
    h = _branch_head3(h, params["head_w"], params["head_b"])   # [3,Nb,6,6,64]
    x = jnp.concatenate([h[0], h[1], h[2]], axis=-1)           # [Nb,6,6,192]
    x = _conv2d(x, params["conv2d_1_w"], params["conv2d_1_b"])  # [Nb,4,4,32]
    x = _conv2d(x, params["conv2d_2_w"], params["conv2d_2_b"])  # [Nb,2,2,32]
    x = jnp.max(x, axis=(1, 2))                 # MaxPool2d(2) on a 2x2 map
    x = jnp.pad(x, ((0, 0), (0, params["fc1_w"].shape[0] - x.shape[1])))
    return _fc_head(x, params["fc1_w"], params["fc1_b"],
                    params["fc2_w"], params["fc2_b"])           # [Nb, 1]


# ---------------------------------------------------------------------------
# Parameter init (PyTorch-like uniform fan-in) + one-time GEMM-layout prep
# ---------------------------------------------------------------------------

def _init_conv(key, cout, cin, ksize):
    fan_in = cin * int(np.prod(ksize))
    bound = 1.0 / np.sqrt(fan_in)
    k1, k2 = jax.random.split(key)
    w = jax.random.uniform(k1, (cout, cin) + tuple(ksize), jnp.float32,
                           -bound, bound)
    b = jax.random.uniform(k2, (cout,), jnp.float32, -bound, bound)
    return w, b


def _init_linear(key, out_f, in_f):
    bound = 1.0 / np.sqrt(in_f)
    k1, k2 = jax.random.split(key)
    w = jax.random.uniform(k1, (out_f, in_f), jnp.float32, -bound, bound)
    b = jax.random.uniform(k2, (out_f,), jnp.float32, -bound, bound)
    return w, b


def _init_residual_layer(key, cin, cout):
    k1, k2, k3 = jax.random.split(key, 3)
    w1, b1 = _init_conv(k1, cout, cin, (3, 3, 3))
    w2, b2 = _init_conv(k2, cout, cout, (3, 3, 3))
    w3, b3 = _init_conv(k3, cout, cin, (1, 1, 1))
    return dict(w1=w1, b1=b1, w2=w2, b2=b2, w3=w3, b3=b3)


def init_raw_params(key):
    """PyTorch-layout parameters mirroring the nn.Module."""
    keys = jax.random.split(key, 13)
    p = {}
    p["res1"] = _init_residual_layer(keys[0], 1, 32)
    p["res2"] = _init_residual_layer(keys[1], 32, 32)
    p["conv3d_w"], p["conv3d_b"] = _init_conv(keys[2], 64, 32, (3, 3, 3))
    p["res1_zdr"] = _init_residual_layer(keys[3], 1, 32)
    p["res2_zdr"] = _init_residual_layer(keys[4], 32, 32)
    p["conv3d_zdr_w"], p["conv3d_zdr_b"] = _init_conv(keys[5], 64, 32, (3, 3, 3))
    p["res1_kdp"] = _init_residual_layer(keys[6], 1, 32)
    p["res2_kdp"] = _init_residual_layer(keys[7], 32, 32)
    p["conv3d_kdp_w"], p["conv3d_kdp_b"] = _init_conv(keys[8], 64, 32, (3, 3, 3))
    p["conv2d_1_w"], p["conv2d_1_b"] = _init_conv(keys[9], 32, 64 * 3, (3, 3))
    p["conv2d_2_w"], p["conv2d_2_b"] = _init_conv(keys[10], 32, 32, (3, 3))
    p["fc1_w"], p["fc1_b"] = _init_linear(keys[11], 64, 32)
    p["fc2_w"], p["fc2_b"] = _init_linear(keys[12], 1, 64)
    return p


def _prep_conv(w, b):
    """[Cout, Cin, *ks] -> ([Kp, Cout] with K order (*ks, Cin), [1, Cout])."""
    cout, cin = w.shape[0], w.shape[1]
    ks = w.shape[2:]
    perm = tuple(range(2, 2 + len(ks))) + (1, 0)
    wt = jnp.transpose(w, perm).reshape(int(np.prod(ks)) * cin, cout)
    wt = jnp.pad(wt, ((0, _round_up(wt.shape[0], LANE) - wt.shape[0]), (0, 0)))
    return wt, b.reshape(1, cout)


def _prep_res_group(layers):
    out = {}
    for wk, bk in (("w1", "b1"), ("w2", "b2"), ("w3", "b3")):
        ws, bs = zip(*[_prep_conv(l[wk], l[bk]) for l in layers])
        out[wk], out[bk] = jnp.stack(ws), jnp.stack(bs)
    return out


def _prep_fc_head(w1, b1, w2, b2):
    out1, in1 = w1.shape
    out2 = w2.shape[0]
    kp = _round_up(in1, LANE)        # 32 -> 128
    np1 = _round_up(out1, LANE)      # 64 -> 128 (extra hidden units are zero)
    w1p = jnp.zeros((kp, np1), jnp.float32).at[:in1, :out1].set(w1.T)
    b1p = jnp.zeros((1, np1), jnp.float32).at[0, :out1].set(b1)
    w2p = jnp.zeros((np1, out2), jnp.float32).at[:out1, :].set(w2.T)
    b2p = b2.reshape(1, out2)
    return w1p, b1p, w2p, b2p


def prep_params(raw):
    """One-time conversion to GEMM-ready, K-padded, branch-stacked weights."""
    p = {}
    p["res_a"] = _prep_res_group([raw["res1"], raw["res1_zdr"], raw["res1_kdp"]])
    p["res_b"] = _prep_res_group([raw["res2"], raw["res2_zdr"], raw["res2_kdp"]])
    ws, bs = zip(*[_prep_conv(raw[k + "_w"], raw[k + "_b"])
                   for k in ("conv3d", "conv3d_zdr", "conv3d_kdp")])
    p["head_w"], p["head_b"] = jnp.stack(ws), jnp.stack(bs)
    w, b = _prep_conv(raw["conv2d_1_w"], raw["conv2d_1_b"])
    p["conv2d_1_w"], p["conv2d_1_b"] = w[None], b[None]
    w, b = _prep_conv(raw["conv2d_2_w"], raw["conv2d_2_b"])
    p["conv2d_2_w"], p["conv2d_2_b"] = w[None], b[None]
    (p["fc1_w"], p["fc1_b"],
     p["fc2_w"], p["fc2_b"]) = _prep_fc_head(raw["fc1_w"], raw["fc1_b"],
                                             raw["fc2_w"], raw["fc2_b"])
    return p


# ---------------------------------------------------------------------------
# Pure-JAX reference of the PyTorch module (for a numerical sanity check)
# ---------------------------------------------------------------------------

def _ref_conv3d(x, w, b, pad):
    out = jax.lax.conv_general_dilated(
        x, w, window_strides=(1, 1, 1), padding=[(pad, pad)] * 3,
        dimension_numbers=("NCDHW", "OIDHW", "NCDHW"),
        precision=jax.lax.Precision.HIGHEST)
    return out + b.reshape(1, -1, 1, 1, 1)


def _ref_conv2d(x, w, b):
    out = jax.lax.conv_general_dilated(
        x, w, window_strides=(1, 1), padding=[(0, 0)] * 2,
        dimension_numbers=("NCHW", "OIHW", "NCHW"),
        precision=jax.lax.Precision.HIGHEST)
    return out + b.reshape(1, -1, 1, 1)


def _ref_residual(x, rp):
    res = _ref_conv3d(x, rp["w3"], rp["b3"], 0)
    h = jax.nn.relu(_ref_conv3d(x, rp["w1"], rp["b1"], 1))
    h = jax.nn.relu(_ref_conv3d(h, rp["w2"], rp["b2"], 1))
    return h + res


def reference_forward(raw, input1):
    def branch(x, r1, r2, cw, cb):
        x = _ref_residual(x, r1)
        x = _ref_residual(x, r2)
        x = jax.nn.relu(_ref_conv3d(x, cw, cb, 0))
        return x[:, :, 0]
    x1 = branch(input1[:, 0:1], raw["res1"], raw["res2"],
                raw["conv3d_w"], raw["conv3d_b"])
    x2 = branch(input1[:, 1:2], raw["res1_zdr"], raw["res2_zdr"],
                raw["conv3d_zdr_w"], raw["conv3d_zdr_b"])
    x3 = branch(input1[:, 2:3], raw["res1_kdp"], raw["res2_kdp"],
                raw["conv3d_kdp_w"], raw["conv3d_kdp_b"])
    x = jnp.concatenate([x1, x2, x3], axis=1)
    x = jax.nn.relu(_ref_conv2d(x, raw["conv2d_1_w"], raw["conv2d_1_b"]))
    x = jax.nn.relu(_ref_conv2d(x, raw["conv2d_2_w"], raw["conv2d_2_b"]))
    x = jnp.max(x, axis=(2, 3))                  # MaxPool2d(2) on a 2x2 map
    x = jax.nn.relu(x @ raw["fc1_w"].T + raw["fc1_b"])
    x = jax.nn.relu(x @ raw["fc2_w"].T + raw["fc2_b"])
    return x


# ---------------------------------------------------------------------------
# Main
# ---------------------------------------------------------------------------

if __name__ == "__main__":
    key = jax.random.PRNGKey(0)
    pkey, xkey = jax.random.split(key)
    raw = init_raw_params(pkey)
    params = prep_params(raw)   # weight transposes / K padding hoisted here

    # D=3, H=W=8: the valid 3x3x3 conv, two valid 3x3 convs and the 2x2 pool
    # reduce the spatial dims to 1 before Linear(32, 64), as the module needs.
    x = jax.random.normal(xkey, (2, 3, 3, 8, 8), dtype=jnp.float32)

    fwd = jax.jit(forward)
    out = jax.block_until_ready(fwd(params, x))
    assert out.shape == (2, 1), out.shape
    assert bool(jnp.all(jnp.isfinite(out)))

    # Numerical sanity check against a pure-JAX/XLA reference of the module.
    ref = jax.block_until_ready(jax.jit(reference_forward)(raw, x))
    np.testing.assert_allclose(np.asarray(out), np.asarray(ref),
                               rtol=5e-2, atol=5e-2)

    print("KERNEL_OK")
</pallas_src>

<mosaic_0001>
module attributes {stable_mosaic.version = 11 : i64} {
  func.func @_gemm_bias_relu_kernel(%arg0: i32, %arg1: memref<1x384x128xf32, #tpu.memory_space<vmem>>, %arg2: memref<1x128x32xf32, #tpu.memory_space<vmem>>, %arg3: memref<1x1x32xf32, #tpu.memory_space<vmem>>, %arg4: memref<1x384x32xf32, #tpu.memory_space<vmem>>) attributes {dimension_semantics = [#tpu.dimension_semantics<parallel>], iteration_bounds = array<i64: 3>, scalar_prefetch = 0 : i64, scratch_operands = 0 : i64, tpu.core_type = #tpu.core_type<tc>, window_params = [{transform_indices = @transform_0, window_bounds = array<i64: 1, 384, 128>}, {transform_indices = @transform_1, window_bounds = array<i64: 1, 128, 32>}, {transform_indices = @transform_2, window_bounds = array<i64: 1, 1, 32>}, {transform_indices = @transform_3, window_bounds = array<i64: 1, 384, 32>}]} {
    %c0 = arith.constant 0 : index
    %c0_0 = arith.constant 0 : index
    %c0_1 = arith.constant 0 : index
    %0 = vector.load %arg1[%c0, %c0_0, %c0_1] : memref<1x384x128xf32, #tpu.memory_space<vmem>>, vector<1x384x128xf32>
    %1 = vector.shape_cast %0 : vector<1x384x128xf32> to vector<384x128xf32>
    %c0_2 = arith.constant 0 : index
    %c0_3 = arith.constant 0 : index
    %c0_4 = arith.constant 0 : index
    %2 = vector.load %arg2[%c0_2, %c0_3, %c0_4] : memref<1x128x32xf32, #tpu.memory_space<vmem>>, vector<1x128x32xf32>
    %3 = vector.shape_cast %2 : vector<1x128x32xf32> to vector<128x32xf32>
    %cst = arith.constant dense<0.000000e+00> : vector<384x32xf32>
    %4 = tpu.matmul %1, %3, %cst {dimension_numbers = #tpu.dot_dimension_numbers<[1], [0], [0], [1], [0, 0, 1, 1], [], []>} : vector<384x128xf32>, vector<128x32xf32>, vector<384x32xf32> -> vector<384x32xf32>
    %c0_5 = arith.constant 0 : index
    %c0_6 = arith.constant 0 : index
    %c0_7 = arith.constant 0 : index
    %5 = vector.load %arg3[%c0_5, %c0_6, %c0_7] : memref<1x1x32xf32, #tpu.memory_space<vmem>>, vector<1x1x32xf32>
    %6 = vector.shape_cast %5 : vector<1x1x32xf32> to vector<1x32xf32>
    %7 = vector.broadcast %6 : vector<1x32xf32> to vector<384x32xf32>
    %8 = arith.addf %4, %7 : vector<384x32xf32>
    %cst_8 = arith.constant 0.000000e+00 : f32
    %9 = vector.broadcast %cst_8 : f32 to vector<384x32xf32>
    %10 = arith.maximumf %8, %9 : vector<384x32xf32>
    %c0_9 = arith.constant 0 : index
    %c0_10 = arith.constant 0 : index
    %c0_11 = arith.constant 0 : index
    %11 = vector.load %arg4[%c0_9, %c0_10, %c0_11] : memref<1x384x32xf32, #tpu.memory_space<vmem>>, vector<1x384x32xf32>
    %12 = vector.shape_cast %11 : vector<1x384x32xf32> to vector<384x32xf32>
    %13 = vector.shape_cast %10 : vector<384x32xf32> to vector<1x384x32xf32>
    tpu.vector_store %arg4[%c0_9, %c0_10, %c0_11], %13 {strides = array<i32>} : memref<1x384x32xf32, #tpu.memory_space<vmem>>, vector<1x384x32xf32>,
    return
  }
  func.func @transform_0(%arg0: i32) -> (i32, i32, i32) {
    %c0_i32 = arith.constant 0 : i32
    %c0_i32_0 = arith.constant 0 : i32
    %c0_i32_1 = arith.constant 0 : i32
    return %arg0, %c0_i32, %c0_i32_0 : i32, i32, i32
  }
  func.func @transform_1(%arg0: i32) -> (i32, i32, i32) {
    %c0_i32 = arith.constant 0 : i32
    %c0_i32_0 = arith.constant 0 : i32
    %c0_i32_1 = arith.constant 0 : i32
    return %arg0, %c0_i32, %c0_i32_0 : i32, i32, i32
  }
  func.func @transform_2(%arg0: i32) -> (i32, i32, i32) {
    %c0_i32 = arith.constant 0 : i32
    %c0_i32_0 = arith.constant 0 : i32
    %c0_i32_1 = arith.constant 0 : i32
    return %arg0, %c0_i32, %c0_i32_0 : i32, i32, i32
  }
  func.func @transform_3(%arg0: i32) -> (i32, i32, i32) {
    %c0_i32 = arith.constant 0 : i32
    %c0_i32_0 = arith.constant 0 : i32
    %c0_i32_1 = arith.constant 0 : i32
    return %arg0, %c0_i32, %c0_i32_0 : i32, i32, i32
  }
}

module attributes {stable_mosaic.version = 11 : i64} {
  func.func @_gemm_residual_kernel(%arg0: i32, %arg1: memref<1x384x896xf32, #tpu.memory_space<vmem>>, %arg2: memref<1x896x32xf32, #tpu.memory_space<vmem>>, %arg3: memref<1x1x32xf32, #tpu.memory_space<vmem>>, %arg4: memref<1x384x128xf32, #tpu.memory_space<vmem>>, %arg5: memref<1x128x32xf32, #tpu.memory_space<vmem>>, %arg6: memref<1x1x32xf32, #tpu.memory_space<vmem>>, %arg7: memref<1x384x32xf32, #tpu.memory_space<vmem>>) attributes {dimension_semantics = [#tpu.dimension_semantics<parallel>], iteration_bounds = array<i64: 3>, scalar_prefetch = 0 : i64, scratch_operands = 0 : i64, tpu.core_type = #tpu.core_type<tc>, window_params = [{transform_indices = @transform_0, window_bounds = array<i64: 1, 384, 896>}, {transform_indices = @transform_1, window_bounds = array<i64: 1, 896, 32>}, {transform_indices = @transform_2, window_bounds = array<i64: 1, 1, 32>}, {transform_indices = @transform_3, window_bounds = array<i64: 1, 384, 128>}, {transform_indices = @transform_4, window_bounds = array<i64: 1, 128, 32>}, {transform_indices = @transform_5, window_bounds = array<i64: 1, 1, 32>}, {transform_indices = @transform_6, window_bounds = array<i64: 1, 384, 32>}]} {
    %c0 = arith.constant 0 : index
    %c0_0 = arith.constant 0 : index
    %c0_1 = arith.constant 0 : index
    %0 = vector.load %arg1[%c0, %c0_0, %c0_1] : memref<1x384x896xf32, #tpu.memory_space<vmem>>, vector<1x384x896xf32>
    %1 = vector.shape_cast %0 : vector<1x384x896xf32> to vector<384x896xf32>
    %c0_2 = arith.constant 0 : index
    %c0_3 = arith.constant 0 : index
    %c0_4 = arith.constant 0 : index
    %2 = vector.load %arg2[%c0_2, %c0_3, %c0_4] : memref<1x896x32xf32, #tpu.memory_space<vmem>>, vector<1x896x32xf32>
    %3 = vector.shape_cast %2 : vector<1x896x32xf32> to vector<896x32xf32>
    %cst = arith.constant dense<0.000000e+00> : vector<384x32xf32>
    %4 = tpu.matmul %1, %3, %cst {dimension_numbers = #tpu.dot_dimension_numbers<[1], [0], [0], [1], [0, 0, 1, 1], [], []>} : vector<384x896xf32>, vector<896x32xf32>, vector<384x32xf32> -> vector<384x32xf32>
    %c0_5 = arith.constant 0 : index
    %c0_6 = arith.constant 0 : index
    %c0_7 = arith.constant 0 : index
    %5 = vector.load %arg3[%c0_5, %c0_6, %c0_7] : memref<1x1x32xf32, #tpu.memory_space<vmem>>, vector<1x1x32xf32>
    %6 = vector.shape_cast %5 : vector<1x1x32xf32> to vector<1x32xf32>
    %7 = vector.broadcast %6 : vector<1x32xf32> to vector<384x32xf32>
    %8 = arith.addf %4, %7 : vector<384x32xf32>
    %cst_8 = arith.constant 0.000000e+00 : f32
    %9 = vector.broadcast %cst_8 : f32 to vector<384x32xf32>
    %10 = arith.maximumf %8, %9 : vector<384x32xf32>
    %c0_9 = arith.constant 0 : index
    %c0_10 = arith.constant 0 : index
    %c0_11 = arith.constant 0 : index
    %11 = vector.load %arg4[%c0_9, %c0_10, %c0_11] : memref<1x384x128xf32, #tpu.memory_space<vmem>>, vector<1x384x128xf32>
    %12 = vector.shape_cast %11 : vector<1x384x128xf32> to vector<384x128xf32>
    %c0_12 = arith.constant 0 : index
    %c0_13 = arith.constant 0 : index
    %c0_14 = arith.constant 0 : index
    %13 = vector.load %arg5[%c0_12, %c0_13, %c0_14] : memref<1x128x32xf32, #tpu.memory_space<vmem>>, vector<1x128x32xf32>
    %14 = vector.shape_cast %13 : vector<1x128x32xf32> to vector<128x32xf32>
    %cst_15 = arith.constant dense<0.000000e+00> : vector<384x32xf32>
    %15 = tpu.matmul %12, %14, %cst_15 {dimension_numbers = #tpu.dot_dimension_numbers<[1], [0], [0], [1], [0, 0, 1, 1], [], []>} : vector<384x128xf32>, vector<128x32xf32>, vector<384x32xf32> -> vector<384x32xf32>
    %16 = arith.addf %10, %15 : vector<384x32xf32>
    %c0_16 = arith.constant 0 : index
    %c0_17 = arith.constant 0 : index
    %c0_18 = arith.constant 0 : index
    %17 = vector.load %arg6[%c0_16, %c0_17, %c0_18] : memref<1x1x32xf32, #tpu.memory_space<vmem>>, vector<1x1x32xf32>
    %18 = vector.shape_cast %17 : vector<1x1x32xf32> to vector<1x32xf32>
    %19 = vector.broadcast %18 : vector<1x32xf32> to vector<384x32xf32>
    %20 = arith.addf %16, %19 : vector<384x32xf32>
    %c0_19 = arith.constant 0 : index
    %c0_20 = arith.constant 0 : index
    %c0_21 = arith.constant 0 : index
    %21 = vector.load %arg7[%c0_19, %c0_20, %c0_21] : memref<1x384x32xf32, #tpu.memory_space<vmem>>, vector<1x384x32xf32>
    %22 = vector.shape_cast %21 : vector<1x384x32xf32> to vector<384x32xf32>
    %23 = vector.shape_cast %20 : vector<384x32xf32> to vector<1x384x32xf32>
    tpu.vector_store %arg7[%c0_19, %c0_20, %c0_21], %23 {strides = array<i32>} : memref<1x384x32xf32, #tpu.memory_space<vmem>>, vector<1x384x32xf32>,
    return
  }
  func.func @transform_0(%arg0: i32) -> (i32, i32, i32) {
    %c0_i32 = arith.constant 0 : i32
    %c0_i32_0 = arith.constant 0 : i32
    %c0_i32_1 = arith.constant 0 : i32
    return %arg0, %c0_i32, %c0_i32_0 : i32, i32, i32
  }
  func.func @transform_1(%arg0: i32) -> (i32, i32, i32) {
    %c0_i32 = arith.constant 0 : i32
    %c0_i32_0 = arith.constant 0 : i32
    %c0_i32_1 = arith.constant 0 : i32
    return %arg0, %c0_i32, %c0_i32_0 : i32, i32, i32
  }
  func.func @transform_2(%arg0: i32) -> (i32, i32, i32) {
    %c0_i32 = arith.constant 0 : i32
    %c0_i32_0 = arith.constant 0 : i32
    %c0_i32_1 = arith.constant 0 : i32
    return %arg0, %c0_i32, %c0_i32_0 : i32, i32, i32
  }
  func.func @transform_3(%arg0: i32) -> (i32, i32, i32) {
    %c0_i32 = arith.constant 0 : i32
    %c0_i32_0 = arith.constant 0 : i32
    %c0_i32_1 = arith.constant 0 : i32
    return %arg0, %c0_i32, %c0_i32_0 : i32, i32, i32
  }
  func.func @transform_4(%arg0: i32) -> (i32, i32, i32) {
    %c0_i32 = arith.constant 0 : i32
    %c0_i32_0 = arith.constant 0 : i32
    %c0_i32_1 = arith.constant 0 : i32
    return %arg0, %c0_i32, %c0_i32_0 : i32, i32, i32
  }
  func.func @transform_5(%arg0: i32) -> (i32, i32, i32) {
    %c0_i32 = arith.constant 0 : i32
    %c0_i32_0 = arith.constant 0 : i32
    %c0_i32_1 = arith.constant 0 : i32
    return %arg0, %c0_i32, %c0_i32_0 : i32, i32, i32
  }
  func.func @transform_6(%arg0: i32) -> (i32, i32, i32) {
    %c0_i32 = arith.constant 0 : i32
    %c0_i32_0 = arith.constant 0 : i32
    %c0_i32_1 = arith.constant 0 : i32
    return %arg0, %c0_i32, %c0_i32_0 : i32, i32, i32
  }
}

module attributes {stable_mosaic.version = 11 : i64} {
  func.func @_gemm_bias_relu_kernel(%arg0: i32, %arg1: memref<1x384x896xf32, #tpu.memory_space<vmem>>, %arg2: memref<1x896x32xf32, #tpu.memory_space<vmem>>, %arg3: memref<1x1x32xf32, #tpu.memory_space<vmem>>, %arg4: memref<1x384x32xf32, #tpu.memory_space<vmem>>) attributes {dimension_semantics = [#tpu.dimension_semantics<parallel>], iteration_bounds = array<i64: 3>, scalar_prefetch = 0 : i64, scratch_operands = 0 : i64, tpu.core_type = #tpu.core_type<tc>, window_params = [{transform_indices = @transform_0, window_bounds = array<i64: 1, 384, 896>}, {transform_indices = @transform_1, window_bounds = array<i64: 1, 896, 32>}, {transform_indices = @transform_2, window_bounds = array<i64: 1, 1, 32>}, {transform_indices = @transform_3, window_bounds = array<i64: 1, 384, 32>}]} {
    %c0 = arith.constant 0 : index
    %c0_0 = arith.constant 0 : index
    %c0_1 = arith.constant 0 : index
    %0 = vector.load %arg1[%c0, %c0_0, %c0_1] : memref<1x384x896xf32, #tpu.memory_space<vmem>>, vector<1x384x896xf32>
    %1 = vector.shape_cast %0 : vector<1x384x896xf32> to vector<384x896xf32>
    %c0_2 = arith.constant 0 : index
    %c0_3 = arith.constant 0 : index
    %c0_4 = arith.constant 0 : index
    %2 = vector.load %arg2[%c0_2, %c0_3, %c0_4] : memref<1x896x32xf32, #tpu.memory_space<vmem>>, vector<1x896x32xf32>
    %3 = vector.shape_cast %2 : vector<1x896x32xf32> to vector<896x32xf32>
    %cst = arith.constant dense<0.000000e+00> : vector<384x32xf32>
    %4 = tpu.matmul %1, %3, %cst {dimension_numbers = #tpu.dot_dimension_numbers<[1], [0], [0], [1], [0, 0, 1, 1], [], []>} : vector<384x896xf32>, vector<896x32xf32>, vector<384x32xf32> -> vector<384x32xf32>
    %c0_5 = arith.constant 0 : index
    %c0_6 = arith.constant 0 : index
    %c0_7 = arith.constant 0 : index
    %5 = vector.load %arg3[%c0_5, %c0_6, %c0_7] : memref<1x1x32xf32, #tpu.memory_space<vmem>>, vector<1x1x32xf32>
    %6 = vector.shape_cast %5 : vector<1x1x32xf32> to vector<1x32xf32>
    %7 = vector.broadcast %6 : vector<1x32xf32> to vector<384x32xf32>
    %8 = arith.addf %4, %7 : vector<384x32xf32>
    %cst_8 = arith.constant 0.000000e+00 : f32
    %9 = vector.broadcast %cst_8 : f32 to vector<384x32xf32>
    %10 = arith.maximumf %8, %9 : vector<384x32xf32>
    %c0_9 = arith.constant 0 : index
    %c0_10 = arith.constant 0 : index
    %c0_11 = arith.constant 0 : index
    %11 = vector.load %arg4[%c0_9, %c0_10, %c0_11] : memref<1x384x32xf32, #tpu.memory_space<vmem>>, vector<1x384x32xf32>
    %12 = vector.shape_cast %11 : vector<1x384x32xf32> to vector<384x32xf32>
    %13 = vector.shape_cast %10 : vector<384x32xf32> to vector<1x384x32xf32>
    tpu.vector_store %arg4[%c0_9, %c0_10, %c0_11], %13 {strides = array<i32>} : memref<1x384x32xf32, #tpu.memory_space<vmem>>, vector<1x384x32xf32>,
    return
  }
  func.func @transform_0(%arg0: i32) -> (i32, i32, i32) {
    %c0_i32 = arith.constant 0 : i32
    %c0_i32_0 = arith.constant 0 : i32
    %c0_i32_1 = arith.constant 0 : i32
    return %arg0, %c0_i32, %c0_i32_0 : i32, i32, i32
  }
  func.func @transform_1(%arg0: i32) -> (i32, i32, i32) {
    %c0_i32 = arith.constant 0 : i32
    %c0_i32_0 = arith.constant 0 : i32
    %c0_i32_1 = arith.constant 0 : i32
    return %arg0, %c0_i32, %c0_i32_0 : i32, i32, i32
  }
  func.func @transform_2(%arg0: i32) -> (i32, i32, i32) {
    %c0_i32 = arith.constant 0 : i32
    %c0_i32_0 = arith.constant 0 : i32
    %c0_i32_1 = arith.constant 0 : i32
    return %arg0, %c0_i32, %c0_i32_0 : i32, i32, i32
  }
  func.func @transform_3(%arg0: i32) -> (i32, i32, i32) {
    %c0_i32 = arith.constant 0 : i32
    %c0_i32_0 = arith.constant 0 : i32
    %c0_i32_1 = arith.constant 0 : i32
    return %arg0, %c0_i32, %c0_i32_0 : i32, i32, i32
  }
}

module attributes {stable_mosaic.version = 11 : i64} {
  func.func @_gemm_bias_relu_kernel(%arg0: i32, %arg1: memref<1x72x896xf32, #tpu.memory_space<vmem>>, %arg2: memref<1x896x64xf32, #tpu.memory_space<vmem>>, %arg3: memref<1x1x64xf32, #tpu.memory_space<vmem>>, %arg4: memref<1x72x64xf32, #tpu.memory_space<vmem>>) attributes {dimension_semantics = [#tpu.dimension_semantics<parallel>], iteration_bounds = array<i64: 3>, scalar_prefetch = 0 : i64, scratch_operands = 0 : i64, tpu.core_type = #tpu.core_type<tc>, window_params = [{transform_indices = @transform_0, window_bounds = array<i64: 1, 72, 896>}, {transform_indices = @transform_1, window_bounds = array<i64: 1, 896, 64>}, {transform_indices = @transform_2, window_bounds = array<i64: 1, 1, 64>}, {transform_indices = @transform_3, window_bounds = array<i64: 1, 72, 64>}]} {
    %c0 = arith.constant 0 : index
    %c0_0 = arith.constant 0 : index
    %c0_1 = arith.constant 0 : index
    %0 = vector.load %arg1[%c0, %c0_0, %c0_1] : memref<1x72x896xf32, #tpu.memory_space<vmem>>, vector<1x72x896xf32>
    %1 = vector.shape_cast %0 : vector<1x72x896xf32> to vector<72x896xf32>
    %c0_2 = arith.constant 0 : index
    %c0_3 = arith.constant 0 : index
    %c0_4 = arith.constant 0 : index
    %2 = vector.load %arg2[%c0_2, %c0_3, %c0_4] : memref<1x896x64xf32, #tpu.memory_space<vmem>>, vector<1x896x64xf32>
    %3 = vector.shape_cast %2 : vector<1x896x64xf32> to vector<896x64xf32>
    %cst = arith.constant dense<0.000000e+00> : vector<72x64xf32>
    %4 = tpu.matmul %1, %3, %cst {dimension_numbers = #tpu.dot_dimension_numbers<[1], [0], [0], [1], [0, 0, 1, 1], [], []>} : vector<72x896xf32>, vector<896x64xf32>, vector<72x64xf32> -> vector<72x64xf32>
    %c0_5 = arith.constant 0 : index
    %c0_6 = arith.constant 0 : index
    %c0_7 = arith.constant 0 : index
    %5 = vector.load %arg3[%c0_5, %c0_6, %c0_7] : memref<1x1x64xf32, #tpu.memory_space<vmem>>, vector<1x1x64xf32>
    %6 = vector.shape_cast %5 : vector<1x1x64xf32> to vector<1x64xf32>
    %7 = vector.broadcast %6 : vector<1x64xf32> to vector<72x64xf32>
    %8 = arith.addf %4, %7 : vector<72x64xf32>
    %cst_8 = arith.constant 0.000000e+00 : f32
    %9 = vector.broadcast %cst_8 : f32 to vector<72x64xf32>
    %10 = arith.maximumf %8, %9 : vector<72x64xf32>
    %c0_9 = arith.constant 0 : index
    %c0_10 = arith.constant 0 : index
    %c0_11 = arith.constant 0 : index
    %11 = vector.load %arg4[%c0_9, %c0_10, %c0_11] : memref<1x72x64xf32, #tpu.memory_space<vmem>>, vector<1x72x64xf32>
    %12 = vector.shape_cast %11 : vector<1x72x64xf32> to vector<72x64xf32>
    %13 = vector.shape_cast %10 : vector<72x64xf32> to vector<1x72x64xf32>
    tpu.vector_store %arg4[%c0_9, %c0_10, %c0_11], %13 {strides = array<i32>} : memref<1x72x64xf32, #tpu.memory_space<vmem>>, vector<1x72x64xf32>,
    return
  }
  func.func @transform_0(%arg0: i32) -> (i32, i32, i32) {
    %c0_i32 = arith.constant 0 : i32
    %c0_i32_0 = arith.constant 0 : i32
    %c0_i32_1 = arith.constant 0 : i32
    return %arg0, %c0_i32, %c0_i32_0 : i32, i32, i32
  }
  func.func @transform_1(%arg0: i32) -> (i32, i32, i32) {
    %c0_i32 = arith.constant 0 : i32
    %c0_i32_0 = arith.constant 0 : i32
    %c0_i32_1 = arith.constant 0 : i32
    return %arg0, %c0_i32, %c0_i32_0 : i32, i32, i32
  }
  func.func @transform_2(%arg0: i32) -> (i32, i32, i32) {
    %c0_i32 = arith.constant 0 : i32
    %c0_i32_0 = arith.constant 0 : i32
    %c0_i32_1 = arith.constant 0 : i32
    return %arg0, %c0_i32, %c0_i32_0 : i32, i32, i32
  }
  func.func @transform_3(%arg0: i32) -> (i32, i32, i32) {
    %c0_i32 = arith.constant 0 : i32
    %c0_i32_0 = arith.constant 0 : i32
    %c0_i32_1 = arith.constant 0 : i32
    return %arg0, %c0_i32, %c0_i32_0 : i32, i32, i32
  }
}

module attributes {stable_mosaic.version = 11 : i64} {
  func.func @_gemm_bias_relu_kernel(%arg0: i32, %arg1: memref<1x32x1792xf32, #tpu.memory_space<vmem>>, %arg2: memref<1x1792x32xf32, #tpu.memory_space<vmem>>, %arg3: memref<1x1x32xf32, #tpu.memory_space<vmem>>, %arg4: memref<1x32x32xf32, #tpu.memory_space<vmem>>) attributes {dimension_semantics = [#tpu.dimension_semantics<parallel>], iteration_bounds = array<i64: 1>, scalar_prefetch = 0 : i64, scratch_operands = 0 : i64, tpu.core_type = #tpu.core_type<tc>, window_params = [{transform_indices = @transform_0, window_bounds = array<i64: 1, 32, 1792>}, {transform_indices = @transform_1, window_bounds = array<i64: 1, 1792, 32>}, {transform_indices = @transform_2, window_bounds = array<i64: 1, 1, 32>}, {transform_indices = @transform_3, window_bounds = array<i64: 1, 32, 32>}]} {
    %c0 = arith.constant 0 : index
    %c0_0 = arith.constant 0 : index
    %c0_1 = arith.constant 0 : index
    %0 = vector.load %arg1[%c0, %c0_0, %c0_1] : memref<1x32x1792xf32, #tpu.memory_space<vmem>>, vector<1x32x1792xf32>
    %1 = vector.shape_cast %0 : vector<1x32x1792xf32> to vector<32x1792xf32>
    %c0_2 = arith.constant 0 : index
    %c0_3 = arith.constant 0 : index
    %c0_4 = arith.constant 0 : index
    %2 = vector.load %arg2[%c0_2, %c0_3, %c0_4] : memref<1x1792x32xf32, #tpu.memory_space<vmem>>, vector<1x1792x32xf32>
    %3 = vector.shape_cast %2 : vector<1x1792x32xf32> to vector<1792x32xf32>
    %cst = arith.constant dense<0.000000e+00> : vector<32x32xf32>
    %4 = tpu.matmul %1, %3, %cst {dimension_numbers = #tpu.dot_dimension_numbers<[1], [0], [0], [1], [0, 0, 1, 1], [], []>} : vector<32x1792xf32>, vector<1792x32xf32>, vector<32x32xf32> -> vector<32x32xf32>
    %c0_5 = arith.constant 0 : index
    %c0_6 = arith.constant 0 : index
    %c0_7 = arith.constant 0 : index
    %5 = vector.load %arg3[%c0_5, %c0_6, %c0_7] : memref<1x1x32xf32, #tpu.memory_space<vmem>>, vector<1x1x32xf32>
    %6 = vector.shape_cast %5 : vector<1x1x32xf32> to vector<1x32xf32>
    %7 = vector.broadcast %6 : vector<1x32xf32> to vector<32x32xf32>
    %8 = arith.addf %4, %7 : vector<32x32xf32>
    %cst_8 = arith.constant 0.000000e+00 : f32
    %9 = vector.broadcast %cst_8 : f32 to vector<32x32xf32>
    %10 = arith.maximumf %8, %9 : vector<32x32xf32>
    %c0_9 = arith.constant 0 : index
    %c0_10 = arith.constant 0 : index
    %c0_11 = arith.constant 0 : index
    %11 = vector.load %arg4[%c0_9, %c0_10, %c0_11] : memref<1x32x32xf32, #tpu.memory_space<vmem>>, vector<1x32x32xf32>
    %12 = vector.shape_cast %11 : vector<1x32x32xf32> to vector<32x32xf32>
    %13 = vector.shape_cast %10 : vector<32x32xf32> to vector<1x32x32xf32>
    tpu.vector_store %arg4[%c0_9, %c0_10, %c0_11], %13 {strides = array<i32>} : memref<1x32x32xf32, #tpu.memory_space<vmem>>, vector<1x32x32xf32>,
    return
  }
  func.func @transform_0(%arg0: i32) -> (i32, i32, i32) {
    %c0_i32 = arith.constant 0 : i32
    %c0_i32_0 = arith.constant 0 : i32
    %c0_i32_1 = arith.constant 0 : i32
    return %arg0, %c0_i32, %c0_i32_0 : i32, i32, i32
  }
  func.func @transform_1(%arg0: i32) -> (i32, i32, i32) {
    %c0_i32 = arith.constant 0 : i32
    %c0_i32_0 = arith.constant 0 : i32
    %c0_i32_1 = arith.constant 0 : i32
    return %arg0, %c0_i32, %c0_i32_0 : i32, i32, i32
  }
  func.func @transform_2(%arg0: i32) -> (i32, i32, i32) {
    %c0_i32 = arith.constant 0 : i32
    %c0_i32_0 = arith.constant 0 : i32
    %c0_i32_1 = arith.constant 0 : i32
    return %arg0, %c0_i32, %c0_i32_0 : i32, i32, i32
  }
  func.func @transform_3(%arg0: i32) -> (i32, i32, i32) {
    %c0_i32 = arith.constant 0 : i32
    %c0_i32_0 = arith.constant 0 : i32
    %c0_i32_1 = arith.constant 0 : i32
    return %arg0, %c0_i32, %c0_i32_0 : i32, i32, i32
  }
}

module attributes {stable_mosaic.version = 11 : i64} {
  func.func @_gemm_bias_relu_kernel(%arg0: i32, %arg1: memref<1x8x384xf32, #tpu.memory_space<vmem>>, %arg2: memref<1x384x32xf32, #tpu.memory_space<vmem>>, %arg3: memref<1x1x32xf32, #tpu.memory_space<vmem>>, %arg4: memref<1x8x32xf32, #tpu.memory_space<vmem>>) attributes {dimension_semantics = [#tpu.dimension_semantics<parallel>], iteration_bounds = array<i64: 1>, scalar_prefetch = 0 : i64, scratch_operands = 0 : i64, tpu.core_type = #tpu.core_type<tc>, window_params = [{transform_indices = @transform_0, window_bounds = array<i64: 1, 8, 384>}, {transform_indices = @transform_1, window_bounds = array<i64: 1, 384, 32>}, {transform_indices = @transform_2, window_bounds = array<i64: 1, 1, 32>}, {transform_indices = @transform_3, window_bounds = array<i64: 1, 8, 32>}]} {
    %c0 = arith.constant 0 : index
    %c0_0 = arith.constant 0 : index
    %c0_1 = arith.constant 0 : index
    %0 = vector.load %arg1[%c0, %c0_0, %c0_1] : memref<1x8x384xf32, #tpu.memory_space<vmem>>, vector<1x8x384xf32>
    %1 = vector.shape_cast %0 : vector<1x8x384xf32> to vector<8x384xf32>
    %c0_2 = arith.constant 0 : index
    %c0_3 = arith.constant 0 : index
    %c0_4 = arith.constant 0 : index
    %2 = vector.load %arg2[%c0_2, %c0_3, %c0_4] : memref<1x384x32xf32, #tpu.memory_space<vmem>>, vector<1x384x32xf32>
    %3 = vector.shape_cast %2 : vector<1x384x32xf32> to vector<384x32xf32>
    %cst = arith.constant dense<0.000000e+00> : vector<8x32xf32>
    %4 = tpu.matmul %1, %3, %cst {dimension_numbers = #tpu.dot_dimension_numbers<[1], [0], [0], [1], [0, 0, 1, 1], [], []>} : vector<8x384xf32>, vector<384x32xf32>, vector<8x32xf32> -> vector<8x32xf32>
    %c0_5 = arith.constant 0 : index
    %c0_6 = arith.constant 0 : index
    %c0_7 = arith.constant 0 : index
    %5 = vector.load %arg3[%c0_5, %c0_6, %c0_7] : memref<1x1x32xf32, #tpu.memory_space<vmem>>, vector<1x1x32xf32>
    %6 = vector.shape_cast %5 : vector<1x1x32xf32> to vector<1x32xf32>
    %7 = vector.broadcast %6 : vector<1x32xf32> to vector<8x32xf32>
    %8 = arith.addf %4, %7 : vector<8x32xf32>
    %cst_8 = arith.constant 0.000000e+00 : f32
    %9 = vector.broadcast %cst_8 : f32 to vector<8x32xf32>
    %10 = arith.maximumf %8, %9 : vector<8x32xf32>
    %c0_9 = arith.constant 0 : index
    %c0_10 = arith.constant 0 : index
    %c0_11 = arith.constant 0 : index
    %11 = vector.load %arg4[%c0_9, %c0_10, %c0_11] : memref<1x8x32xf32, #tpu.memory_space<vmem>>, vector<1x8x32xf32>
    %12 = vector.shape_cast %11 : vector<1x8x32xf32> to vector<8x32xf32>
    %13 = vector.shape_cast %10 : vector<8x32xf32> to vector<1x8x32xf32>
    tpu.vector_store %arg4[%c0_9, %c0_10, %c0_11], %13 {strides = array<i32>} : memref<1x8x32xf32, #tpu.memory_space<vmem>>, vector<1x8x32xf32>,
    return
  }
  func.func @transform_0(%arg0: i32) -> (i32, i32, i32) {
    %c0_i32 = arith.constant 0 : i32
    %c0_i32_0 = arith.constant 0 : i32
    %c0_i32_1 = arith.constant 0 : i32
    return %arg0, %c0_i32, %c0_i32_0 : i32, i32, i32
  }
  func.func @transform_1(%arg0: i32) -> (i32, i32, i32) {
    %c0_i32 = arith.constant 0 : i32
    %c0_i32_0 = arith.constant 0 : i32
    %c0_i32_1 = arith.constant 0 : i32
    return %arg0, %c0_i32, %c0_i32_0 : i32, i32, i32
  }
  func.func @transform_2(%arg0: i32) -> (i32, i32, i32) {
    %c0_i32 = arith.constant 0 : i32
    %c0_i32_0 = arith.constant 0 : i32
    %c0_i32_1 = arith.constant 0 : i32
    return %arg0, %c0_i32, %c0_i32_0 : i32, i32, i32
  }
  func.func @transform_3(%arg0: i32) -> (i32, i32, i32) {
    %c0_i32 = arith.constant 0 : i32
    %c0_i32_0 = arith.constant 0 : i32
    %c0_i32_1 = arith.constant 0 : i32
    return %arg0, %c0_i32, %c0_i32_0 : i32, i32, i32
  }
}

module attributes {stable_mosaic.version = 11 : i64} {
  func.func @_fc_head_kernel(%arg0: memref<2x128xf32, #tpu.memory_space<vmem>>, %arg1: memref<128x128xf32, #tpu.memory_space<vmem>>, %arg2: memref<1x128xf32, #tpu.memory_space<vmem>>, %arg3: memref<128x1xf32, #tpu.memory_space<vmem>>, %arg4: memref<1x1xf32, #tpu.memory_space<vmem>>, %arg5: memref<2x1xf32, #tpu.memory_space<vmem>>) attributes {dimension_semantics = [], scalar_prefetch = 0 : i64, scratch_operands = 0 : i64, tpu.core_type = #tpu.core_type<tc>} {
    %c0 = arith.constant 0 : index
    %c0_0 = arith.constant 0 : index
    %0 = vector.load %arg0[%c0, %c0_0] : memref<2x128xf32, #tpu.memory_space<vmem>>, vector<2x128xf32>
    %c0_1 = arith.constant 0 : index
    %c0_2 = arith.constant 0 : index
    %1 = vector.load %arg1[%c0_1, %c0_2] : memref<128x128xf32, #tpu.memory_space<vmem>>, vector<128x128xf32>
    %cst = arith.constant dense<0.000000e+00> : vector<2x128xf32>
    %2 = tpu.matmul %0, %1, %cst {dimension_numbers = #tpu.dot_dimension_numbers<[1], [0], [0], [1], [0, 0, 1, 1], [], []>} : vector<2x128xf32>, vector<128x128xf32>, vector<2x128xf32> -> vector<2x128xf32>
    %c0_3 = arith.constant 0 : index
    %c0_4 = arith.constant 0 : index
    %3 = vector.load %arg2[%c0_3, %c0_4] : memref<1x128xf32, #tpu.memory_space<vmem>>, vector<1x128xf32>
    %4 = vector.broadcast %3 : vector<1x128xf32> to vector<2x128xf32>
    %5 = arith.addf %2, %4 : vector<2x128xf32>
    %cst_5 = arith.constant 0.000000e+00 : f32
    %6 = vector.broadcast %cst_5 : f32 to vector<2x128xf32>
    %7 = arith.maximumf %5, %6 : vector<2x128xf32>
    %c0_6 = arith.constant 0 : index
    %c0_7 = arith.constant 0 : index
    %8 = vector.load %arg3[%c0_6, %c0_7] : memref<128x1xf32, #tpu.memory_space<vmem>>, vector<128x1xf32>
    %cst_8 = arith.constant dense<0.000000e+00> : vector<2x1xf32>
    %9 = tpu.matmul %7, %8, %cst_8 {dimension_numbers = #tpu.dot_dimension_numbers<[1], [0], [0], [1], [0, 0, 1, 1], [], []>} : vector<2x128xf32>, vector<128x1xf32>, vector<2x1xf32> -> vector<2x1xf32>
    %c0_9 = arith.constant 0 : index
    %c0_10 = arith.constant 0 : index
    %10 = vector.load %arg4[%c0_9, %c0_10] : memref<1x1xf32, #tpu.memory_space<vmem>>, vector<1x1xf32>
    %11 = vector.broadcast %10 : vector<1x1xf32> to vector<2x1xf32>
    %12 = arith.addf %9, %11 : vector<2x1xf32>
    %cst_11 = arith.constant 0.000000e+00 : f32
    %13 = vector.broadcast %cst_11 : f32 to vector<2x1xf32>
    %14 = arith.maximumf %12, %13 : vector<2x1xf32>
    %c0_12 = arith.constant 0 : index
    %c0_13 = arith.constant 0 : index
    %15 = vector.load %arg5[%c0_12, %c0_13] : memref<2x1xf32, #tpu.memory_space<vmem>>, vector<2x1xf32>
    tpu.vector_store %arg5[%c0_12, %c0_13], %14 {strides = array<i32>} : memref<2x1xf32, #tpu.memory_space<vmem>>, vector<2x1xf32>,
    return
  }
}

</mosaic_0001>

<llo_original>
// kernel: forward.8
$region0: #{forward.8}
  #allocation0 [shape = 'u32[]', space=smem, size = 0x4, offset = 0x4, fixed_abs, tag = 'smem constant byte address 0x4 - core index']
  #allocation1 [shape = 'u32[144,128]{1,0:T(1,128)}', space=vmem, size = 0x12000, scoped, tag = 'internal scratch']
  %s0 = inlined_call_operand.vmem [shape: f32[3,384,128], index: 0, kind: input, shape index: {}]
  %s1 = inlined_call_operand.vmem [shape: f32[3,128,32], index: 1, kind: input, shape index: {}]
  %s2 = inlined_call_operand.vmem [shape: f32[3,1,32], index: 2, kind: input, shape index: {}]
  %s3 = inlined_call_operand.vmem [shape: f32[3,384,32], index: 3, kind: output, shape index: {}]
  %s4 = sld [smem:[#allocation0]]
  $region45: #{forward.8} parent=0
    _
  %s6 = ssub.s32 1, %s4
  %s7 = scalar_select 0, %s6, %s4
  loop: start=0, step=1, limit=5
  $region2: #{forward.8} parent=0 // loop_pre_header
    _
  $region3: #{forward.8} parent=0 // loop_header
    %s9 = sphi 0, %s13
    %p10 = scmp.ge.s32.totalorder %s9, 5
    %s19 = sphi 0, %s21
    %s22 = sphi 0, %s19
    %s23 = sphi 0, %s22
    %s39 = sphi 0, %s23
    %s45 = sphi 0, %s47
    %s48 = sphi 0, %s45
    %s49 = sphi 0, %s48
    %s65 = sphi 0, %s49
    %s71 = sphi 0, %s73
    %s74 = sphi 0, %s71
    %s75 = sphi 0, %s74
    %s91 = sphi 0, %s75
    %s97 = sphi 0, %s99
    %s100 = sphi 0, %s97
    %s101 = sphi 0, %s100
    %s117 = sphi 0, %s101
  $region4: #{forward.8} parent=0 // loop_header_branch
    %12 = sbr.rel (%p10) target = $region8
  $region5: #{forward.8} parent=0 // loop_body
    %s14 = ssub.s32 %s9, 1
    %s15 = ssub.s32 %s9, 2
    %s16 = sadd.s32 %s9, 1
    %s17 = ssub.s32 %s9, %s16
    %p18 = scmp.eq.s32.totalorder %s17, 0
    %s20 = sadd.s32 %s19, 1
    %s21 = scalar_select %p18, %s19, %s20
    %p24 = pneg %p18
    %p25 = scmp.eq.s32.totalorder %s9, 2
    %p26 = por %p24, %p25
    %p27 = scmp.ne.s32.totalorder %s19, %s22
    %p28 = scmp.eq.s32.totalorder %s9, 0
    %p29 = por %p27, %p28
    %p30 = scmp.ne.s32.totalorder %s19, %s22
    %p31 = scmp.eq.s32.totalorder %s14, 2
    %p32 = por %p30, %p31
    %p33 = scmp.ne.s32.totalorder %s22, %s23
    %p34 = scmp.eq.s32.totalorder %s14, 0
    %p35 = por %p33, %p34
    %p36 = scmp.ne.s32.totalorder %s22, %s23
    %p37 = scmp.eq.s32.totalorder %s15, 2
    %p38 = por %p36, %p37
    %p40 = scmp.ne.s32.totalorder %s23, %s39
    %p41 = scmp.eq.s32.totalorder %s15, 0
    %p42 = por %p40, %p41
    %s43 = ssub.s32 %s9, %s16
    %p44 = scmp.eq.s32.totalorder %s43, 0
    %s46 = sadd.s32 %s45, 1
    %s47 = scalar_select %p44, %s45, %s46
    %p50 = pneg %p44
    %p51 = scmp.eq.s32.totalorder %s9, 2
    %p52 = por %p50, %p51
    %p53 = scmp.ne.s32.totalorder %s45, %s48
    %p54 = scmp.eq.s32.totalorder %s9, 0
    %p55 = por %p53, %p54
    %p56 = scmp.ne.s32.totalorder %s45, %s48
    %p57 = scmp.eq.s32.totalorder %s14, 2
    %p58 = por %p56, %p57
    %p59 = scmp.ne.s32.totalorder %s48, %s49
    %p60 = scmp.eq.s32.totalorder %s14, 0
    %p61 = por %p59, %p60
    %p62 = scmp.ne.s32.totalorder %s48, %s49
    %p63 = scmp.eq.s32.totalorder %s15, 2
    %p64 = por %p62, %p63
    %p66 = scmp.ne.s32.totalorder %s49, %s65
    %p67 = scmp.eq.s32.totalorder %s15, 0
    %p68 = por %p66, %p67
    %s69 = ssub.s32 %s9, %s16
    %p70 = scmp.eq.s32.totalorder %s69, 0
    %s72 = sadd.s32 %s71, 1
    %s73 = scalar_select %p70, %s71, %s72
    %p76 = pneg %p70
    %p77 = scmp.eq.s32.totalorder %s9, 2
    %p78 = por %p76, %p77
    %p79 = scmp.ne.s32.totalorder %s71, %s74
    %p80 = scmp.eq.s32.totalorder %s9, 0
    %p81 = por %p79, %p80
    %p82 = scmp.ne.s32.totalorder %s71, %s74
    %p83 = scmp.eq.s32.totalorder %s14, 2
    %p84 = por %p82, %p83
    %p85 = scmp.ne.s32.totalorder %s74, %s75
    %p86 = scmp.eq.s32.totalorder %s14, 0
    %p87 = por %p85, %p86
    %p88 = scmp.ne.s32.totalorder %s74, %s75
    %p89 = scmp.eq.s32.totalorder %s15, 2
    %p90 = por %p88, %p89
    %p92 = scmp.ne.s32.totalorder %s75, %s91
    %p93 = scmp.eq.s32.totalorder %s15, 0
    %p94 = por %p92, %p93
    %s95 = ssub.s32 %s9, %s16
    %p96 = scmp.eq.s32.totalorder %s95, 0
    %s98 = sadd.s32 %s97, 1
    %s99 = scalar_select %p96, %s97, %s98
    %p102 = pneg %p96
    %p103 = scmp.eq.s32.totalorder %s9, 2
    %p104 = por %p102, %p103
    %p105 = scmp.ne.s32.totalorder %s97, %s100
    %p106 = scmp.eq.s32.totalorder %s9, 0
    %p107 = por %p105, %p106
    %p108 = scmp.ne.s32.totalorder %s97, %s100
    %p109 = scmp.eq.s32.totalorder %s14, 2
    %p110 = por %p108, %p109
    %p111 = scmp.ne.s32.totalorder %s100, %s101
    %p112 = scmp.eq.s32.totalorder %s14, 0
    %p113 = por %p111, %p112
    %p114 = scmp.ne.s32.totalorder %s100, %s101
    %p115 = scmp.eq.s32.totalorder %s15, 2
    %p116 = por %p114, %p115
    %p118 = scmp.ne.s32.totalorder %s101, %s117
    %p119 = scmp.eq.s32.totalorder %s15, 0
    %p120 = por %p118, %p119
    %p121 = scmp.le.s32.totalorder 1, %s9
    %p122 = scmp.lt.s32.totalorder %s9, 4
    %p123 = pnand %p121, %p122
    %p124 = pneg %p123
    // Predicated region
    $region9: #{forward.8} parent=5 // pred_check
      _
    $region10: #{forward.8} parent=5 // pred_check_branch
      %126 = sbr.rel (%p123) target = $region12
    $region11: #{forward.8} parent=5 // pred_region
      %s127 = ssub.s32 %s9, 1
    $region12: #{forward.8} parent=5 // pred_fallthru
      _
    %p128 = scmp.lt.s32.totalorder %s9, 3
    // Predicated region
    $region13: #{forward.8} parent=5 // pred_check
      %p129 = pneg %p128
    $region14: #{forward.8} parent=5 // pred_check_branch
      %131 = sbr.rel (%p129) target = $region16
    $region15: #{forward.8} parent=5 // pred_region
      // Predicated region
      $region17: #{forward.8} parent=15 // pred_check
        %p132 = pneg %p29
      $region18: #{forward.8} parent=15 // pred_check_branch
        %134 = sbr.rel (%p132) target = $region20
      $region19: #{forward.8} parent=15 // pred_region
        %p135 = scmp.lt.s32.totalorder %s9, 2
        %s136 = scalar_select %p135, %s9, 2
        %s137 = smul.addr %s136, 48
        %s138 = smul.addr %s137, 8
        %s139 = scalar_lea.vmem %s0, %s138
      $region20: #{forward.8} parent=15 // pred_fallthru
        _
      // Predicated region
      $region21: #{forward.8} parent=15 // pred_check
        %p140 = pneg %p55
      $region22: #{forward.8} parent=15 // pred_check_branch
        %142 = sbr.rel (%p140) target = $region24
      $region23: #{forward.8} parent=15 // pred_region
        %p143 = scmp.lt.s32.totalorder %s9, 2
        %s144 = scalar_select %p143, %s9, 2
        %s145 = smul.addr %s144, 16
        %s146 = smul.addr %s145, 8
        %s147 = scalar_lea.vmem %s1, %s146
      $region24: #{forward.8} parent=15 // pred_fallthru
        _
      // Predicated region
      $region25: #{forward.8} parent=15 // pred_check
        %p148 = pneg %p81
      $region26: #{forward.8} parent=15 // pred_check_branch
        %150 = sbr.rel (%p148) target = $region28
      $region27: #{forward.8} parent=15 // pred_region
        %p151 = scmp.lt.s32.totalorder %s9, 2
        %s152 = scalar_select %p151, %s9, 2
        %s153 = scalar_lea.vmem %s2, %s152
      $region28: #{forward.8} parent=15 // pred_fallthru
        _
    $region16: #{forward.8} parent=5 // pred_fallthru
      _
    %p154 = scmp.le.s32.totalorder 1, %s9
    %p155 = scmp.lt.s32.totalorder %s9, 4
    %p156 = pnand %p154, %p155
    %p157 = pneg %p156
    // Predicated region
    $region29: #{forward.8} parent=5 // pred_check
      _
    $region30: #{forward.8} parent=5 // pred_check_branch
      %159 = sbr.rel (%p156) target = $region32
    $region31: #{forward.8} parent=5 // pred_region
      %s160 = ssub.s32 %s9, 1
      %p161 = scmp.lt.s32.totalorder %s14, 2
      %s162 = scalar_select %p161, %s14, 2
      %s163 = smul.addr %s162, 48
      %s164 = smul.addr %s163, 8
      %s165 = scalar_lea.vmem %s0, %s164
      %p166 = pneg %p35
      %p167 = pneg %p32
      %p168 = scmp.lt.s32.totalorder %s14, 2
      %s169 = scalar_select %p168, %s14, 2
      %s170 = smul.addr %s169, 16
      %s171 = smul.addr %s170, 8
      %s172 = scalar_lea.vmem %s1, %s171
      %p173 = pneg %p61
      %p174 = pneg %p58
      %p175 = scmp.lt.s32.totalorder %s14, 2
      %s176 = scalar_select %p175, %s14, 2
      %s177 = scalar_lea.vmem %s2, %s176
      %p178 = pneg %p87
      %p179 = pneg %p84
      %p180 = pneg %p113
      %p181 = pneg %p110
      %p182 = scmp.lt.s32.totalorder %s14, 2
      %s183 = scalar_select %p182, %s14, 2
      %s184 = smul.addr %s183, 48
      %s185 = smul.addr %s184, 8
      %s186 = scalar_lea.vmem %s3, %s185
      %p187 = scmp.lt.s32.totalorder %s14, 2
      %s188 = scalar_select %p187, %s14, 2
      %s189 = smul.addr %s188, 48
      %s190 = smul.addr %s189, 8
      %s191 = scalar_lea.vmem %s0, %s190
      %p192 = scmp.lt.s32.totalorder %s14, 2
      %s193 = scalar_select %p192, %s14, 2
      %s194 = smul.addr %s193, 16
      %s195 = smul.addr %s194, 8
      %s196 = scalar_lea.vmem %s1, %s195
      %p197 = scmp.lt.s32.totalorder %s14, 2
      %s198 = scalar_select %p197, %s14, 2
      %s199 = scalar_lea.vmem %s2, %s198
      %p200 = scmp.lt.s32.totalorder %s14, 2
      %s201 = scalar_select %p200, %s14, 2
      %s202 = smul.addr %s201, 48
      %s203 = smul.addr %s202, 8
      %s204 = scalar_lea.vmem %s3, %s203
      %v205 = vld [vmem:[%s191] sm:$0xff]
      %v206 = vld [vmem:[%s191 + $0x8] sm:$0xff]
      %v207 = vld [vmem:[%s191 + $0x10] sm:$0xff]
      %v208 = vld [vmem:[%s191 + $0x18] sm:$0xff]
      %v209 = vld [vmem:[%s191 + $0x20] sm:$0xff]
      %v210 = vld [vmem:[%s191 + $0x28] sm:$0xff]
      %v211 = vld [vmem:[%s191 + $0x30] sm:$0xff]
      %v212 = vld [vmem:[%s191 + $0x38] sm:$0xff]
      %v213 = vld [vmem:[%s191 + $0x40] sm:$0xff]
      %v214 = vld [vmem:[%s191 + $0x48] sm:$0xff]
      %v215 = vld [vmem:[%s191 + $0x50] sm:$0xff]
      %v216 = vld [vmem:[%s191 + $0x58] sm:$0xff]
      %v217 = vld [vmem:[%s191 + $0x60] sm:$0xff]
      %v218 = vld [vmem:[%s191 + $0x68] sm:$0xff]
      %v219 = vld [vmem:[%s191 + $0x70] sm:$0xff]
      %v220 = vld [vmem:[%s191 + $0x78] sm:$0xff]
      %v221 = vld [vmem:[%s191 + $0x80] sm:$0xff]
      %v222 = vld [vmem:[%s191 + $0x88] sm:$0xff]
      %v223 = vld [vmem:[%s191 + $0x90] sm:$0xff]
      %v224 = vld [vmem:[%s191 + $0x98] sm:$0xff]
      %v225 = vld [vmem:[%s191 + $0xa0] sm:$0xff]
      %v226 = vld [vmem:[%s191 + $0xa8] sm:$0xff]
      %v227 = vld [vmem:[%s191 + $0xb0] sm:$0xff]
      %v228 = vld [vmem:[%s191 + $0xb8] sm:$0xff]
      %v229 = vld [vmem:[%s191 + $0xc0] sm:$0xff]
      %v230 = vld [vmem:[%s191 + $0xc8] sm:$0xff]
      %v231 = vld [vmem:[%s191 + $0xd0] sm:$0xff]
      %v232 = vld [vmem:[%s191 + $0xd8] sm:$0xff]
      %v233 = vld [vmem:[%s191 + $0xe0] sm:$0xff]
      %v234 = vld [vmem:[%s191 + $0xe8] sm:$0xff]
      %v235 = vld [vmem:[%s191 + $0xf0] sm:$0xff]
      %v236 = vld [vmem:[%s191 + $0xf8] sm:$0xff]
      %v237 = vld [vmem:[%s191 + $0x100] sm:$0xff]
      %v238 = vld [vmem:[%s191 + $0x108] sm:$0xff]
      %v239 = vld [vmem:[%s191 + $0x110] sm:$0xff]
      %v240 = vld [vmem:[%s191 + $0x118] sm:$0xff]
      %v241 = vld [vmem:[%s191 + $0x120] sm:$0xff]
      %v242 = vld [vmem:[%s191 + $0x128] sm:$0xff]
      %v243 = vld [vmem:[%s191 + $0x130] sm:$0xff]
      %v244 = vld [vmem:[%s191 + $0x138] sm:$0xff]
      %v245 = vld [vmem:[%s191 + $0x140] sm:$0xff]
      %v246 = vld [vmem:[%s191 + $0x148] sm:$0xff]
      %v247 = vld [vmem:[%s191 + $0x150] sm:$0xff]
      %v248 = vld [vmem:[%s191 + $0x158] sm:$0xff]
      %v249 = vld [vmem:[%s191 + $0x160] sm:$0xff]
      %v250 = vld [vmem:[%s191 + $0x168] sm:$0xff]
      %v251 = vld [vmem:[%s191 + $0x170] sm:$0xff]
      %v252 = vld [vmem:[%s191 + $0x178] sm:$0xff]
      %v253 = vld [vmem:[%s196] sm:$0xff]
      %v254 = vld [vmem:[%s196 + $0x8] sm:$0xff]
      %v255 = vld [vmem:[%s196 + $0x10] sm:$0xff]
      %v256 = vld [vmem:[%s196 + $0x18] sm:$0xff]
      %v257 = vld [vmem:[%s196 + $0x20] sm:$0xff]
      %v258 = vld [vmem:[%s196 + $0x28] sm:$0xff]
      %v259 = vld [vmem:[%s196 + $0x30] sm:$0xff]
      %v260 = vld [vmem:[%s196 + $0x38] sm:$0xff]
      %v261 = vld [vmem:[%s196 + $0x40] sm:$0xff]
      %v262 = vld [vmem:[%s196 + $0x48] sm:$0xff]
      %v263 = vld [vmem:[%s196 + $0x50] sm:$0xff]
      %v264 = vld [vmem:[%s196 + $0x58] sm:$0xff]
      %v265 = vld [vmem:[%s196 + $0x60] sm:$0xff]
      %v266 = vld [vmem:[%s196 + $0x68] sm:$0xff]
      %v267 = vld [vmem:[%s196 + $0x70] sm:$0xff]
      %v268 = vld [vmem:[%s196 + $0x78] sm:$0xff]
      %v269 = vld [vmem:[%s199] sm:$0x1]
      %v271 = vlaneseq
      %v272 = vshrl.u32 %v271, 7
      %v273 = vsub.s32 0, %v272
      %v274 = vrot.slane %v269, %v273
      %276 = vmatprep.subr.mxu0 0.0
      %277 = vmatpush1.msra.mxu0 %v253
      %278 = vmatprep.subr.mxu0 0.0
      %279 = vmatpush1.msra.mxu0 %v254
      %280 = vmatprep.subr.mxu0 0.0
      %281 = vmatpush1.msra.mxu0 %v255
      %282 = vmatprep.subr.mxu0 0.0
      %283 = vmatpush1.msra.mxu0 %v256
      %284 = vmatprep.subr.mxu0 0.0
      %285 = vmatpush1.msra.mxu0 %v257
      %286 = vmatprep.subr.mxu0 0.0
      %287 = vmatpush1.msra.mxu0 %v258
      %288 = vmatprep.subr.mxu0 0.0
      %289 = vmatpush1.msra.mxu0 %v259
      %290 = vmatprep.subr.mxu0 0.0
      %291 = vmatpush1.msra.mxu0 %v260
      %292 = vmatprep.subr.mxu0 0.0
      %293 = vmatpush1.msra.mxu0 %v261
      %294 = vmatprep.subr.mxu0 0.0
      %295 = vmatpush1.msra.mxu0 %v262
      %296 = vmatprep.subr.mxu0 0.0
      %297 = vmatpush1.msra.mxu0 %v263
      %298 = vmatprep.subr.mxu0 0.0
      %299 = vmatpush1.msra.mxu0 %v264
      %300 = vmatprep.subr.mxu0 0.0
      %301 = vmatpush1.msra.mxu0 %v265
      %302 = vmatprep.subr.mxu0 0.0
      %303 = vmatpush1.msra.mxu0 %v266
      %304 = vmatprep.subr.mxu0 0.0
      %305 = vmatpush1.msra.mxu0 %v267
      %306 = vmatprep.subr.mxu0 0.0
      %307 = vmatpush1.msra.mxu0 %v268
      %308 = vmatprep.subr.mxu0 0.0
      %309 = vmatpush1.msra.mxu0 0.0
      %310 = vmatprep.subr.mxu0 0.0
      %311 = vmatpush1.msra.mxu0 0.0
      %312 = vmatprep.subr.mxu0 0.0
      %313 = vmatpush1.msra.mxu0 0.0
      %314 = vmatprep.subr.mxu0 0.0
      %315 = vmatpush1.msra.mxu0 0.0
      %316 = vmatprep.subr.mxu0 0.0
      %317 = vmatpush1.msra.mxu0 0.0
      %318 = vmatprep.subr.mxu0 0.0
      %319 = vmatpush1.msra.mxu0 0.0
      %320 = vmatprep.subr.mxu0 0.0
      %321 = vmatpush1.msra.mxu0 0.0
      %322 = vmatprep.subr.mxu0 0.0
      %323 = vmatpush1.msra.mxu0 0.0
      %324 = vmatprep.subr.mxu0 0.0
      %325 = vmatpush1.msra.mxu0 0.0
      %326 = vmatprep.subr.mxu0 0.0
      %327 = vmatpush1.msra.mxu0 0.0
      %328 = vmatprep.subr.mxu0 0.0
      %329 = vmatpush1.msra.mxu0 0.0
      %330 = vmatprep.subr.mxu0 0.0
      %331 = vmatpush1.msra.mxu0 0.0
      %332 = vmatprep.subr.mxu0 0.0
      %333 = vmatpush1.msra.mxu0 0.0
      %334 = vmatprep.subr.mxu0 0.0
      %335 = vmatpush1.msra.mxu0 0.0
      %336 = vmatprep.subr.mxu0 0.0
      %337 = vmatpush1.msra.mxu0 0.0
      %338 = vmatprep.subr.mxu0 0.0
      %339 = vmatpush1.msra.mxu0 0.0
      %340 = vmatprep.mubr.f32.mxu0 0.0
      %341 = vmatmul.mubr.f32.gmra.mrb[0].mxu0 %v205
      %v342 = vpop.f32.mrb[0].mxu0
      %v343 = vadd.f32 %v274, %v342
      %v344 = vpop.f32.mrb[0].mxu0
      %345 = vmatprep.mubr.f32.mxu0 0.0
      %346 = vmatmul.mubr.f32.gmra.mrb[0].mxu0 %v206
      %v347 = vpop.f32.mrb[0].mxu0
      %v348 = vadd.f32 %v274, %v347
      %v349 = vpop.f32.mrb[0].mxu0
      %350 = vmatprep.mubr.f32.mxu0 0.0
      %351 = vmatmul.mubr.f32.gmra.mrb[0].mxu0 %v207
      %v352 = vpop.f32.mrb[0].mxu0
      %v353 = vadd.f32 %v274, %v352
      %v354 = vpop.f32.mrb[0].mxu0
      %355 = vmatprep.mubr.f32.mxu0 0.0
      %356 = vmatmul.mubr.f32.gmra.mrb[0].mxu0 %v208
      %v357 = vpop.f32.mrb[0].mxu0
      %v358 = vadd.f32 %v274, %v357
      %v359 = vpop.f32.mrb[0].mxu0
      %360 = vmatprep.mubr.f32.mxu0 0.0
      %361 = vmatmul.mubr.f32.gmra.mrb[0].mxu0 %v209
      %v362 = vpop.f32.mrb[0].mxu0
      %v363 = vadd.f32 %v274, %v362
      %v364 = vpop.f32.mrb[0].mxu0
      %365 = vmatprep.mubr.f32.mxu0 0.0
      %366 = vmatmul.mubr.f32.gmra.mrb[0].mxu0 %v210
      %v367 = vpop.f32.mrb[0].mxu0
      %v368 = vadd.f32 %v274, %v367
      %v369 = vpop.f32.mrb[0].mxu0
      %370 = vmatprep.mubr.f32.mxu0 0.0
      %371 = vmatmul.mubr.f32.gmra.mrb[0].mxu0 %v211
      %v372 = vpop.f32.mrb[0].mxu0
      %v373 = vadd.f32 %v274, %v372
      %v374 = vpop.f32.mrb[0].mxu0
      %375 = vmatprep.mubr.f32.mxu0 0.0
      %376 = vmatmul.mubr.f32.gmra.mrb[0].mxu0 %v212
      %v377 = vpop.f32.mrb[0].mxu0
      %v378 = vadd.f32 %v274, %v377
      %v379 = vpop.f32.mrb[0].mxu0
      %380 = vmatprep.mubr.f32.mxu0 0.0
      %381 = vmatmul.mubr.f32.gmra.mrb[0].mxu0 %v213
      %v382 = vpop.f32.mrb[0].mxu0
      %v383 = vadd.f32 %v274, %v382
      %v384 = vpop.f32.mrb[0].mxu0
      %385 = vmatprep.mubr.f32.mxu0 0.0
      %386 = vmatmul.mubr.f32.gmra.mrb[0].mxu0 %v214
      %v387 = vpop.f32.mrb[0].mxu0
      %v388 = vadd.f32 %v274, %v387
      %v389 = vpop.f32.mrb[0].mxu0
      %390 = vmatprep.mubr.f32.mxu0 0.0
      %391 = vmatmul.mubr.f32.gmra.mrb[0].mxu0 %v215
      %v392 = vpop.f32.mrb[0].mxu0
      %v393 = vadd.f32 %v274, %v392
      %v394 = vpop.f32.mrb[0].mxu0
      %395 = vmatprep.mubr.f32.mxu0 0.0
      %396 = vmatmul.mubr.f32.gmra.mrb[0].mxu0 %v216
      %v397 = vpop.f32.mrb[0].mxu0
      %v398 = vadd.f32 %v274, %v397
      %v399 = vpop.f32.mrb[0].mxu0
      %400 = vmatprep.mubr.f32.mxu0 0.0
      %401 = vmatmul.mubr.f32.gmra.mrb[0].mxu0 %v217
      %v402 = vpop.f32.mrb[0].mxu0
      %v403 = vadd.f32 %v274, %v402
      %v404 = vpop.f32.mrb[0].mxu0
      %405 = vmatprep.mubr.f32.mxu0 0.0
      %406 = vmatmul.mubr.f32.gmra.mrb[0].mxu0 %v218
      %v407 = vpop.f32.mrb[0].mxu0
      %v408 = vadd.f32 %v274, %v407
      %v409 = vpop.f32.mrb[0].mxu0
      %410 = vmatprep.mubr.f32.mxu0 0.0
      %411 = vmatmul.mubr.f32.gmra.mrb[0].mxu0 %v219
      %v412 = vpop.f32.mrb[0].mxu0
      %v413 = vadd.f32 %v274, %v412
      %v414 = vpop.f32.mrb[0].mxu0
      %415 = vmatprep.mubr.f32.mxu0 0.0
      %416 = vmatmul.mubr.f32.gmra.mrb[0].mxu0 %v220
      %v417 = vpop.f32.mrb[0].mxu0
      %v418 = vadd.f32 %v274, %v417
      %v419 = vpop.f32.mrb[0].mxu0
      %420 = vmatprep.mubr.f32.mxu0 0.0
      %421 = vmatmul.mubr.f32.gmra.mrb[0].mxu0 %v221
      %v422 = vpop.f32.mrb[0].mxu0
      %v423 = vadd.f32 %v274, %v422
      %v424 = vpop.f32.mrb[0].mxu0
      %425 = vmatprep.mubr.f32.mxu0 0.0
      %426 = vmatmul.mubr.f32.gmra.mrb[0].mxu0 %v222
      %v427 = vpop.f32.mrb[0].mxu0
      %v428 = vadd.f32 %v274, %v427
      %v429 = vpop.f32.mrb[0].mxu0
      %430 = vmatprep.mubr.f32.mxu0 0.0
      %431 = vmatmul.mubr.f32.gmra.mrb[0].mxu0 %v223
      %v432 = vpop.f32.mrb[0].mxu0
      %v433 = vadd.f32 %v274, %v432
      %v434 = vpop.f32.mrb[0].mxu0
      %435 = vmatprep.mubr.f32.mxu0 0.0
      %436 = vmatmul.mubr.f32.gmra.mrb[0].mxu0 %v224
      %v437 = vpop.f32.mrb[0].mxu0
      %v438 = vadd.f32 %v274, %v437
      %v439 = vpop.f32.mrb[0].mxu0
      %440 = vmatprep.mubr.f32.mxu0 0.0
      %441 = vmatmul.mubr.f32.gmra.mrb[0].mxu0 %v225
      %v442 = vpop.f32.mrb[0].mxu0
      %v443 = vadd.f32 %v274, %v442
      %v444 = vpop.f32.mrb[0].mxu0
      %445 = vmatprep.mubr.f32.mxu0 0.0
      %446 = vmatmul.mubr.f32.gmra.mrb[0].mxu0 %v226
      %v447 = vpop.f32.mrb[0].mxu0
      %v448 = vadd.f32 %v274, %v447
      %v449 = vpop.f32.mrb[0].mxu0
      %450 = vmatprep.mubr.f32.mxu0 0.0
      %451 = vmatmul.mubr.f32.gmra.mrb[0].mxu0 %v227
      %v452 = vpop.f32.mrb[0].mxu0
      %v453 = vadd.f32 %v274, %v452
      %v454 = vpop.f32.mrb[0].mxu0
      %455 = vmatprep.mubr.f32.mxu0 0.0
      %456 = vmatmul.mubr.f32.gmra.mrb[0].mxu0 %v228
      %v457 = vpop.f32.mrb[0].mxu0
      %v458 = vadd.f32 %v274, %v457
      %v459 = vpop.f32.mrb[0].mxu0
      %460 = vmatprep.mubr.f32.mxu0 0.0
      %461 = vmatmul.mubr.f32.gmra.mrb[0].mxu0 %v229
      %v462 = vpop.f32.mrb[0].mxu0
      %v463 = vadd.f32 %v274, %v462
      %v464 = vpop.f32.mrb[0].mxu0
      %465 = vmatprep.mubr.f32.mxu0 0.0
      %466 = vmatmul.mubr.f32.gmra.mrb[0].mxu0 %v230
      %v467 = vpop.f32.mrb[0].mxu0
      %v468 = vadd.f32 %v274, %v467
      %v469 = vpop.f32.mrb[0].mxu0
      %470 = vmatprep.mubr.f32.mxu0 0.0
      %471 = vmatmul.mubr.f32.gmra.mrb[0].mxu0 %v231
      %v472 = vpop.f32.mrb[0].mxu0
      %v473 = vadd.f32 %v274, %v472
      %v474 = vpop.f32.mrb[0].mxu0
      %475 = vmatprep.mubr.f32.mxu0 0.0
      %476 = vmatmul.mubr.f32.gmra.mrb[0].mxu0 %v232
      %v477 = vpop.f32.mrb[0].mxu0
      %v478 = vadd.f32 %v274, %v477
      %v479 = vpop.f32.mrb[0].mxu0
      %480 = vmatprep.mubr.f32.mxu0 0.0
      %481 = vmatmul.mubr.f32.gmra.mrb[0].mxu0 %v233
      %v482 = vpop.f32.mrb[0].mxu0
      %v483 = vadd.f32 %v274, %v482
      %v484 = vpop.f32.mrb[0].mxu0
      %485 = vmatprep.mubr.f32.mxu0 0.0
      %486 = vmatmul.mubr.f32.gmra.mrb[0].mxu0 %v234
      %v487 = vpop.f32.mrb[0].mxu0
      %v488 = vadd.f32 %v274, %v487
      %v489 = vpop.f32.mrb[0].mxu0
      %490 = vmatprep.mubr.f32.mxu0 0.0
      %491 = vmatmul.mubr.f32.gmra.mrb[0].mxu0 %v235
      %v492 = vpop.f32.mrb[0].mxu0
      %v493 = vadd.f32 %v274, %v492
      %v494 = vpop.f32.mrb[0].mxu0
      %495 = vmatprep.mubr.f32.mxu0 0.0
      %496 = vmatmul.mubr.f32.gmra.mrb[0].mxu0 %v236
      %v497 = vpop.f32.mrb[0].mxu0
      %v498 = vadd.f32 %v274, %v497
      %v499 = vpop.f32.mrb[0].mxu0
      %500 = vmatprep.mubr.f32.mxu0 0.0
      %501 = vmatmul.mubr.f32.gmra.mrb[0].mxu0 %v237
      %v502 = vpop.f32.mrb[0].mxu0
      %v503 = vadd.f32 %v274, %v502
      %v504 = vpop.f32.mrb[0].mxu0
      %505 = vmatprep.mubr.f32.mxu0 0.0
      %506 = vmatmul.mubr.f32.gmra.mrb[0].mxu0 %v238
      %v507 = vpop.f32.mrb[0].mxu0
      %v508 = vadd.f32 %v274, %v507
      %v509 = vpop.f32.mrb[0].mxu0
      %510 = vmatprep.mubr.f32.mxu0 0.0
      %511 = vmatmul.mubr.f32.gmra.mrb[0].mxu0 %v239
      %v512 = vpop.f32.mrb[0].mxu0
      %v513 = vadd.f32 %v274, %v512
      %v514 = vpop.f32.mrb[0].mxu0
      %515 = vmatprep.mubr.f32.mxu0 0.0
      %516 = vmatmul.mubr.f32.gmra.mrb[0].mxu0 %v240
      %v517 = vpop.f32.mrb[0].mxu0
      %v518 = vadd.f32 %v274, %v517
      %v519 = vpop.f32.mrb[0].mxu0
      %520 = vmatprep.mubr.f32.mxu0 0.0
      %521 = vmatmul.mubr.f32.gmra.mrb[0].mxu0 %v241
      %v522 = vpop.f32.mrb[0].mxu0
      %v523 = vadd.f32 %v274, %v522
      %v524 = vpop.f32.mrb[0].mxu0
      %525 = vmatprep.mubr.f32.mxu0 0.0
      %526 = vmatmul.mubr.f32.gmra.mrb[0].mxu0 %v242
      %v527 = vpop.f32.mrb[0].mxu0
      %v528 = vadd.f32 %v274, %v527
      %v529 = vpop.f32.mrb[0].mxu0
      %530 = vmatprep.mubr.f32.mxu0 0.0
      %531 = vmatmul.mubr.f32.gmra.mrb[0].mxu0 %v243
      %v532 = vpop.f32.mrb[0].mxu0
      %v533 = vadd.f32 %v274, %v532
      %v534 = vpop.f32.mrb[0].mxu0
      %535 = vmatprep.mubr.f32.mxu0 0.0
      %536 = vmatmul.mubr.f32.gmra.mrb[0].mxu0 %v244
      %v537 = vpop.f32.mrb[0].mxu0
      %v538 = vadd.f32 %v274, %v537
      %v539 = vpop.f32.mrb[0].mxu0
      %540 = vmatprep.mubr.f32.mxu0 0.0
      %541 = vmatmul.mubr.f32.gmra.mrb[0].mxu0 %v245
      %v542 = vpop.f32.mrb[0].mxu0
      %v543 = vadd.f32 %v274, %v542
      %v544 = vpop.f32.mrb[0].mxu0
      %545 = vmatprep.mubr.f32.mxu0 0.0
      %546 = vmatmul.mubr.f32.gmra.mrb[0].mxu0 %v246
      %v547 = vpop.f32.mrb[0].mxu0
      %v548 = vadd.f32 %v274, %v547
      %v549 = vpop.f32.mrb[0].mxu0
      %550 = vmatprep.mubr.f32.mxu0 0.0
      %551 = vmatmul.mubr.f32.gmra.mrb[0].mxu0 %v247
      %v552 = vpop.f32.mrb[0].mxu0
      %v553 = vadd.f32 %v274, %v552
      %v554 = vpop.f32.mrb[0].mxu0
      %555 = vmatprep.mubr.f32.mxu0 0.0
      %556 = vmatmul.mubr.f32.gmra.mrb[0].mxu0 %v248
      %v557 = vpop.f32.mrb[0].mxu0
      %v558 = vadd.f32 %v274, %v557
      %v559 = vpop.f32.mrb[0].mxu0
      %560 = vmatprep.mubr.f32.mxu0 0.0
      %561 = vmatmul.mubr.f32.gmra.mrb[0].mxu0 %v249
      %v562 = vpop.f32.mrb[0].mxu0
      %v563 = vadd.f32 %v274, %v562
      %v564 = vpop.f32.mrb[0].mxu0
      %565 = vmatprep.mubr.f32.mxu0 0.0
      %566 = vmatmul.mubr.f32.gmra.mrb[0].mxu0 %v250
      %v567 = vpop.f32.mrb[0].mxu0
      %v568 = vadd.f32 %v274, %v567
      %v569 = vpop.f32.mrb[0].mxu0
      %570 = vmatprep.mubr.f32.mxu0 0.0
      %571 = vmatmul.mubr.f32.gmra.mrb[0].mxu0 %v251
      %v572 = vpop.f32.mrb[0].mxu0
      %v573 = vadd.f32 %v274, %v572
      %v574 = vpop.f32.mrb[0].mxu0
      %575 = vmatprep.mubr.f32.mxu0 0.0
      %576 = vmatmul.mubr.f32.gmra.mrb[0].mxu0 %v252
      %v577 = vpop.f32.mrb[0].mxu0
      %v578 = vadd.f32 %v274, %v577
      %v579 = vpop.f32.mrb[0].mxu0
      %580 = vdwg.mxu0
      %v581 = vmax.f32 %v343, 0.0
      %v582 = vmax.f32 %v348, 0.0
      %v583 = vmax.f32 %v353, 0.0
      %v584 = vmax.f32 %v358, 0.0
      %v585 = vmax.f32 %v363, 0.0
      %v586 = vmax.f32 %v368, 0.0
      %v587 = vmax.f32 %v373, 0.0
      %v588 = vmax.f32 %v378, 0.0
      %v589 = vmax.f32 %v383, 0.0
      %v590 = vmax.f32 %v388, 0.0
      %v591 = vmax.f32 %v393, 0.0
      %v592 = vmax.f32 %v398, 0.0
      %v593 = vmax.f32 %v403, 0.0
      %v594 = vmax.f32 %v408, 0.0
      %v595 = vmax.f32 %v413, 0.0
      %v596 = vmax.f32 %v418, 0.0
      %v597 = vmax.f32 %v423, 0.0
      %v598 = vmax.f32 %v428, 0.0
      %v599 = vmax.f32 %v433, 0.0
      %v600 = vmax.f32 %v438, 0.0
      %v601 = vmax.f32 %v443, 0.0
      %v602 = vmax.f32 %v448, 0.0
      %v603 = vmax.f32 %v453, 0.0
      %v604 = vmax.f32 %v458, 0.0
      %v605 = vmax.f32 %v463, 0.0
      %v606 = vmax.f32 %v468, 0.0
      %v607 = vmax.f32 %v473, 0.0
      %v608 = vmax.f32 %v478, 0.0
      %v609 = vmax.f32 %v483, 0.0
      %v610 = vmax.f32 %v488, 0.0
      %v611 = vmax.f32 %v493, 0.0
      %v612 = vmax.f32 %v498, 0.0
      %v613 = vmax.f32 %v503, 0.0
      %v614 = vmax.f32 %v508, 0.0
      %v615 = vmax.f32 %v513, 0.0
      %v616 = vmax.f32 %v518, 0.0
      %v617 = vmax.f32 %v523, 0.0
      %v618 = vmax.f32 %v528, 0.0
      %v619 = vmax.f32 %v533, 0.0
      %v620 = vmax.f32 %v538, 0.0
      %v621 = vmax.f32 %v543, 0.0
      %v622 = vmax.f32 %v548, 0.0
      %v623 = vmax.f32 %v553, 0.0
      %v624 = vmax.f32 %v558, 0.0
      %v625 = vmax.f32 %v563, 0.0
      %v626 = vmax.f32 %v568, 0.0
      %v627 = vmax.f32 %v573, 0.0
      %v628 = vmax.f32 %v578, 0.0
      %vm629 = vcmask 261120
      %630 = vst.msk [vmem:[%s204] sm:$0xff] %vm629, %v581
      %631 = vst.msk [vmem:[%s204 + $0x8] sm:$0xff] %vm629, %v582
      %632 = vst.msk [vmem:[%s204 + $0x10] sm:$0xff] %vm629, %v583
      %633 = vst.msk [vmem:[%s204 + $0x18] sm:$0xff] %vm629, %v584
      %634 = vst.msk [vmem:[%s204 + $0x20] sm:$0xff] %vm629, %v585
      %635 = vst.msk [vmem:[%s204 + $0x28] sm:$0xff] %vm629, %v586
      %636 = vst.msk [vmem:[%s204 + $0x30] sm:$0xff] %vm629, %v587
      %637 = vst.msk [vmem:[%s204 + $0x38] sm:$0xff] %vm629, %v588
      %638 = vst.msk [vmem:[%s204 + $0x40] sm:$0xff] %vm629, %v589
      %639 = vst.msk [vmem:[%s204 + $0x48] sm:$0xff] %vm629, %v590
      %640 = vst.msk [vmem:[%s204 + $0x50] sm:$0xff] %vm629, %v591
      %641 = vst.msk [vmem:[%s204 + $0x58] sm:$0xff] %vm629, %v592
      %642 = vst.msk [vmem:[%s204 + $0x60] sm:$0xff] %vm629, %v593
      %643 = vst.msk [vmem:[%s204 + $0x68] sm:$0xff] %vm629, %v594
      %644 = vst.msk [vmem:[%s204 + $0x70] sm:$0xff] %vm629, %v595
      %645 = vst.msk [vmem:[%s204 + $0x78] sm:$0xff] %vm629, %v596
      %646 = vst.msk [vmem:[%s204 + $0x80] sm:$0xff] %vm629, %v597
      %647 = vst.msk [vmem:[%s204 + $0x88] sm:$0xff] %vm629, %v598
      %648 = vst.msk [vmem:[%s204 + $0x90] sm:$0xff] %vm629, %v599
      %649 = vst.msk [vmem:[%s204 + $0x98] sm:$0xff] %vm629, %v600
      %650 = vst.msk [vmem:[%s204 + $0xa0] sm:$0xff] %vm629, %v601
      %651 = vst.msk [vmem:[%s204 + $0xa8] sm:$0xff] %vm629, %v602
      %652 = vst.msk [vmem:[%s204 + $0xb0] sm:$0xff] %vm629, %v603
      %653 = vst.msk [vmem:[%s204 + $0xb8] sm:$0xff] %vm629, %v604
      %654 = vst.msk [vmem:[%s204 + $0xc0] sm:$0xff] %vm629, %v605
      %655 = vst.msk [vmem:[%s204 + $0xc8] sm:$0xff] %vm629, %v606
      %656 = vst.msk [vmem:[%s204 + $0xd0] sm:$0xff] %vm629, %v607
      %657 = vst.msk [vmem:[%s204 + $0xd8] sm:$0xff] %vm629, %v608
      %658 = vst.msk [vmem:[%s204 + $0xe0] sm:$0xff] %vm629, %v609
      %659 = vst.msk [vmem:[%s204 + $0xe8] sm:$0xff] %vm629, %v610
      %660 = vst.msk [vmem:[%s204 + $0xf0] sm:$0xff] %vm629, %v611
      %661 = vst.msk [vmem:[%s204 + $0xf8] sm:$0xff] %vm629, %v612
      %662 = vst.msk [vmem:[%s204 + $0x100] sm:$0xff] %vm629, %v613
      %663 = vst.msk [vmem:[%s204 + $0x108] sm:$0xff] %vm629, %v614
      %664 = vst.msk [vmem:[%s204 + $0x110] sm:$0xff] %vm629, %v615
      %665 = vst.msk [vmem:[%s204 + $0x118] sm:$0xff] %vm629, %v616
      %666 = vst.msk [vmem:[%s204 + $0x120] sm:$0xff] %vm629, %v617
      %667 = vst.msk [vmem:[%s204 + $0x128] sm:$0xff] %vm629, %v618
      %668 = vst.msk [vmem:[%s204 + $0x130] sm:$0xff] %vm629, %v619
      %669 = vst.msk [vmem:[%s204 + $0x138] sm:$0xff] %vm629, %v620
      %670 = vst.msk [vmem:[%s204 + $0x140] sm:$0xff] %vm629, %v621
      %671 = vst.msk [vmem:[%s204 + $0x148] sm:$0xff] %vm629, %v622
      %672 = vst.msk [vmem:[%s204 + $0x150] sm:$0xff] %vm629, %v623
      %673 = vst.msk [vmem:[%s204 + $0x158] sm:$0xff] %vm629, %v624
      %674 = vst.msk [vmem:[%s204 + $0x160] sm:$0xff] %vm629, %v625
      %675 = vst.msk [vmem:[%s204 + $0x168] sm:$0xff] %vm629, %v626
      %676 = vst.msk [vmem:[%s204 + $0x170] sm:$0xff] %vm629, %v627
      %677 = vst.msk [vmem:[%s204 + $0x178] sm:$0xff] %vm629, %v628
      %p678 = scmp.lt.s32.totalorder %s14, 2
      %s679 = scalar_select %p678, %s14, 2
      %s680 = smul.addr %s679, 48
      %s681 = smul.addr %s680, 8
      %s682 = scalar_lea.vmem %s3, %s681
      // Predicated region
      $region33: #{forward.8} parent=31 // pred_check
        %p683 = pneg %p110
      $region34: #{forward.8} parent=31 // pred_check_branch
        %685 = sbr.rel (%p683) target = $region36
      $region35: #{forward.8} parent=31 // pred_region
        _
      $region36: #{forward.8} parent=31 // pred_fallthru
        _
    $region32: #{forward.8} parent=5 // pred_fallthru
      _
    %p686 = scmp.le.s32.totalorder 2, %s9
    // Predicated region
    $region37: #{forward.8} parent=5 // pred_check
      %p687 = pneg %p686
    $region38: #{forward.8} parent=5 // pred_check_branch
      %689 = sbr.rel (%p687) target = $region40
    $region39: #{forward.8} parent=5 // pred_region
      %s690 = ssub.s32 %s9, 2
      // Predicated region
      $region41: #{forward.8} parent=39 // pred_check
        %p691 = pneg %p116
      $region42: #{forward.8} parent=39 // pred_check_branch
        %693 = sbr.rel (%p691) target = $region44
      $region43: #{forward.8} parent=39 // pred_region
        %p694 = scmp.lt.s32.totalorder %s15, 2
        %s695 = scalar_select %p694, %s15, 2
        %s696 = smul.addr %s695, 48
        %s697 = smul.addr %s696, 8
        %s698 = scalar_lea.vmem %s3, %s697
      $region44: #{forward.8} parent=39 // pred_fallthru
        _
    $region40: #{forward.8} parent=5 // pred_fallthru
      _
  $region6: #{forward.8} parent=0 // loop_footer
    %s13 = sadd.s32 1, %s9
  $region7: #{forward.8} parent=0 // loop_footer_branch
    %8 = sbr.rel target = $region3
  $region8: #{forward.8} parent=0 // loop_exit
    _

// kernel: forward.9
$region0: #{forward.9}
  #allocation0 [shape = 'u32[]', space=smem, size = 0x4, offset = 0x4, fixed_abs, tag = 'smem constant byte address 0x4 - core index']
  #allocation1 [shape = 'u32[144,128]{1,0:T(1,128)}', space=vmem, size = 0x12000, scoped, tag = 'internal scratch']
  %s0 = inlined_call_operand.vmem [shape: f32[3,384,896], index: 0, kind: input, shape index: {}]
  %s1 = inlined_call_operand.vmem [shape: f32[3,896,32], index: 1, kind: input, shape index: {}]
  %s2 = inlined_call_operand.vmem [shape: f32[3,1,32], index: 2, kind: input, shape index: {}]
  %s3 = inlined_call_operand.vmem [shape: f32[3,384,128], index: 3, kind: input, shape index: {}]
  %s4 = inlined_call_operand.vmem [shape: f32[3,128,32], index: 4, kind: input, shape index: {}]
  %s5 = inlined_call_operand.vmem [shape: f32[3,1,32], index: 5, kind: input, shape index: {}]
  %s6 = inlined_call_operand.vmem [shape: f32[3,384,32], index: 6, kind: output, shape index: {}]
  %s7 = sld [smem:[#allocation0]]
  $region57: #{forward.9} parent=0
    _
  %s9 = ssub.s32 1, %s7
  %s10 = scalar_select 0, %s9, %s7
  loop: start=0, step=1, limit=5
  $region2: #{forward.9} parent=0 // loop_pre_header
    _
  $region3: #{forward.9} parent=0 // loop_header
    %s12 = sphi 0, %s16
    %p13 = scmp.ge.s32.totalorder %s12, 5
    %s22 = sphi 0, %s24
    %s25 = sphi 0, %s22
    %s26 = sphi 0, %s25
    %s42 = sphi 0, %s26
    %s48 = sphi 0, %s50
    %s51 = sphi 0, %s48
    %s52 = sphi 0, %s51
    %s68 = sphi 0, %s52
    %s74 = sphi 0, %s76
    %s77 = sphi 0, %s74
    %s78 = sphi 0, %s77
    %s94 = sphi 0, %s78
    %s100 = sphi 0, %s102
    %s103 = sphi 0, %s100
    %s104 = sphi 0, %s103
    %s120 = sphi 0, %s104
    %s126 = sphi 0, %s128
    %s129 = sphi 0, %s126
    %s130 = sphi 0, %s129
    %s146 = sphi 0, %s130
    %s152 = sphi 0, %s154
    %s155 = sphi 0, %s152
    %s156 = sphi 0, %s155
    %s172 = sphi 0, %s156
    %s178 = sphi 0, %s180
    %s181 = sphi 0, %s178
    %s182 = sphi 0, %s181
    %s198 = sphi 0, %s182
  $region4: #{forward.9} parent=0 // loop_header_branch
    %15 = sbr.rel (%p13) target = $region8
  $region5: #{forward.9} parent=0 // loop_body
    %s17 = ssub.s32 %s12, 1
    %s18 = ssub.s32 %s12, 2
    %s19 = sadd.s32 %s12, 1
    %s20 = ssub.s32 %s12, %s19
    %p21 = scmp.eq.s32.totalorder %s20, 0
    %s23 = sadd.s32 %s22, 1
    %s24 = scalar_select %p21, %s22, %s23
    %p27 = pneg %p21
    %p28 = scmp.eq.s32.totalorder %s12, 2
    %p29 = por %p27, %p28
    %p30 = scmp.ne.s32.totalorder %s22, %s25
    %p31 = scmp.eq.s32.totalorder %s12, 0
    %p32 = por %p30, %p31
    %p33 = scmp.ne.s32.totalorder %s22, %s25
    %p34 = scmp.eq.s32.totalorder %s17, 2
    %p35 = por %p33, %p34
    %p36 = scmp.ne.s32.totalorder %s25, %s26
    %p37 = scmp.eq.s32.totalorder %s17, 0
    %p38 = por %p36, %p37
    %p39 = scmp.ne.s32.totalorder %s25, %s26
    %p40 = scmp.eq.s32.totalorder %s18, 2
    %p41 = por %p39, %p40
    %p43 = scmp.ne.s32.totalorder %s26, %s42
    %p44 = scmp.eq.s32.totalorder %s18, 0
    %p45 = por %p43, %p44
    %s46 = ssub.s32 %s12, %s19
    %p47 = scmp.eq.s32.totalorder %s46, 0
    %s49 = sadd.s32 %s48, 1
    %s50 = scalar_select %p47, %s48, %s49
    %p53 = pneg %p47
    %p54 = scmp.eq.s32.totalorder %s12, 2
    %p55 = por %p53, %p54
    %p56 = scmp.ne.s32.totalorder %s48, %s51
    %p57 = scmp.eq.s32.totalorder %s12, 0
    %p58 = por %p56, %p57
    %p59 = scmp.ne.s32.totalorder %s48, %s51
    %p60 = scmp.eq.s32.totalorder %s17, 2
    %p61 = por %p59, %p60
    %p62 = scmp.ne.s32.totalorder %s51, %s52
    %p63 = scmp.eq.s32.totalorder %s17, 0
    %p64 = por %p62, %p63
    %p65 = scmp.ne.s32.totalorder %s51, %s52
    %p66 = scmp.eq.s32.totalorder %s18, 2
    %p67 = por %p65, %p66
    %p69 = scmp.ne.s32.totalorder %s52, %s68
    %p70 = scmp.eq.s32.totalorder %s18, 0
    %p71 = por %p69, %p70
    %s72 = ssub.s32 %s12, %s19
    %p73 = scmp.eq.s32.totalorder %s72, 0
    %s75 = sadd.s32 %s74, 1
    %s76 = scalar_select %p73, %s74, %s75
    %p79 = pneg %p73
    %p80 = scmp.eq.s32.totalorder %s12, 2
    %p81 = por %p79, %p80
    %p82 = scmp.ne.s32.totalorder %s74, %s77
    %p83 = scmp.eq.s32.totalorder %s12, 0
    %p84 = por %p82, %p83
    %p85 = scmp.ne.s32.totalorder %s74, %s77
    %p86 = scmp.eq.s32.totalorder %s17, 2
    %p87 = por %p85, %p86
    %p88 = scmp.ne.s32.totalorder %s77, %s78
    %p89 = scmp.eq.s32.totalorder %s17, 0
    %p90 = por %p88, %p89
    %p91 = scmp.ne.s32.totalorder %s77, %s78
    %p92 = scmp.eq.s32.totalorder %s18, 2
    %p93 = por %p91, %p92
    %p95 = scmp.ne.s32.totalorder %s78, %s94
    %p96 = scmp.eq.s32.totalorder %s18, 0
    %p97 = por %p95, %p96
    %s98 = ssub.s32 %s12, %s19
    %p99 = scmp.eq.s32.totalorder %s98, 0
    %s101 = sadd.s32 %s100, 1
    %s102 = scalar_select %p99, %s100, %s101
    %p105 = pneg %p99
    %p106 = scmp.eq.s32.totalorder %s12, 2
    %p107 = por %p105, %p106
    %p108 = scmp.ne.s32.totalorder %s100, %s103
    %p109 = scmp.eq.s32.totalorder %s12, 0
    %p110 = por %p108, %p109
    %p111 = scmp.ne.s32.totalorder %s100, %s103
    %p112 = scmp.eq.s32.totalorder %s17, 2
    %p113 = por %p111, %p112
    %p114 = scmp.ne.s32.totalorder %s103, %s104
    %p115 = scmp.eq.s32.totalorder %s17, 0
    %p116 = por %p114, %p115
    %p117 = scmp.ne.s32.totalorder %s103, %s104
    %p118 = scmp.eq.s32.totalorder %s18, 2
    %p119 = por %p117, %p118
    %p121 = scmp.ne.s32.totalorder %s104, %s120
    %p122 = scmp.eq.s32.totalorder %s18, 0
    %p123 = por %p121, %p122
    %s124 = ssub.s32 %s12, %s19
    %p125 = scmp.eq.s32.totalorder %s124, 0
    %s127 = sadd.s32 %s126, 1
    %s128 = scalar_select %p125, %s126, %s127
    %p131 = pneg %p125
    %p132 = scmp.eq.s32.totalorder %s12, 2
    %p133 = por %p131, %p132
    %p134 = scmp.ne.s32.totalorder %s126, %s129
    %p135 = scmp.eq.s32.totalorder %s12, 0
    %p136 = por %p134, %p135
    %p137 = scmp.ne.s32.totalorder %s126, %s129
    %p138 = scmp.eq.s32.totalorder %s17, 2
    %p139 = por %p137, %p138
    %p140 = scmp.ne.s32.totalorder %s129, %s130
    %p141 = scmp.eq.s32.totalorder %s17, 0
    %p142 = por %p140, %p141
    %p143 = scmp.ne.s32.totalorder %s129, %s130
    %p144 = scmp.eq.s32.totalorder %s18, 2
    %p145 = por %p143, %p144
    %p147 = scmp.ne.s32.totalorder %s130, %s146
    %p148 = scmp.eq.s32.totalorder %s18, 0
    %p149 = por %p147, %p148
    %s150 = ssub.s32 %s12, %s19
    %p151 = scmp.eq.s32.totalorder %s150, 0
    %s153 = sadd.s32 %s152, 1
    %s154 = scalar_select %p151, %s152, %s153
    %p157 = pneg %p151
    %p158 = scmp.eq.s32.totalorder %s12, 2
    %p159 = por %p157, %p158
    %p160 = scmp.ne.s32.totalorder %s152, %s155
    %p161 = scmp.eq.s32.totalorder %s12, 0
    %p162 = por %p160, %p161
    %p163 = scmp.ne.s32.totalorder %s152, %s155
    %p164 = scmp.eq.s32.totalorder %s17, 2
    %p165 = por %p163, %p164
    %p166 = scmp.ne.s32.totalorder %s155, %s156
    %p167 = scmp.eq.s32.totalorder %s17, 0
    %p168 = por %p166, %p167
    %p169 = scmp.ne.s32.totalorder %s155, %s156
    %p170 = scmp.eq.s32.totalorder %s18, 2
    %p171 = por %p169, %p170
    %p173 = scmp.ne.s32.totalorder %s156, %s172
    %p174 = scmp.eq.s32.totalorder %s18, 0
    %p175 = por %p173, %p174
    %s176 = ssub.s32 %s12, %s19
    %p177 = scmp.eq.s32.totalorder %s176, 0
    %s179 = sadd.s32 %s178, 1
    %s180 = scalar_select %p177, %s178, %s179
    %p183 = pneg %p177
    %p184 = scmp.eq.s32.totalorder %s12, 2
    %p185 = por %p183, %p184
    %p186 = scmp.ne.s32.totalorder %s178, %s181
    %p187 = scmp.eq.s32.totalorder %s12, 0
    %p188 = por %p186, %p187
    %p189 = scmp.ne.s32.totalorder %s178, %s181
    %p190 = scmp.eq.s32.totalorder %s17, 2
    %p191 = por %p189, %p190
    %p192 = scmp.ne.s32.totalorder %s181, %s182
    %p193 = scmp.eq.s32.totalorder %s17, 0
    %p194 = por %p192, %p193
    %p195 = scmp.ne.s32.totalorder %s181, %s182
    %p196 = scmp.eq.s32.totalorder %s18, 2
    %p197 = por %p195, %p196
    %p199 = scmp.ne.s32.totalorder %s182, %s198
    %p200 = scmp.eq.s32.totalorder %s18, 0
    %p201 = por %p199, %p200
    %p202 = scmp.le.s32.totalorder 1, %s12
    %p203 = scmp.lt.s32.totalorder %s12, 4
    %p204 = pnand %p202, %p203
    %p205 = pneg %p204
    // Predicated region
    $region9: #{forward.9} parent=5 // pred_check
      _
    $region10: #{forward.9} parent=5 // pred_check_branch
      %207 = sbr.rel (%p204) target = $region12
    $region11: #{forward.9} parent=5 // pred_region
      %s208 = ssub.s32 %s12, 1
    $region12: #{forward.9} parent=5 // pred_fallthru
      _
    %p209 = scmp.lt.s32.totalorder %s12, 3
    // Predicated region
    $region13: #{forward.9} parent=5 // pred_check
      %p210 = pneg %p209
    $region14: #{forward.9} parent=5 // pred_check_branch
      %212 = sbr.rel (%p210) target = $region16
    $region15: #{forward.9} parent=5 // pred_region
      // Predicated region
      $region17: #{forward.9} parent=15 // pred_check
        %p213 = pneg %p32
      $region18: #{forward.9} parent=15 // pred_check_branch
        %215 = sbr.rel (%p213) target = $region20
      $region19: #{forward.9} parent=15 // pred_region
        %p216 = scmp.lt.s32.totalorder %s12, 2
        %s217 = scalar_select %p216, %s12, 2
        %s218 = smul.addr %s217, 336
        %s219 = smul.addr %s218, 8
        %s220 = scalar_lea.vmem %s0, %s219
      $region20: #{forward.9} parent=15 // pred_fallthru
        _
      // Predicated region
      $region21: #{forward.9} parent=15 // pred_check
        %p221 = pneg %p58
      $region22: #{forward.9} parent=15 // pred_check_branch
        %223 = sbr.rel (%p221) target = $region24
      $region23: #{forward.9} parent=15 // pred_region
        %p224 = scmp.lt.s32.totalorder %s12, 2
        %s225 = scalar_select %p224, %s12, 2
        %s226 = smul.addr %s225, 112
        %s227 = smul.addr %s226, 8
        %s228 = scalar_lea.vmem %s1, %s227
      $region24: #{forward.9} parent=15 // pred_fallthru
        _
      // Predicated region
      $region25: #{forward.9} parent=15 // pred_check
        %p229 = pneg %p84
      $region26: #{forward.9} parent=15 // pred_check_branch
        %231 = sbr.rel (%p229) target = $region28
      $region27: #{forward.9} parent=15 // pred_region
        %p232 = scmp.lt.s32.totalorder %s12, 2
        %s233 = scalar_select %p232, %s12, 2
        %s234 = scalar_lea.vmem %s2, %s233
      $region28: #{forward.9} parent=15 // pred_fallthru
        _
      // Predicated region
      $region29: #{forward.9} parent=15 // pred_check
        %p235 = pneg %p110
      $region30: #{forward.9} parent=15 // pred_check_branch
        %237 = sbr.rel (%p235) target = $region32
      $region31: #{forward.9} parent=15 // pred_region
        %p238 = scmp.lt.s32.totalorder %s12, 2
        %s239 = scalar_select %p238, %s12, 2
        %s240 = smul.addr %s239, 48
        %s241 = smul.addr %s240, 8
        %s242 = scalar_lea.vmem %s3, %s241
      $region32: #{forward.9} parent=15 // pred_fallthru
        _
      // Predicated region
      $region33: #{forward.9} parent=15 // pred_check
        %p243 = pneg %p136
      $region34: #{forward.9} parent=15 // pred_check_branch
        %245 = sbr.rel (%p243) target = $region36
      $region35: #{forward.9} parent=15 // pred_region
        %p246 = scmp.lt.s32.totalorder %s12, 2
        %s247 = scalar_select %p246, %s12, 2
        %s248 = smul.addr %s247, 16
        %s249 = smul.addr %s248, 8
        %s250 = scalar_lea.vmem %s4, %s249
      $region36: #{forward.9} parent=15 // pred_fallthru
        _
      // Predicated region
      $region37: #{forward.9} parent=15 // pred_check
        %p251 = pneg %p162
      $region38: #{forward.9} parent=15 // pred_check_branch
        %253 = sbr.rel (%p251) target = $region40
      $region39: #{forward.9} parent=15 // pred_region
        %p254 = scmp.lt.s32.totalorder %s12, 2
        %s255 = scalar_select %p254, %s12, 2
        %s256 = scalar_lea.vmem %s5, %s255
      $region40: #{forward.9} parent=15 // pred_fallthru
        _
    $region16: #{forward.9} parent=5 // pred_fallthru
      _
    %p257 = scmp.le.s32.totalorder 1, %s12
    %p258 = scmp.lt.s32.totalorder %s12, 4
    %p259 = pnand %p257, %p258
    %p260 = pneg %p259
    // Predicated region
    $region41: #{forward.9} parent=5 // pred_check
      _
    $region42: #{forward.9} parent=5 // pred_check_branch
      %262 = sbr.rel (%p259) target = $region44
    $region43: #{forward.9} parent=5 // pred_region
      %s263 = ssub.s32 %s12, 1
      %p264 = scmp.lt.s32.totalorder %s17, 2
      %s265 = scalar_select %p264, %s17, 2
      %s266 = smul.addr %s265, 336
      %s267 = smul.addr %s266, 8
      %s268 = scalar_lea.vmem %s0, %s267
      %p269 = pneg %p38
      %p270 = pneg %p35
      %p271 = scmp.lt.s32.totalorder %s17, 2
      %s272 = scalar_select %p271, %s17, 2
      %s273 = smul.addr %s272, 112
      %s274 = smul.addr %s273, 8
      %s275 = scalar_lea.vmem %s1, %s274
      %p276 = pneg %p64
      %p277 = pneg %p61
      %p278 = scmp.lt.s32.totalorder %s17, 2
      %s279 = scalar_select %p278, %s17, 2
      %s280 = scalar_lea.vmem %s2, %s279
      %p281 = pneg %p90
      %p282 = pneg %p87
      %p283 = scmp.lt.s32.totalorder %s17, 2
      %s284 = scalar_select %p283, %s17, 2
      %s285 = smul.addr %s284, 48
      %s286 = smul.addr %s285, 8
      %s287 = scalar_lea.vmem %s3, %s286
      %p288 = pneg %p116
      %p289 = pneg %p113
      %p290 = scmp.lt.s32.totalorder %s17, 2
      %s291 = scalar_select %p290, %s17, 2
      %s292 = smul.addr %s291, 16
      %s293 = smul.addr %s292, 8
      %s294 = scalar_lea.vmem %s4, %s293
      %p295 = pneg %p142
      %p296 = pneg %p139
      %p297 = scmp.lt.s32.totalorder %s17, 2
      %s298 = scalar_select %p297, %s17, 2
      %s299 = scalar_lea.vmem %s5, %s298
      %p300 = pneg %p168
      %p301 = pneg %p165
      %p302 = pneg %p194
      %p303 = pneg %p191
      %p304 = scmp.lt.s32.totalorder %s17, 2
      %s305 = scalar_select %p304, %s17, 2
      %s306 = smul.addr %s305, 48
      %s307 = smul.addr %s306, 8
      %s308 = scalar_lea.vmem %s6, %s307
      %p309 = scmp.lt.s32.totalorder %s17, 2
      %s310 = scalar_select %p309, %s17, 2
      %s311 = smul.addr %s310, 336
      %s312 = smul.addr %s311, 8
      %s313 = scalar_lea.vmem %s0, %s312
      %p314 = scmp.lt.s32.totalorder %s17, 2
      %s315 = scalar_select %p314, %s17, 2
      %s316 = smul.addr %s315, 112
      %s317 = smul.addr %s316, 8
      %s318 = scalar_lea.vmem %s1, %s317
      %p319 = scmp.lt.s32.totalorder %s17, 2
      %s320 = scalar_select %p319, %s17, 2
      %s321 = scalar_lea.vmem %s2, %s320
      %p322 = scmp.lt.s32.totalorder %s17, 2
      %s323 = scalar_select %p322, %s17, 2
      %s324 = smul.addr %s323, 48
      %s325 = smul.addr %s324, 8
      %s326 = scalar_lea.vmem %s3, %s325
      %p327 = scmp.lt.s32.totalorder %s17, 2
      %s328 = scalar_select %p327, %s17, 2
      %s329 = smul.addr %s328, 16
      %s330 = smul.addr %s329, 8
      %s331 = scalar_lea.vmem %s4, %s330
      %p332 = scmp.lt.s32.totalorder %s17, 2
      %s333 = scalar_select %p332, %s17, 2
      %s334 = scalar_lea.vmem %s5, %s333
      %p335 = scmp.lt.s32.totalorder %s17, 2
      %s336 = scalar_select %p335, %s17, 2
      %s337 = smul.addr %s336, 48
      %s338 = smul.addr %s337, 8
      %s339 = scalar_lea.vmem %s6, %s338
      %v340 = vld [vmem:[%s313] sm:$0xff]
      %v341 = vld [vmem:[%s313 + $0x8] sm:$0xff]
      %v342 = vld [vmem:[%s313 + $0x10] sm:$0xff]
      %v343 = vld [vmem:[%s313 + $0x18] sm:$0xff]
      %v344 = vld [vmem:[%s313 + $0x20] sm:$0xff]
      %v345 = vld [vmem:[%s313 + $0x28] sm:$0xff]
      %v346 = vld [vmem:[%s313 + $0x30] sm:$0xff]
      %v347 = vld [vmem:[%s313 + $0x38] sm:$0xff]
      %v348 = vld [vmem:[%s313 + $0x40] sm:$0xff]
      %v349 = vld [vmem:[%s313 + $0x48] sm:$0xff]
      %v350 = vld [vmem:[%s313 + $0x50] sm:$0xff]
      %v351 = vld [vmem:[%s313 + $0x58] sm:$0xff]
      %v352 = vld [vmem:[%s313 + $0x60] sm:$0xff]
      %v353 = vld [vmem:[%s313 + $0x68] sm:$0xff]
      %v354 = vld [vmem:[%s313 + $0x70] sm:$0xff]
      %v355 = vld [vmem:[%s313 + $0x78] sm:$0xff]
      %v356 = vld [vmem:[%s313 + $0x80] sm:$0xff]
      %v357 = vld [vmem:[%s313 + $0x88] sm:$0xff]
      %v358 = vld [vmem:[%s313 + $0x90] sm:$0xff]
      %v359 = vld [vmem:[%s313 + $0x98] sm:$0xff]
      %v360 = vld [vmem:[%s313 + $0xa0] sm:$0xff]
      %v361 = vld [vmem:[%s313 + $0xa8] sm:$0xff]
      %v362 = vld [vmem:[%s313 + $0xb0] sm:$0xff]
      %v363 = vld [vmem:[%s313 + $0xb8] sm:$0xff]
      %v364 = vld [vmem:[%s313 + $0xc0] sm:$0xff]
      %v365 = vld [vmem:[%s313 + $0xc8] sm:$0xff]
      %v366 = vld [vmem:[%s313 + $0xd0] sm:$0xff]
      %v367 = vld [vmem:[%s313 + $0xd8] sm:$0xff]
      %v368 = vld [vmem:[%s313 + $0xe0] sm:$0xff]
      %v369 = vld [vmem:[%s313 + $0xe8] sm:$0xff]
      %v370 = vld [vmem:[%s313 + $0xf0] sm:$0xff]
      %v371 = vld [vmem:[%s313 + $0xf8] sm:$0xff]
      %v372 = vld [vmem:[%s313 + $0x100] sm:$0xff]
      %v373 = vld [vmem:[%s313 + $0x108] sm:$0xff]
      %v374 = vld [vmem:[%s313 + $0x110] sm:$0xff]
      %v375 = vld [vmem:[%s313 + $0x118] sm:$0xff]
      %v376 = vld [vmem:[%s313 + $0x120] sm:$0xff]
      %v377 = vld [vmem:[%s313 + $0x128] sm:$0xff]
      %v378 = vld [vmem:[%s313 + $0x130] sm:$0xff]
      %v379 = vld [vmem:[%s313 + $0x138] sm:$0xff]
      %v380 = vld [vmem:[%s313 + $0x140] sm:$0xff]
      %v381 = vld [vmem:[%s313 + $0x148] sm:$0xff]
      %v382 = vld [vmem:[%s313 + $0x150] sm:$0xff]
      %v383 = vld [vmem:[%s313 + $0x158] sm:$0xff]
      %v384 = vld [vmem:[%s313 + $0x160] sm:$0xff]
      %v385 = vld [vmem:[%s313 + $0x168] sm:$0xff]
      %v386 = vld [vmem:[%s313 + $0x170] sm:$0xff]
      %v387 = vld [vmem:[%s313 + $0x178] sm:$0xff]
      %v388 = vld [vmem:[%s313 + $0x180] sm:$0xff]
      %v389 = vld [vmem:[%s313 + $0x188] sm:$0xff]
      %v390 = vld [vmem:[%s313 + $0x190] sm:$0xff]
      %v391 = vld [vmem:[%s313 + $0x198] sm:$0xff]
      %v392 = vld [vmem:[%s313 + $0x1a0] sm:$0xff]
      %v393 = vld [vmem:[%s313 + $0x1a8] sm:$0xff]
      %v394 = vld [vmem:[%s313 + $0x1b0] sm:$0xff]
      %v395 = vld [vmem:[%s313 + $0x1b8] sm:$0xff]
      %v396 = vld [vmem:[%s313 + $0x1c0] sm:$0xff]
      %v397 = vld [vmem:[%s313 + $0x1c8] sm:$0xff]
      %v398 = vld [vmem:[%s313 + $0x1d0] sm:$0xff]
      %v399 = vld [vmem:[%s313 + $0x1d8] sm:$0xff]
      %v400 = vld [vmem:[%s313 + $0x1e0] sm:$0xff]
      %v401 = vld [vmem:[%s313 + $0x1e8] sm:$0xff]
      %v402 = vld [vmem:[%s313 + $0x1f0] sm:$0xff]
      %v403 = vld [vmem:[%s313 + $0x1f8] sm:$0xff]
      %v404 = vld [vmem:[%s313 + $0x200] sm:$0xff]
      %v405 = vld [vmem:[%s313 + $0x208] sm:$0xff]
      %v406 = vld [vmem:[%s313 + $0x210] sm:$0xff]
      %v407 = vld [vmem:[%s313 + $0x218] sm:$0xff]
      %v408 = vld [vmem:[%s313 + $0x220] sm:$0xff]
      %v409 = vld [vmem:[%s313 + $0x228] sm:$0xff]
      %v410 = vld [vmem:[%s313 + $0x230] sm:$0xff]
      %v411 = vld [vmem:[%s313 + $0x238] sm:$0xff]
      %v412 = vld [vmem:[%s313 + $0x240] sm:$0xff]
      %v413 = vld [vmem:[%s313 + $0x248] sm:$0xff]
      %v414 = vld [vmem:[%s313 + $0x250] sm:$0xff]
      %v415 = vld [vmem:[%s313 + $0x258] sm:$0xff]
      %v416 = vld [vmem:[%s313 + $0x260] sm:$0xff]
      %v417 = vld [vmem:[%s313 + $0x268] sm:$0xff]
      %v418 = vld [vmem:[%s313 + $0x270] sm:$0xff]
      %v419 = vld [vmem:[%s313 + $0x278] sm:$0xff]
      %v420 = vld [vmem:[%s313 + $0x280] sm:$0xff]
      %v421 = vld [vmem:[%s313 + $0x288] sm:$0xff]
      %v422 = vld [vmem:[%s313 + $0x290] sm:$0xff]
      %v423 = vld [vmem:[%s313 + $0x298] sm:$0xff]
      %v424 = vld [vmem:[%s313 + $0x2a0] sm:$0xff]
      %v425 = vld [vmem:[%s313 + $0x2a8] sm:$0xff]
      %v426 = vld [vmem:[%s313 + $0x2b0] sm:$0xff]
      %v427 = vld [vmem:[%s313 + $0x2b8] sm:$0xff]
      %v428 = vld [vmem:[%s313 + $0x2c0] sm:$0xff]
      %v429 = vld [vmem:[%s313 + $0x2c8] sm:$0xff]
      %v430 = vld [vmem:[%s313 + $0x2d0] sm:$0xff]
      %v431 = vld [vmem:[%s313 + $0x2d8] sm:$0xff]
      %v432 = vld [vmem:[%s313 + $0x2e0] sm:$0xff]
      %v433 = vld [vmem:[%s313 + $0x2e8] sm:$0xff]
      %v434 = vld [vmem:[%s313 + $0x2f0] sm:$0xff]
      %v435 = vld [vmem:[%s313 + $0x2f8] sm:$0xff]
      %v436 = vld [vmem:[%s313 + $0x300] sm:$0xff]
      %v437 = vld [vmem:[%s313 + $0x308] sm:$0xff]
      %v438 = vld [vmem:[%s313 + $0x310] sm:$0xff]
      %v439 = vld [vmem:[%s313 + $0x318] sm:$0xff]
      %v440 = vld [vmem:[%s313 + $0x320] sm:$0xff]
      %v441 = vld [vmem:[%s313 + $0x328] sm:$0xff]
      %v442 = vld [vmem:[%s313 + $0x330] sm:$0xff]
      %v443 = vld [vmem:[%s313 + $0x338] sm:$0xff]
      %v444 = vld [vmem:[%s313 + $0x340] sm:$0xff]
      %v445 = vld [vmem:[%s313 + $0x348] sm:$0xff]
      %v446 = vld [vmem:[%s313 + $0x350] sm:$0xff]
      %v447 = vld [vmem:[%s313 + $0x358] sm:$0xff]
      %v448 = vld [vmem:[%s313 + $0x360] sm:$0xff]
      %v449 = vld [vmem:[%s313 + $0x368] sm:$0xff]
      %v450 = vld [vmem:[%s313 + $0x370] sm:$0xff]
      %v451 = vld [vmem:[%s313 + $0x378] sm:$0xff]
      %v452 = vld [vmem:[%s313 + $0x380] sm:$0xff]
      %v453 = vld [vmem:[%s313 + $0x388] sm:$0xff]
      %v454 = vld [vmem:[%s313 + $0x390] sm:$0xff]
      %v455 = vld [vmem:[%s313 + $0x398] sm:$0xff]
      %v456 = vld [vmem:[%s313 + $0x3a0] sm:$0xff]
      %v457 = vld [vmem:[%s313 + $0x3a8] sm:$0xff]
      %v458 = vld [vmem:[%s313 + $0x3b0] sm:$0xff]
      %v459 = vld [vmem:[%s313 + $0x3b8] sm:$0xff]
      %v460 = vld [vmem:[%s313 + $0x3c0] sm:$0xff]
      %v461 = vld [vmem:[%s313 + $0x3c8] sm:$0xff]
      %v462 = vld [vmem:[%s313 + $0x3d0] sm:$0xff]
      %v463 = vld [vmem:[%s313 + $0x3d8] sm:$0xff]
      %v464 = vld [vmem:[%s313 + $0x3e0] sm:$0xff]
      %v465 = vld [vmem:[%s313 + $0x3e8] sm:$0xff]
      %v466 = vld [vmem:[%s313 + $0x3f0] sm:$0xff]
      %v467 = vld [vmem:[%s313 + $0x3f8] sm:$0xff]
      %v468 = vld [vmem:[%s313 + $0x400] sm:$0xff]
      %v469 = vld [vmem:[%s313 + $0x408] sm:$0xff]
      %v470 = vld [vmem:[%s313 + $0x410] sm:$0xff]
      %v471 = vld [vmem:[%s313 + $0x418] sm:$0xff]
      %v472 = vld [vmem:[%s313 + $0x420] sm:$0xff]
      %v473 = vld [vmem:[%s313 + $0x428] sm:$0xff]
      %v474 = vld [vmem:[%s313 + $0x430] sm:$0xff]
      %v475 = vld [vmem:[%s313 + $0x438] sm:$0xff]
      %v476 = vld [vmem:[%s313 + $0x440] sm:$0xff]
      %v477 = vld [vmem:[%s313 + $0x448] sm:$0xff]
      %v478 = vld [vmem:[%s313 + $0x450] sm:$0xff]
      %v479 = vld [vmem:[%s313 + $0x458] sm:$0xff]
      %v480 = vld [vmem:[%s313 + $0x460] sm:$0xff]
      %v481 = vld [vmem:[%s313 + $0x468] sm:$0xff]
      %v482 = vld [vmem:[%s313 + $0x470] sm:$0xff]
      %v483 = vld [vmem:[%s313 + $0x478] sm:$0xff]
      %v484 = vld [vmem:[%s313 + $0x480] sm:$0xff]
      %v485 = vld [vmem:[%s313 + $0x488] sm:$0xff]
      %v486 = vld [vmem:[%s313 + $0x490] sm:$0xff]
      %v487 = vld [vmem:[%s313 + $0x498] sm:$0xff]
      %v488 = vld [vmem:[%s313 + $0x4a0] sm:$0xff]
      %v489 = vld [vmem:[%s313 + $0x4a8] sm:$0xff]
      %v490 = vld [vmem:[%s313 + $0x4b0] sm:$0xff]
      %v491 = vld [vmem:[%s313 + $0x4b8] sm:$0xff]
      %v492 = vld [vmem:[%s313 + $0x4c0] sm:$0xff]
      %v493 = vld [vmem:[%s313 + $0x4c8] sm:$0xff]
      %v494 = vld [vmem:[%s313 + $0x4d0] sm:$0xff]
      %v495 = vld [vmem:[%s313 + $0x4d8] sm:$0xff]
      %v496 = vld [vmem:[%s313 + $0x4e0] sm:$0xff]
      %v497 = vld [vmem:[%s313 + $0x4e8] sm:$0xff]
      %v498 = vld [vmem:[%s313 + $0x4f0] sm:$0xff]
      %v499 = vld [vmem:[%s313 + $0x4f8] sm:$0xff]
      %v500 = vld [vmem:[%s313 + $0x500] sm:$0xff]
      %v501 = vld [vmem:[%s313 + $0x508] sm:$0xff]
      %v502 = vld [vmem:[%s313 + $0x510] sm:$0xff]
      %v503 = vld [vmem:[%s313 + $0x518] sm:$0xff]
      %v504 = vld [vmem:[%s313 + $0x520] sm:$0xff]
      %v505 = vld [vmem:[%s313 + $0x528] sm:$0xff]
      %v506 = vld [vmem:[%s313 + $0x530] sm:$0xff]
      %v507 = vld [vmem:[%s313 + $0x538] sm:$0xff]
      %v508 = vld [vmem:[%s313 + $0x540] sm:$0xff]
      %v509 = vld [vmem:[%s313 + $0x548] sm:$0xff]
      %v510 = vld [vmem:[%s313 + $0x550] sm:$0xff]
      %v511 = vld [vmem:[%s313 + $0x558] sm:$0xff]
      %v512 = vld [vmem:[%s313 + $0x560] sm:$0xff]
      %v513 = vld [vmem:[%s313 + $0x568] sm:$0xff]
      %v514 = vld [vmem:[%s313 + $0x570] sm:$0xff]
      %v515 = vld [vmem:[%s313 + $0x578] sm:$0xff]
      %v516 = vld [vmem:[%s313 + $0x580] sm:$0xff]
      %v517 = vld [vmem:[%s313 + $0x588] sm:$0xff]
      %v518 = vld [vmem:[%s313 + $0x590] sm:$0xff]
      %v519 = vld [vmem:[%s313 + $0x598] sm:$0xff]
      %v520 = vld [vmem:[%s313 + $0x5a0] sm:$0xff]
      %v521 = vld [vmem:[%s313 + $0x5a8] sm:$0xff]
      %v522 = vld [vmem:[%s313 + $0x5b0] sm:$0xff]
      %v523 = vld [vmem:[%s313 + $0x5b8] sm:$0xff]
      %v524 = vld [vmem:[%s313 + $0x5c0] sm:$0xff]
      %v525 = vld [vmem:[%s313 + $0x5c8] sm:$0xff]
      %v526 = vld [vmem:[%s313 + $0x5d0] sm:$0xff]
      %v527 = vld [vmem:[%s313 + $0x5d8] sm:$0xff]
      %v528 = vld [vmem:[%s313 + $0x5e0] sm:$0xff]
      %v529 = vld [vmem:[%s313 + $0x5e8] sm:$0xff]
      %v530 = vld [vmem:[%s313 + $0x5f0] sm:$0xff]
      %v531 = vld [vmem:[%s313 + $0x5f8] sm:$0xff]
      %v532 = vld [vmem:[%s313 + $0x600] sm:$0xff]
      %v533 = vld [vmem:[%s313 + $0x608] sm:$0xff]
      %v534 = vld [vmem:[%s313 + $0x610] sm:$0xff]
      %v535 = vld [vmem:[%s313 + $0x618] sm:$0xff]
      %v536 = vld [vmem:[%s313 + $0x620] sm:$0xff]
      %v537 = vld [vmem:[%s313 + $0x628] sm:$0xff]
      %v538 = vld [vmem:[%s313 + $0x630] sm:$0xff]
      %v539 = vld [vmem:[%s313 + $0x638] sm:$0xff]
      %v540 = vld [vmem:[%s313 + $0x640] sm:$0xff]
      %v541 = vld [vmem:[%s313 + $0x648] sm:$0xff]
      %v542 = vld [vmem:[%s313 + $0x650] sm:$0xff]
      %v543 = vld [vmem:[%s313 + $0x658] sm:$0xff]
      %v544 = vld [vmem:[%s313 + $0x660] sm:$0xff]
      %v545 = vld [vmem:[%s313 + $0x668] sm:$0xff]
      %v546 = vld [vmem:[%s313 + $0x670] sm:$0xff]
      %v547 = vld [vmem:[%s313 + $0x678] sm:$0xff]
      %v548 = vld [vmem:[%s313 + $0x680] sm:$0xff]
      %v549 = vld [vmem:[%s313 + $0x688] sm:$0xff]
      %v550 = vld [vmem:[%s313 + $0x690] sm:$0xff]
      %v551 = vld [vmem:[%s313 + $0x698] sm:$0xff]
      %v552 = vld [vmem:[%s313 + $0x6a0] sm:$0xff]
      %v553 = vld [vmem:[%s313 + $0x6a8] sm:$0xff]
      %v554 = vld [vmem:[%s313 + $0x6b0] sm:$0xff]
      %v555 = vld [vmem:[%s313 + $0x6b8] sm:$0xff]
      %v556 = vld [vmem:[%s313 + $0x6c0] sm:$0xff]
      %v557 = vld [vmem:[%s313 + $0x6c8] sm:$0xff]
      %v558 = vld [vmem:[%s313 + $0x6d0] sm:$0xff]
      %v559 = vld [vmem:[%s313 + $0x6d8] sm:$0xff]
      %v560 = vld [vmem:[%s313 + $0x6e0] sm:$0xff]
      %v561 = vld [vmem:[%s313 + $0x6e8] sm:$0xff]
      %v562 = vld [vmem:[%s313 + $0x6f0] sm:$0xff]
      %v563 = vld [vmem:[%s313 + $0x6f8] sm:$0xff]
      %v564 = vld [vmem:[%s313 + $0x700] sm:$0xff]
      %v565 = vld [vmem:[%s313 + $0x708] sm:$0xff]
      %v566 = vld [vmem:[%s313 + $0x710] sm:$0xff]
      %v567 = vld [vmem:[%s313 + $0x718] sm:$0xff]
      %v568 = vld [vmem:[%s313 + $0x720] sm:$0xff]
      %v569 = vld [vmem:[%s313 + $0x728] sm:$0xff]
      %v570 = vld [vmem:[%s313 + $0x730] sm:$0xff]
      %v571 = vld [vmem:[%s313 + $0x738] sm:$0xff]
      %v572 = vld [vmem:[%s313 + $0x740] sm:$0xff]
      %v573 = vld [vmem:[%s313 + $0x748] sm:$0xff]
      %v574 = vld [vmem:[%s313 + $0x750] sm:$0xff]
      %v575 = vld [vmem:[%s313 + $0x758] sm:$0xff]
      %v576 = vld [vmem:[%s313 + $0x760] sm:$0xff]
      %v577 = vld [vmem:[%s313 + $0x768] sm:$0xff]
      %v578 = vld [vmem:[%s313 + $0x770] sm:$0xff]
      %v579 = vld [vmem:[%s313 + $0x778] sm:$0xff]
      %v580 = vld [vmem:[%s313 + $0x780] sm:$0xff]
      %v581 = vld [vmem:[%s313 + $0x788] sm:$0xff]
      %v582 = vld [vmem:[%s313 + $0x790] sm:$0xff]
      %v583 = vld [vmem:[%s313 + $0x798] sm:$0xff]
      %v584 = vld [vmem:[%s313 + $0x7a0] sm:$0xff]
      %v585 = vld [vmem:[%s313 + $0x7a8] sm:$0xff]
      %v586 = vld [vmem:[%s313 + $0x7b0] sm:$0xff]
      %v587 = vld [vmem:[%s313 + $0x7b8] sm:$0xff]
      %v588 = vld [vmem:[%s313 + $0x7c0] sm:$0xff]
      %v589 = vld [vmem:[%s313 + $0x7c8] sm:$0xff]
      %v590 = vld [vmem:[%s313 + $0x7d0] sm:$0xff]
      %v591 = vld [vmem:[%s313 + $0x7d8] sm:$0xff]
      %v592 = vld [vmem:[%s313 + $0x7e0] sm:$0xff]
      %v593 = vld [vmem:[%s313 + $0x7e8] sm:$0xff]
      %v594 = vld [vmem:[%s313 + $0x7f0] sm:$0xff]
      %v595 = vld [vmem:[%s313 + $0x7f8] sm:$0xff]
      %v596 = vld [vmem:[%s313 + $0x800] sm:$0xff]
      %v597 = vld [vmem:[%s313 + $0x808] sm:$0xff]
      %v598 = vld [vmem:[%s313 + $0x810] sm:$0xff]
      %v599 = vld [vmem:[%s313 + $0x818] sm:$0xff]
      %v600 = vld [vmem:[%s313 + $0x820] sm:$0xff]
      %v601 = vld [vmem:[%s313 + $0x828] sm:$0xff]
      %v602 = vld [vmem:[%s313 + $0x830] sm:$0xff]
      %v603 = vld [vmem:[%s313 + $0x838] sm:$0xff]
      %v604 = vld [vmem:[%s313 + $0x840] sm:$0xff]
      %v605 = vld [vmem:[%s313 + $0x848] sm:$0xff]
      %v606 = vld [vmem:[%s313 + $0x850] sm:$0xff]
      %v607 = vld [vmem:[%s313 + $0x858] sm:$0xff]
      %v608 = vld [vmem:[%s313 + $0x860] sm:$0xff]
      %v609 = vld [vmem:[%s313 + $0x868] sm:$0xff]
      %v610 = vld [vmem:[%s313 + $0x870] sm:$0xff]
      %v611 = vld [vmem:[%s313 + $0x878] sm:$0xff]
      %v612 = vld [vmem:[%s313 + $0x880] sm:$0xff]
      %v613 = vld [vmem:[%s313 + $0x888] sm:$0xff]
      %v614 = vld [vmem:[%s313 + $0x890] sm:$0xff]
      %v615 = vld [vmem:[%s313 + $0x898] sm:$0xff]
      %v616 = vld [vmem:[%s313 + $0x8a0] sm:$0xff]
      %v617 = vld [vmem:[%s313 + $0x8a8] sm:$0xff]
      %v618 = vld [vmem:[%s313 + $0x8b0] sm:$0xff]
      %v619 = vld [vmem:[%s313 + $0x8b8] sm:$0xff]
      %v620 = vld [vmem:[%s313 + $0x8c0] sm:$0xff]
      %v621 = vld [vmem:[%s313 + $0x8c8] sm:$0xff]
      %v622 = vld [vmem:[%s313 + $0x8d0] sm:$0xff]
      %v623 = vld [vmem:[%s313 + $0x8d8] sm:$0xff]
      %v624 = vld [vmem:[%s313 + $0x8e0] sm:$0xff]
      %v625 = vld [vmem:[%s313 + $0x8e8] sm:$0xff]
      %v626 = vld [vmem:[%s313 + $0x8f0] sm:$0xff]
      %v627 = vld [vmem:[%s313 + $0x8f8] sm:$0xff]
      %v628 = vld [vmem:[%s313 + $0x900] sm:$0xff]
      %v629 = vld [vmem:[%s313 + $0x908] sm:$0xff]
      %v630 = vld [vmem:[%s313 + $0x910] sm:$0xff]
      %v631 = vld [vmem:[%s313 + $0x918] sm:$0xff]
      %v632 = vld [vmem:[%s313 + $0x920] sm:$0xff]
      %v633 = vld [vmem:[%s313 + $0x928] sm:$0xff]
      %v634 = vld [vmem:[%s313 + $0x930] sm:$0xff]
      %v635 = vld [vmem:[%s313 + $0x938] sm:$0xff]
      %v636 = vld [vmem:[%s313 + $0x940] sm:$0xff]
      %v637 = vld [vmem:[%s313 + $0x948] sm:$0xff]
      %v638 = vld [vmem:[%s313 + $0x950] sm:$0xff]
      %v639 = vld [vmem:[%s313 + $0x958] sm:$0xff]
      %v640 = vld [vmem:[%s313 + $0x960] sm:$0xff]
      %v641 = vld [vmem:[%s313 + $0x968] sm:$0xff]
      %v642 = vld [vmem:[%s313 + $0x970] sm:$0xff]
      %v643 = vld [vmem:[%s313 + $0x978] sm:$0xff]
      %v644 = vld [vmem:[%s313 + $0x980] sm:$0xff]
      %v645 = vld [vmem:[%s313 + $0x988] sm:$0xff]
      %v646 = vld [vmem:[%s313 + $0x990] sm:$0xff]
      %v647 = vld [vmem:[%s313 + $0x998] sm:$0xff]
      %v648 = vld [vmem:[%s313 + $0x9a0] sm:$0xff]
      %v649 = vld [vmem:[%s313 + $0x9a8] sm:$0xff]
      %v650 = vld [vmem:[%s313 + $0x9b0] sm:$0xff]
      %v651 = vld [vmem:[%s313 + $0x9b8] sm:$0xff]
      %v652 = vld [vmem:[%s313 + $0x9c0] sm:$0xff]
      %v653 = vld [vmem:[%s313 + $0x9c8] sm:$0xff]
      %v654 = vld [vmem:[%s313 + $0x9d0] sm:$0xff]
      %v655 = vld [vmem:[%s313 + $0x9d8] sm:$0xff]
      %v656 = vld [vmem:[%s313 + $0x9e0] sm:$0xff]
      %v657 = vld [vmem:[%s313 + $0x9e8] sm:$0xff]
      %v658 = vld [vmem:[%s313 + $0x9f0] sm:$0xff]
      %v659 = vld [vmem:[%s313 + $0x9f8] sm:$0xff]
      %v660 = vld [vmem:[%s313 + $0xa00] sm:$0xff]
      %v661 = vld [vmem:[%s313 + $0xa08] sm:$0xff]
      %v662 = vld [vmem:[%s313 + $0xa10] sm:$0xff]
      %v663 = vld [vmem:[%s313 + $0xa18] sm:$0xff]
      %v664 = vld [vmem:[%s313 + $0xa20] sm:$0xff]
      %v665 = vld [vmem:[%s313 + $0xa28] sm:$0xff]
      %v666 = vld [vmem:[%s313 + $0xa30] sm:$0xff]
      %v667 = vld [vmem:[%s313 + $0xa38] sm:$0xff]
      %v668 = vld [vmem:[%s313 + $0xa40] sm:$0xff]
      %v669 = vld [vmem:[%s313 + $0xa48] sm:$0xff]
      %v670 = vld [vmem:[%s313 + $0xa50] sm:$0xff]
      %v671 = vld [vmem:[%s313 + $0xa58] sm:$0xff]
      %v672 = vld [vmem:[%s313 + $0xa60] sm:$0xff]
      %v673 = vld [vmem:[%s313 + $0xa68] sm:$0xff]
      %v674 = vld [vmem:[%s313 + $0xa70] sm:$0xff]
      %v675 = vld [vmem:[%s313 + $0xa78] sm:$0xff]
      %v676 = vld [vmem:[%s318] sm:$0xff]
      %v677 = vld [vmem:[%s318 + $0x8] sm:$0xff]
      %v678 = vld [vmem:[%s318 + $0x10] sm:$0xff]
      %v679 = vld [vmem:[%s318 + $0x18] sm:$0xff]
      %v680 = vld [vmem:[%s318 + $0x20] sm:$0xff]
      %v681 = vld [vmem:[%s318 + $0x28] sm:$0xff]
      %v682 = vld [vmem:[%s318 + $0x30] sm:$0xff]
      %v683 = vld [vmem:[%s318 + $0x38] sm:$0xff]
      %v684 = vld [vmem:[%s318 + $0x40] sm:$0xff]
      %v685 = vld [vmem:[%s318 + $0x48] sm:$0xff]
      %v686 = vld [vmem:[%s318 + $0x50] sm:$0xff]
      %v687 = vld [vmem:[%s318 + $0x58] sm:$0xff]
      %v688 = vld [vmem:[%s318 + $0x60] sm:$0xff]
      %v689 = vld [vmem:[%s318 + $0x68] sm:$0xff]
      %v690 = vld [vmem:[%s318 + $0x70] sm:$0xff]
      %v691 = vld [vmem:[%s318 + $0x78] sm:$0xff]
      %v692 = vld [vmem:[%s318 + $0x80] sm:$0xff]
      %v693 = vld [vmem:[%s318 + $0x88] sm:$0xff]
      %v694 = vld [vmem:[%s318 + $0x90] sm:$0xff]
      %v695 = vld [vmem:[%s318 + $0x98] sm:$0xff]
      %v696 = vld [vmem:[%s318 + $0xa0] sm:$0xff]
      %v697 = vld [vmem:[%s318 + $0xa8] sm:$0xff]
      %v698 = vld [vmem:[%s318 + $0xb0] sm:$0xff]
      %v699 = vld [vmem:[%s318 + $0xb8] sm:$0xff]
      %v700 = vld [vmem:[%s318 + $0xc0] sm:$0xff]
      %v701 = vld [vmem:[%s318 + $0xc8] sm:$0xff]
      %v702 = vld [vmem:[%s318 + $0xd0] sm:$0xff]
      %v703 = vld [vmem:[%s318 + $0xd8] sm:$0xff]
      %v704 = vld [vmem:[%s318 + $0xe0] sm:$0xff]
      %v705 = vld [vmem:[%s318 + $0xe8] sm:$0xff]
      %v706 = vld [vmem:[%s318 + $0xf0] sm:$0xff]
      %v707 = vld [vmem:[%s318 + $0xf8] sm:$0xff]
      %v708 = vld [vmem:[%s318 + $0x100] sm:$0xff]
      %v709 = vld [vmem:[%s318 + $0x108] sm:$0xff]
      %v710 = vld [vmem:[%s318 + $0x110] sm:$0xff]
      %v711 = vld [vmem:[%s318 + $0x118] sm:$0xff]
      %v712 = vld [vmem:[%s318 + $0x120] sm:$0xff]
      %v713 = vld [vmem:[%s318 + $0x128] sm:$0xff]
      %v714 = vld [vmem:[%s318 + $0x130] sm:$0xff]
      %v715 = vld [vmem:[%s318 + $0x138] sm:$0xff]
      %v716 = vld [vmem:[%s318 + $0x140] sm:$0xff]
      %v717 = vld [vmem:[%s318 + $0x148] sm:$0xff]
      %v718 = vld [vmem:[%s318 + $0x150] sm:$0xff]
      %v719 = vld [vmem:[%s318 + $0x158] sm:$0xff]
      %v720 = vld [vmem:[%s318 + $0x160] sm:$0xff]
      %v721 = vld [vmem:[%s318 + $0x168] sm:$0xff]
      %v722 = vld [vmem:[%s318 + $0x170] sm:$0xff]
      %v723 = vld [vmem:[%s318 + $0x178] sm:$0xff]
      %v724 = vld [vmem:[%s318 + $0x180] sm:$0xff]
      %v725 = vld [vmem:[%s318 + $0x188] sm:$0xff]
      %v726 = vld [vmem:[%s318 + $0x190] sm:$0xff]
      %v727 = vld [vmem:[%s318 + $0x198] sm:$0xff]
      %v728 = vld [vmem:[%s318 + $0x1a0] sm:$0xff]
      %v729 = vld [vmem:[%s318 + $0x1a8] sm:$0xff]
      %v730 = vld [vmem:[%s318 + $0x1b0] sm:$0xff]
      %v731 = vld [vmem:[%s318 + $0x1b8] sm:$0xff]
      %v732 = vld [vmem:[%s318 + $0x1c0] sm:$0xff]
      %v733 = vld [vmem:[%s318 + $0x1c8] sm:$0xff]
      %v734 = vld [vmem:[%s318 + $0x1d0] sm:$0xff]
      %v735 = vld [vmem:[%s318 + $0x1d8] sm:$0xff]
      %v736 = vld [vmem:[%s318 + $0x1e0] sm:$0xff]
      %v737 = vld [vmem:[%s318 + $0x1e8] sm:$0xff]
      %v738 = vld [vmem:[%s318 + $0x1f0] sm:$0xff]
      %v739 = vld [vmem:[%s318 + $0x1f8] sm:$0xff]
      %v740 = vld [vmem:[%s318 + $0x200] sm:$0xff]
      %v741 = vld [vmem:[%s318 + $0x208] sm:$0xff]
      %v742 = vld [vmem:[%s318 + $0x210] sm:$0xff]
      %v743 = vld [vmem:[%s318 + $0x218] sm:$0xff]
      %v744 = vld [vmem:[%s318 + $0x220] sm:$0xff]
      %v745 = vld [vmem:[%s318 + $0x228] sm:$0xff]
      %v746 = vld [vmem:[%s318 + $0x230] sm:$0xff]
      %v747 = vld [vmem:[%s318 + $0x238] sm:$0xff]
      %v748 = vld [vmem:[%s318 + $0x240] sm:$0xff]
      %v749 = vld [vmem:[%s318 + $0x248] sm:$0xff]
      %v750 = vld [vmem:[%s318 + $0x250] sm:$0xff]
      %v751 = vld [vmem:[%s318 + $0x258] sm:$0xff]
      %v752 = vld [vmem:[%s318 + $0x260] sm:$0xff]
      %v753 = vld [vmem:[%s318 + $0x268] sm:$0xff]
      %v754 = vld [vmem:[%s318 + $0x270] sm:$0xff]
      %v755 = vld [vmem:[%s318 + $0x278] sm:$0xff]
      %v756 = vld [vmem:[%s318 + $0x280] sm:$0xff]
      %v757 = vld [vmem:[%s318 + $0x288] sm:$0xff]
      %v758 = vld [vmem:[%s318 + $0x290] sm:$0xff]
      %v759 = vld [vmem:[%s318 + $0x298] sm:$0xff]
      %v760 = vld [vmem:[%s318 + $0x2a0] sm:$0xff]
      %v761 = vld [vmem:[%s318 + $0x2a8] sm:$0xff]
      %v762 = vld [vmem:[%s318 + $0x2b0] sm:$0xff]
      %v763 = vld [vmem:[%s318 + $0x2b8] sm:$0xff]
      %v764 = vld [vmem:[%s318 + $0x2c0] sm:$0xff]
      %v765 = vld [vmem:[%s318 + $0x2c8] sm:$0xff]
      %v766 = vld [vmem:[%s318 + $0x2d0] sm:$0xff]
      %v767 = vld [vmem:[%s318 + $0x2d8] sm:$0xff]
      %v768 = vld [vmem:[%s318 + $0x2e0] sm:$0xff]
      %v769 = vld [vmem:[%s318 + $0x2e8] sm:$0xff]
      %v770 = vld [vmem:[%s318 + $0x2f0] sm:$0xff]
      %v771 = vld [vmem:[%s318 + $0x2f8] sm:$0xff]
      %v772 = vld [vmem:[%s318 + $0x300] sm:$0xff]
      %v773 = vld [vmem:[%s318 + $0x308] sm:$0xff]
      %v774 = vld [vmem:[%s318 + $0x310] sm:$0xff]
      %v775 = vld [vmem:[%s318 + $0x318] sm:$0xff]
      %v776 = vld [vmem:[%s318 + $0x320] sm:$0xff]
      %v777 = vld [vmem:[%s318 + $0x328] sm:$0xff]
      %v778 = vld [vmem:[%s318 + $0x330] sm:$0xff]
      %v779 = vld [vmem:[%s318 + $0x338] sm:$0xff]
      %v780 = vld [vmem:[%s318 + $0x340] sm:$0xff]
      %v781 = vld [vmem:[%s318 + $0x348] sm:$0xff]
      %v782 = vld [vmem:[%s318 + $0x350] sm:$0xff]
      %v783 = vld [vmem:[%s318 + $0x358] sm:$0xff]
      %v784 = vld [vmem:[%s318 + $0x360] sm:$0xff]
      %v785 = vld [vmem:[%s318 + $0x368] sm:$0xff]
      %v786 = vld [vmem:[%s318 + $0x370] sm:$0xff]
      %v787 = vld [vmem:[%s318 + $0x378] sm:$0xff]
      %v788 = vld [vmem:[%s321] sm:$0x1]
      %v790 = vlaneseq
      %v791 = vshrl.u32 %v790, 7
      %v792 = vsub.s32 0, %v791
      %v793 = vrot.slane %v788, %v792
      %795 = vmatprep.subr.mxu0 0.0
      %796 = vmatpush1.msra.mxu0 %v676
      %797 = vmatprep.subr.mxu0 0.0
      %798 = vmatpush1.msra.mxu0 %v677
      %799 = vmatprep.subr.mxu0 0.0
      %800 = vmatpush1.msra.mxu0 %v678
      %801 = vmatprep.subr.mxu0 0.0
      %802 = vmatpush1.msra.mxu0 %v679
      %803 = vmatprep.subr.mxu0 0.0
      %804 = vmatpush1.msra.mxu0 %v680
      %805 = vmatprep.subr.mxu0 0.0
      %806 = vmatpush1.msra.mxu0 %v681
      %807 = vmatprep.subr.mxu0 0.0
      %808 = vmatpush1.msra.mxu0 %v682
      %809 = vmatprep.subr.mxu0 0.0
      %810 = vmatpush1.msra.mxu0 %v683
      %811 = vmatprep.subr.mxu0 0.0
      %812 = vmatpush1.msra.mxu0 %v684
      %813 = vmatprep.subr.mxu0 0.0
      %814 = vmatpush1.msra.mxu0 %v685
      %815 = vmatprep.subr.mxu0 0.0
      %816 = vmatpush1.msra.mxu0 %v686
      %817 = vmatprep.subr.mxu0 0.0
      %818 = vmatpush1.msra.mxu0 %v687
      %819 = vmatprep.subr.mxu0 0.0
      %820 = vmatpush1.msra.mxu0 %v688
      %821 = vmatprep.subr.mxu0 0.0
      %822 = vmatpush1.msra.mxu0 %v689
      %823 = vmatprep.subr.mxu0 0.0
      %824 = vmatpush1.msra.mxu0 %v690
      %825 = vmatprep.subr.mxu0 0.0
      %826 = vmatpush1.msra.mxu0 %v691
      %827 = vmatprep.subr.mxu0 0.0
      %828 = vmatpush1.msra.mxu0 %v692
      %829 = vmatprep.subr.mxu0 0.0
      %830 = vmatpush1.msra.mxu0 %v693
      %831 = vmatprep.subr.mxu0 0.0
      %832 = vmatpush1.msra.mxu0 %v694
      %833 = vmatprep.subr.mxu0 0.0
      %834 = vmatpush1.msra.mxu0 %v695
      %835 = vmatprep.subr.mxu0 0.0
      %836 = vmatpush1.msra.mxu0 %v696
      %837 = vmatprep.subr.mxu0 0.0
      %838 = vmatpush1.msra.mxu0 %v697
      %839 = vmatprep.subr.mxu0 0.0
      %840 = vmatpush1.msra.mxu0 %v698
      %841 = vmatprep.subr.mxu0 0.0
      %842 = vmatpush1.msra.mxu0 %v699
      %843 = vmatprep.subr.mxu0 0.0
      %844 = vmatpush1.msra.mxu0 %v700
      %845 = vmatprep.subr.mxu0 0.0
      %846 = vmatpush1.msra.mxu0 %v701
      %847 = vmatprep.subr.mxu0 0.0
      %848 = vmatpush1.msra.mxu0 %v702
      %849 = vmatprep.subr.mxu0 0.0
      %850 = vmatpush1.msra.mxu0 %v703
      %851 = vmatprep.subr.mxu0 0.0
      %852 = vmatpush1.msra.mxu0 %v704
      %853 = vmatprep.subr.mxu0 0.0
      %854 = vmatpush1.msra.mxu0 %v705
      %855 = vmatprep.subr.mxu0 0.0
      %856 = vmatpush1.msra.mxu0 %v706
      %857 = vmatprep.subr.mxu0 0.0
      %858 = vmatpush1.msra.mxu0 %v707
      %859 = vmatprep.mubr.f32.mxu0 %v341
      %860 = vmatmul.mubr.f32.gmra.mrb[0].mxu0 %v340
      %v861 = vpop.f32.mrb[0].mxu0
      %v862 = vadd.f32 %v793, %v861
      %v863 = vpop.f32.mrb[0].mxu0
      %864 = vmatprep.mubr.f32.mxu0 %v348
      %865 = vmatmul.mubr.f32.gmra.mrb[0].mxu0 %v347
      %v866 = vpop.f32.mrb[0].mxu0
      %v867 = vadd.f32 %v793, %v866
      %v868 = vpop.f32.mrb[0].mxu0
      %869 = vmatprep.mubr.f32.mxu0 %v355
      %870 = vmatmul.mubr.f32.gmra.mrb[0].mxu0 %v354
      %v871 = vpop.f32.mrb[0].mxu0
      %v872 = vadd.f32 %v793, %v871
      %v873 = vpop.f32.mrb[0].mxu0
      %874 = vmatprep.mubr.f32.mxu0 %v362
      %875 = vmatmul.mubr.f32.gmra.mrb[0].mxu0 %v361
      %v876 = vpop.f32.mrb[0].mxu0
      %v877 = vadd.f32 %v793, %v876
      %v878 = vpop.f32.mrb[0].mxu0
      %879 = vmatprep.mubr.f32.mxu0 %v369
      %880 = vmatmul.mubr.f32.gmra.mrb[0].mxu0 %v368
      %v881 = vpop.f32.mrb[0].mxu0
      %v882 = vadd.f32 %v793, %v881
      %v883 = vpop.f32.mrb[0].mxu0
      %884 = vmatprep.mubr.f32.mxu0 %v376
      %885 = vmatmul.mubr.f32.gmra.mrb[0].mxu0 %v375
      %v886 = vpop.f32.mrb[0].mxu0
      %v887 = vadd.f32 %v793, %v886
      %v888 = vpop.f32.mrb[0].mxu0
      %889 = vmatprep.mubr.f32.mxu0 %v383
      %890 = vmatmul.mubr.f32.gmra.mrb[0].mxu0 %v382
      %v891 = vpop.f32.mrb[0].mxu0
      %v892 = vadd.f32 %v793, %v891
      %v893 = vpop.f32.mrb[0].mxu0
      %894 = vmatprep.mubr.f32.mxu0 %v390
      %895 = vmatmul.mubr.f32.gmra.mrb[0].mxu0 %v389
      %v896 = vpop.f32.mrb[0].mxu0
      %v897 = vadd.f32 %v793, %v896
      %v898 = vpop.f32.mrb[0].mxu0
      %899 = vmatprep.mubr.f32.mxu0 %v397
      %900 = vmatmul.mubr.f32.gmra.mrb[0].mxu0 %v396
      %v901 = vpop.f32.mrb[0].mxu0
      %v902 = vadd.f32 %v793, %v901
      %v903 = vpop.f32.mrb[0].mxu0
      %904 = vmatprep.mubr.f32.mxu0 %v404
      %905 = vmatmul.mubr.f32.gmra.mrb[0].mxu0 %v403
      %v906 = vpop.f32.mrb[0].mxu0
      %v907 = vadd.f32 %v793, %v906
      %v908 = vpop.f32.mrb[0].mxu0
      %909 = vmatprep.mubr.f32.mxu0 %v411
      %910 = vmatmul.mubr.f32.gmra.mrb[0].mxu0 %v410
      %v911 = vpop.f32.mrb[0].mxu0
      %v912 = vadd.f32 %v793, %v911
      %v913 = vpop.f32.mrb[0].mxu0
      %914 = vmatprep.mubr.f32.mxu0 %v418
      %915 = vmatmul.mubr.f32.gmra.mrb[0].mxu0 %v417
      %v916 = vpop.f32.mrb[0].mxu0
      %v917 = vadd.f32 %v793, %v916
      %v918 = vpop.f32.mrb[0].mxu0
      %919 = vmatprep.mubr.f32.mxu0 %v425
      %920 = vmatmul.mubr.f32.gmra.mrb[0].mxu0 %v424
      %v921 = vpop.f32.mrb[0].mxu0
      %v922 = vadd.f32 %v793, %v921
      %v923 = vpop.f32.mrb[0].mxu0
      %924 = vmatprep.mubr.f32.mxu0 %v432
      %925 = vmatmul.mubr.f32.gmra.mrb[0].mxu0 %v431
      %v926 = vpop.f32.mrb[0].mxu0
      %v927 = vadd.f32 %v793, %v926
      %v928 = vpop.f32.mrb[0].mxu0
      %929 = vmatprep.mubr.f32.mxu0 %v439
      %930 = vmatmul.mubr.f32.gmra.mrb[0].mxu0 %v438
      %v931 = vpop.f32.mrb[0].mxu0
      %v932 = vadd.f32 %v793, %v931
      %v933 = vpop.f32.mrb[0].mxu0
      %934 = vmatprep.mubr.f32.mxu0 %v446
      %935 = vmatmul.mubr.f32.gmra.mrb[0].mxu0 %v445
      %v936 = vpop.f32.mrb[0].mxu0
      %v937 = vadd.f32 %v793, %v936
      %v938 = vpop.f32.mrb[0].mxu0
      %939 = vmatprep.mubr.f32.mxu0 %v453
      %940 = vmatmul.mubr.f32.gmra.mrb[0].mxu0 %v452
      %v941 = vpop.f32.mrb[0].mxu0
      %v942 = vadd.f32 %v793, %v941
      %v943 = vpop.f32.mrb[0].mxu0
      %944 = vmatprep.mubr.f32.mxu0 %v460
      %945 = vmatmul.mubr.f32.gmra.mrb[0].mxu0 %v459
      %v946 = vpop.f32.mrb[0].mxu0
      %v947 = vadd.f32 %v793, %v946
      %v948 = vpop.f32.mrb[0].mxu0
      %949 = vmatprep.mubr.f32.mxu0 %v467
      %950 = vmatmul.mubr.f32.gmra.mrb[0].mxu0 %v466
      %v951 = vpop.f32.mrb[0].mxu0
      %v952 = vadd.f32 %v793, %v951
      %v953 = vpop.f32.mrb[0].mxu0
      %954 = vmatprep.mubr.f32.mxu0 %v474
      %955 = vmatmul.mubr.f32.gmra.mrb[0].mxu0 %v473
      %v956 = vpop.f32.mrb[0].mxu0
      %v957 = vadd.f32 %v793, %v956
      %v958 = vpop.f32.mrb[0].mxu0
      %959 = vmatprep.mubr.f32.mxu0 %v481
      %960 = vmatmul.mubr.f32.gmra.mrb[0].mxu0 %v480
      %v961 = vpop.f32.mrb[0].mxu0
      %v962 = vadd.f32 %v793, %v961
      %v963 = vpop.f32.mrb[0].mxu0
      %964 = vmatprep.mubr.f32.mxu0 %v488
      %965 = vmatmul.mubr.f32.gmra.mrb[0].mxu0 %v487
      %v966 = vpop.f32.mrb[0].mxu0
      %v967 = vadd.f32 %v793, %v966
      %v968 = vpop.f32.mrb[0].mxu0
      %969 = vmatprep.mubr.f32.mxu0 %v495
      %970 = vmatmul.mubr.f32.gmra.mrb[0].mxu0 %v494
      %v971 = vpop.f32.mrb[0].mxu0
      %v972 = vadd.f32 %v793, %v971
      %v973 = vpop.f32.mrb[0].mxu0
      %974 = vmatprep.mubr.f32.mxu0 %v502
      %975 = vmatmul.mubr.f32.gmra.mrb[0].mxu0 %v501
      %v976 = vpop.f32.mrb[0].mxu0
      %v977 = vadd.f32 %v793, %v976
      %v978 = vpop.f32.mrb[0].mxu0
      %979 = vmatprep.mubr.f32.mxu0 %v509
      %980 = vmatmul.mubr.f32.gmra.mrb[0].mxu0 %v508
      %v981 = vpop.f32.mrb[0].mxu0
      %v982 = vadd.f32 %v793, %v981
      %v983 = vpop.f32.mrb[0].mxu0
      %984 = vmatprep.mubr.f32.mxu0 %v516
      %985 = vmatmul.mubr.f32.gmra.mrb[0].mxu0 %v515
      %v986 = vpop.f32.mrb[0].mxu0
      %v987 = vadd.f32 %v793, %v986
      %v988 = vpop.f32.mrb[0].mxu0
      %989 = vmatprep.mubr.f32.mxu0 %v523
      %990 = vmatmul.mubr.f32.gmra.mrb[0].mxu0 %v522
      %v991 = vpop.f32.mrb[0].mxu0
      %v992 = vadd.f32 %v793, %v991
      %v993 = vpop.f32.mrb[0].mxu0
      %994 = vmatprep.mubr.f32.mxu0 %v530
      %995 = vmatmul.mubr.f32.gmra.mrb[0].mxu0 %v529
      %v996 = vpop.f32.mrb[0].mxu0
      %v997 = vadd.f32 %v793, %v996
      %v998 = vpop.f32.mrb[0].mxu0
      %999 = vmatprep.mubr.f32.mxu0 %v537
      %1000 = vmatmul.mubr.f32.gmra.mrb[0].mxu0 %v536
      %v1001 = vpop.f32.mrb[0].mxu0
      %v1002 = vadd.f32 %v793, %v1001
      %v1003 = vpop.f32.mrb[0].mxu0
      %1004 = vmatprep.mubr.f32.mxu0 %v544
      %1005 = vmatmul.mubr.f32.gmra.mrb[0].mxu0 %v543
      %v1006 = vpop.f32.mrb[0].mxu0
      %v1007 = vadd.f32 %v793, %v1006
      %v1008 = vpop.f32.mrb[0].mxu0
      %1009 = vmatprep.mubr.f32.mxu0 %v551
      %1010 = vmatmul.mubr.f32.gmra.mrb[0].mxu0 %v550
      %v1011 = vpop.f32.mrb[0].mxu0
      %v1012 = vadd.f32 %v793, %v1011
      %v1013 = vpop.f32.mrb[0].mxu0
      %1014 = vmatprep.mubr.f32.mxu0 %v558
      %1015 = vmatmul.mubr.f32.gmra.mrb[0].mxu0 %v557
      %v1016 = vpop.f32.mrb[0].mxu0
      %v1017 = vadd.f32 %v793, %v1016
      %v1018 = vpop.f32.mrb[0].mxu0
      %1019 = vmatprep.mubr.f32.mxu0 %v565
      %1020 = vmatmul.mubr.f32.gmra.mrb[0].mxu0 %v564
      %v1021 = vpop.f32.mrb[0].mxu0
      %v1022 = vadd.f32 %v793, %v1021
      %v1023 = vpop.f32.mrb[0].mxu0
      %1024 = vmatprep.mubr.f32.mxu0 %v572
      %1025 = vmatmul.mubr.f32.gmra.mrb[0].mxu0 %v571
      %v1026 = vpop.f32.mrb[0].mxu0
      %v1027 = vadd.f32 %v793, %v1026
      %v1028 = vpop.f32.mrb[0].mxu0
      %1029 = vmatprep.mubr.f32.mxu0 %v579
      %1030 = vmatmul.mubr.f32.gmra.mrb[0].mxu0 %v578
      %v1031 = vpop.f32.mrb[0].mxu0
      %v1032 = vadd.f32 %v793, %v1031
      %v1033 = vpop.f32.mrb[0].mxu0
      %1034 = vmatprep.mubr.f32.mxu0 %v586
      %1035 = vmatmul.mubr.f32.gmra.mrb[0].mxu0 %v585
      %v1036 = vpop.f32.mrb[0].mxu0
      %v1037 = vadd.f32 %v793, %v1036
      %v1038 = vpop.f32.mrb[0].mxu0
      %1039 = vmatprep.mubr.f32.mxu0 %v593
      %1040 = vmatmul.mubr.f32.gmra.mrb[0].mxu0 %v592
      %v1041 = vpop.f32.mrb[0].mxu0
      %v1042 = vadd.f32 %v793, %v1041
      %v1043 = vpop.f32.mrb[0].mxu0
      %1044 = vmatprep.mubr.f32.mxu0 %v600
      %1045 = vmatmul.mubr.f32.gmra.mrb[0].mxu0 %v599
      %v1046 = vpop.f32.mrb[0].mxu0
      %v1047 = vadd.f32 %v793, %v1046
      %v1048 = vpop.f32.mrb[0].mxu0
      %1049 = vmatprep.mubr.f32.mxu0 %v607
      %1050 = vmatmul.mubr.f32.gmra.mrb[0].mxu0 %v606
      %v1051 = vpop.f32.mrb[0].mxu0
      %v1052 = vadd.f32 %v793, %v1051
      %v1053 = vpop.f32.mrb[0].mxu0
      %1054 = vmatprep.mubr.f32.mxu0 %v614
      %1055 = vmatmul.mubr.f32.gmra.mrb[0].mxu0 %v613
      %v1056 = vpop.f32.mrb[0].mxu0
      %v1057 = vadd.f32 %v793, %v1056
      %v1058 = vpop.f32.mrb[0].mxu0
      %1059 = vmatprep.mubr.f32.mxu0 %v621
      %1060 = vmatmul.mubr.f32.gmra.mrb[0].mxu0 %v620
      %v1061 = vpop.f32.mrb[0].mxu0
      %v1062 = vadd.f32 %v793, %v1061
      %v1063 = vpop.f32.mrb[0].mxu0
      %1064 = vmatprep.mubr.f32.mxu0 %v628
      %1065 = vmatmul.mubr.f32.gmra.mrb[0].mxu0 %v627
      %v1066 = vpop.f32.mrb[0].mxu0
      %v1067 = vadd.f32 %v793, %v1066
      %v1068 = vpop.f32.mrb[0].mxu0
      %1069 = vmatprep.mubr.f32.mxu0 %v635
      %1070 = vmatmul.mubr.f32.gmra.mrb[0].mxu0 %v634
      %v1071 = vpop.f32.mrb[0].mxu0
      %v1072 = vadd.f32 %v793, %v1071
      %v1073 = vpop.f32.mrb[0].mxu0
      %1074 = vmatprep.mubr.f32.mxu0 %v642
      %1075 = vmatmul.mubr.f32.gmra.mrb[0].mxu0 %v641
      %v1076 = vpop.f32.mrb[0].mxu0
      %v1077 = vadd.f32 %v793, %v1076
      %v1078 = vpop.f32.mrb[0].mxu0
      %1079 = vmatprep.mubr.f32.mxu0 %v649
      %1080 = vmatmul.mubr.f32.gmra.mrb[0].mxu0 %v648
      %v1081 = vpop.f32.mrb[0].mxu0
      %v1082 = vadd.f32 %v793, %v1081
      %v1083 = vpop.f32.mrb[0].mxu0
      %1084 = vmatprep.mubr.f32.mxu0 %v656
      %1085 = vmatmul.mubr.f32.gmra.mrb[0].mxu0 %v655
      %v1086 = vpop.f32.mrb[0].mxu0
      %v1087 = vadd.f32 %v793, %v1086
      %v1088 = vpop.f32.mrb[0].mxu0
      %1089 = vmatprep.mubr.f32.mxu0 %v663
      %1090 = vmatmul.mubr.f32.gmra.mrb[0].mxu0 %v662
      %v1091 = vpop.f32.mrb[0].mxu0
      %v1092 = vadd.f32 %v793, %v1091
      %v1093 = vpop.f32.mrb[0].mxu0
      %1094 = vmatprep.mubr.f32.mxu0 %v670
      %1095 = vmatmul.mubr.f32.gmra.mrb[0].mxu0 %v669
      %v1096 = vpop.f32.mrb[0].mxu0
      %v1097 = vadd.f32 %v793, %v1096
      %v1098 = vpop.f32.mrb[0].mxu0
      %1099 = vdwg.mxu0
      %1100 = vmatprep.subr.mxu0 0.0
      %1101 = vmatpush1.msra.mxu0 %v708
      %1102 = vmatprep.subr.mxu0 0.0
      %1103 = vmatpush1.msra.mxu0 %v709
      %1104 = vmatprep.subr.mxu0 0.0
      %1105 = vmatpush1.msra.mxu0 %v710
      %1106 = vmatprep.subr.mxu0 0.0
      %1107 = vmatpush1.msra.mxu0 %v711
      %1108 = vmatprep.subr.mxu0 0.0
      %1109 = vmatpush1.msra.mxu0 %v712
      %1110 = vmatprep.subr.mxu0 0.0
      %1111 = vmatpush1.msra.mxu0 %v713
      %1112 = vmatprep.subr.mxu0 0.0
      %1113 = vmatpush1.msra.mxu0 %v714
      %1114 = vmatprep.subr.mxu0 0.0
      %1115 = vmatpush1.msra.mxu0 %v715
      %1116 = vmatprep.subr.mxu0 0.0
      %1117 = vmatpush1.msra.mxu0 %v716
      %1118 = vmatprep.subr.mxu0 0.0
      %1119 = vmatpush1.msra.mxu0 %v717
      %1120 = vmatprep.subr.mxu0 0.0
      %1121 = vmatpush1.msra.mxu0 %v718
      %1122 = vmatprep.subr.mxu0 0.0
      %1123 = vmatpush1.msra.mxu0 %v719
      %1124 = vmatprep.subr.mxu0 0.0
      %1125 = vmatpush1.msra.mxu0 %v720
      %1126 = vmatprep.subr.mxu0 0.0
      %1127 = vmatpush1.msra.mxu0 %v721
      %1128 = vmatprep.subr.mxu0 0.0
      %1129 = vmatpush1.msra.mxu0 %v722
      %1130 = vmatprep.subr.mxu0 0.0
      %1131 = vmatpush1.msra.mxu0 %v723
      %1132 = vmatprep.subr.mxu0 0.0
      %1133 = vmatpush1.msra.mxu0 %v724
      %1134 = vmatprep.subr.mxu0 0.0
      %1135 = vmatpush1.msra.mxu0 %v725
      %1136 = vmatprep.subr.mxu0 0.0
      %1137 = vmatpush1.msra.mxu0 %v726
      %1138 = vmatprep.subr.mxu0 0.0
      %1139 = vmatpush1.msra.mxu0 %v727
      %1140 = vmatprep.subr.mxu0 0.0
      %1141 = vmatpush1.msra.mxu0 %v728
      %1142 = vmatprep.subr.mxu0 0.0
      %1143 = vmatpush1.msra.mxu0 %v729
      %1144 = vmatprep.subr.mxu0 0.0
      %1145 = vmatpush1.msra.mxu0 %v730
      %1146 = vmatprep.subr.mxu0 0.0
      %1147 = vmatpush1.msra.mxu0 %v731
      %1148 = vmatprep.subr.mxu0 0.0
      %1149 = vmatpush1.msra.mxu0 %v732
      %1150 = vmatprep.subr.mxu0 0.0
      %1151 = vmatpush1.msra.mxu0 %v733
      %1152 = vmatprep.subr.mxu0 0.0
      %1153 = vmatpush1.msra.mxu0 %v734
      %1154 = vmatprep.subr.mxu0 0.0
      %1155 = vmatpush1.msra.mxu0 %v735
      %1156 = vmatprep.subr.mxu0 0.0
      %1157 = vmatpush1.msra.mxu0 %v736
      %1158 = vmatprep.subr.mxu0 0.0
      %1159 = vmatpush1.msra.mxu0 %v737
      %1160 = vmatprep.subr.mxu0 0.0
      %1161 = vmatpush1.msra.mxu0 %v738
      %1162 = vmatprep.subr.mxu0 0.0
      %1163 = vmatpush1.msra.mxu0 %v739
      %1164 = vmatprep.mubr.f32.mxu0 %v343
      %1165 = vmatmul.mubr.f32.gmra.mrb[0].mxu0 %v342
      %v1166 = vpop.f32.mrb[0].mxu0
      %v1167 = vadd.f32 %v862, %v1166
      %v1168 = vpop.f32.mrb[0].mxu0
      %1169 = vmatprep.mubr.f32.mxu0 %v350
      %1170 = vmatmul.mubr.f32.gmra.mrb[0].mxu0 %v349
      %v1171 = vpop.f32.mrb[0].mxu0
      %v1172 = vadd.f32 %v867, %v1171
      %v1173 = vpop.f32.mrb[0].mxu0
      %1174 = vmatprep.mubr.f32.mxu0 %v357
      %1175 = vmatmul.mubr.f32.gmra.mrb[0].mxu0 %v356
      %v1176 = vpop.f32.mrb[0].mxu0
      %v1177 = vadd.f32 %v872, %v1176
      %v1178 = vpop.f32.mrb[0].mxu0
      %1179 = vmatprep.mubr.f32.mxu0 %v364
      %1180 = vmatmul.mubr.f32.gmra.mrb[0].mxu0 %v363
      %v1181 = vpop.f32.mrb[0].mxu0
      %v1182 = vadd.f32 %v877, %v1181
      %v1183 = vpop.f32.mrb[0].mxu0
      %1184 = vmatprep.mubr.f32.mxu0 %v371
      %1185 = vmatmul.mubr.f32.gmra.mrb[0].mxu0 %v370
      %v1186 = vpop.f32.mrb[0].mxu0
      %v1187 = vadd.f32 %v882, %v1186
      %v1188 = vpop.f32.mrb[0].mxu0
      %1189 = vmatprep.mubr.f32.mxu0 %v378
      %1190 = vmatmul.mubr.f32.gmra.mrb[0].mxu0 %v377
      %v1191 = vpop.f32.mrb[0].mxu0
      %v1192 = vadd.f32 %v887, %v1191
      %v1193 = vpop.f32.mrb[0].mxu0
      %1194 = vmatprep.mubr.f32.mxu0 %v385
      %1195 = vmatmul.mubr.f32.gmra.mrb[0].mxu0 %v384
      %v1196 = vpop.f32.mrb[0].mxu0
      %v1197 = vadd.f32 %v892, %v1196
      %v1198 = vpop.f32.mrb[0].mxu0
      %1199 = vmatprep.mubr.f32.mxu0 %v392
      %1200 = vmatmul.mubr.f32.gmra.mrb[0].mxu0 %v391
      %v1201 = vpop.f32.mrb[0].mxu0
      %v1202 = vadd.f32 %v897, %v1201
      %v1203 = vpop.f32.mrb[0].mxu0
      %1204 = vmatprep.mubr.f32.mxu0 %v399
      %1205 = vmatmul.mubr.f32.gmra.mrb[0].mxu0 %v398
      %v1206 = vpop.f32.mrb[0].mxu0
      %v1207 = vadd.f32 %v902, %v1206
      %v1208 = vpop.f32.mrb[0].mxu0
      %1209 = vmatprep.mubr.f32.mxu0 %v406
      %1210 = vmatmul.mubr.f32.gmra.mrb[0].mxu0 %v405
      %v1211 = vpop.f32.mrb[0].mxu0
      %v1212 = vadd.f32 %v907, %v1211
      %v1213 = vpop.f32.mrb[0].mxu0
      %1214 = vmatprep.mubr.f32.mxu0 %v413
      %1215 = vmatmul.mubr.f32.gmra.mrb[0].mxu0 %v412
      %v1216 = vpop.f32.mrb[0].mxu0
      %v1217 = vadd.f32 %v912, %v1216
      %v1218 = vpop.f32.mrb[0].mxu0
      %1219 = vmatprep.mubr.f32.mxu0 %v420
      %1220 = vmatmul.mubr.f32.gmra.mrb[0].mxu0 %v419
      %v1221 = vpop.f32.mrb[0].mxu0
      %v1222 = vadd.f32 %v917, %v1221
      %v1223 = vpop.f32.mrb[0].mxu0
      %1224 = vmatprep.mubr.f32.mxu0 %v427
      %1225 = vmatmul.mubr.f32.gmra.mrb[0].mxu0 %v426
      %v1226 = vpop.f32.mrb[0].mxu0
      %v1227 = vadd.f32 %v922, %v1226
      %v1228 = vpop.f32.mrb[0].mxu0
      %1229 = vmatprep.mubr.f32.mxu0 %v434
      %1230 = vmatmul.mubr.f32.gmra.mrb[0].mxu0 %v433
      %v1231 = vpop.f32.mrb[0].mxu0
      %v1232 = vadd.f32 %v927, %v1231
      %v1233 = vpop.f32.mrb[0].mxu0
      %1234 = vmatprep.mubr.f32.mxu0 %v441
      %1235 = vmatmul.mubr.f32.gmra.mrb[0].mxu0 %v440
      %v1236 = vpop.f32.mrb[0].mxu0
      %v1237 = vadd.f32 %v932, %v1236
      %v1238 = vpop.f32.mrb[0].mxu0
      %1239 = vmatprep.mubr.f32.mxu0 %v448
      %1240 = vmatmul.mubr.f32.gmra.mrb[0].mxu0 %v447
      %v1241 = vpop.f32.mrb[0].mxu0
      %v1242 = vadd.f32 %v937, %v1241
      %v1243 = vpop.f32.mrb[0].mxu0
      %1244 = vmatprep.mubr.f32.mxu0 %v455
      %1245 = vmatmul.mubr.f32.gmra.mrb[0].mxu0 %v454
      %v1246 = vpop.f32.mrb[0].mxu0
      %v1247 = vadd.f32 %v942, %v1246
      %v1248 = vpop.f32.mrb[0].mxu0
      %1249 = vmatprep.mubr.f32.mxu0 %v462
      %1250 = vmatmul.mubr.f32.gmra.mrb[0].mxu0 %v461
      %v1251 = vpop.f32.mrb[0].mxu0
      %v1252 = vadd.f32 %v947, %v1251
      %v1253 = vpop.f32.mrb[0].mxu0
      %1254 = vmatprep.mubr.f32.mxu0 %v469
      %1255 = vmatmul.mubr.f32.gmra.mrb[0].mxu0 %v468
      %v1256 = vpop.f32.mrb[0].mxu0
      %v1257 = vadd.f32 %v952, %v1256
      %v1258 = vpop.f32.mrb[0].mxu0
      %1259 = vmatprep.mubr.f32.mxu0 %v476
      %1260 = vmatmul.mubr.f32.gmra.mrb[0].mxu0 %v475
      %v1261 = vpop.f32.mrb[0].mxu0
      %v1262 = vadd.f32 %v957, %v1261
      %v1263 = vpop.f32.mrb[0].mxu0
      %1264 = vmatprep.mubr.f32.mxu0 %v483
      %1265 = vmatmul.mubr.f32.gmra.mrb[0].mxu0 %v482
      %v1266 = vpop.f32.mrb[0].mxu0
      %v1267 = vadd.f32 %v962, %v1266
      %v1268 = vpop.f32.mrb[0].mxu0
      %1269 = vmatprep.mubr.f32.mxu0 %v490
      %1270 = vmatmul.mubr.f32.gmra.mrb[0].mxu0 %v489
      %v1271 = vpop.f32.mrb[0].mxu0
      %v1272 = vadd.f32 %v967, %v1271
      %v1273 = vpop.f32.mrb[0].mxu0
      %1274 = vmatprep.mubr.f32.mxu0 %v497
      %1275 = vmatmul.mubr.f32.gmra.mrb[0].mxu0 %v496
      %v1276 = vpop.f32.mrb[0].mxu0
      %v1277 = vadd.f32 %v972, %v1276
      %v1278 = vpop.f32.mrb[0].mxu0
      %1279 = vmatprep.mubr.f32.mxu0 %v504
      %1280 = vmatmul.mubr.f32.gmra.mrb[0].mxu0 %v503
      %v1281 = vpop.f32.mrb[0].mxu0
      %v1282 = vadd.f32 %v977, %v1281
      %v1283 = vpop.f32.mrb[0].mxu0
      %1284 = vmatprep.mubr.f32.mxu0 %v511
      %1285 = vmatmul.mubr.f32.gmra.mrb[0].mxu0 %v510
      %v1286 = vpop.f32.mrb[0].mxu0
      %v1287 = vadd.f32 %v982, %v1286
      %v1288 = vpop.f32.mrb[0].mxu0
      %1289 = vmatprep.mubr.f32.mxu0 %v518
      %1290 = vmatmul.mubr.f32.gmra.mrb[0].mxu0 %v517
      %v1291 = vpop.f32.mrb[0].mxu0
      %v1292 = vadd.f32 %v987, %v1291
      %v1293 = vpop.f32.mrb[0].mxu0
      %1294 = vmatprep.mubr.f32.mxu0 %v525
      %1295 = vmatmul.mubr.f32.gmra.mrb[0].mxu0 %v524
      %v1296 = vpop.f32.mrb[0].mxu0
      %v1297 = vadd.f32 %v992, %v1296
      %v1298 = vpop.f32.mrb[0].mxu0
      %1299 = vmatprep.mubr.f32.mxu0 %v532
      %1300 = vmatmul.mubr.f32.gmra.mrb[0].mxu0 %v531
      %v1301 = vpop.f32.mrb[0].mxu0
      %v1302 = vadd.f32 %v997, %v1301
      %v1303 = vpop.f32.mrb[0].mxu0
      %1304 = vmatprep.mubr.f32.mxu0 %v539
      %1305 = vmatmul.mubr.f32.gmra.mrb[0].mxu0 %v538
      %v1306 = vpop.f32.mrb[0].mxu0
      %v1307 = vadd.f32 %v1002, %v1306
      %v1308 = vpop.f32.mrb[0].mxu0
      %1309 = vmatprep.mubr.f32.mxu0 %v546
      %1310 = vmatmul.mubr.f32.gmra.mrb[0].mxu0 %v545
      %v1311 = vpop.f32.mrb[0].mxu0
      %v1312 = vadd.f32 %v1007, %v1311
      %v1313 = vpop.f32.mrb[0].mxu0
      %1314 = vmatprep.mubr.f32.mxu0 %v553
      %1315 = vmatmul.mubr.f32.gmra.mrb[0].mxu0 %v552
      %v1316 = vpop.f32.mrb[0].mxu0
      %v1317 = vadd.f32 %v1012, %v1316
      %v1318 = vpop.f32.mrb[0].mxu0
      %1319 = vmatprep.mubr.f32.mxu0 %v560
      %1320 = vmatmul.mubr.f32.gmra.mrb[0].mxu0 %v559
      %v1321 = vpop.f32.mrb[0].mxu0
      %v1322 = vadd.f32 %v1017, %v1321
      %v1323 = vpop.f32.mrb[0].mxu0
      %1324 = vmatprep.mubr.f32.mxu0 %v567
      %1325 = vmatmul.mubr.f32.gmra.mrb[0].mxu0 %v566
      %v1326 = vpop.f32.mrb[0].mxu0
      %v1327 = vadd.f32 %v1022, %v1326
      %v1328 = vpop.f32.mrb[0].mxu0
      %1329 = vmatprep.mubr.f32.mxu0 %v574
      %1330 = vmatmul.mubr.f32.gmra.mrb[0].mxu0 %v573
      %v1331 = vpop.f32.mrb[0].mxu0
      %v1332 = vadd.f32 %v1027, %v1331
      %v1333 = vpop.f32.mrb[0].mxu0
      %1334 = vmatprep.mubr.f32.mxu0 %v581
      %1335 = vmatmul.mubr.f32.gmra.mrb[0].mxu0 %v580
      %v1336 = vpop.f32.mrb[0].mxu0
      %v1337 = vadd.f32 %v1032, %v1336
      %v1338 = vpop.f32.mrb[0].mxu0
      %1339 = vmatprep.mubr.f32.mxu0 %v588
      %1340 = vmatmul.mubr.f32.gmra.mrb[0].mxu0 %v587
      %v1341 = vpop.f32.mrb[0].mxu0
      %v1342 = vadd.f32 %v1037, %v1341
      %v1343 = vpop.f32.mrb[0].mxu0
      %1344 = vmatprep.mubr.f32.mxu0 %v595
      %1345 = vmatmul.mubr.f32.gmra.mrb[0].mxu0 %v594
      %v1346 = vpop.f32.mrb[0].mxu0
      %v1347 = vadd.f32 %v1042, %v1346
      %v1348 = vpop.f32.mrb[0].mxu0
      %1349 = vmatprep.mubr.f32.mxu0 %v602
      %1350 = vmatmul.mubr.f32.gmra.mrb[0].mxu0 %v601
      %v1351 = vpop.f32.mrb[0].mxu0
      %v1352 = vadd.f32 %v1047, %v1351
      %v1353 = vpop.f32.mrb[0].mxu0
      %1354 = vmatprep.mubr.f32.mxu0 %v609
      %1355 = vmatmul.mubr.f32.gmra.mrb[0].mxu0 %v608
      %v1356 = vpop.f32.mrb[0].mxu0
      %v1357 = vadd.f32 %v1052, %v1356
      %v1358 = vpop.f32.mrb[0].mxu0
      %1359 = vmatprep.mubr.f32.mxu0 %v616
      %1360 = vmatmul.mubr.f32.gmra.mrb[0].mxu0 %v615
      %v1361 = vpop.f32.mrb[0].mxu0
      %v1362 = vadd.f32 %v1057, %v1361
      %v1363 = vpop.f32.mrb[0].mxu0
      %1364 = vmatprep.mubr.f32.mxu0 %v623
      %1365 = vmatmul.mubr.f32.gmra.mrb[0].mxu0 %v622
      %v1366 = vpop.f32.mrb[0].mxu0
      %v1367 = vadd.f32 %v1062, %v1366
      %v1368 = vpop.f32.mrb[0].mxu0
      %1369 = vmatprep.mubr.f32.mxu0 %v630
      %1370 = vmatmul.mubr.f32.gmra.mrb[0].mxu0 %v629
      %v1371 = vpop.f32.mrb[0].mxu0
      %v1372 = vadd.f32 %v1067, %v1371
      %v1373 = vpop.f32.mrb[0].mxu0
      %1374 = vmatprep.mubr.f32.mxu0 %v637
      %1375 = vmatmul.mubr.f32.gmra.mrb[0].mxu0 %v636
      %v1376 = vpop.f32.mrb[0].mxu0
      %v1377 = vadd.f32 %v1072, %v1376
      %v1378 = vpop.f32.mrb[0].mxu0
      %1379 = vmatprep.mubr.f32.mxu0 %v644
      %1380 = vmatmul.mubr.f32.gmra.mrb[0].mxu0 %v643
      %v1381 = vpop.f32.mrb[0].mxu0
      %v1382 = vadd.f32 %v1077, %v1381
      %v1383 = vpop.f32.mrb[0].mxu0
      %1384 = vmatprep.mubr.f32.mxu0 %v651
      %1385 = vmatmul.mubr.f32.gmra.mrb[0].mxu0 %v650
      %v1386 = vpop.f32.mrb[0].mxu0
      %v1387 = vadd.f32 %v1082, %v1386
      %v1388 = vpop.f32.mrb[0].mxu0
      %1389 = vmatprep.mubr.f32.mxu0 %v658
      %1390 = vmatmul.mubr.f32.gmra.mrb[0].mxu0 %v657
      %v1391 = vpop.f32.mrb[0].mxu0
      %v1392 = vadd.f32 %v1087, %v1391
      %v1393 = vpop.f32.mrb[0].mxu0
      %1394 = vmatprep.mubr.f32.mxu0 %v665
      %1395 = vmatmul.mubr.f32.gmra.mrb[0].mxu0 %v664
      %v1396 = vpop.f32.mrb[0].mxu0
      %v1397 = vadd.f32 %v1092, %v1396
      %v1398 = vpop.f32.mrb[0].mxu0
      %1399 = vmatprep.mubr.f32.mxu0 %v672
      %1400 = vmatmul.mubr.f32.gmra.mrb[0].mxu0 %v671
      %v1401 = vpop.f32.mrb[0].mxu0
      %v1402 = vadd.f32 %v1097, %v1401
      %v1403 = vpop.f32.mrb[0].mxu0
      %1404 = vdwg.mxu0
      %1405 = vmatprep.subr.mxu0 0.0
      %1406 = vmatpush1.msra.mxu0 %v740
      %1407 = vmatprep.subr.mxu0 0.0
      %1408 = vmatpush1.msra.mxu0 %v741
      %1409 = vmatprep.subr.mxu0 0.0
      %1410 = vmatpush1.msra.mxu0 %v742
      %1411 = vmatprep.subr.mxu0 0.0
      %1412 = vmatpush1.msra.mxu0 %v743
      %1413 = vmatprep.subr.mxu0 0.0
      %1414 = vmatpush1.msra.mxu0 %v744
      %1415 = vmatprep.subr.mxu0 0.0
      %1416 = vmatpush1.msra.mxu0 %v745
      %1417 = vmatprep.subr.mxu0 0.0
      %1418 = vmatpush1.msra.mxu0 %v746
      %1419 = vmatprep.subr.mxu0 0.0
      %1420 = vmatpush1.msra.mxu0 %v747
      %1421 = vmatprep.subr.mxu0 0.0
      %1422 = vmatpush1.msra.mxu0 %v748
      %1423 = vmatprep.subr.mxu0 0.0
      %1424 = vmatpush1.msra.mxu0 %v749
      %1425 = vmatprep.subr.mxu0 0.0
      %1426 = vmatpush1.msra.mxu0 %v750
      %1427 = vmatprep.subr.mxu0 0.0
      %1428 = vmatpush1.msra.mxu0 %v751
      %1429 = vmatprep.subr.mxu0 0.0
      %1430 = vmatpush1.msra.mxu0 %v752
      %1431 = vmatprep.subr.mxu0 0.0
      %1432 = vmatpush1.msra.mxu0 %v753
      %1433 = vmatprep.subr.mxu0 0.0
      %1434 = vmatpush1.msra.mxu0 %v754
      %1435 = vmatprep.subr.mxu0 0.0
      %1436 = vmatpush1.msra.mxu0 %v755
      %1437 = vmatprep.subr.mxu0 0.0
      %1438 = vmatpush1.msra.mxu0 %v756
      %1439 = vmatprep.subr.mxu0 0.0
      %1440 = vmatpush1.msra.mxu0 %v757
      %1441 = vmatprep.subr.mxu0 0.0
      %1442 = vmatpush1.msra.mxu0 %v758
      %1443 = vmatprep.subr.mxu0 0.0
      %1444 = vmatpush1.msra.mxu0 %v759
      %1445 = vmatprep.subr.mxu0 0.0
      %1446 = vmatpush1.msra.mxu0 %v760
      %1447 = vmatprep.subr.mxu0 0.0
      %1448 = vmatpush1.msra.mxu0 %v761
      %1449 = vmatprep.subr.mxu0 0.0
      %1450 = vmatpush1.msra.mxu0 %v762
      %1451 = vmatprep.subr.mxu0 0.0
      %1452 = vmatpush1.msra.mxu0 %v763
      %1453 = vmatprep.subr.mxu0 0.0
      %1454 = vmatpush1.msra.mxu0 %v764
      %1455 = vmatprep.subr.mxu0 0.0
      %1456 = vmatpush1.msra.mxu0 %v765
      %1457 = vmatprep.subr.mxu0 0.0
      %1458 = vmatpush1.msra.mxu0 %v766
      %1459 = vmatprep.subr.mxu0 0.0
      %1460 = vmatpush1.msra.mxu0 %v767
      %1461 = vmatprep.subr.mxu0 0.0
      %1462 = vmatpush1.msra.mxu0 %v768
      %1463 = vmatprep.subr.mxu0 0.0
      %1464 = vmatpush1.msra.mxu0 %v769
      %1465 = vmatprep.subr.mxu0 0.0
      %1466 = vmatpush1.msra.mxu0 %v770
      %1467 = vmatprep.subr.mxu0 0.0
      %1468 = vmatpush1.msra.mxu0 %v771
      %1469 = vmatprep.mubr.f32.mxu0 %v345
      %1470 = vmatmul.mubr.f32.gmra.mrb[0].mxu0 %v344
      %v1471 = vpop.f32.mrb[0].mxu0
      %v1472 = vadd.f32 %v1167, %v1471
      %v1473 = vpop.f32.mrb[0].mxu0
      %1474 = vmatprep.mubr.f32.mxu0 %v352
      %1475 = vmatmul.mubr.f32.gmra.mrb[0].mxu0 %v351
      %v1476 = vpop.f32.mrb[0].mxu0
      %v1477 = vadd.f32 %v1172, %v1476
      %v1478 = vpop.f32.mrb[0].mxu0
      %1479 = vmatprep.mubr.f32.mxu0 %v359
      %1480 = vmatmul.mubr.f32.gmra.mrb[0].mxu0 %v358
      %v1481 = vpop.f32.mrb[0].mxu0
      %v1482 = vadd.f32 %v1177, %v1481
      %v1483 = vpop.f32.mrb[0].mxu0
      %1484 = vmatprep.mubr.f32.mxu0 %v366
      %1485 = vmatmul.mubr.f32.gmra.mrb[0].mxu0 %v365
      %v1486 = vpop.f32.mrb[0].mxu0
      %v1487 = vadd.f32 %v1182, %v1486
      %v1488 = vpop.f32.mrb[0].mxu0
      %1489 = vmatprep.mubr.f32.mxu0 %v373
      %1490 = vmatmul.mubr.f32.gmra.mrb[0].mxu0 %v372
      %v1491 = vpop.f32.mrb[0].mxu0
      %v1492 = vadd.f32 %v1187, %v1491
      %v1493 = vpop.f32.mrb[0].mxu0
      %1494 = vmatprep.mubr.f32.mxu0 %v380
      %1495 = vmatmul.mubr.f32.gmra.mrb[0].mxu0 %v379
      %v1496 = vpop.f32.mrb[0].mxu0
      %v1497 = vadd.f32 %v1192, %v1496
      %v1498 = vpop.f32.mrb[0].mxu0
      %1499 = vmatprep.mubr.f32.mxu0 %v387
      %1500 = vmatmul.mubr.f32.gmra.mrb[0].mxu0 %v386
      %v1501 = vpop.f32.mrb[0].mxu0
      %v1502 = vadd.f32 %v1197, %v1501
      %v1503 = vpop.f32.mrb[0].mxu0
      %1504 = vmatprep.mubr.f32.mxu0 %v394
      %1505 = vmatmul.mubr.f32.gmra.mrb[0].mxu0 %v393
      %v1506 = vpop.f32.mrb[0].mxu0
      %v1507 = vadd.f32 %v1202, %v1506
      %v1508 = vpop.f32.mrb[0].mxu0
      %1509 = vmatprep.mubr.f32.mxu0 %v401
      %1510 = vmatmul.mubr.f32.gmra.mrb[0].mxu0 %v400
      %v1511 = vpop.f32.mrb[0].mxu0
      %v1512 = vadd.f32 %v1207, %v1511
      %v1513 = vpop.f32.mrb[0].mxu0
      %1514 = vmatprep.mubr.f32.mxu0 %v408
      %1515 = vmatmul.mubr.f32.gmra.mrb[0].mxu0 %v407
      %v1516 = vpop.f32.mrb[0].mxu0
      %v1517 = vadd.f32 %v1212, %v1516
      %v1518 = vpop.f32.mrb[0].mxu0
      %1519 = vmatprep.mubr.f32.mxu0 %v415
      %1520 = vmatmul.mubr.f32.gmra.mrb[0].mxu0 %v414
      %v1521 = vpop.f32.mrb[0].mxu0
      %v1522 = vadd.f32 %v1217, %v1521
      %v1523 = vpop.f32.mrb[0].mxu0
      %1524 = vmatprep.mubr.f32.mxu0 %v422
      %1525 = vmatmul.mubr.f32.gmra.mrb[0].mxu0 %v421
      %v1526 = vpop.f32.mrb[0].mxu0
      %v1527 = vadd.f32 %v1222, %v1526
      %v1528 = vpop.f32.mrb[0].mxu0
      %1529 = vmatprep.mubr.f32.mxu0 %v429
      %1530 = vmatmul.mubr.f32.gmra.mrb[0].mxu0 %v428
      %v1531 = vpop.f32.mrb[0].mxu0
      %v1532 = vadd.f32 %v1227, %v1531
      %v1533 = vpop.f32.mrb[0].mxu0
      %1534 = vmatprep.mubr.f32.mxu0 %v436
      %1535 = vmatmul.mubr.f32.gmra.mrb[0].mxu0 %v435
      %v1536 = vpop.f32.mrb[0].mxu0
      %v1537 = vadd.f32 %v1232, %v1536
      %v1538 = vpop.f32.mrb[0].mxu0
      %1539 = vmatprep.mubr.f32.mxu0 %v443
      %1540 = vmatmul.mubr.f32.gmra.mrb[0].mxu0 %v442
      %v1541 = vpop.f32.mrb[0].mxu0
      %v1542 = vadd.f32 %v1237, %v1541
      %v1543 = vpop.f32.mrb[0].mxu0
      %1544 = vmatprep.mubr.f32.mxu0 %v450
      %1545 = vmatmul.mubr.f32.gmra.mrb[0].mxu0 %v449
      %v1546 = vpop.f32.mrb[0].mxu0
      %v1547 = vadd.f32 %v1242, %v1546
      %v1548 = vpop.f32.mrb[0].mxu0
      %1549 = vmatprep.mubr.f32.mxu0 %v457
      %1550 = vmatmul.mubr.f32.gmra.mrb[0].mxu0 %v456
      %v1551 = vpop.f32.mrb[0].mxu0
      %v1552 = vadd.f32 %v1247, %v1551
      %v1553 = vpop.f32.mrb[0].mxu0
      %1554 = vmatprep.mubr.f32.mxu0 %v464
      %1555 = vmatmul.mubr.f32.gmra.mrb[0].mxu0 %v463
      %v1556 = vpop.f32.mrb[0].mxu0
      %v1557 = vadd.f32 %v1252, %v1556
      %v1558 = vpop.f32.mrb[0].mxu0
      %1559 = vmatprep.mubr.f32.mxu0 %v471
      %1560 = vmatmul.mubr.f32.gmra.mrb[0].mxu0 %v470
      %v1561 = vpop.f32.mrb[0].mxu0
      %v1562 = vadd.f32 %v1257, %v1561
      %v1563 = vpop.f32.mrb[0].mxu0
      %1564 = vmatprep.mubr.f32.mxu0 %v478
      %1565 = vmatmul.mubr.f32.gmra.mrb[0].mxu0 %v477
      %v1566 = vpop.f32.mrb[0].mxu0
      %v1567 = vadd.f32 %v1262, %v1566
      %v1568 = vpop.f32.mrb[0].mxu0
      %1569 = vmatprep.mubr.f32.mxu0 %v485
      %1570 = vmatmul.mubr.f32.gmra.mrb[0].mxu0 %v484
      %v1571 = vpop.f32.mrb[0].mxu0
      %v1572 = vadd.f32 %v1267, %v1571
      %v1573 = vpop.f32.mrb[0].mxu0
      %1574 = vmatprep.mubr.f32.mxu0 %v492
      %1575 = vmatmul.mubr.f32.gmra.mrb[0].mxu0 %v491
      %v1576 = vpop.f32.mrb[0].mxu0
      %v1577 = vadd.f32 %v1272, %v1576
      %v1578 = vpop.f32.mrb[0].mxu0
      %1579 = vmatprep.mubr.f32.mxu0 %v499
      %1580 = vmatmul.mubr.f32.gmra.mrb[0].mxu0 %v498
      %v1581 = vpop.f32.mrb[0].mxu0
      %v1582 = vadd.f32 %v1277, %v1581
      %v1583 = vpop.f32.mrb[0].mxu0
      %1584 = vmatprep.mubr.f32.mxu0 %v506
      %1585 = vmatmul.mubr.f32.gmra.mrb[0].mxu0 %v505
      %v1586 = vpop.f32.mrb[0].mxu0
      %v1587 = vadd.f32 %v1282, %v1586
      %v1588 = vpop.f32.mrb[0].mxu0
      %1589 = vmatprep.mubr.f32.mxu0 %v513
      %1590 = vmatmul.mubr.f32.gmra.mrb[0].mxu0 %v512
      %v1591 = vpop.f32.mrb[0].mxu0
      %v1592 = vadd.f32 %v1287, %v1591
      %v1593 = vpop.f32.mrb[0].mxu0
      %1594 = vmatprep.mubr.f32.mxu0 %v520
      %1595 = vmatmul.mubr.f32.gmra.mrb[0].mxu0 %v519
      %v1596 = vpop.f32.mrb[0].mxu0
      %v1597 = vadd.f32 %v1292, %v1596
      %v1598 = vpop.f32.mrb[0].mxu0
      %1599 = vmatprep.mubr.f32.mxu0 %v527
      %1600 = vmatmul.mubr.f32.gmra.mrb[0].mxu0 %v526
      %v1601 = vpop.f32.mrb[0].mxu0
      %v1602 = vadd.f32 %v1297, %v1601
      %v1603 = vpop.f32.mrb[0].mxu0
      %1604 = vmatprep.mubr.f32.mxu0 %v534
      %1605 = vmatmul.mubr.f32.gmra.mrb[0].mxu0 %v533
      %v1606 = vpop.f32.mrb[0].mxu0
      %v1607 = vadd.f32 %v1302, %v1606
      %v1608 = vpop.f32.mrb[0].mxu0
      %1609 = vmatprep.mubr.f32.mxu0 %v541
      %1610 = vmatmul.mubr.f32.gmra.mrb[0].mxu0 %v540
      %v1611 = vpop.f32.mrb[0].mxu0
      %v1612 = vadd.f32 %v1307, %v1611
      %v1613 = vpop.f32.mrb[0].mxu0
      %1614 = vmatprep.mubr.f32.mxu0 %v548
      %1615 = vmatmul.mubr.f32.gmra.mrb[0].mxu0 %v547
      %v1616 = vpop.f32.mrb[0].mxu0
      %v1617 = vadd.f32 %v1312, %v1616
      %v1618 = vpop.f32.mrb[0].mxu0
      %1619 = vmatprep.mubr.f32.mxu0 %v555
      %1620 = vmatmul.mubr.f32.gmra.mrb[0].mxu0 %v554
      %v1621 = vpop.f32.mrb[0].mxu0
      %v1622 = vadd.f32 %v1317, %v1621
      %v1623 = vpop.f32.mrb[0].mxu0
      %1624 = vmatprep.mubr.f32.mxu0 %v562
      %1625 = vmatmul.mubr.f32.gmra.mrb[0].mxu0 %v561
      %v1626 = vpop.f32.mrb[0].mxu0
      %v1627 = vadd.f32 %v1322, %v1626
      %v1628 = vpop.f32.mrb[0].mxu0
      %1629 = vmatprep.mubr.f32.mxu0 %v569
      %1630 = vmatmul.mubr.f32.gmra.mrb[0].mxu0 %v568
      %v1631 = vpop.f32.mrb[0].mxu0
      %v1632 = vadd.f32 %v1327, %v1631
      %v1633 = vpop.f32.mrb[0].mxu0
      %1634 = vmatprep.mubr.f32.mxu0 %v576
      %1635 = vmatmul.mubr.f32.gmra.mrb[0].mxu0 %v575
      %v1636 = vpop.f32.mrb[0].mxu0
      %v1637 = vadd.f32 %v1332, %v1636
      %v1638 = vpop.f32.mrb[0].mxu0
      %1639 = vmatprep.mubr.f32.mxu0 %v583
      %1640 = vmatmul.mubr.f32.gmra.mrb[0].mxu0 %v582
      %v1641 = vpop.f32.mrb[0].mxu0
      %v1642 = vadd.f32 %v1337, %v1641
      %v1643 = vpop.f32.mrb[0].mxu0
      %1644 = vmatprep.mubr.f32.mxu0 %v590
      %1645 = vmatmul.mubr.f32.gmra.mrb[0].mxu0 %v589
      %v1646 = vpop.f32.mrb[0].mxu0
      %v1647 = vadd.f32 %v1342, %v1646
      %v1648 = vpop.f32.mrb[0].mxu0
      %1649 = vmatprep.mubr.f32.mxu0 %v597
      %1650 = vmatmul.mubr.f32.gmra.mrb[0].mxu0 %v596
      %v1651 = vpop.f32.mrb[0].mxu0
      %v1652 = vadd.f32 %v1347, %v1651
      %v1653 = vpop.f32.mrb[0].mxu0
      %1654 = vmatprep.mubr.f32.mxu0 %v604
      %1655 = vmatmul.mubr.f32.gmra.mrb[0].mxu0 %v603
      %v1656 = vpop.f32.mrb[0].mxu0
      %v1657 = vadd.f32 %v1352, %v1656
      %v1658 = vpop.f32.mrb[0].mxu0
      %1659 = vmatprep.mubr.f32.mxu0 %v611
      %1660 = vmatmul.mubr.f32.gmra.mrb[0].mxu0 %v610
      %v1661 = vpop.f32.mrb[0].mxu0
      %v1662 = vadd.f32 %v1357, %v1661
      %v1663 = vpop.f32.mrb[0].mxu0
      %1664 = vmatprep.mubr.f32.mxu0 %v618
      %1665 = vmatmul.mubr.f32.gmra.mrb[0].mxu0 %v617
      %v1666 = vpop.f32.mrb[0].mxu0
      %v1667 = vadd.f32 %v1362, %v1666
      %v1668 = vpop.f32.mrb[0].mxu0
      %1669 = vmatprep.mubr.f32.mxu0 %v625
      %1670 = vmatmul.mubr.f32.gmra.mrb[0].mxu0 %v624
      %v1671 = vpop.f32.mrb[0].mxu0
      %v1672 = vadd.f32 %v1367, %v1671
      %v1673 = vpop.f32.mrb[0].mxu0
      %1674 = vmatprep.mubr.f32.mxu0 %v632
      %1675 = vmatmul.mubr.f32.gmra.mrb[0].mxu0 %v631
      %v1676 = vpop.f32.mrb[0].mxu0
      %v1677 = vadd.f32 %v1372, %v1676
      %v1678 = vpop.f32.mrb[0].mxu0
      %1679 = vmatprep.mubr.f32.mxu0 %v639
      %1680 = vmatmul.mubr.f32.gmra.mrb[0].mxu0 %v638
      %v1681 = vpop.f32.mrb[0].mxu0
      %v1682 = vadd.f32 %v1377, %v1681
      %v1683 = vpop.f32.mrb[0].mxu0
      %1684 = vmatprep.mubr.f32.mxu0 %v646
      %1685 = vmatmul.mubr.f32.gmra.mrb[0].mxu0 %v645
      %v1686 = vpop.f32.mrb[0].mxu0
      %v1687 = vadd.f32 %v1382, %v1686
      %v1688 = vpop.f32.mrb[0].mxu0
      %1689 = vmatprep.mubr.f32.mxu0 %v653
      %1690 = vmatmul.mubr.f32.gmra.mrb[0].mxu0 %v652
      %v1691 = vpop.f32.mrb[0].mxu0
      %v1692 = vadd.f32 %v1387, %v1691
      %v1693 = vpop.f32.mrb[0].mxu0
      %1694 = vmatprep.mubr.f32.mxu0 %v660
      %1695 = vmatmul.mubr.f32.gmra.mrb[0].mxu0 %v659
      %v1696 = vpop.f32.mrb[0].mxu0
      %v1697 = vadd.f32 %v1392, %v1696
      %v1698 = vpop.f32.mrb[0].mxu0
      %1699 = vmatprep.mubr.f32.mxu0 %v667
      %1700 = vmatmul.mubr.f32.gmra.mrb[0].mxu0 %v666
      %v1701 = vpop.f32.mrb[0].mxu0
      %v1702 = vadd.f32 %v1397, %v1701
      %v1703 = vpop.f32.mrb[0].mxu0
      %1704 = vmatprep.mubr.f32.mxu0 %v674
      %1705 = vmatmul.mubr.f32.gmra.mrb[0].mxu0 %v673
      %v1706 = vpop.f32.mrb[0].mxu0
      %v1707 = vadd.f32 %v1402, %v1706
      %v1708 = vpop.f32.mrb[0].mxu0
      %1709 = vdwg.mxu0
      %1710 = vmatprep.subr.mxu0 0.0
      %1711 = vmatpush1.msra.mxu0 %v772
      %1712 = vmatprep.subr.mxu0 0.0
      %1713 = vmatpush1.msra.mxu0 %v773
      %1714 = vmatprep.subr.mxu0 0.0
      %1715 = vmatpush1.msra.mxu0 %v774
      %1716 = vmatprep.subr.mxu0 0.0
      %1717 = vmatpush1.msra.mxu0 %v775
      %1718 = vmatprep.subr.mxu0 0.0
      %1719 = vmatpush1.msra.mxu0 %v776
      %1720 = vmatprep.subr.mxu0 0.0
      %1721 = vmatpush1.msra.mxu0 %v777
      %1722 = vmatprep.subr.mxu0 0.0
      %1723 = vmatpush1.msra.mxu0 %v778
      %1724 = vmatprep.subr.mxu0 0.0
      %1725 = vmatpush1.msra.mxu0 %v779
      %1726 = vmatprep.subr.mxu0 0.0
      %1727 = vmatpush1.msra.mxu0 %v780
      %1728 = vmatprep.subr.mxu0 0.0
      %1729 = vmatpush1.msra.mxu0 %v781
      %1730 = vmatprep.subr.mxu0 0.0
      %1731 = vmatpush1.msra.mxu0 %v782
      %1732 = vmatprep.subr.mxu0 0.0
      %1733 = vmatpush1.msra.mxu0 %v783
      %1734 = vmatprep.subr.mxu0 0.0
      %1735 = vmatpush1.msra.mxu0 %v784
      %1736 = vmatprep.subr.mxu0 0.0
      %1737 = vmatpush1.msra.mxu0 %v785
      %1738 = vmatprep.subr.mxu0 0.0
      %1739 = vmatpush1.msra.mxu0 %v786
      %1740 = vmatprep.subr.mxu0 0.0
      %1741 = vmatpush1.msra.mxu0 %v787
      %1742 = vmatprep.subr.mxu0 0.0
      %1743 = vmatpush1.msra.mxu0 0.0
      %1744 = vmatprep.subr.mxu0 0.0
      %1745 = vmatpush1.msra.mxu0 0.0
      %1746 = vmatprep.subr.mxu0 0.0
      %1747 = vmatpush1.msra.mxu0 0.0
      %1748 = vmatprep.subr.mxu0 0.0
      %1749 = vmatpush1.msra.mxu0 0.0
      %1750 = vmatprep.subr.mxu0 0.0
      %1751 = vmatpush1.msra.mxu0 0.0
      %1752 = vmatprep.subr.mxu0 0.0
      %1753 = vmatpush1.msra.mxu0 0.0
      %1754 = vmatprep.subr.mxu0 0.0
      %1755 = vmatpush1.msra.mxu0 0.0
      %1756 = vmatprep.subr.mxu0 0.0
      %1757 = vmatpush1.msra.mxu0 0.0
      %1758 = vmatprep.subr.mxu0 0.0
      %1759 = vmatpush1.msra.mxu0 0.0
      %1760 = vmatprep.subr.mxu0 0.0
      %1761 = vmatpush1.msra.mxu0 0.0
      %1762 = vmatprep.subr.mxu0 0.0
      %1763 = vmatpush1.msra.mxu0 0.0
      %1764 = vmatprep.subr.mxu0 0.0
      %1765 = vmatpush1.msra.mxu0 0.0
      %1766 = vmatprep.subr.mxu0 0.0
      %1767 = vmatpush1.msra.mxu0 0.0
      %1768 = vmatprep.subr.mxu0 0.0
      %1769 = vmatpush1.msra.mxu0 0.0
      %1770 = vmatprep.subr.mxu0 0.0
      %1771 = vmatpush1.msra.mxu0 0.0
      %1772 = vmatprep.subr.mxu0 0.0
      %1773 = vmatpush1.msra.mxu0 0.0
      %1774 = vmatprep.mubr.f32.mxu0 0.0
      %1775 = vmatmul.mubr.f32.gmra.mrb[0].mxu0 %v346
      %v1776 = vpop.f32.mrb[0].mxu0
      %v1777 = vadd.f32 %v1472, %v1776
      %v1778 = vpop.f32.mrb[0].mxu0
      %1779 = vmatprep.mubr.f32.mxu0 0.0
      %1780 = vmatmul.mubr.f32.gmra.mrb[0].mxu0 %v353
      %v1781 = vpop.f32.mrb[0].mxu0
      %v1782 = vadd.f32 %v1477, %v1781
      %v1783 = vpop.f32.mrb[0].mxu0
      %1784 = vmatprep.mubr.f32.mxu0 0.0
      %1785 = vmatmul.mubr.f32.gmra.mrb[0].mxu0 %v360
      %v1786 = vpop.f32.mrb[0].mxu0
      %v1787 = vadd.f32 %v1482, %v1786
      %v1788 = vpop.f32.mrb[0].mxu0
      %1789 = vmatprep.mubr.f32.mxu0 0.0
      %1790 = vmatmul.mubr.f32.gmra.mrb[0].mxu0 %v367
      %v1791 = vpop.f32.mrb[0].mxu0
      %v1792 = vadd.f32 %v1487, %v1791
      %v1793 = vpop.f32.mrb[0].mxu0
      %1794 = vmatprep.mubr.f32.mxu0 0.0
      %1795 = vmatmul.mubr.f32.gmra.mrb[0].mxu0 %v374
      %v1796 = vpop.f32.mrb[0].mxu0
      %v1797 = vadd.f32 %v1492, %v1796
      %v1798 = vpop.f32.mrb[0].mxu0
      %1799 = vmatprep.mubr.f32.mxu0 0.0
      %1800 = vmatmul.mubr.f32.gmra.mrb[0].mxu0 %v381
      %v1801 = vpop.f32.mrb[0].mxu0
      %v1802 = vadd.f32 %v1497, %v1801
      %v1803 = vpop.f32.mrb[0].mxu0
      %1804 = vmatprep.mubr.f32.mxu0 0.0
      %1805 = vmatmul.mubr.f32.gmra.mrb[0].mxu0 %v388
      %v1806 = vpop.f32.mrb[0].mxu0
      %v1807 = vadd.f32 %v1502, %v1806
      %v1808 = vpop.f32.mrb[0].mxu0
      %1809 = vmatprep.mubr.f32.mxu0 0.0
      %1810 = vmatmul.mubr.f32.gmra.mrb[0].mxu0 %v395
      %v1811 = vpop.f32.mrb[0].mxu0
      %v1812 = vadd.f32 %v1507, %v1811
      %v1813 = vpop.f32.mrb[0].mxu0
      %1814 = vmatprep.mubr.f32.mxu0 0.0
      %1815 = vmatmul.mubr.f32.gmra.mrb[0].mxu0 %v402
      %v1816 = vpop.f32.mrb[0].mxu0
      %v1817 = vadd.f32 %v1512, %v1816
      %v1818 = vpop.f32.mrb[0].mxu0
      %1819 = vmatprep.mubr.f32.mxu0 0.0
      %1820 = vmatmul.mubr.f32.gmra.mrb[0].mxu0 %v409
      %v1821 = vpop.f32.mrb[0].mxu0
      %v1822 = vadd.f32 %v1517, %v1821
      %v1823 = vpop.f32.mrb[0].mxu0
      %1824 = vmatprep.mubr.f32.mxu0 0.0
      %1825 = vmatmul.mubr.f32.gmra.mrb[0].mxu0 %v416
      %v1826 = vpop.f32.mrb[0].mxu0
      %v1827 = vadd.f32 %v1522, %v1826
      %v1828 = vpop.f32.mrb[0].mxu0
      %1829 = vmatprep.mubr.f32.mxu0 0.0
      %1830 = vmatmul.mubr.f32.gmra.mrb[0].mxu0 %v423
      %v1831 = vpop.f32.mrb[0].mxu0
      %v1832 = vadd.f32 %v1527, %v1831
      %v1833 = vpop.f32.mrb[0].mxu0
      %1834 = vmatprep.mubr.f32.mxu0 0.0
      %1835 = vmatmul.mubr.f32.gmra.mrb[0].mxu0 %v430
      %v1836 = vpop.f32.mrb[0].mxu0
      %v1837 = vadd.f32 %v1532, %v1836
      %v1838 = vpop.f32.mrb[0].mxu0
      %1839 = vmatprep.mubr.f32.mxu0 0.0
      %1840 = vmatmul.mubr.f32.gmra.mrb[0].mxu0 %v437
      %v1841 = vpop.f32.mrb[0].mxu0
      %v1842 = vadd.f32 %v1537, %v1841
      %v1843 = vpop.f32.mrb[0].mxu0
      %1844 = vmatprep.mubr.f32.mxu0 0.0
      %1845 = vmatmul.mubr.f32.gmra.mrb[0].mxu0 %v444
      %v1846 = vpop.f32.mrb[0].mxu0
      %v1847 = vadd.f32 %v1542, %v1846
      %v1848 = vpop.f32.mrb[0].mxu0
      %1849 = vmatprep.mubr.f32.mxu0 0.0
      %1850 = vmatmul.mubr.f32.gmra.mrb[0].mxu0 %v451
      %v1851 = vpop.f32.mrb[0].mxu0
      %v1852 = vadd.f32 %v1547, %v1851
      %v1853 = vpop.f32.mrb[0].mxu0
      %1854 = vmatprep.mubr.f32.mxu0 0.0
      %1855 = vmatmul.mubr.f32.gmra.mrb[0].mxu0 %v458
      %v1856 = vpop.f32.mrb[0].mxu0
      %v1857 = vadd.f32 %v1552, %v1856
      %v1858 = vpop.f32.mrb[0].mxu0
      %1859 = vmatprep.mubr.f32.mxu0 0.0
      %1860 = vmatmul.mubr.f32.gmra.mrb[0].mxu0 %v465
      %v1861 = vpop.f32.mrb[0].mxu0
      %v1862 = vadd.f32 %v1557, %v1861
      %v1863 = vpop.f32.mrb[0].mxu0
      %1864 = vmatprep.mubr.f32.mxu0 0.0
      %1865 = vmatmul.mubr.f32.gmra.mrb[0].mxu0 %v472
      %v1866 = vpop.f32.mrb[0].mxu0
      %v1867 = vadd.f32 %v1562, %v1866
      %v1868 = vpop.f32.mrb[0].mxu0
      %1869 = vmatprep.mubr.f32.mxu0 0.0
      %1870 = vmatmul.mubr.f32.gmra.mrb[0].mxu0 %v479
      %v1871 = vpop.f32.mrb[0].mxu0
      %v1872 = vadd.f32 %v1567, %v1871
      %v1873 = vpop.f32.mrb[0].mxu0
      %1874 = vmatprep.mubr.f32.mxu0 0.0
      %1875 = vmatmul.mubr.f32.gmra.mrb[0].mxu0 %v486
      %v1876 = vpop.f32.mrb[0].mxu0
      %v1877 = vadd.f32 %v1572, %v1876
      %v1878 = vpop.f32.mrb[0].mxu0
      %1879 = vmatprep.mubr.f32.mxu0 0.0
      %1880 = vmatmul.mubr.f32.gmra.mrb[0].mxu0 %v493
      %v1881 = vpop.f32.mrb[0].mxu0
      %v1882 = vadd.f32 %v1577, %v1881
      %v1883 = vpop.f32.mrb[0].mxu0
      %1884 = vmatprep.mubr.f32.mxu0 0.0
      %1885 = vmatmul.mubr.f32.gmra.mrb[0].mxu0 %v500
      %v1886 = vpop.f32.mrb[0].mxu0
      %v1887 = vadd.f32 %v1582, %v1886
      %v1888 = vpop.f32.mrb[0].mxu0
      %1889 = vmatprep.mubr.f32.mxu0 0.0
      %1890 = vmatmul.mubr.f32.gmra.mrb[0].mxu0 %v507
      %v1891 = vpop.f32.mrb[0].mxu0
      %v1892 = vadd.f32 %v1587, %v1891
      %v1893 = vpop.f32.mrb[0].mxu0
      %1894 = vmatprep.mubr.f32.mxu0 0.0
      %1895 = vmatmul.mubr.f32.gmra.mrb[0].mxu0 %v514
      %v1896 = vpop.f32.mrb[0].mxu0
      %v1897 = vadd.f32 %v1592, %v1896
      %v1898 = vpop.f32.mrb[0].mxu0
      %1899 = vmatprep.mubr.f32.mxu0 0.0
      %1900 = vmatmul.mubr.f32.gmra.mrb[0].mxu0 %v521
      %v1901 = vpop.f32.mrb[0].mxu0
      %v1902 = vadd.f32 %v1597, %v1901
      %v1903 = vpop.f32.mrb[0].mxu0
      %1904 = vmatprep.mubr.f32.mxu0 0.0
      %1905 = vmatmul.mubr.f32.gmra.mrb[0].mxu0 %v528
      %v1906 = vpop.f32.mrb[0].mxu0
      %v1907 = vadd.f32 %v1602, %v1906
      %v1908 = vpop.f32.mrb[0].mxu0
      %1909 = vmatprep.mubr.f32.mxu0 0.0
      %1910 = vmatmul.mubr.f32.gmra.mrb[0].mxu0 %v535
      %v1911 = vpop.f32.mrb[0].mxu0
      %v1912 = vadd.f32 %v1607, %v1911
      %v1913 = vpop.f32.mrb[0].mxu0
      %1914 = vmatprep.mubr.f32.mxu0 0.0
      %1915 = vmatmul.mubr.f32.gmra.mrb[0].mxu0 %v542
      %v1916 = vpop.f32.mrb[0].mxu0
      %v1917 = vadd.f32 %v1612, %v1916
      %v1918 = vpop.f32.mrb[0].mxu0
      %1919 = vmatprep.mubr.f32.mxu0 0.0
      %1920 = vmatmul.mubr.f32.gmra.mrb[0].mxu0 %v549
      %v1921 = vpop.f32.mrb[0].mxu0
      %v1922 = vadd.f32 %v1617, %v1921
      %v1923 = vpop.f32.mrb[0].mxu0
      %1924 = vmatprep.mubr.f32.mxu0 0.0
      %1925 = vmatmul.mubr.f32.gmra.mrb[0].mxu0 %v556
      %v1926 = vpop.f32.mrb[0].mxu0
      %v1927 = vadd.f32 %v1622, %v1926
      %v1928 = vpop.f32.mrb[0].mxu0
      %1929 = vmatprep.mubr.f32.mxu0 0.0
      %1930 = vmatmul.mubr.f32.gmra.mrb[0].mxu0 %v563
      %v1931 = vpop.f32.mrb[0].mxu0
      %v1932 = vadd.f32 %v1627, %v1931
      %v1933 = vpop.f32.mrb[0].mxu0
      %1934 = vmatprep.mubr.f32.mxu0 0.0
      %1935 = vmatmul.mubr.f32.gmra.mrb[0].mxu0 %v570
      %v1936 = vpop.f32.mrb[0].mxu0
      %v1937 = vadd.f32 %v1632, %v1936
      %v1938 = vpop.f32.mrb[0].mxu0
      %1939 = vmatprep.mubr.f32.mxu0 0.0
      %1940 = vmatmul.mubr.f32.gmra.mrb[0].mxu0 %v577
      %v1941 = vpop.f32.mrb[0].mxu0
      %v1942 = vadd.f32 %v1637, %v1941
      %v1943 = vpop.f32.mrb[0].mxu0
      %1944 = vmatprep.mubr.f32.mxu0 0.0
      %1945 = vmatmul.mubr.f32.gmra.mrb[0].mxu0 %v584
      %v1946 = vpop.f32.mrb[0].mxu0
      %v1947 = vadd.f32 %v1642, %v1946
      %v1948 = vpop.f32.mrb[0].mxu0
      %1949 = vmatprep.mubr.f32.mxu0 0.0
      %1950 = vmatmul.mubr.f32.gmra.mrb[0].mxu0 %v591
      %v1951 = vpop.f32.mrb[0].mxu0
      %v1952 = vadd.f32 %v1647, %v1951
      %v1953 = vpop.f32.mrb[0].mxu0
      %1954 = vmatprep.mubr.f32.mxu0 0.0
      %1955 = vmatmul.mubr.f32.gmra.mrb[0].mxu0 %v598
      %v1956 = vpop.f32.mrb[0].mxu0
      %v1957 = vadd.f32 %v1652, %v1956
      %v1958 = vpop.f32.mrb[0].mxu0
      %1959 = vmatprep.mubr.f32.mxu0 0.0
      %1960 = vmatmul.mubr.f32.gmra.mrb[0].mxu0 %v605
      %v1961 = vpop.f32.mrb[0].mxu0
      %v1962 = vadd.f32 %v1657, %v1961
      %v1963 = vpop.f32.mrb[0].mxu0
      %1964 = vmatprep.mubr.f32.mxu0 0.0
      %1965 = vmatmul.mubr.f32.gmra.mrb[0].mxu0 %v612
      %v1966 = vpop.f32.mrb[0].mxu0
      %v1967 = vadd.f32 %v1662, %v1966
      %v1968 = vpop.f32.mrb[0].mxu0
      %1969 = vmatprep.mubr.f32.mxu0 0.0
      %1970 = vmatmul.mubr.f32.gmra.mrb[0].mxu0 %v619
      %v1971 = vpop.f32.mrb[0].mxu0
      %v1972 = vadd.f32 %v1667, %v1971
      %v1973 = vpop.f32.mrb[0].mxu0
      %1974 = vmatprep.mubr.f32.mxu0 0.0
      %1975 = vmatmul.mubr.f32.gmra.mrb[0].mxu0 %v626
      %v1976 = vpop.f32.mrb[0].mxu0
      %v1977 = vadd.f32 %v1672, %v1976
      %v1978 = vpop.f32.mrb[0].mxu0
      %1979 = vmatprep.mubr.f32.mxu0 0.0
      %1980 = vmatmul.mubr.f32.gmra.mrb[0].mxu0 %v633
      %v1981 = vpop.f32.mrb[0].mxu0
      %v1982 = vadd.f32 %v1677, %v1981
      %v1983 = vpop.f32.mrb[0].mxu0
      %1984 = vmatprep.mubr.f32.mxu0 0.0
      %1985 = vmatmul.mubr.f32.gmra.mrb[0].mxu0 %v640
      %v1986 = vpop.f32.mrb[0].mxu0
      %v1987 = vadd.f32 %v1682, %v1986
      %v1988 = vpop.f32.mrb[0].mxu0
      %1989 = vmatprep.mubr.f32.mxu0 0.0
      %1990 = vmatmul.mubr.f32.gmra.mrb[0].mxu0 %v647
      %v1991 = vpop.f32.mrb[0].mxu0
      %v1992 = vadd.f32 %v1687, %v1991
      %v1993 = vpop.f32.mrb[0].mxu0
      %1994 = vmatprep.mubr.f32.mxu0 0.0
      %1995 = vmatmul.mubr.f32.gmra.mrb[0].mxu0 %v654
      %v1996 = vpop.f32.mrb[0].mxu0
      %v1997 = vadd.f32 %v1692, %v1996
      %v1998 = vpop.f32.mrb[0].mxu0
      %1999 = vmatprep.mubr.f32.mxu0 0.0
      %2000 = vmatmul.mubr.f32.gmra.mrb[0].mxu0 %v661
      %v2001 = vpop.f32.mrb[0].mxu0
      %v2002 = vadd.f32 %v1697, %v2001
      %v2003 = vpop.f32.mrb[0].mxu0
      %2004 = vmatprep.mubr.f32.mxu0 0.0
      %2005 = vmatmul.mubr.f32.gmra.mrb[0].mxu0 %v668
      %v2006 = vpop.f32.mrb[0].mxu0
      %v2007 = vadd.f32 %v1702, %v2006
      %v2008 = vpop.f32.mrb[0].mxu0
      %2009 = vmatprep.mubr.f32.mxu0 0.0
      %2010 = vmatmul.mubr.f32.gmra.mrb[0].mxu0 %v675
      %v2011 = vpop.f32.mrb[0].mxu0
      %v2012 = vadd.f32 %v1707, %v2011
      %v2013 = vpop.f32.mrb[0].mxu0
      %2014 = vdwg.mxu0
      %v2015 = vmax.f32 %v1777, 0.0
      %v2016 = vmax.f32 %v1782, 0.0
      %v2017 = vmax.f32 %v1787, 0.0
      %v2018 = vmax.f32 %v1792, 0.0
      %v2019 = vmax.f32 %v1797, 0.0
      %v2020 = vmax.f32 %v1802, 0.0
      %v2021 = vmax.f32 %v1807, 0.0
      %v2022 = vmax.f32 %v1812, 0.0
      %v2023 = vmax.f32 %v1817, 0.0
      %v2024 = vmax.f32 %v1822, 0.0
      %v2025 = vmax.f32 %v1827, 0.0
      %v2026 = vmax.f32 %v1832, 0.0
      %v2027 = vmax.f32 %v1837, 0.0
      %v2028 = vmax.f32 %v1842, 0.0
      %v2029 = vmax.f32 %v1847, 0.0
      %v2030 = vmax.f32 %v1852, 0.0
      %v2031 = vmax.f32 %v1857, 0.0
      %v2032 = vmax.f32 %v1862, 0.0
      %v2033 = vmax.f32 %v1867, 0.0
      %v2034 = vmax.f32 %v1872, 0.0
      %v2035 = vmax.f32 %v1877, 0.0
      %v2036 = vmax.f32 %v1882, 0.0
      %v2037 = vmax.f32 %v1887, 0.0
      %v2038 = vmax.f32 %v1892, 0.0
      %v2039 = vmax.f32 %v1897, 0.0
      %v2040 = vmax.f32 %v1902, 0.0
      %v2041 = vmax.f32 %v1907, 0.0
      %v2042 = vmax.f32 %v1912, 0.0
      %v2043 = vmax.f32 %v1917, 0.0
      %v2044 = vmax.f32 %v1922, 0.0
      %v2045 = vmax.f32 %v1927, 0.0
      %v2046 = vmax.f32 %v1932, 0.0
      %v2047 = vmax.f32 %v1937, 0.0
      %v2048 = vmax.f32 %v1942, 0.0
      %v2049 = vmax.f32 %v1947, 0.0
      %v2050 = vmax.f32 %v1952, 0.0
      %v2051 = vmax.f32 %v1957, 0.0
      %v2052 = vmax.f32 %v1962, 0.0
      %v2053 = vmax.f32 %v1967, 0.0
      %v2054 = vmax.f32 %v1972, 0.0
      %v2055 = vmax.f32 %v1977, 0.0
      %v2056 = vmax.f32 %v1982, 0.0
      %v2057 = vmax.f32 %v1987, 0.0
      %v2058 = vmax.f32 %v1992, 0.0
      %v2059 = vmax.f32 %v1997, 0.0
      %v2060 = vmax.f32 %v2002, 0.0
      %v2061 = vmax.f32 %v2007, 0.0
      %v2062 = vmax.f32 %v2012, 0.0
      %v2063 = vld [vmem:[%s326] sm:$0xff]
      %v2064 = vld [vmem:[%s326 + $0x8] sm:$0xff]
      %v2065 = vld [vmem:[%s326 + $0x10] sm:$0xff]
      %v2066 = vld [vmem:[%s326 + $0x18] sm:$0xff]
      %v2067 = vld [vmem:[%s326 + $0x20] sm:$0xff]
      %v2068 = vld [vmem:[%s326 + $0x28] sm:$0xff]
      %v2069 = vld [vmem:[%s326 + $0x30] sm:$0xff]
      %v2070 = vld [vmem:[%s326 + $0x38] sm:$0xff]
      %v2071 = vld [vmem:[%s326 + $0x40] sm:$0xff]
      %v2072 = vld [vmem:[%s326 + $0x48] sm:$0xff]
      %v2073 = vld [vmem:[%s326 + $0x50] sm:$0xff]
      %v2074 = vld [vmem:[%s326 + $0x58] sm:$0xff]
      %v2075 = vld [vmem:[%s326 + $0x60] sm:$0xff]
      %v2076 = vld [vmem:[%s326 + $0x68] sm:$0xff]
      %v2077 = vld [vmem:[%s326 + $0x70] sm:$0xff]
      %v2078 = vld [vmem:[%s326 + $0x78] sm:$0xff]
      %v2079 = vld [vmem:[%s326 + $0x80] sm:$0xff]
      %v2080 = vld [vmem:[%s326 + $0x88] sm:$0xff]
      %v2081 = vld [vmem:[%s326 + $0x90] sm:$0xff]
      %v2082 = vld [vmem:[%s326 + $0x98] sm:$0xff]
      %v2083 = vld [vmem:[%s326 + $0xa0] sm:$0xff]
      %v2084 = vld [vmem:[%s326 + $0xa8] sm:$0xff]
      %v2085 = vld [vmem:[%s326 + $0xb0] sm:$0xff]
      %v2086 = vld [vmem:[%s326 + $0xb8] sm:$0xff]
      %v2087 = vld [vmem:[%s326 + $0xc0] sm:$0xff]
      %v2088 = vld [vmem:[%s326 + $0xc8] sm:$0xff]
      %v2089 = vld [vmem:[%s326 + $0xd0] sm:$0xff]
      %v2090 = vld [vmem:[%s326 + $0xd8] sm:$0xff]
      %v2091 = vld [vmem:[%s326 + $0xe0] sm:$0xff]
      %v2092 = vld [vmem:[%s326 + $0xe8] sm:$0xff]
      %v2093 = vld [vmem:[%s326 + $0xf0] sm:$0xff]
      %v2094 = vld [vmem:[%s326 + $0xf8] sm:$0xff]
      %v2095 = vld [vmem:[%s326 + $0x100] sm:$0xff]
      %v2096 = vld [vmem:[%s326 + $0x108] sm:$0xff]
      %v2097 = vld [vmem:[%s326 + $0x110] sm:$0xff]
      %v2098 = vld [vmem:[%s326 + $0x118] sm:$0xff]
      %v2099 = vld [vmem:[%s326 + $0x120] sm:$0xff]
      %v2100 = vld [vmem:[%s326 + $0x128] sm:$0xff]
      %v2101 = vld [vmem:[%s326 + $0x130] sm:$0xff]
      %v2102 = vld [vmem:[%s326 + $0x138] sm:$0xff]
      %v2103 = vld [vmem:[%s326 + $0x140] sm:$0xff]
      %v2104 = vld [vmem:[%s326 + $0x148] sm:$0xff]
      %v2105 = vld [vmem:[%s326 + $0x150] sm:$0xff]
      %v2106 = vld [vmem:[%s326 + $0x158] sm:$0xff]
      %v2107 = vld [vmem:[%s326 + $0x160] sm:$0xff]
      %v2108 = vld [vmem:[%s326 + $0x168] sm:$0xff]
      %v2109 = vld [vmem:[%s326 + $0x170] sm:$0xff]
      %v2110 = vld [vmem:[%s326 + $0x178] sm:$0xff]
      %v2111 = vld [vmem:[%s331] sm:$0xff]
      %v2112 = vld [vmem:[%s331 + $0x8] sm:$0xff]
      %v2113 = vld [vmem:[%s331 + $0x10] sm:$0xff]
      %v2114 = vld [vmem:[%s331 + $0x18] sm:$0xff]
      %v2115 = vld [vmem:[%s331 + $0x20] sm:$0xff]
      %v2116 = vld [vmem:[%s331 + $0x28] sm:$0xff]
      %v2117 = vld [vmem:[%s331 + $0x30] sm:$0xff]
      %v2118 = vld [vmem:[%s331 + $0x38] sm:$0xff]
      %v2119 = vld [vmem:[%s331 + $0x40] sm:$0xff]
      %v2120 = vld [vmem:[%s331 + $0x48] sm:$0xff]
      %v2121 = vld [vmem:[%s331 + $0x50] sm:$0xff]
      %v2122 = vld [vmem:[%s331 + $0x58] sm:$0xff]
      %v2123 = vld [vmem:[%s331 + $0x60] sm:$0xff]
      %v2124 = vld [vmem:[%s331 + $0x68] sm:$0xff]
      %v2125 = vld [vmem:[%s331 + $0x70] sm:$0xff]
      %v2126 = vld [vmem:[%s331 + $0x78] sm:$0xff]
      %2127 = vmatprep.subr.mxu0 0.0
      %2128 = vmatpush1.msra.mxu0 %v2111
      %2129 = vmatprep.subr.mxu0 0.0
      %2130 = vmatpush1.msra.mxu0 %v2112
      %2131 = vmatprep.subr.mxu0 0.0
      %2132 = vmatpush1.msra.mxu0 %v2113
      %2133 = vmatprep.subr.mxu0 0.0
      %2134 = vmatpush1.msra.mxu0 %v2114
      %2135 = vmatprep.subr.mxu0 0.0
      %2136 = vmatpush1.msra.mxu0 %v2115
      %2137 = vmatprep.subr.mxu0 0.0
      %2138 = vmatpush1.msra.mxu0 %v2116
      %2139 = vmatprep.subr.mxu0 0.0
      %2140 = vmatpush1.msra.mxu0 %v2117
      %2141 = vmatprep.subr.mxu0 0.0
      %2142 = vmatpush1.msra.mxu0 %v2118
      %2143 = vmatprep.subr.mxu0 0.0
      %2144 = vmatpush1.msra.mxu0 %v2119
      %2145 = vmatprep.subr.mxu0 0.0
      %2146 = vmatpush1.msra.mxu0 %v2120
      %2147 = vmatprep.subr.mxu0 0.0
      %2148 = vmatpush1.msra.mxu0 %v2121
      %2149 = vmatprep.subr.mxu0 0.0
      %2150 = vmatpush1.msra.mxu0 %v2122
      %2151 = vmatprep.subr.mxu0 0.0
      %2152 = vmatpush1.msra.mxu0 %v2123
      %2153 = vmatprep.subr.mxu0 0.0
      %2154 = vmatpush1.msra.mxu0 %v2124
      %2155 = vmatprep.subr.mxu0 0.0
      %2156 = vmatpush1.msra.mxu0 %v2125
      %2157 = vmatprep.subr.mxu0 0.0
      %2158 = vmatpush1.msra.mxu0 %v2126
      %2159 = vmatprep.subr.mxu0 0.0
      %2160 = vmatpush1.msra.mxu0 0.0
      %2161 = vmatprep.subr.mxu0 0.0
      %2162 = vmatpush1.msra.mxu0 0.0
      %2163 = vmatprep.subr.mxu0 0.0
      %2164 = vmatpush1.msra.mxu0 0.0
      %2165 = vmatprep.subr.mxu0 0.0
      %2166 = vmatpush1.msra.mxu0 0.0
      %2167 = vmatprep.subr.mxu0 0.0
      %2168 = vmatpush1.msra.mxu0 0.0
      %2169 = vmatprep.subr.mxu0 0.0
      %2170 = vmatpush1.msra.mxu0 0.0
      %2171 = vmatprep.subr.mxu0 0.0
      %2172 = vmatpush1.msra.mxu0 0.0
      %2173 = vmatprep.subr.mxu0 0.0
      %2174 = vmatpush1.msra.mxu0 0.0
      %2175 = vmatprep.subr.mxu0 0.0
      %2176 = vmatpush1.msra.mxu0 0.0
      %2177 = vmatprep.subr.mxu0 0.0
      %2178 = vmatpush1.msra.mxu0 0.0
      %2179 = vmatprep.subr.mxu0 0.0
      %2180 = vmatpush1.msra.mxu0 0.0
      %2181 = vmatprep.subr.mxu0 0.0
      %2182 = vmatpush1.msra.mxu0 0.0
      %2183 = vmatprep.subr.mxu0 0.0
      %2184 = vmatpush1.msra.mxu0 0.0
      %2185 = vmatprep.subr.mxu0 0.0
      %2186 = vmatpush1.msra.mxu0 0.0
      %2187 = vmatprep.subr.mxu0 0.0
      %2188 = vmatpush1.msra.mxu0 0.0
      %2189 = vmatprep.subr.mxu0 0.0
      %2190 = vmatpush1.msra.mxu0 0.0
      %2191 = vmatprep.mubr.f32.mxu0 0.0
      %2192 = vmatmul.mubr.f32.gmra.mrb[0].mxu0 %v2063
      %v2193 = vpop.f32.mrb[0].mxu0
      %v2194 = vadd.f32 0.0, %v2193
      %v2195 = vpop.f32.mrb[0].mxu0
      %2196 = vmatprep.mubr.f32.mxu0 0.0
      %2197 = vmatmul.mubr.f32.gmra.mrb[0].mxu0 %v2064
      %v2198 = vpop.f32.mrb[0].mxu0
      %v2199 = vadd.f32 0.0, %v2198
      %v2200 = vpop.f32.mrb[0].mxu0
      %2201 = vmatprep.mubr.f32.mxu0 0.0
      %2202 = vmatmul.mubr.f32.gmra.mrb[0].mxu0 %v2065
      %v2203 = vpop.f32.mrb[0].mxu0
      %v2204 = vadd.f32 0.0, %v2203
      %v2205 = vpop.f32.mrb[0].mxu0
      %2206 = vmatprep.mubr.f32.mxu0 0.0
      %2207 = vmatmul.mubr.f32.gmra.mrb[0].mxu0 %v2066
      %v2208 = vpop.f32.mrb[0].mxu0
      %v2209 = vadd.f32 0.0, %v2208
      %v2210 = vpop.f32.mrb[0].mxu0
      %2211 = vmatprep.mubr.f32.mxu0 0.0
      %2212 = vmatmul.mubr.f32.gmra.mrb[0].mxu0 %v2067
      %v2213 = vpop.f32.mrb[0].mxu0
      %v2214 = vadd.f32 0.0, %v2213
      %v2215 = vpop.f32.mrb[0].mxu0
      %2216 = vmatprep.mubr.f32.mxu0 0.0
      %2217 = vmatmul.mubr.f32.gmra.mrb[0].mxu0 %v2068
      %v2218 = vpop.f32.mrb[0].mxu0
      %v2219 = vadd.f32 0.0, %v2218
      %v2220 = vpop.f32.mrb[0].mxu0
      %2221 = vmatprep.mubr.f32.mxu0 0.0
      %2222 = vmatmul.mubr.f32.gmra.mrb[0].mxu0 %v2069
      %v2223 = vpop.f32.mrb[0].mxu0
      %v2224 = vadd.f32 0.0, %v2223
      %v2225 = vpop.f32.mrb[0].mxu0
      %2226 = vmatprep.mubr.f32.mxu0 0.0
      %2227 = vmatmul.mubr.f32.gmra.mrb[0].mxu0 %v2070
      %v2228 = vpop.f32.mrb[0].mxu0
      %v2229 = vadd.f32 0.0, %v2228
      %v2230 = vpop.f32.mrb[0].mxu0
      %2231 = vmatprep.mubr.f32.mxu0 0.0
      %2232 = vmatmul.mubr.f32.gmra.mrb[0].mxu0 %v2071
      %v2233 = vpop.f32.mrb[0].mxu0
      %v2234 = vadd.f32 0.0, %v2233
      %v2235 = vpop.f32.mrb[0].mxu0
      %2236 = vmatprep.mubr.f32.mxu0 0.0
      %2237 = vmatmul.mubr.f32.gmra.mrb[0].mxu0 %v2072
      %v2238 = vpop.f32.mrb[0].mxu0
      %v2239 = vadd.f32 0.0, %v2238
      %v2240 = vpop.f32.mrb[0].mxu0
      %2241 = vmatprep.mubr.f32.mxu0 0.0
      %2242 = vmatmul.mubr.f32.gmra.mrb[0].mxu0 %v2073
      %v2243 = vpop.f32.mrb[0].mxu0
      %v2244 = vadd.f32 0.0, %v2243
      %v2245 = vpop.f32.mrb[0].mxu0
      %2246 = vmatprep.mubr.f32.mxu0 0.0
      %2247 = vmatmul.mubr.f32.gmra.mrb[0].mxu0 %v2074
      %v2248 = vpop.f32.mrb[0].mxu0
      %v2249 = vadd.f32 0.0, %v2248
      %v2250 = vpop.f32.mrb[0].mxu0
      %2251 = vmatprep.mubr.f32.mxu0 0.0
      %2252 = vmatmul.mubr.f32.gmra.mrb[0].mxu0 %v2075
      %v2253 = vpop.f32.mrb[0].mxu0
      %v2254 = vadd.f32 0.0, %v2253
      %v2255 = vpop.f32.mrb[0].mxu0
      %2256 = vmatprep.mubr.f32.mxu0 0.0
      %2257 = vmatmul.mubr.f32.gmra.mrb[0].mxu0 %v2076
      %v2258 = vpop.f32.mrb[0].mxu0
      %v2259 = vadd.f32 0.0, %v2258
      %v2260 = vpop.f32.mrb[0].mxu0
      %2261 = vmatprep.mubr.f32.mxu0 0.0
      %2262 = vmatmul.mubr.f32.gmra.mrb[0].mxu0 %v2077
      %v2263 = vpop.f32.mrb[0].mxu0
      %v2264 = vadd.f32 0.0, %v2263
      %v2265 = vpop.f32.mrb[0].mxu0
      %2266 = vmatprep.mubr.f32.mxu0 0.0
      %2267 = vmatmul.mubr.f32.gmra.mrb[0].mxu0 %v2078
      %v2268 = vpop.f32.mrb[0].mxu0
      %v2269 = vadd.f32 0.0, %v2268
      %v2270 = vpop.f32.mrb[0].mxu0
      %2271 = vmatprep.mubr.f32.mxu0 0.0
      %2272 = vmatmul.mubr.f32.gmra.mrb[0].mxu0 %v2079
      %v2273 = vpop.f32.mrb[0].mxu0
      %v2274 = vadd.f32 0.0, %v2273
      %v2275 = vpop.f32.mrb[0].mxu0
      %2276 = vmatprep.mubr.f32.mxu0 0.0
      %2277 = vmatmul.mubr.f32.gmra.mrb[0].mxu0 %v2080
      %v2278 = vpop.f32.mrb[0].mxu0
      %v2279 = vadd.f32 0.0, %v2278
      %v2280 = vpop.f32.mrb[0].mxu0
      %2281 = vmatprep.mubr.f32.mxu0 0.0
      %2282 = vmatmul.mubr.f32.gmra.mrb[0].mxu0 %v2081
      %v2283 = vpop.f32.mrb[0].mxu0
      %v2284 = vadd.f32 0.0, %v2283
      %v2285 = vpop.f32.mrb[0].mxu0
      %2286 = vmatprep.mubr.f32.mxu0 0.0
      %2287 = vmatmul.mubr.f32.gmra.mrb[0].mxu0 %v2082
      %v2288 = vpop.f32.mrb[0].mxu0
      %v2289 = vadd.f32 0.0, %v2288
      %v2290 = vpop.f32.mrb[0].mxu0
      %2291 = vmatprep.mubr.f32.mxu0 0.0
      %2292 = vmatmul.mubr.f32.gmra.mrb[0].mxu0 %v2083
      %v2293 = vpop.f32.mrb[0].mxu0
      %v2294 = vadd.f32 0.0, %v2293
      %v2295 = vpop.f32.mrb[0].mxu0
      %2296 = vmatprep.mubr.f32.mxu0 0.0
      %2297 = vmatmul.mubr.f32.gmra.mrb[0].mxu0 %v2084
      %v2298 = vpop.f32.mrb[0].mxu0
      %v2299 = vadd.f32 0.0, %v2298
      %v2300 = vpop.f32.mrb[0].mxu0
      %2301 = vmatprep.mubr.f32.mxu0 0.0
      %2302 = vmatmul.mubr.f32.gmra.mrb[0].mxu0 %v2085
      %v2303 = vpop.f32.mrb[0].mxu0
      %v2304 = vadd.f32 0.0, %v2303
      %v2305 = vpop.f32.mrb[0].mxu0
      %2306 = vmatprep.mubr.f32.mxu0 0.0
      %2307 = vmatmul.mubr.f32.gmra.mrb[0].mxu0 %v2086
      %v2308 = vpop.f32.mrb[0].mxu0
      %v2309 = vadd.f32 0.0, %v2308
      %v2310 = vpop.f32.mrb[0].mxu0
      %2311 = vmatprep.mubr.f32.mxu0 0.0
      %2312 = vmatmul.mubr.f32.gmra.mrb[0].mxu0 %v2087
      %v2313 = vpop.f32.mrb[0].mxu0
      %v2314 = vadd.f32 0.0, %v2313
      %v2315 = vpop.f32.mrb[0].mxu0
      %2316 = vmatprep.mubr.f32.mxu0 0.0
      %2317 = vmatmul.mubr.f32.gmra.mrb[0].mxu0 %v2088
      %v2318 = vpop.f32.mrb[0].mxu0
      %v2319 = vadd.f32 0.0, %v2318
      %v2320 = vpop.f32.mrb[0].mxu0
      %2321 = vmatprep.mubr.f32.mxu0 0.0
      %2322 = vmatmul.mubr.f32.gmra.mrb[0].mxu0 %v2089
      %v2323 = vpop.f32.mrb[0].mxu0
      %v2324 = vadd.f32 0.0, %v2323
      %v2325 = vpop.f32.mrb[0].mxu0
      %2326 = vmatprep.mubr.f32.mxu0 0.0
      %2327 = vmatmul.mubr.f32.gmra.mrb[0].mxu0 %v2090
      %v2328 = vpop.f32.mrb[0].mxu0
      %v2329 = vadd.f32 0.0, %v2328
      %v2330 = vpop.f32.mrb[0].mxu0
      %2331 = vmatprep.mubr.f32.mxu0 0.0
      %2332 = vmatmul.mubr.f32.gmra.mrb[0].mxu0 %v2091
      %v2333 = vpop.f32.mrb[0].mxu0
      %v2334 = vadd.f32 0.0, %v2333
      %v2335 = vpop.f32.mrb[0].mxu0
      %2336 = vmatprep.mubr.f32.mxu0 0.0
      %2337 = vmatmul.mubr.f32.gmra.mrb[0].mxu0 %v2092
      %v2338 = vpop.f32.mrb[0].mxu0
      %v2339 = vadd.f32 0.0, %v2338
      %v2340 = vpop.f32.mrb[0].mxu0
      %2341 = vmatprep.mubr.f32.mxu0 0.0
      %2342 = vmatmul.mubr.f32.gmra.mrb[0].mxu0 %v2093
      %v2343 = vpop.f32.mrb[0].mxu0
      %v2344 = vadd.f32 0.0, %v2343
      %v2345 = vpop.f32.mrb[0].mxu0
      %2346 = vmatprep.mubr.f32.mxu0 0.0
      %2347 = vmatmul.mubr.f32.gmra.mrb[0].mxu0 %v2094
      %v2348 = vpop.f32.mrb[0].mxu0
      %v2349 = vadd.f32 0.0, %v2348
      %v2350 = vpop.f32.mrb[0].mxu0
      %2351 = vmatprep.mubr.f32.mxu0 0.0
      %2352 = vmatmul.mubr.f32.gmra.mrb[0].mxu0 %v2095
      %v2353 = vpop.f32.mrb[0].mxu0
      %v2354 = vadd.f32 0.0, %v2353
      %v2355 = vpop.f32.mrb[0].mxu0
      %2356 = vmatprep.mubr.f32.mxu0 0.0
      %2357 = vmatmul.mubr.f32.gmra.mrb[0].mxu0 %v2096
      %v2358 = vpop.f32.mrb[0].mxu0
      %v2359 = vadd.f32 0.0, %v2358
      %v2360 = vpop.f32.mrb[0].mxu0
      %2361 = vmatprep.mubr.f32.mxu0 0.0
      %2362 = vmatmul.mubr.f32.gmra.mrb[0].mxu0 %v2097
      %v2363 = vpop.f32.mrb[0].mxu0
      %v2364 = vadd.f32 0.0, %v2363
      %v2365 = vpop.f32.mrb[0].mxu0
      %2366 = vmatprep.mubr.f32.mxu0 0.0
      %2367 = vmatmul.mubr.f32.gmra.mrb[0].mxu0 %v2098
      %v2368 = vpop.f32.mrb[0].mxu0
      %v2369 = vadd.f32 0.0, %v2368
      %v2370 = vpop.f32.mrb[0].mxu0
      %2371 = vmatprep.mubr.f32.mxu0 0.0
      %2372 = vmatmul.mubr.f32.gmra.mrb[0].mxu0 %v2099
      %v2373 = vpop.f32.mrb[0].mxu0
      %v2374 = vadd.f32 0.0, %v2373
      %v2375 = vpop.f32.mrb[0].mxu0
      %2376 = vmatprep.mubr.f32.mxu0 0.0
      %2377 = vmatmul.mubr.f32.gmra.mrb[0].mxu0 %v2100
      %v2378 = vpop.f32.mrb[0].mxu0
      %v2379 = vadd.f32 0.0, %v2378
      %v2380 = vpop.f32.mrb[0].mxu0
      %2381 = vmatprep.mubr.f32.mxu0 0.0
      %2382 = vmatmul.mubr.f32.gmra.mrb[0].mxu0 %v2101
      %v2383 = vpop.f32.mrb[0].mxu0
      %v2384 = vadd.f32 0.0, %v2383
      %v2385 = vpop.f32.mrb[0].mxu0
      %2386 = vmatprep.mubr.f32.mxu0 0.0
      %2387 = vmatmul.mubr.f32.gmra.mrb[0].mxu0 %v2102
      %v2388 = vpop.f32.mrb[0].mxu0
      %v2389 = vadd.f32 0.0, %v2388
      %v2390 = vpop.f32.mrb[0].mxu0
      %2391 = vmatprep.mubr.f32.mxu0 0.0
      %2392 = vmatmul.mubr.f32.gmra.mrb[0].mxu0 %v2103
      %v2393 = vpop.f32.mrb[0].mxu0
      %v2394 = vadd.f32 0.0, %v2393
      %v2395 = vpop.f32.mrb[0].mxu0
      %2396 = vmatprep.mubr.f32.mxu0 0.0
      %2397 = vmatmul.mubr.f32.gmra.mrb[0].mxu0 %v2104
      %v2398 = vpop.f32.mrb[0].mxu0
      %v2399 = vadd.f32 0.0, %v2398
      %v2400 = vpop.f32.mrb[0].mxu0
      %2401 = vmatprep.mubr.f32.mxu0 0.0
      %2402 = vmatmul.mubr.f32.gmra.mrb[0].mxu0 %v2105
      %v2403 = vpop.f32.mrb[0].mxu0
      %v2404 = vadd.f32 0.0, %v2403
      %v2405 = vpop.f32.mrb[0].mxu0
      %2406 = vmatprep.mubr.f32.mxu0 0.0
      %2407 = vmatmul.mubr.f32.gmra.mrb[0].mxu0 %v2106
      %v2408 = vpop.f32.mrb[0].mxu0
      %v2409 = vadd.f32 0.0, %v2408
      %v2410 = vpop.f32.mrb[0].mxu0
      %2411 = vmatprep.mubr.f32.mxu0 0.0
      %2412 = vmatmul.mubr.f32.gmra.mrb[0].mxu0 %v2107
      %v2413 = vpop.f32.mrb[0].mxu0
      %v2414 = vadd.f32 0.0, %v2413
      %v2415 = vpop.f32.mrb[0].mxu0
      %2416 = vmatprep.mubr.f32.mxu0 0.0
      %2417 = vmatmul.mubr.f32.gmra.mrb[0].mxu0 %v2108
      %v2418 = vpop.f32.mrb[0].mxu0
      %v2419 = vadd.f32 0.0, %v2418
      %v2420 = vpop.f32.mrb[0].mxu0
      %2421 = vmatprep.mubr.f32.mxu0 0.0
      %2422 = vmatmul.mubr.f32.gmra.mrb[0].mxu0 %v2109
      %v2423 = vpop.f32.mrb[0].mxu0
      %v2424 = vadd.f32 0.0, %v2423
      %v2425 = vpop.f32.mrb[0].mxu0
      %2426 = vmatprep.mubr.f32.mxu0 0.0
      %2427 = vmatmul.mubr.f32.gmra.mrb[0].mxu0 %v2110
      %v2428 = vpop.f32.mrb[0].mxu0
      %v2429 = vadd.f32 0.0, %v2428
      %v2430 = vpop.f32.mrb[0].mxu0
      %2431 = vdwg.mxu0
      %v2432 = vadd.f32 %v2015, %v2194
      %v2433 = vadd.f32 %v2016, %v2199
      %v2434 = vadd.f32 %v2017, %v2204
      %v2435 = vadd.f32 %v2018, %v2209
      %v2436 = vadd.f32 %v2019, %v2214
      %v2437 = vadd.f32 %v2020, %v2219
      %v2438 = vadd.f32 %v2021, %v2224
      %v2439 = vadd.f32 %v2022, %v2229
      %v2440 = vadd.f32 %v2023, %v2234
      %v2441 = vadd.f32 %v2024, %v2239
      %v2442 = vadd.f32 %v2025, %v2244
      %v2443 = vadd.f32 %v2026, %v2249
      %v2444 = vadd.f32 %v2027, %v2254
      %v2445 = vadd.f32 %v2028, %v2259
      %v2446 = vadd.f32 %v2029, %v2264
      %v2447 = vadd.f32 %v2030, %v2269
      %v2448 = vadd.f32 %v2031, %v2274
      %v2449 = vadd.f32 %v2032, %v2279
      %v2450 = vadd.f32 %v2033, %v2284
      %v2451 = vadd.f32 %v2034, %v2289
      %v2452 = vadd.f32 %v2035, %v2294
      %v2453 = vadd.f32 %v2036, %v2299
      %v2454 = vadd.f32 %v2037, %v2304
      %v2455 = vadd.f32 %v2038, %v2309
      %v2456 = vadd.f32 %v2039, %v2314
      %v2457 = vadd.f32 %v2040, %v2319
      %v2458 = vadd.f32 %v2041, %v2324
      %v2459 = vadd.f32 %v2042, %v2329
      %v2460 = vadd.f32 %v2043, %v2334
      %v2461 = vadd.f32 %v2044, %v2339
      %v2462 = vadd.f32 %v2045, %v2344
      %v2463 = vadd.f32 %v2046, %v2349
      %v2464 = vadd.f32 %v2047, %v2354
      %v2465 = vadd.f32 %v2048, %v2359
      %v2466 = vadd.f32 %v2049, %v2364
      %v2467 = vadd.f32 %v2050, %v2369
      %v2468 = vadd.f32 %v2051, %v2374
      %v2469 = vadd.f32 %v2052, %v2379
      %v2470 = vadd.f32 %v2053, %v2384
      %v2471 = vadd.f32 %v2054, %v2389
      %v2472 = vadd.f32 %v2055, %v2394
      %v2473 = vadd.f32 %v2056, %v2399
      %v2474 = vadd.f32 %v2057, %v2404
      %v2475 = vadd.f32 %v2058, %v2409
      %v2476 = vadd.f32 %v2059, %v2414
      %v2477 = vadd.f32 %v2060, %v2419
      %v2478 = vadd.f32 %v2061, %v2424
      %v2479 = vadd.f32 %v2062, %v2429
      %v2480 = vld [vmem:[%s334] sm:$0x1]
      %v2482 = vlaneseq
      %v2483 = vshrl.u32 %v2482, 7
      %v2484 = vsub.s32 0, %v2483
      %v2485 = vrot.slane %v2480, %v2484
      %v2487 = vadd.f32 %v2432, %v2485
      %v2488 = vadd.f32 %v2433, %v2485
      %v2489 = vadd.f32 %v2434, %v2485
      %v2490 = vadd.f32 %v2435, %v2485
      %v2491 = vadd.f32 %v2436, %v2485
      %v2492 = vadd.f32 %v2437, %v2485
      %v2493 = vadd.f32 %v2438, %v2485
      %v2494 = vadd.f32 %v2439, %v2485
      %v2495 = vadd.f32 %v2440, %v2485
      %v2496 = vadd.f32 %v2441, %v2485
      %v2497 = vadd.f32 %v2442, %v2485
      %v2498 = vadd.f32 %v2443, %v2485
      %v2499 = vadd.f32 %v2444, %v2485
      %v2500 = vadd.f32 %v2445, %v2485
      %v2501 = vadd.f32 %v2446, %v2485
      %v2502 = vadd.f32 %v2447, %v2485
      %v2503 = vadd.f32 %v2448, %v2485
      %v2504 = vadd.f32 %v2449, %v2485
      %v2505 = vadd.f32 %v2450, %v2485
      %v2506 = vadd.f32 %v2451, %v2485
      %v2507 = vadd.f32 %v2452, %v2485
      %v2508 = vadd.f32 %v2453, %v2485
      %v2509 = vadd.f32 %v2454, %v2485
      %v2510 = vadd.f32 %v2455, %v2485
      %v2511 = vadd.f32 %v2456, %v2485
      %v2512 = vadd.f32 %v2457, %v2485
      %v2513 = vadd.f32 %v2458, %v2485
      %v2514 = vadd.f32 %v2459, %v2485
      %v2515 = vadd.f32 %v2460, %v2485
      %v2516 = vadd.f32 %v2461, %v2485
      %v2517 = vadd.f32 %v2462, %v2485
      %v2518 = vadd.f32 %v2463, %v2485
      %v2519 = vadd.f32 %v2464, %v2485
      %v2520 = vadd.f32 %v2465, %v2485
      %v2521 = vadd.f32 %v2466, %v2485
      %v2522 = vadd.f32 %v2467, %v2485
      %v2523 = vadd.f32 %v2468, %v2485
      %v2524 = vadd.f32 %v2469, %v2485
      %v2525 = vadd.f32 %v2470, %v2485
      %v2526 = vadd.f32 %v2471, %v2485
      %v2527 = vadd.f32 %v2472, %v2485
      %v2528 = vadd.f32 %v2473, %v2485
      %v2529 = vadd.f32 %v2474, %v2485
      %v2530 = vadd.f32 %v2475, %v2485
      %v2531 = vadd.f32 %v2476, %v2485
      %v2532 = vadd.f32 %v2477, %v2485
      %v2533 = vadd.f32 %v2478, %v2485
      %v2534 = vadd.f32 %v2479, %v2485
      %vm2535 = vcmask 261120
      %2536 = vst.msk [vmem:[%s339] sm:$0xff] %vm2535, %v2487
      %2537 = vst.msk [vmem:[%s339 + $0x8] sm:$0xff] %vm2535, %v2488
      %2538 = vst.msk [vmem:[%s339 + $0x10] sm:$0xff] %vm2535, %v2489
      %2539 = vst.msk [vmem:[%s339 + $0x18] sm:$0xff] %vm2535, %v2490
      %2540 = vst.msk [vmem:[%s339 + $0x20] sm:$0xff] %vm2535, %v2491
      %2541 = vst.msk [vmem:[%s339 + $0x28] sm:$0xff] %vm2535, %v2492
      %2542 = vst.msk [vmem:[%s339 + $0x30] sm:$0xff] %vm2535, %v2493
      %2543 = vst.msk [vmem:[%s339 + $0x38] sm:$0xff] %vm2535, %v2494
      %2544 = vst.msk [vmem:[%s339 + $0x40] sm:$0xff] %vm2535, %v2495
      %2545 = vst.msk [vmem:[%s339 + $0x48] sm:$0xff] %vm2535, %v2496
      %2546 = vst.msk [vmem:[%s339 + $0x50] sm:$0xff] %vm2535, %v2497
      %2547 = vst.msk [vmem:[%s339 + $0x58] sm:$0xff] %vm2535, %v2498
      %2548 = vst.msk [vmem:[%s339 + $0x60] sm:$0xff] %vm2535, %v2499
      %2549 = vst.msk [vmem:[%s339 + $0x68] sm:$0xff] %vm2535, %v2500
      %2550 = vst.msk [vmem:[%s339 + $0x70] sm:$0xff] %vm2535, %v2501
      %2551 = vst.msk [vmem:[%s339 + $0x78] sm:$0xff] %vm2535, %v2502
      %2552 = vst.msk [vmem:[%s339 + $0x80] sm:$0xff] %vm2535, %v2503
      %2553 = vst.msk [vmem:[%s339 + $0x88] sm:$0xff] %vm2535, %v2504
      %2554 = vst.msk [vmem:[%s339 + $0x90] sm:$0xff] %vm2535, %v2505
      %2555 = vst.msk [vmem:[%s339 + $0x98] sm:$0xff] %vm2535, %v2506
      %2556 = vst.msk [vmem:[%s339 + $0xa0] sm:$0xff] %vm2535, %v2507
      %2557 = vst.msk [vmem:[%s339 + $0xa8] sm:$0xff] %vm2535, %v2508
      %2558 = vst.msk [vmem:[%s339 + $0xb0] sm:$0xff] %vm2535, %v2509
      %2559 = vst.msk [vmem:[%s339 + $0xb8] sm:$0xff] %vm2535, %v2510
      %2560 = vst.msk [vmem:[%s339 + $0xc0] sm:$0xff] %vm2535, %v2511
      %2561 = vst.msk [vmem:[%s339 + $0xc8] sm:$0xff] %vm2535, %v2512
      %2562 = vst.msk [vmem:[%s339 + $0xd0] sm:$0xff] %vm2535, %v2513
      %2563 = vst.msk [vmem:[%s339 + $0xd8] sm:$0xff] %vm2535, %v2514
      %2564 = vst.msk [vmem:[%s339 + $0xe0] sm:$0xff] %vm2535, %v2515
      %2565 = vst.msk [vmem:[%s339 + $0xe8] sm:$0xff] %vm2535, %v2516
      %2566 = vst.msk [vmem:[%s339 + $0xf0] sm:$0xff] %vm2535, %v2517
      %2567 = vst.msk [vmem:[%s339 + $0xf8] sm:$0xff] %vm2535, %v2518
      %2568 = vst.msk [vmem:[%s339 + $0x100] sm:$0xff] %vm2535, %v2519
      %2569 = vst.msk [vmem:[%s339 + $0x108] sm:$0xff] %vm2535, %v2520
      %2570 = vst.msk [vmem:[%s339 + $0x110] sm:$0xff] %vm2535, %v2521
      %2571 = vst.msk [vmem:[%s339 + $0x118] sm:$0xff] %vm2535, %v2522
      %2572 = vst.msk [vmem:[%s339 + $0x120] sm:$0xff] %vm2535, %v2523
      %2573 = vst.msk [vmem:[%s339 + $0x128] sm:$0xff] %vm2535, %v2524
      %2574 = vst.msk [vmem:[%s339 + $0x130] sm:$0xff] %vm2535, %v2525
      %2575 = vst.msk [vmem:[%s339 + $0x138] sm:$0xff] %vm2535, %v2526
      %2576 = vst.msk [vmem:[%s339 + $0x140] sm:$0xff] %vm2535, %v2527
      %2577 = vst.msk [vmem:[%s339 + $0x148] sm:$0xff] %vm2535, %v2528
      %2578 = vst.msk [vmem:[%s339 + $0x150] sm:$0xff] %vm2535, %v2529
      %2579 = vst.msk [vmem:[%s339 + $0x158] sm:$0xff] %vm2535, %v2530
      %2580 = vst.msk [vmem:[%s339 + $0x160] sm:$0xff] %vm2535, %v2531
      %2581 = vst.msk [vmem:[%s339 + $0x168] sm:$0xff] %vm2535, %v2532
      %2582 = vst.msk [vmem:[%s339 + $0x170] sm:$0xff] %vm2535, %v2533
      %2583 = vst.msk [vmem:[%s339 + $0x178] sm:$0xff] %vm2535, %v2534
      %p2584 = scmp.lt.s32.totalorder %s17, 2
      %s2585 = scalar_select %p2584, %s17, 2
      %s2586 = smul.addr %s2585, 48
      %s2587 = smul.addr %s2586, 8
      %s2588 = scalar_lea.vmem %s6, %s2587
      // Predicated region
      $region45: #{forward.9} parent=43 // pred_check
        %p2589 = pneg %p191
      $region46: #{forward.9} parent=43 // pred_check_branch
        %2591 = sbr.rel (%p2589) target = $region48
      $region47: #{forward.9} parent=43 // pred_region
        _
      $region48: #{forward.9} parent=43 // pred_fallthru
        _
    $region44: #{forward.9} parent=5 // pred_fallthru
      _
    %p2592 = scmp.le.s32.totalorder 2, %s12
    // Predicated region
    $region49: #{forward.9} parent=5 // pred_check
      %p2593 = pneg %p2592
    $region50: #{forward.9} parent=5 // pred_check_branch
      %2595 = sbr.rel (%p2593) target = $region52
    $region51: #{forward.9} parent=5 // pred_region
      %s2596 = ssub.s32 %s12, 2
      // Predicated region
      $region53: #{forward.9} parent=51 // pred_check
        %p2597 = pneg %p197
      $region54: #{forward.9} parent=51 // pred_check_branch
        %2599 = sbr.rel (%p2597) target = $region56
      $region55: #{forward.9} parent=51 // pred_region
        %p2600 = scmp.lt.s32.totalorder %s18, 2
        %s2601 = scalar_select %p2600, %s18, 2
        %s2602 = smul.addr %s2601, 48
        %s2603 = smul.addr %s2602, 8
        %s2604 = scalar_lea.vmem %s6, %s2603
      $region56: #{forward.9} parent=51 // pred_fallthru
        _
    $region52: #{forward.9} parent=5 // pred_fallthru
      _
  $region6: #{forward.9} parent=0 // loop_footer
    %s16 = sadd.s32 1, %s12
  $region7: #{forward.9} parent=0 // loop_footer_branch
    %11 = sbr.rel target = $region3
  $region8: #{forward.9} parent=0 // loop_exit
    _

// kernel: forward.10
$region0: #{forward.10}
  #allocation0 [shape = 'u32[]', space=smem, size = 0x4, offset = 0x4, fixed_abs, tag = 'smem constant byte address 0x4 - core index']
  #allocation1 [shape = 'u32[144,128]{1,0:T(1,128)}', space=vmem, size = 0x12000, scoped, tag = 'internal scratch']
  %s0 = inlined_call_operand.vmem [shape: f32[3,384,896], index: 0, kind: input, shape index: {}]
  %s1 = inlined_call_operand.vmem [shape: f32[3,896,32], index: 1, kind: input, shape index: {}]
  %s2 = inlined_call_operand.vmem [shape: f32[3,1,32], index: 2, kind: input, shape index: {}]
  %s3 = inlined_call_operand.vmem [shape: f32[3,384,32], index: 3, kind: output, shape index: {}]
  %s4 = sld [smem:[#allocation0]]
  $region45: #{forward.10} parent=0
    _
  %s6 = ssub.s32 1, %s4
  %s7 = scalar_select 0, %s6, %s4
  loop: start=0, step=1, limit=5
  $region2: #{forward.10} parent=0 // loop_pre_header
    _
  $region3: #{forward.10} parent=0 // loop_header
    %s9 = sphi 0, %s13
    %p10 = scmp.ge.s32.totalorder %s9, 5
    %s19 = sphi 0, %s21
    %s22 = sphi 0, %s19
    %s23 = sphi 0, %s22
    %s39 = sphi 0, %s23
    %s45 = sphi 0, %s47
    %s48 = sphi 0, %s45
    %s49 = sphi 0, %s48
    %s65 = sphi 0, %s49
    %s71 = sphi 0, %s73
    %s74 = sphi 0, %s71
    %s75 = sphi 0, %s74
    %s91 = sphi 0, %s75
    %s97 = sphi 0, %s99
    %s100 = sphi 0, %s97
    %s101 = sphi 0, %s100
    %s117 = sphi 0, %s101
  $region4: #{forward.10} parent=0 // loop_header_branch
    %12 = sbr.rel (%p10) target = $region8
  $region5: #{forward.10} parent=0 // loop_body
    %s14 = ssub.s32 %s9, 1
    %s15 = ssub.s32 %s9, 2
    %s16 = sadd.s32 %s9, 1
    %s17 = ssub.s32 %s9, %s16
    %p18 = scmp.eq.s32.totalorder %s17, 0
    %s20 = sadd.s32 %s19, 1
    %s21 = scalar_select %p18, %s19, %s20
    %p24 = pneg %p18
    %p25 = scmp.eq.s32.totalorder %s9, 2
    %p26 = por %p24, %p25
    %p27 = scmp.ne.s32.totalorder %s19, %s22
    %p28 = scmp.eq.s32.totalorder %s9, 0
    %p29 = por %p27, %p28
    %p30 = scmp.ne.s32.totalorder %s19, %s22
    %p31 = scmp.eq.s32.totalorder %s14, 2
    %p32 = por %p30, %p31
    %p33 = scmp.ne.s32.totalorder %s22, %s23
    %p34 = scmp.eq.s32.totalorder %s14, 0
    %p35 = por %p33, %p34
    %p36 = scmp.ne.s32.totalorder %s22, %s23
    %p37 = scmp.eq.s32.totalorder %s15, 2
    %p38 = por %p36, %p37
    %p40 = scmp.ne.s32.totalorder %s23, %s39
    %p41 = scmp.eq.s32.totalorder %s15, 0
    %p42 = por %p40, %p41
    %s43 = ssub.s32 %s9, %s16
    %p44 = scmp.eq.s32.totalorder %s43, 0
    %s46 = sadd.s32 %s45, 1
    %s47 = scalar_select %p44, %s45, %s46
    %p50 = pneg %p44
    %p51 = scmp.eq.s32.totalorder %s9, 2
    %p52 = por %p50, %p51
    %p53 = scmp.ne.s32.totalorder %s45, %s48
    %p54 = scmp.eq.s32.totalorder %s9, 0
    %p55 = por %p53, %p54
    %p56 = scmp.ne.s32.totalorder %s45, %s48
    %p57 = scmp.eq.s32.totalorder %s14, 2
    %p58 = por %p56, %p57
    %p59 = scmp.ne.s32.totalorder %s48, %s49
    %p60 = scmp.eq.s32.totalorder %s14, 0
    %p61 = por %p59, %p60
    %p62 = scmp.ne.s32.totalorder %s48, %s49
    %p63 = scmp.eq.s32.totalorder %s15, 2
    %p64 = por %p62, %p63
    %p66 = scmp.ne.s32.totalorder %s49, %s65
    %p67 = scmp.eq.s32.totalorder %s15, 0
    %p68 = por %p66, %p67
    %s69 = ssub.s32 %s9, %s16
    %p70 = scmp.eq.s32.totalorder %s69, 0
    %s72 = sadd.s32 %s71, 1
    %s73 = scalar_select %p70, %s71, %s72
    %p76 = pneg %p70
    %p77 = scmp.eq.s32.totalorder %s9, 2
    %p78 = por %p76, %p77
    %p79 = scmp.ne.s32.totalorder %s71, %s74
    %p80 = scmp.eq.s32.totalorder %s9, 0
    %p81 = por %p79, %p80
    %p82 = scmp.ne.s32.totalorder %s71, %s74
    %p83 = scmp.eq.s32.totalorder %s14, 2
    %p84 = por %p82, %p83
    %p85 = scmp.ne.s32.totalorder %s74, %s75
    %p86 = scmp.eq.s32.totalorder %s14, 0
    %p87 = por %p85, %p86
    %p88 = scmp.ne.s32.totalorder %s74, %s75
    %p89 = scmp.eq.s32.totalorder %s15, 2
    %p90 = por %p88, %p89
    %p92 = scmp.ne.s32.totalorder %s75, %s91
    %p93 = scmp.eq.s32.totalorder %s15, 0
    %p94 = por %p92, %p93
    %s95 = ssub.s32 %s9, %s16
    %p96 = scmp.eq.s32.totalorder %s95, 0
    %s98 = sadd.s32 %s97, 1
    %s99 = scalar_select %p96, %s97, %s98
    %p102 = pneg %p96
    %p103 = scmp.eq.s32.totalorder %s9, 2
    %p104 = por %p102, %p103
    %p105 = scmp.ne.s32.totalorder %s97, %s100
    %p106 = scmp.eq.s32.totalorder %s9, 0
    %p107 = por %p105, %p106
    %p108 = scmp.ne.s32.totalorder %s97, %s100
    %p109 = scmp.eq.s32.totalorder %s14, 2
    %p110 = por %p108, %p109
    %p111 = scmp.ne.s32.totalorder %s100, %s101
    %p112 = scmp.eq.s32.totalorder %s14, 0
    %p113 = por %p111, %p112
    %p114 = scmp.ne.s32.totalorder %s100, %s101
    %p115 = scmp.eq.s32.totalorder %s15, 2
    %p116 = por %p114, %p115
    %p118 = scmp.ne.s32.totalorder %s101, %s117
    %p119 = scmp.eq.s32.totalorder %s15, 0
    %p120 = por %p118, %p119
    %p121 = scmp.le.s32.totalorder 1, %s9
    %p122 = scmp.lt.s32.totalorder %s9, 4
    %p123 = pnand %p121, %p122
    %p124 = pneg %p123
    // Predicated region
    $region9: #{forward.10} parent=5 // pred_check
      _
    $region10: #{forward.10} parent=5 // pred_check_branch
      %126 = sbr.rel (%p123) target = $region12
    $region11: #{forward.10} parent=5 // pred_region
      %s127 = ssub.s32 %s9, 1
    $region12: #{forward.10} parent=5 // pred_fallthru
      _
    %p128 = scmp.lt.s32.totalorder %s9, 3
    // Predicated region
    $region13: #{forward.10} parent=5 // pred_check
      %p129 = pneg %p128
    $region14: #{forward.10} parent=5 // pred_check_branch
      %131 = sbr.rel (%p129) target = $region16
    $region15: #{forward.10} parent=5 // pred_region
      // Predicated region
      $region17: #{forward.10} parent=15 // pred_check
        %p132 = pneg %p29
      $region18: #{forward.10} parent=15 // pred_check_branch
        %134 = sbr.rel (%p132) target = $region20
      $region19: #{forward.10} parent=15 // pred_region
        %p135 = scmp.lt.s32.totalorder %s9, 2
        %s136 = scalar_select %p135, %s9, 2
        %s137 = smul.addr %s136, 336
        %s138 = smul.addr %s137, 8
        %s139 = scalar_lea.vmem %s0, %s138
      $region20: #{forward.10} parent=15 // pred_fallthru
        _
      // Predicated region
      $region21: #{forward.10} parent=15 // pred_check
        %p140 = pneg %p55
      $region22: #{forward.10} parent=15 // pred_check_branch
        %142 = sbr.rel (%p140) target = $region24
      $region23: #{forward.10} parent=15 // pred_region
        %p143 = scmp.lt.s32.totalorder %s9, 2
        %s144 = scalar_select %p143, %s9, 2
        %s145 = smul.addr %s144, 112
        %s146 = smul.addr %s145, 8
        %s147 = scalar_lea.vmem %s1, %s146
      $region24: #{forward.10} parent=15 // pred_fallthru
        _
      // Predicated region
      $region25: #{forward.10} parent=15 // pred_check
        %p148 = pneg %p81
      $region26: #{forward.10} parent=15 // pred_check_branch
        %150 = sbr.rel (%p148) target = $region28
      $region27: #{forward.10} parent=15 // pred_region
        %p151 = scmp.lt.s32.totalorder %s9, 2
        %s152 = scalar_select %p151, %s9, 2
        %s153 = scalar_lea.vmem %s2, %s152
      $region28: #{forward.10} parent=15 // pred_fallthru
        _
    $region16: #{forward.10} parent=5 // pred_fallthru
      _
    %p154 = scmp.le.s32.totalorder 1, %s9
    %p155 = scmp.lt.s32.totalorder %s9, 4
    %p156 = pnand %p154, %p155
    %p157 = pneg %p156
    // Predicated region
    $region29: #{forward.10} parent=5 // pred_check
      _
    $region30: #{forward.10} parent=5 // pred_check_branch
      %159 = sbr.rel (%p156) target = $region32
    $region31: #{forward.10} parent=5 // pred_region
      %s160 = ssub.s32 %s9, 1
      %p161 = scmp.lt.s32.totalorder %s14, 2
      %s162 = scalar_select %p161, %s14, 2
      %s163 = smul.addr %s162, 336
      %s164 = smul.addr %s163, 8
      %s165 = scalar_lea.vmem %s0, %s164
      %p166 = pneg %p35
      %p167 = pneg %p32
      %p168 = scmp.lt.s32.totalorder %s14, 2
      %s169 = scalar_select %p168, %s14, 2
      %s170 = smul.addr %s169, 112
      %s171 = smul.addr %s170, 8
      %s172 = scalar_lea.vmem %s1, %s171
      %p173 = pneg %p61
      %p174 = pneg %p58
      %p175 = scmp.lt.s32.totalorder %s14, 2
      %s176 = scalar_select %p175, %s14, 2
      %s177 = scalar_lea.vmem %s2, %s176
      %p178 = pneg %p87
      %p179 = pneg %p84
      %p180 = pneg %p113
      %p181 = pneg %p110
      %p182 = scmp.lt.s32.totalorder %s14, 2
      %s183 = scalar_select %p182, %s14, 2
      %s184 = smul.addr %s183, 48
      %s185 = smul.addr %s184, 8
      %s186 = scalar_lea.vmem %s3, %s185
      %p187 = scmp.lt.s32.totalorder %s14, 2
      %s188 = scalar_select %p187, %s14, 2
      %s189 = smul.addr %s188, 336
      %s190 = smul.addr %s189, 8
      %s191 = scalar_lea.vmem %s0, %s190
      %p192 = scmp.lt.s32.totalorder %s14, 2
      %s193 = scalar_select %p192, %s14, 2
      %s194 = smul.addr %s193, 112
      %s195 = smul.addr %s194, 8
      %s196 = scalar_lea.vmem %s1, %s195
      %p197 = scmp.lt.s32.totalorder %s14, 2
      %s198 = scalar_select %p197, %s14, 2
      %s199 = scalar_lea.vmem %s2, %s198
      %p200 = scmp.lt.s32.totalorder %s14, 2
      %s201 = scalar_select %p200, %s14, 2
      %s202 = smul.addr %s201, 48
      %s203 = smul.addr %s202, 8
      %s204 = scalar_lea.vmem %s3, %s203
      %v205 = vld [vmem:[%s191] sm:$0xff]
      %v206 = vld [vmem:[%s191 + $0x8] sm:$0xff]
      %v207 = vld [vmem:[%s191 + $0x10] sm:$0xff]
      %v208 = vld [vmem:[%s191 + $0x18] sm:$0xff]
      %v209 = vld [vmem:[%s191 + $0x20] sm:$0xff]
      %v210 = vld [vmem:[%s191 + $0x28] sm:$0xff]
      %v211 = vld [vmem:[%s191 + $0x30] sm:$0xff]
      %v212 = vld [vmem:[%s191 + $0x38] sm:$0xff]
      %v213 = vld [vmem:[%s191 + $0x40] sm:$0xff]
      %v214 = vld [vmem:[%s191 + $0x48] sm:$0xff]
      %v215 = vld [vmem:[%s191 + $0x50] sm:$0xff]
      %v216 = vld [vmem:[%s191 + $0x58] sm:$0xff]
      %v217 = vld [vmem:[%s191 + $0x60] sm:$0xff]
      %v218 = vld [vmem:[%s191 + $0x68] sm:$0xff]
      %v219 = vld [vmem:[%s191 + $0x70] sm:$0xff]
      %v220 = vld [vmem:[%s191 + $0x78] sm:$0xff]
      %v221 = vld [vmem:[%s191 + $0x80] sm:$0xff]
      %v222 = vld [vmem:[%s191 + $0x88] sm:$0xff]
      %v223 = vld [vmem:[%s191 + $0x90] sm:$0xff]
      %v224 = vld [vmem:[%s191 + $0x98] sm:$0xff]
      %v225 = vld [vmem:[%s191 + $0xa0] sm:$0xff]
      %v226 = vld [vmem:[%s191 + $0xa8] sm:$0xff]
      %v227 = vld [vmem:[%s191 + $0xb0] sm:$0xff]
      %v228 = vld [vmem:[%s191 + $0xb8] sm:$0xff]
      %v229 = vld [vmem:[%s191 + $0xc0] sm:$0xff]
      %v230 = vld [vmem:[%s191 + $0xc8] sm:$0xff]
      %v231 = vld [vmem:[%s191 + $0xd0] sm:$0xff]
      %v232 = vld [vmem:[%s191 + $0xd8] sm:$0xff]
      %v233 = vld [vmem:[%s191 + $0xe0] sm:$0xff]
      %v234 = vld [vmem:[%s191 + $0xe8] sm:$0xff]
      %v235 = vld [vmem:[%s191 + $0xf0] sm:$0xff]
      %v236 = vld [vmem:[%s191 + $0xf8] sm:$0xff]
      %v237 = vld [vmem:[%s191 + $0x100] sm:$0xff]
      %v238 = vld [vmem:[%s191 + $0x108] sm:$0xff]
      %v239 = vld [vmem:[%s191 + $0x110] sm:$0xff]
      %v240 = vld [vmem:[%s191 + $0x118] sm:$0xff]
      %v241 = vld [vmem:[%s191 + $0x120] sm:$0xff]
      %v242 = vld [vmem:[%s191 + $0x128] sm:$0xff]
      %v243 = vld [vmem:[%s191 + $0x130] sm:$0xff]
      %v244 = vld [vmem:[%s191 + $0x138] sm:$0xff]
      %v245 = vld [vmem:[%s191 + $0x140] sm:$0xff]
      %v246 = vld [vmem:[%s191 + $0x148] sm:$0xff]
      %v247 = vld [vmem:[%s191 + $0x150] sm:$0xff]
      %v248 = vld [vmem:[%s191 + $0x158] sm:$0xff]
      %v249 = vld [vmem:[%s191 + $0x160] sm:$0xff]
      %v250 = vld [vmem:[%s191 + $0x168] sm:$0xff]
      %v251 = vld [vmem:[%s191 + $0x170] sm:$0xff]
      %v252 = vld [vmem:[%s191 + $0x178] sm:$0xff]
      %v253 = vld [vmem:[%s191 + $0x180] sm:$0xff]
      %v254 = vld [vmem:[%s191 + $0x188] sm:$0xff]
      %v255 = vld [vmem:[%s191 + $0x190] sm:$0xff]
      %v256 = vld [vmem:[%s191 + $0x198] sm:$0xff]
      %v257 = vld [vmem:[%s191 + $0x1a0] sm:$0xff]
      %v258 = vld [vmem:[%s191 + $0x1a8] sm:$0xff]
      %v259 = vld [vmem:[%s191 + $0x1b0] sm:$0xff]
      %v260 = vld [vmem:[%s191 + $0x1b8] sm:$0xff]
      %v261 = vld [vmem:[%s191 + $0x1c0] sm:$0xff]
      %v262 = vld [vmem:[%s191 + $0x1c8] sm:$0xff]
      %v263 = vld [vmem:[%s191 + $0x1d0] sm:$0xff]
      %v264 = vld [vmem:[%s191 + $0x1d8] sm:$0xff]
      %v265 = vld [vmem:[%s191 + $0x1e0] sm:$0xff]
      %v266 = vld [vmem:[%s191 + $0x1e8] sm:$0xff]
      %v267 = vld [vmem:[%s191 + $0x1f0] sm:$0xff]
      %v268 = vld [vmem:[%s191 + $0x1f8] sm:$0xff]
      %v269 = vld [vmem:[%s191 + $0x200] sm:$0xff]
      %v270 = vld [vmem:[%s191 + $0x208] sm:$0xff]
      %v271 = vld [vmem:[%s191 + $0x210] sm:$0xff]
      %v272 = vld [vmem:[%s191 + $0x218] sm:$0xff]
      %v273 = vld [vmem:[%s191 + $0x220] sm:$0xff]
      %v274 = vld [vmem:[%s191 + $0x228] sm:$0xff]
      %v275 = vld [vmem:[%s191 + $0x230] sm:$0xff]
      %v276 = vld [vmem:[%s191 + $0x238] sm:$0xff]
      %v277 = vld [vmem:[%s191 + $0x240] sm:$0xff]
      %v278 = vld [vmem:[%s191 + $0x248] sm:$0xff]
      %v279 = vld [vmem:[%s191 + $0x250] sm:$0xff]
      %v280 = vld [vmem:[%s191 + $0x258] sm:$0xff]
      %v281 = vld [vmem:[%s191 + $0x260] sm:$0xff]
      %v282 = vld [vmem:[%s191 + $0x268] sm:$0xff]
      %v283 = vld [vmem:[%s191 + $0x270] sm:$0xff]
      %v284 = vld [vmem:[%s191 + $0x278] sm:$0xff]
      %v285 = vld [vmem:[%s191 + $0x280] sm:$0xff]
      %v286 = vld [vmem:[%s191 + $0x288] sm:$0xff]
      %v287 = vld [vmem:[%s191 + $0x290] sm:$0xff]
      %v288 = vld [vmem:[%s191 + $0x298] sm:$0xff]
      %v289 = vld [vmem:[%s191 + $0x2a0] sm:$0xff]
      %v290 = vld [vmem:[%s191 + $0x2a8] sm:$0xff]
      %v291 = vld [vmem:[%s191 + $0x2b0] sm:$0xff]
      %v292 = vld [vmem:[%s191 + $0x2b8] sm:$0xff]
      %v293 = vld [vmem:[%s191 + $0x2c0] sm:$0xff]
      %v294 = vld [vmem:[%s191 + $0x2c8] sm:$0xff]
      %v295 = vld [vmem:[%s191 + $0x2d0] sm:$0xff]
      %v296 = vld [vmem:[%s191 + $0x2d8] sm:$0xff]
      %v297 = vld [vmem:[%s191 + $0x2e0] sm:$0xff]
      %v298 = vld [vmem:[%s191 + $0x2e8] sm:$0xff]
      %v299 = vld [vmem:[%s191 + $0x2f0] sm:$0xff]
      %v300 = vld [vmem:[%s191 + $0x2f8] sm:$0xff]
      %v301 = vld [vmem:[%s191 + $0x300] sm:$0xff]
      %v302 = vld [vmem:[%s191 + $0x308] sm:$0xff]
      %v303 = vld [vmem:[%s191 + $0x310] sm:$0xff]
      %v304 = vld [vmem:[%s191 + $0x318] sm:$0xff]
      %v305 = vld [vmem:[%s191 + $0x320] sm:$0xff]
      %v306 = vld [vmem:[%s191 + $0x328] sm:$0xff]
      %v307 = vld [vmem:[%s191 + $0x330] sm:$0xff]
      %v308 = vld [vmem:[%s191 + $0x338] sm:$0xff]
      %v309 = vld [vmem:[%s191 + $0x340] sm:$0xff]
      %v310 = vld [vmem:[%s191 + $0x348] sm:$0xff]
      %v311 = vld [vmem:[%s191 + $0x350] sm:$0xff]
      %v312 = vld [vmem:[%s191 + $0x358] sm:$0xff]
      %v313 = vld [vmem:[%s191 + $0x360] sm:$0xff]
      %v314 = vld [vmem:[%s191 + $0x368] sm:$0xff]
      %v315 = vld [vmem:[%s191 + $0x370] sm:$0xff]
      %v316 = vld [vmem:[%s191 + $0x378] sm:$0xff]
      %v317 = vld [vmem:[%s191 + $0x380] sm:$0xff]
      %v318 = vld [vmem:[%s191 + $0x388] sm:$0xff]
      %v319 = vld [vmem:[%s191 + $0x390] sm:$0xff]
      %v320 = vld [vmem:[%s191 + $0x398] sm:$0xff]
      %v321 = vld [vmem:[%s191 + $0x3a0] sm:$0xff]
      %v322 = vld [vmem:[%s191 + $0x3a8] sm:$0xff]
      %v323 = vld [vmem:[%s191 + $0x3b0] sm:$0xff]
      %v324 = vld [vmem:[%s191 + $0x3b8] sm:$0xff]
      %v325 = vld [vmem:[%s191 + $0x3c0] sm:$0xff]
      %v326 = vld [vmem:[%s191 + $0x3c8] sm:$0xff]
      %v327 = vld [vmem:[%s191 + $0x3d0] sm:$0xff]
      %v328 = vld [vmem:[%s191 + $0x3d8] sm:$0xff]
      %v329 = vld [vmem:[%s191 + $0x3e0] sm:$0xff]
      %v330 = vld [vmem:[%s191 + $0x3e8] sm:$0xff]
      %v331 = vld [vmem:[%s191 + $0x3f0] sm:$0xff]
      %v332 = vld [vmem:[%s191 + $0x3f8] sm:$0xff]
      %v333 = vld [vmem:[%s191 + $0x400] sm:$0xff]
      %v334 = vld [vmem:[%s191 + $0x408] sm:$0xff]
      %v335 = vld [vmem:[%s191 + $0x410] sm:$0xff]
      %v336 = vld [vmem:[%s191 + $0x418] sm:$0xff]
      %v337 = vld [vmem:[%s191 + $0x420] sm:$0xff]
      %v338 = vld [vmem:[%s191 + $0x428] sm:$0xff]
      %v339 = vld [vmem:[%s191 + $0x430] sm:$0xff]
      %v340 = vld [vmem:[%s191 + $0x438] sm:$0xff]
      %v341 = vld [vmem:[%s191 + $0x440] sm:$0xff]
      %v342 = vld [vmem:[%s191 + $0x448] sm:$0xff]
      %v343 = vld [vmem:[%s191 + $0x450] sm:$0xff]
      %v344 = vld [vmem:[%s191 + $0x458] sm:$0xff]
      %v345 = vld [vmem:[%s191 + $0x460] sm:$0xff]
      %v346 = vld [vmem:[%s191 + $0x468] sm:$0xff]
      %v347 = vld [vmem:[%s191 + $0x470] sm:$0xff]
      %v348 = vld [vmem:[%s191 + $0x478] sm:$0xff]
      %v349 = vld [vmem:[%s191 + $0x480] sm:$0xff]
      %v350 = vld [vmem:[%s191 + $0x488] sm:$0xff]
      %v351 = vld [vmem:[%s191 + $0x490] sm:$0xff]
      %v352 = vld [vmem:[%s191 + $0x498] sm:$0xff]
      %v353 = vld [vmem:[%s191 + $0x4a0] sm:$0xff]
      %v354 = vld [vmem:[%s191 + $0x4a8] sm:$0xff]
      %v355 = vld [vmem:[%s191 + $0x4b0] sm:$0xff]
      %v356 = vld [vmem:[%s191 + $0x4b8] sm:$0xff]
      %v357 = vld [vmem:[%s191 + $0x4c0] sm:$0xff]
      %v358 = vld [vmem:[%s191 + $0x4c8] sm:$0xff]
      %v359 = vld [vmem:[%s191 + $0x4d0] sm:$0xff]
      %v360 = vld [vmem:[%s191 + $0x4d8] sm:$0xff]
      %v361 = vld [vmem:[%s191 + $0x4e0] sm:$0xff]
      %v362 = vld [vmem:[%s191 + $0x4e8] sm:$0xff]
      %v363 = vld [vmem:[%s191 + $0x4f0] sm:$0xff]
      %v364 = vld [vmem:[%s191 + $0x4f8] sm:$0xff]
      %v365 = vld [vmem:[%s191 + $0x500] sm:$0xff]
      %v366 = vld [vmem:[%s191 + $0x508] sm:$0xff]
      %v367 = vld [vmem:[%s191 + $0x510] sm:$0xff]
      %v368 = vld [vmem:[%s191 + $0x518] sm:$0xff]
      %v369 = vld [vmem:[%s191 + $0x520] sm:$0xff]
      %v370 = vld [vmem:[%s191 + $0x528] sm:$0xff]
      %v371 = vld [vmem:[%s191 + $0x530] sm:$0xff]
      %v372 = vld [vmem:[%s191 + $0x538] sm:$0xff]
      %v373 = vld [vmem:[%s191 + $0x540] sm:$0xff]
      %v374 = vld [vmem:[%s191 + $0x548] sm:$0xff]
      %v375 = vld [vmem:[%s191 + $0x550] sm:$0xff]
      %v376 = vld [vmem:[%s191 + $0x558] sm:$0xff]
      %v377 = vld [vmem:[%s191 + $0x560] sm:$0xff]
      %v378 = vld [vmem:[%s191 + $0x568] sm:$0xff]
      %v379 = vld [vmem:[%s191 + $0x570] sm:$0xff]
      %v380 = vld [vmem:[%s191 + $0x578] sm:$0xff]
      %v381 = vld [vmem:[%s191 + $0x580] sm:$0xff]
      %v382 = vld [vmem:[%s191 + $0x588] sm:$0xff]
      %v383 = vld [vmem:[%s191 + $0x590] sm:$0xff]
      %v384 = vld [vmem:[%s191 + $0x598] sm:$0xff]
      %v385 = vld [vmem:[%s191 + $0x5a0] sm:$0xff]
      %v386 = vld [vmem:[%s191 + $0x5a8] sm:$0xff]
      %v387 = vld [vmem:[%s191 + $0x5b0] sm:$0xff]
      %v388 = vld [vmem:[%s191 + $0x5b8] sm:$0xff]
      %v389 = vld [vmem:[%s191 + $0x5c0] sm:$0xff]
      %v390 = vld [vmem:[%s191 + $0x5c8] sm:$0xff]
      %v391 = vld [vmem:[%s191 + $0x5d0] sm:$0xff]
      %v392 = vld [vmem:[%s191 + $0x5d8] sm:$0xff]
      %v393 = vld [vmem:[%s191 + $0x5e0] sm:$0xff]
      %v394 = vld [vmem:[%s191 + $0x5e8] sm:$0xff]
      %v395 = vld [vmem:[%s191 + $0x5f0] sm:$0xff]
      %v396 = vld [vmem:[%s191 + $0x5f8] sm:$0xff]
      %v397 = vld [vmem:[%s191 + $0x600] sm:$0xff]
      %v398 = vld [vmem:[%s191 + $0x608] sm:$0xff]
      %v399 = vld [vmem:[%s191 + $0x610] sm:$0xff]
      %v400 = vld [vmem:[%s191 + $0x618] sm:$0xff]
      %v401 = vld [vmem:[%s191 + $0x620] sm:$0xff]
      %v402 = vld [vmem:[%s191 + $0x628] sm:$0xff]
      %v403 = vld [vmem:[%s191 + $0x630] sm:$0xff]
      %v404 = vld [vmem:[%s191 + $0x638] sm:$0xff]
      %v405 = vld [vmem:[%s191 + $0x640] sm:$0xff]
      %v406 = vld [vmem:[%s191 + $0x648] sm:$0xff]
      %v407 = vld [vmem:[%s191 + $0x650] sm:$0xff]
      %v408 = vld [vmem:[%s191 + $0x658] sm:$0xff]
      %v409 = vld [vmem:[%s191 + $0x660] sm:$0xff]
      %v410 = vld [vmem:[%s191 + $0x668] sm:$0xff]
      %v411 = vld [vmem:[%s191 + $0x670] sm:$0xff]
      %v412 = vld [vmem:[%s191 + $0x678] sm:$0xff]
      %v413 = vld [vmem:[%s191 + $0x680] sm:$0xff]
      %v414 = vld [vmem:[%s191 + $0x688] sm:$0xff]
      %v415 = vld [vmem:[%s191 + $0x690] sm:$0xff]
      %v416 = vld [vmem:[%s191 + $0x698] sm:$0xff]
      %v417 = vld [vmem:[%s191 + $0x6a0] sm:$0xff]
      %v418 = vld [vmem:[%s191 + $0x6a8] sm:$0xff]
      %v419 = vld [vmem:[%s191 + $0x6b0] sm:$0xff]
      %v420 = vld [vmem:[%s191 + $0x6b8] sm:$0xff]
      %v421 = vld [vmem:[%s191 + $0x6c0] sm:$0xff]
      %v422 = vld [vmem:[%s191 + $0x6c8] sm:$0xff]
      %v423 = vld [vmem:[%s191 + $0x6d0] sm:$0xff]
      %v424 = vld [vmem:[%s191 + $0x6d8] sm:$0xff]
      %v425 = vld [vmem:[%s191 + $0x6e0] sm:$0xff]
      %v426 = vld [vmem:[%s191 + $0x6e8] sm:$0xff]
      %v427 = vld [vmem:[%s191 + $0x6f0] sm:$0xff]
      %v428 = vld [vmem:[%s191 + $0x6f8] sm:$0xff]
      %v429 = vld [vmem:[%s191 + $0x700] sm:$0xff]
      %v430 = vld [vmem:[%s191 + $0x708] sm:$0xff]
      %v431 = vld [vmem:[%s191 + $0x710] sm:$0xff]
      %v432 = vld [vmem:[%s191 + $0x718] sm:$0xff]
      %v433 = vld [vmem:[%s191 + $0x720] sm:$0xff]
      %v434 = vld [vmem:[%s191 + $0x728] sm:$0xff]
      %v435 = vld [vmem:[%s191 + $0x730] sm:$0xff]
      %v436 = vld [vmem:[%s191 + $0x738] sm:$0xff]
      %v437 = vld [vmem:[%s191 + $0x740] sm:$0xff]
      %v438 = vld [vmem:[%s191 + $0x748] sm:$0xff]
      %v439 = vld [vmem:[%s191 + $0x750] sm:$0xff]
      %v440 = vld [vmem:[%s191 + $0x758] sm:$0xff]
      %v441 = vld [vmem:[%s191 + $0x760] sm:$0xff]
      %v442 = vld [vmem:[%s191 + $0x768] sm:$0xff]
      %v443 = vld [vmem:[%s191 + $0x770] sm:$0xff]
      %v444 = vld [vmem:[%s191 + $0x778] sm:$0xff]
      %v445 = vld [vmem:[%s191 + $0x780] sm:$0xff]
      %v446 = vld [vmem:[%s191 + $0x788] sm:$0xff]
      %v447 = vld [vmem:[%s191 + $0x790] sm:$0xff]
      %v448 = vld [vmem:[%s191 + $0x798] sm:$0xff]
      %v449 = vld [vmem:[%s191 + $0x7a0] sm:$0xff]
      %v450 = vld [vmem:[%s191 + $0x7a8] sm:$0xff]
      %v451 = vld [vmem:[%s191 + $0x7b0] sm:$0xff]
      %v452 = vld [vmem:[%s191 + $0x7b8] sm:$0xff]
      %v453 = vld [vmem:[%s191 + $0x7c0] sm:$0xff]
      %v454 = vld [vmem:[%s191 + $0x7c8] sm:$0xff]
      %v455 = vld [vmem:[%s191 + $0x7d0] sm:$0xff]
      %v456 = vld [vmem:[%s191 + $0x7d8] sm:$0xff]
      %v457 = vld [vmem:[%s191 + $0x7e0] sm:$0xff]
      %v458 = vld [vmem:[%s191 + $0x7e8] sm:$0xff]
      %v459 = vld [vmem:[%s191 + $0x7f0] sm:$0xff]
      %v460 = vld [vmem:[%s191 + $0x7f8] sm:$0xff]
      %v461 = vld [vmem:[%s191 + $0x800] sm:$0xff]
      %v462 = vld [vmem:[%s191 + $0x808] sm:$0xff]
      %v463 = vld [vmem:[%s191 + $0x810] sm:$0xff]
      %v464 = vld [vmem:[%s191 + $0x818] sm:$0xff]
      %v465 = vld [vmem:[%s191 + $0x820] sm:$0xff]
      %v466 = vld [vmem:[%s191 + $0x828] sm:$0xff]
      %v467 = vld [vmem:[%s191 + $0x830] sm:$0xff]
      %v468 = vld [vmem:[%s191 + $0x838] sm:$0xff]
      %v469 = vld [vmem:[%s191 + $0x840] sm:$0xff]
      %v470 = vld [vmem:[%s191 + $0x848] sm:$0xff]
      %v471 = vld [vmem:[%s191 + $0x850] sm:$0xff]
      %v472 = vld [vmem:[%s191 + $0x858] sm:$0xff]
      %v473 = vld [vmem:[%s191 + $0x860] sm:$0xff]
      %v474 = vld [vmem:[%s191 + $0x868] sm:$0xff]
      %v475 = vld [vmem:[%s191 + $0x870] sm:$0xff]
      %v476 = vld [vmem:[%s191 + $0x878] sm:$0xff]
      %v477 = vld [vmem:[%s191 + $0x880] sm:$0xff]
      %v478 = vld [vmem:[%s191 + $0x888] sm:$0xff]
      %v479 = vld [vmem:[%s191 + $0x890] sm:$0xff]
      %v480 = vld [vmem:[%s191 + $0x898] sm:$0xff]
      %v481 = vld [vmem:[%s191 + $0x8a0] sm:$0xff]
      %v482 = vld [vmem:[%s191 + $0x8a8] sm:$0xff]
      %v483 = vld [vmem:[%s191 + $0x8b0] sm:$0xff]
      %v484 = vld [vmem:[%s191 + $0x8b8] sm:$0xff]
      %v485 = vld [vmem:[%s191 + $0x8c0] sm:$0xff]
      %v486 = vld [vmem:[%s191 + $0x8c8] sm:$0xff]
      %v487 = vld [vmem:[%s191 + $0x8d0] sm:$0xff]
      %v488 = vld [vmem:[%s191 + $0x8d8] sm:$0xff]
      %v489 = vld [vmem:[%s191 + $0x8e0] sm:$0xff]
      %v490 = vld [vmem:[%s191 + $0x8e8] sm:$0xff]
      %v491 = vld [vmem:[%s191 + $0x8f0] sm:$0xff]
      %v492 = vld [vmem:[%s191 + $0x8f8] sm:$0xff]
      %v493 = vld [vmem:[%s191 + $0x900] sm:$0xff]
      %v494 = vld [vmem:[%s191 + $0x908] sm:$0xff]
      %v495 = vld [vmem:[%s191 + $0x910] sm:$0xff]
      %v496 = vld [vmem:[%s191 + $0x918] sm:$0xff]
      %v497 = vld [vmem:[%s191 + $0x920] sm:$0xff]
      %v498 = vld [vmem:[%s191 + $0x928] sm:$0xff]
      %v499 = vld [vmem:[%s191 + $0x930] sm:$0xff]
      %v500 = vld [vmem:[%s191 + $0x938] sm:$0xff]
      %v501 = vld [vmem:[%s191 + $0x940] sm:$0xff]
      %v502 = vld [vmem:[%s191 + $0x948] sm:$0xff]
      %v503 = vld [vmem:[%s191 + $0x950] sm:$0xff]
      %v504 = vld [vmem:[%s191 + $0x958] sm:$0xff]
      %v505 = vld [vmem:[%s191 + $0x960] sm:$0xff]
      %v506 = vld [vmem:[%s191 + $0x968] sm:$0xff]
      %v507 = vld [vmem:[%s191 + $0x970] sm:$0xff]
      %v508 = vld [vmem:[%s191 + $0x978] sm:$0xff]
      %v509 = vld [vmem:[%s191 + $0x980] sm:$0xff]
      %v510 = vld [vmem:[%s191 + $0x988] sm:$0xff]
      %v511 = vld [vmem:[%s191 + $0x990] sm:$0xff]
      %v512 = vld [vmem:[%s191 + $0x998] sm:$0xff]
      %v513 = vld [vmem:[%s191 + $0x9a0] sm:$0xff]
      %v514 = vld [vmem:[%s191 + $0x9a8] sm:$0xff]
      %v515 = vld [vmem:[%s191 + $0x9b0] sm:$0xff]
      %v516 = vld [vmem:[%s191 + $0x9b8] sm:$0xff]
      %v517 = vld [vmem:[%s191 + $0x9c0] sm:$0xff]
      %v518 = vld [vmem:[%s191 + $0x9c8] sm:$0xff]
      %v519 = vld [vmem:[%s191 + $0x9d0] sm:$0xff]
      %v520 = vld [vmem:[%s191 + $0x9d8] sm:$0xff]
      %v521 = vld [vmem:[%s191 + $0x9e0] sm:$0xff]
      %v522 = vld [vmem:[%s191 + $0x9e8] sm:$0xff]
      %v523 = vld [vmem:[%s191 + $0x9f0] sm:$0xff]
      %v524 = vld [vmem:[%s191 + $0x9f8] sm:$0xff]
      %v525 = vld [vmem:[%s191 + $0xa00] sm:$0xff]
      %v526 = vld [vmem:[%s191 + $0xa08] sm:$0xff]
      %v527 = vld [vmem:[%s191 + $0xa10] sm:$0xff]
      %v528 = vld [vmem:[%s191 + $0xa18] sm:$0xff]
      %v529 = vld [vmem:[%s191 + $0xa20] sm:$0xff]
      %v530 = vld [vmem:[%s191 + $0xa28] sm:$0xff]
      %v531 = vld [vmem:[%s191 + $0xa30] sm:$0xff]
      %v532 = vld [vmem:[%s191 + $0xa38] sm:$0xff]
      %v533 = vld [vmem:[%s191 + $0xa40] sm:$0xff]
      %v534 = vld [vmem:[%s191 + $0xa48] sm:$0xff]
      %v535 = vld [vmem:[%s191 + $0xa50] sm:$0xff]
      %v536 = vld [vmem:[%s191 + $0xa58] sm:$0xff]
      %v537 = vld [vmem:[%s191 + $0xa60] sm:$0xff]
      %v538 = vld [vmem:[%s191 + $0xa68] sm:$0xff]
      %v539 = vld [vmem:[%s191 + $0xa70] sm:$0xff]
      %v540 = vld [vmem:[%s191 + $0xa78] sm:$0xff]
      %v541 = vld [vmem:[%s196] sm:$0xff]
      %v542 = vld [vmem:[%s196 + $0x8] sm:$0xff]
      %v543 = vld [vmem:[%s196 + $0x10] sm:$0xff]
      %v544 = vld [vmem:[%s196 + $0x18] sm:$0xff]
      %v545 = vld [vmem:[%s196 + $0x20] sm:$0xff]
      %v546 = vld [vmem:[%s196 + $0x28] sm:$0xff]
      %v547 = vld [vmem:[%s196 + $0x30] sm:$0xff]
      %v548 = vld [vmem:[%s196 + $0x38] sm:$0xff]
      %v549 = vld [vmem:[%s196 + $0x40] sm:$0xff]
      %v550 = vld [vmem:[%s196 + $0x48] sm:$0xff]
      %v551 = vld [vmem:[%s196 + $0x50] sm:$0xff]
      %v552 = vld [vmem:[%s196 + $0x58] sm:$0xff]
      %v553 = vld [vmem:[%s196 + $0x60] sm:$0xff]
      %v554 = vld [vmem:[%s196 + $0x68] sm:$0xff]
      %v555 = vld [vmem:[%s196 + $0x70] sm:$0xff]
      %v556 = vld [vmem:[%s196 + $0x78] sm:$0xff]
      %v557 = vld [vmem:[%s196 + $0x80] sm:$0xff]
      %v558 = vld [vmem:[%s196 + $0x88] sm:$0xff]
      %v559 = vld [vmem:[%s196 + $0x90] sm:$0xff]
      %v560 = vld [vmem:[%s196 + $0x98] sm:$0xff]
      %v561 = vld [vmem:[%s196 + $0xa0] sm:$0xff]
      %v562 = vld [vmem:[%s196 + $0xa8] sm:$0xff]
      %v563 = vld [vmem:[%s196 + $0xb0] sm:$0xff]
      %v564 = vld [vmem:[%s196 + $0xb8] sm:$0xff]
      %v565 = vld [vmem:[%s196 + $0xc0] sm:$0xff]
      %v566 = vld [vmem:[%s196 + $0xc8] sm:$0xff]
      %v567 = vld [vmem:[%s196 + $0xd0] sm:$0xff]
      %v568 = vld [vmem:[%s196 + $0xd8] sm:$0xff]
      %v569 = vld [vmem:[%s196 + $0xe0] sm:$0xff]
      %v570 = vld [vmem:[%s196 + $0xe8] sm:$0xff]
      %v571 = vld [vmem:[%s196 + $0xf0] sm:$0xff]
      %v572 = vld [vmem:[%s196 + $0xf8] sm:$0xff]
      %v573 = vld [vmem:[%s196 + $0x100] sm:$0xff]
      %v574 = vld [vmem:[%s196 + $0x108] sm:$0xff]
      %v575 = vld [vmem:[%s196 + $0x110] sm:$0xff]
      %v576 = vld [vmem:[%s196 + $0x118] sm:$0xff]
      %v577 = vld [vmem:[%s196 + $0x120] sm:$0xff]
      %v578 = vld [vmem:[%s196 + $0x128] sm:$0xff]
      %v579 = vld [vmem:[%s196 + $0x130] sm:$0xff]
      %v580 = vld [vmem:[%s196 + $0x138] sm:$0xff]
      %v581 = vld [vmem:[%s196 + $0x140] sm:$0xff]
      %v582 = vld [vmem:[%s196 + $0x148] sm:$0xff]
      %v583 = vld [vmem:[%s196 + $0x150] sm:$0xff]
      %v584 = vld [vmem:[%s196 + $0x158] sm:$0xff]
      %v585 = vld [vmem:[%s196 + $0x160] sm:$0xff]
      %v586 = vld [vmem:[%s196 + $0x168] sm:$0xff]
      %v587 = vld [vmem:[%s196 + $0x170] sm:$0xff]
      %v588 = vld [vmem:[%s196 + $0x178] sm:$0xff]
      %v589 = vld [vmem:[%s196 + $0x180] sm:$0xff]
      %v590 = vld [vmem:[%s196 + $0x188] sm:$0xff]
      %v591 = vld [vmem:[%s196 + $0x190] sm:$0xff]
      %v592 = vld [vmem:[%s196 + $0x198] sm:$0xff]
      %v593 = vld [vmem:[%s196 + $0x1a0] sm:$0xff]
      %v594 = vld [vmem:[%s196 + $0x1a8] sm:$0xff]
      %v595 = vld [vmem:[%s196 + $0x1b0] sm:$0xff]
      %v596 = vld [vmem:[%s196 + $0x1b8] sm:$0xff]
      %v597 = vld [vmem:[%s196 + $0x1c0] sm:$0xff]
      %v598 = vld [vmem:[%s196 + $0x1c8] sm:$0xff]
      %v599 = vld [vmem:[%s196 + $0x1d0] sm:$0xff]
      %v600 = vld [vmem:[%s196 + $0x1d8] sm:$0xff]
      %v601 = vld [vmem:[%s196 + $0x1e0] sm:$0xff]
      %v602 = vld [vmem:[%s196 + $0x1e8] sm:$0xff]
      %v603 = vld [vmem:[%s196 + $0x1f0] sm:$0xff]
      %v604 = vld [vmem:[%s196 + $0x1f8] sm:$0xff]
      %v605 = vld [vmem:[%s196 + $0x200] sm:$0xff]
      %v606 = vld [vmem:[%s196 + $0x208] sm:$0xff]
      %v607 = vld [vmem:[%s196 + $0x210] sm:$0xff]
      %v608 = vld [vmem:[%s196 + $0x218] sm:$0xff]
      %v609 = vld [vmem:[%s196 + $0x220] sm:$0xff]
      %v610 = vld [vmem:[%s196 + $0x228] sm:$0xff]
      %v611 = vld [vmem:[%s196 + $0x230] sm:$0xff]
      %v612 = vld [vmem:[%s196 + $0x238] sm:$0xff]
      %v613 = vld [vmem:[%s196 + $0x240] sm:$0xff]
      %v614 = vld [vmem:[%s196 + $0x248] sm:$0xff]
      %v615 = vld [vmem:[%s196 + $0x250] sm:$0xff]
      %v616 = vld [vmem:[%s196 + $0x258] sm:$0xff]
      %v617 = vld [vmem:[%s196 + $0x260] sm:$0xff]
      %v618 = vld [vmem:[%s196 + $0x268] sm:$0xff]
      %v619 = vld [vmem:[%s196 + $0x270] sm:$0xff]
      %v620 = vld [vmem:[%s196 + $0x278] sm:$0xff]
      %v621 = vld [vmem:[%s196 + $0x280] sm:$0xff]
      %v622 = vld [vmem:[%s196 + $0x288] sm:$0xff]
      %v623 = vld [vmem:[%s196 + $0x290] sm:$0xff]
      %v624 = vld [vmem:[%s196 + $0x298] sm:$0xff]
      %v625 = vld [vmem:[%s196 + $0x2a0] sm:$0xff]
      %v626 = vld [vmem:[%s196 + $0x2a8] sm:$0xff]
      %v627 = vld [vmem:[%s196 + $0x2b0] sm:$0xff]
      %v628 = vld [vmem:[%s196 + $0x2b8] sm:$0xff]
      %v629 = vld [vmem:[%s196 + $0x2c0] sm:$0xff]
      %v630 = vld [vmem:[%s196 + $0x2c8] sm:$0xff]
      %v631 = vld [vmem:[%s196 + $0x2d0] sm:$0xff]
      %v632 = vld [vmem:[%s196 + $0x2d8] sm:$0xff]
      %v633 = vld [vmem:[%s196 + $0x2e0] sm:$0xff]
      %v634 = vld [vmem:[%s196 + $0x2e8] sm:$0xff]
      %v635 = vld [vmem:[%s196 + $0x2f0] sm:$0xff]
      %v636 = vld [vmem:[%s196 + $0x2f8] sm:$0xff]
      %v637 = vld [vmem:[%s196 + $0x300] sm:$0xff]
      %v638 = vld [vmem:[%s196 + $0x308] sm:$0xff]
      %v639 = vld [vmem:[%s196 + $0x310] sm:$0xff]
      %v640 = vld [vmem:[%s196 + $0x318] sm:$0xff]
      %v641 = vld [vmem:[%s196 + $0x320] sm:$0xff]
      %v642 = vld [vmem:[%s196 + $0x328] sm:$0xff]
      %v643 = vld [vmem:[%s196 + $0x330] sm:$0xff]
      %v644 = vld [vmem:[%s196 + $0x338] sm:$0xff]
      %v645 = vld [vmem:[%s196 + $0x340] sm:$0xff]
      %v646 = vld [vmem:[%s196 + $0x348] sm:$0xff]
      %v647 = vld [vmem:[%s196 + $0x350] sm:$0xff]
      %v648 = vld [vmem:[%s196 + $0x358] sm:$0xff]
      %v649 = vld [vmem:[%s196 + $0x360] sm:$0xff]
      %v650 = vld [vmem:[%s196 + $0x368] sm:$0xff]
      %v651 = vld [vmem:[%s196 + $0x370] sm:$0xff]
      %v652 = vld [vmem:[%s196 + $0x378] sm:$0xff]
      %v653 = vld [vmem:[%s199] sm:$0x1]
      %v655 = vlaneseq
      %v656 = vshrl.u32 %v655, 7
      %v657 = vsub.s32 0, %v656
      %v658 = vrot.slane %v653, %v657
      %660 = vmatprep.subr.mxu0 0.0
      %661 = vmatpush1.msra.mxu0 %v541
      %662 = vmatprep.subr.mxu0 0.0
      %663 = vmatpush1.msra.mxu0 %v542
      %664 = vmatprep.subr.mxu0 0.0
      %665 = vmatpush1.msra.mxu0 %v543
      %666 = vmatprep.subr.mxu0 0.0
      %667 = vmatpush1.msra.mxu0 %v544
      %668 = vmatprep.subr.mxu0 0.0
      %669 = vmatpush1.msra.mxu0 %v545
      %670 = vmatprep.subr.mxu0 0.0
      %671 = vmatpush1.msra.mxu0 %v546
      %672 = vmatprep.subr.mxu0 0.0
      %673 = vmatpush1.msra.mxu0 %v547
      %674 = vmatprep.subr.mxu0 0.0
      %675 = vmatpush1.msra.mxu0 %v548
      %676 = vmatprep.subr.mxu0 0.0
      %677 = vmatpush1.msra.mxu0 %v549
      %678 = vmatprep.subr.mxu0 0.0
      %679 = vmatpush1.msra.mxu0 %v550
      %680 = vmatprep.subr.mxu0 0.0
      %681 = vmatpush1.msra.mxu0 %v551
      %682 = vmatprep.subr.mxu0 0.0
      %683 = vmatpush1.msra.mxu0 %v552
      %684 = vmatprep.subr.mxu0 0.0
      %685 = vmatpush1.msra.mxu0 %v553
      %686 = vmatprep.subr.mxu0 0.0
      %687 = vmatpush1.msra.mxu0 %v554
      %688 = vmatprep.subr.mxu0 0.0
      %689 = vmatpush1.msra.mxu0 %v555
      %690 = vmatprep.subr.mxu0 0.0
      %691 = vmatpush1.msra.mxu0 %v556
      %692 = vmatprep.subr.mxu0 0.0
      %693 = vmatpush1.msra.mxu0 %v557
      %694 = vmatprep.subr.mxu0 0.0
      %695 = vmatpush1.msra.mxu0 %v558
      %696 = vmatprep.subr.mxu0 0.0
      %697 = vmatpush1.msra.mxu0 %v559
      %698 = vmatprep.subr.mxu0 0.0
      %699 = vmatpush1.msra.mxu0 %v560
      %700 = vmatprep.subr.mxu0 0.0
      %701 = vmatpush1.msra.mxu0 %v561
      %702 = vmatprep.subr.mxu0 0.0
      %703 = vmatpush1.msra.mxu0 %v562
      %704 = vmatprep.subr.mxu0 0.0
      %705 = vmatpush1.msra.mxu0 %v563
      %706 = vmatprep.subr.mxu0 0.0
      %707 = vmatpush1.msra.mxu0 %v564
      %708 = vmatprep.subr.mxu0 0.0
      %709 = vmatpush1.msra.mxu0 %v565
      %710 = vmatprep.subr.mxu0 0.0
      %711 = vmatpush1.msra.mxu0 %v566
      %712 = vmatprep.subr.mxu0 0.0
      %713 = vmatpush1.msra.mxu0 %v567
      %714 = vmatprep.subr.mxu0 0.0
      %715 = vmatpush1.msra.mxu0 %v568
      %716 = vmatprep.subr.mxu0 0.0
      %717 = vmatpush1.msra.mxu0 %v569
      %718 = vmatprep.subr.mxu0 0.0
      %719 = vmatpush1.msra.mxu0 %v570
      %720 = vmatprep.subr.mxu0 0.0
      %721 = vmatpush1.msra.mxu0 %v571
      %722 = vmatprep.subr.mxu0 0.0
      %723 = vmatpush1.msra.mxu0 %v572
      %724 = vmatprep.mubr.f32.mxu0 %v206
      %725 = vmatmul.mubr.f32.gmra.mrb[0].mxu0 %v205
      %v726 = vpop.f32.mrb[0].mxu0
      %v727 = vadd.f32 %v658, %v726
      %v728 = vpop.f32.mrb[0].mxu0
      %729 = vmatprep.mubr.f32.mxu0 %v213
      %730 = vmatmul.mubr.f32.gmra.mrb[0].mxu0 %v212
      %v731 = vpop.f32.mrb[0].mxu0
      %v732 = vadd.f32 %v658, %v731
      %v733 = vpop.f32.mrb[0].mxu0
      %734 = vmatprep.mubr.f32.mxu0 %v220
      %735 = vmatmul.mubr.f32.gmra.mrb[0].mxu0 %v219
      %v736 = vpop.f32.mrb[0].mxu0
      %v737 = vadd.f32 %v658, %v736
      %v738 = vpop.f32.mrb[0].mxu0
      %739 = vmatprep.mubr.f32.mxu0 %v227
      %740 = vmatmul.mubr.f32.gmra.mrb[0].mxu0 %v226
      %v741 = vpop.f32.mrb[0].mxu0
      %v742 = vadd.f32 %v658, %v741
      %v743 = vpop.f32.mrb[0].mxu0
      %744 = vmatprep.mubr.f32.mxu0 %v234
      %745 = vmatmul.mubr.f32.gmra.mrb[0].mxu0 %v233
      %v746 = vpop.f32.mrb[0].mxu0
      %v747 = vadd.f32 %v658, %v746
      %v748 = vpop.f32.mrb[0].mxu0
      %749 = vmatprep.mubr.f32.mxu0 %v241
      %750 = vmatmul.mubr.f32.gmra.mrb[0].mxu0 %v240
      %v751 = vpop.f32.mrb[0].mxu0
      %v752 = vadd.f32 %v658, %v751
      %v753 = vpop.f32.mrb[0].mxu0
      %754 = vmatprep.mubr.f32.mxu0 %v248
      %755 = vmatmul.mubr.f32.gmra.mrb[0].mxu0 %v247
      %v756 = vpop.f32.mrb[0].mxu0
      %v757 = vadd.f32 %v658, %v756
      %v758 = vpop.f32.mrb[0].mxu0
      %759 = vmatprep.mubr.f32.mxu0 %v255
      %760 = vmatmul.mubr.f32.gmra.mrb[0].mxu0 %v254
      %v761 = vpop.f32.mrb[0].mxu0
      %v762 = vadd.f32 %v658, %v761
      %v763 = vpop.f32.mrb[0].mxu0
      %764 = vmatprep.mubr.f32.mxu0 %v262
      %765 = vmatmul.mubr.f32.gmra.mrb[0].mxu0 %v261
      %v766 = vpop.f32.mrb[0].mxu0
      %v767 = vadd.f32 %v658, %v766
      %v768 = vpop.f32.mrb[0].mxu0
      %769 = vmatprep.mubr.f32.mxu0 %v269
      %770 = vmatmul.mubr.f32.gmra.mrb[0].mxu0 %v268
      %v771 = vpop.f32.mrb[0].mxu0
      %v772 = vadd.f32 %v658, %v771
      %v773 = vpop.f32.mrb[0].mxu0
      %774 = vmatprep.mubr.f32.mxu0 %v276
      %775 = vmatmul.mubr.f32.gmra.mrb[0].mxu0 %v275
      %v776 = vpop.f32.mrb[0].mxu0
      %v777 = vadd.f32 %v658, %v776
      %v778 = vpop.f32.mrb[0].mxu0
      %779 = vmatprep.mubr.f32.mxu0 %v283
      %780 = vmatmul.mubr.f32.gmra.mrb[0].mxu0 %v282
      %v781 = vpop.f32.mrb[0].mxu0
      %v782 = vadd.f32 %v658, %v781
      %v783 = vpop.f32.mrb[0].mxu0
      %784 = vmatprep.mubr.f32.mxu0 %v290
      %785 = vmatmul.mubr.f32.gmra.mrb[0].mxu0 %v289
      %v786 = vpop.f32.mrb[0].mxu0
      %v787 = vadd.f32 %v658, %v786
      %v788 = vpop.f32.mrb[0].mxu0
      %789 = vmatprep.mubr.f32.mxu0 %v297
      %790 = vmatmul.mubr.f32.gmra.mrb[0].mxu0 %v296
      %v791 = vpop.f32.mrb[0].mxu0
      %v792 = vadd.f32 %v658, %v791
      %v793 = vpop.f32.mrb[0].mxu0
      %794 = vmatprep.mubr.f32.mxu0 %v304
      %795 = vmatmul.mubr.f32.gmra.mrb[0].mxu0 %v303
      %v796 = vpop.f32.mrb[0].mxu0
      %v797 = vadd.f32 %v658, %v796
      %v798 = vpop.f32.mrb[0].mxu0
      %799 = vmatprep.mubr.f32.mxu0 %v311
      %800 = vmatmul.mubr.f32.gmra.mrb[0].mxu0 %v310
      %v801 = vpop.f32.mrb[0].mxu0
      %v802 = vadd.f32 %v658, %v801
      %v803 = vpop.f32.mrb[0].mxu0
      %804 = vmatprep.mubr.f32.mxu0 %v318
      %805 = vmatmul.mubr.f32.gmra.mrb[0].mxu0 %v317
      %v806 = vpop.f32.mrb[0].mxu0
      %v807 = vadd.f32 %v658, %v806
      %v808 = vpop.f32.mrb[0].mxu0
      %809 = vmatprep.mubr.f32.mxu0 %v325
      %810 = vmatmul.mubr.f32.gmra.mrb[0].mxu0 %v324
      %v811 = vpop.f32.mrb[0].mxu0
      %v812 = vadd.f32 %v658, %v811
      %v813 = vpop.f32.mrb[0].mxu0
      %814 = vmatprep.mubr.f32.mxu0 %v332
      %815 = vmatmul.mubr.f32.gmra.mrb[0].mxu0 %v331
      %v816 = vpop.f32.mrb[0].mxu0
      %v817 = vadd.f32 %v658, %v816
      %v818 = vpop.f32.mrb[0].mxu0
      %819 = vmatprep.mubr.f32.mxu0 %v339
      %820 = vmatmul.mubr.f32.gmra.mrb[0].mxu0 %v338
      %v821 = vpop.f32.mrb[0].mxu0
      %v822 = vadd.f32 %v658, %v821
      %v823 = vpop.f32.mrb[0].mxu0
      %824 = vmatprep.mubr.f32.mxu0 %v346
      %825 = vmatmul.mubr.f32.gmra.mrb[0].mxu0 %v345
      %v826 = vpop.f32.mrb[0].mxu0
      %v827 = vadd.f32 %v658, %v826
      %v828 = vpop.f32.mrb[0].mxu0
      %829 = vmatprep.mubr.f32.mxu0 %v353
      %830 = vmatmul.mubr.f32.gmra.mrb[0].mxu0 %v352
      %v831 = vpop.f32.mrb[0].mxu0
      %v832 = vadd.f32 %v658, %v831
      %v833 = vpop.f32.mrb[0].mxu0
      %834 = vmatprep.mubr.f32.mxu0 %v360
      %835 = vmatmul.mubr.f32.gmra.mrb[0].mxu0 %v359
      %v836 = vpop.f32.mrb[0].mxu0
      %v837 = vadd.f32 %v658, %v836
      %v838 = vpop.f32.mrb[0].mxu0
      %839 = vmatprep.mubr.f32.mxu0 %v367
      %840 = vmatmul.mubr.f32.gmra.mrb[0].mxu0 %v366
      %v841 = vpop.f32.mrb[0].mxu0
      %v842 = vadd.f32 %v658, %v841
      %v843 = vpop.f32.mrb[0].mxu0
      %844 = vmatprep.mubr.f32.mxu0 %v374
      %845 = vmatmul.mubr.f32.gmra.mrb[0].mxu0 %v373
      %v846 = vpop.f32.mrb[0].mxu0
      %v847 = vadd.f32 %v658, %v846
      %v848 = vpop.f32.mrb[0].mxu0
      %849 = vmatprep.mubr.f32.mxu0 %v381
      %850 = vmatmul.mubr.f32.gmra.mrb[0].mxu0 %v380
      %v851 = vpop.f32.mrb[0].mxu0
      %v852 = vadd.f32 %v658, %v851
      %v853 = vpop.f32.mrb[0].mxu0
      %854 = vmatprep.mubr.f32.mxu0 %v388
      %855 = vmatmul.mubr.f32.gmra.mrb[0].mxu0 %v387
      %v856 = vpop.f32.mrb[0].mxu0
      %v857 = vadd.f32 %v658, %v856
      %v858 = vpop.f32.mrb[0].mxu0
      %859 = vmatprep.mubr.f32.mxu0 %v395
      %860 = vmatmul.mubr.f32.gmra.mrb[0].mxu0 %v394
      %v861 = vpop.f32.mrb[0].mxu0
      %v862 = vadd.f32 %v658, %v861
      %v863 = vpop.f32.mrb[0].mxu0
      %864 = vmatprep.mubr.f32.mxu0 %v402
      %865 = vmatmul.mubr.f32.gmra.mrb[0].mxu0 %v401
      %v866 = vpop.f32.mrb[0].mxu0
      %v867 = vadd.f32 %v658, %v866
      %v868 = vpop.f32.mrb[0].mxu0
      %869 = vmatprep.mubr.f32.mxu0 %v409
      %870 = vmatmul.mubr.f32.gmra.mrb[0].mxu0 %v408
      %v871 = vpop.f32.mrb[0].mxu0
      %v872 = vadd.f32 %v658, %v871
      %v873 = vpop.f32.mrb[0].mxu0
      %874 = vmatprep.mubr.f32.mxu0 %v416
      %875 = vmatmul.mubr.f32.gmra.mrb[0].mxu0 %v415
      %v876 = vpop.f32.mrb[0].mxu0
      %v877 = vadd.f32 %v658, %v876
      %v878 = vpop.f32.mrb[0].mxu0
      %879 = vmatprep.mubr.f32.mxu0 %v423
      %880 = vmatmul.mubr.f32.gmra.mrb[0].mxu0 %v422
      %v881 = vpop.f32.mrb[0].mxu0
      %v882 = vadd.f32 %v658, %v881
      %v883 = vpop.f32.mrb[0].mxu0
      %884 = vmatprep.mubr.f32.mxu0 %v430
      %885 = vmatmul.mubr.f32.gmra.mrb[0].mxu0 %v429
      %v886 = vpop.f32.mrb[0].mxu0
      %v887 = vadd.f32 %v658, %v886
      %v888 = vpop.f32.mrb[0].mxu0
      %889 = vmatprep.mubr.f32.mxu0 %v437
      %890 = vmatmul.mubr.f32.gmra.mrb[0].mxu0 %v436
      %v891 = vpop.f32.mrb[0].mxu0
      %v892 = vadd.f32 %v658, %v891
      %v893 = vpop.f32.mrb[0].mxu0
      %894 = vmatprep.mubr.f32.mxu0 %v444
      %895 = vmatmul.mubr.f32.gmra.mrb[0].mxu0 %v443
      %v896 = vpop.f32.mrb[0].mxu0
      %v897 = vadd.f32 %v658, %v896
      %v898 = vpop.f32.mrb[0].mxu0
      %899 = vmatprep.mubr.f32.mxu0 %v451
      %900 = vmatmul.mubr.f32.gmra.mrb[0].mxu0 %v450
      %v901 = vpop.f32.mrb[0].mxu0
      %v902 = vadd.f32 %v658, %v901
      %v903 = vpop.f32.mrb[0].mxu0
      %904 = vmatprep.mubr.f32.mxu0 %v458
      %905 = vmatmul.mubr.f32.gmra.mrb[0].mxu0 %v457
      %v906 = vpop.f32.mrb[0].mxu0
      %v907 = vadd.f32 %v658, %v906
      %v908 = vpop.f32.mrb[0].mxu0
      %909 = vmatprep.mubr.f32.mxu0 %v465
      %910 = vmatmul.mubr.f32.gmra.mrb[0].mxu0 %v464
      %v911 = vpop.f32.mrb[0].mxu0
      %v912 = vadd.f32 %v658, %v911
      %v913 = vpop.f32.mrb[0].mxu0
      %914 = vmatprep.mubr.f32.mxu0 %v472
      %915 = vmatmul.mubr.f32.gmra.mrb[0].mxu0 %v471
      %v916 = vpop.f32.mrb[0].mxu0
      %v917 = vadd.f32 %v658, %v916
      %v918 = vpop.f32.mrb[0].mxu0
      %919 = vmatprep.mubr.f32.mxu0 %v479
      %920 = vmatmul.mubr.f32.gmra.mrb[0].mxu0 %v478
      %v921 = vpop.f32.mrb[0].mxu0
      %v922 = vadd.f32 %v658, %v921
      %v923 = vpop.f32.mrb[0].mxu0
      %924 = vmatprep.mubr.f32.mxu0 %v486
      %925 = vmatmul.mubr.f32.gmra.mrb[0].mxu0 %v485
      %v926 = vpop.f32.mrb[0].mxu0
      %v927 = vadd.f32 %v658, %v926
      %v928 = vpop.f32.mrb[0].mxu0
      %929 = vmatprep.mubr.f32.mxu0 %v493
      %930 = vmatmul.mubr.f32.gmra.mrb[0].mxu0 %v492
      %v931 = vpop.f32.mrb[0].mxu0
      %v932 = vadd.f32 %v658, %v931
      %v933 = vpop.f32.mrb[0].mxu0
      %934 = vmatprep.mubr.f32.mxu0 %v500
      %935 = vmatmul.mubr.f32.gmra.mrb[0].mxu0 %v499
      %v936 = vpop.f32.mrb[0].mxu0
      %v937 = vadd.f32 %v658, %v936
      %v938 = vpop.f32.mrb[0].mxu0
      %939 = vmatprep.mubr.f32.mxu0 %v507
      %940 = vmatmul.mubr.f32.gmra.mrb[0].mxu0 %v506
      %v941 = vpop.f32.mrb[0].mxu0
      %v942 = vadd.f32 %v658, %v941
      %v943 = vpop.f32.mrb[0].mxu0
      %944 = vmatprep.mubr.f32.mxu0 %v514
      %945 = vmatmul.mubr.f32.gmra.mrb[0].mxu0 %v513
      %v946 = vpop.f32.mrb[0].mxu0
      %v947 = vadd.f32 %v658, %v946
      %v948 = vpop.f32.mrb[0].mxu0
      %949 = vmatprep.mubr.f32.mxu0 %v521
      %950 = vmatmul.mubr.f32.gmra.mrb[0].mxu0 %v520
      %v951 = vpop.f32.mrb[0].mxu0
      %v952 = vadd.f32 %v658, %v951
      %v953 = vpop.f32.mrb[0].mxu0
      %954 = vmatprep.mubr.f32.mxu0 %v528
      %955 = vmatmul.mubr.f32.gmra.mrb[0].mxu0 %v527
      %v956 = vpop.f32.mrb[0].mxu0
      %v957 = vadd.f32 %v658, %v956
      %v958 = vpop.f32.mrb[0].mxu0
      %959 = vmatprep.mubr.f32.mxu0 %v535
      %960 = vmatmul.mubr.f32.gmra.mrb[0].mxu0 %v534
      %v961 = vpop.f32.mrb[0].mxu0
      %v962 = vadd.f32 %v658, %v961
      %v963 = vpop.f32.mrb[0].mxu0
      %964 = vdwg.mxu0
      %965 = vmatprep.subr.mxu0 0.0
      %966 = vmatpush1.msra.mxu0 %v573
      %967 = vmatprep.subr.mxu0 0.0
      %968 = vmatpush1.msra.mxu0 %v574
      %969 = vmatprep.subr.mxu0 0.0
      %970 = vmatpush1.msra.mxu0 %v575
      %971 = vmatprep.subr.mxu0 0.0
      %972 = vmatpush1.msra.mxu0 %v576
      %973 = vmatprep.subr.mxu0 0.0
      %974 = vmatpush1.msra.mxu0 %v577
      %975 = vmatprep.subr.mxu0 0.0
      %976 = vmatpush1.msra.mxu0 %v578
      %977 = vmatprep.subr.mxu0 0.0
      %978 = vmatpush1.msra.mxu0 %v579
      %979 = vmatprep.subr.mxu0 0.0
      %980 = vmatpush1.msra.mxu0 %v580
      %981 = vmatprep.subr.mxu0 0.0
      %982 = vmatpush1.msra.mxu0 %v581
      %983 = vmatprep.subr.mxu0 0.0
      %984 = vmatpush1.msra.mxu0 %v582
      %985 = vmatprep.subr.mxu0 0.0
      %986 = vmatpush1.msra.mxu0 %v583
      %987 = vmatprep.subr.mxu0 0.0
      %988 = vmatpush1.msra.mxu0 %v584
      %989 = vmatprep.subr.mxu0 0.0
      %990 = vmatpush1.msra.mxu0 %v585
      %991 = vmatprep.subr.mxu0 0.0
      %992 = vmatpush1.msra.mxu0 %v586
      %993 = vmatprep.subr.mxu0 0.0
      %994 = vmatpush1.msra.mxu0 %v587
      %995 = vmatprep.subr.mxu0 0.0
      %996 = vmatpush1.msra.mxu0 %v588
      %997 = vmatprep.subr.mxu0 0.0
      %998 = vmatpush1.msra.mxu0 %v589
      %999 = vmatprep.subr.mxu0 0.0
      %1000 = vmatpush1.msra.mxu0 %v590
      %1001 = vmatprep.subr.mxu0 0.0
      %1002 = vmatpush1.msra.mxu0 %v591
      %1003 = vmatprep.subr.mxu0 0.0
      %1004 = vmatpush1.msra.mxu0 %v592
      %1005 = vmatprep.subr.mxu0 0.0
      %1006 = vmatpush1.msra.mxu0 %v593
      %1007 = vmatprep.subr.mxu0 0.0
      %1008 = vmatpush1.msra.mxu0 %v594
      %1009 = vmatprep.subr.mxu0 0.0
      %1010 = vmatpush1.msra.mxu0 %v595
      %1011 = vmatprep.subr.mxu0 0.0
      %1012 = vmatpush1.msra.mxu0 %v596
      %1013 = vmatprep.subr.mxu0 0.0
      %1014 = vmatpush1.msra.mxu0 %v597
      %1015 = vmatprep.subr.mxu0 0.0
      %1016 = vmatpush1.msra.mxu0 %v598
      %1017 = vmatprep.subr.mxu0 0.0
      %1018 = vmatpush1.msra.mxu0 %v599
      %1019 = vmatprep.subr.mxu0 0.0
      %1020 = vmatpush1.msra.mxu0 %v600
      %1021 = vmatprep.subr.mxu0 0.0
      %1022 = vmatpush1.msra.mxu0 %v601
      %1023 = vmatprep.subr.mxu0 0.0
      %1024 = vmatpush1.msra.mxu0 %v602
      %1025 = vmatprep.subr.mxu0 0.0
      %1026 = vmatpush1.msra.mxu0 %v603
      %1027 = vmatprep.subr.mxu0 0.0
      %1028 = vmatpush1.msra.mxu0 %v604
      %1029 = vmatprep.mubr.f32.mxu0 %v208
      %1030 = vmatmul.mubr.f32.gmra.mrb[0].mxu0 %v207
      %v1031 = vpop.f32.mrb[0].mxu0
      %v1032 = vadd.f32 %v727, %v1031
      %v1033 = vpop.f32.mrb[0].mxu0
      %1034 = vmatprep.mubr.f32.mxu0 %v215
      %1035 = vmatmul.mubr.f32.gmra.mrb[0].mxu0 %v214
      %v1036 = vpop.f32.mrb[0].mxu0
      %v1037 = vadd.f32 %v732, %v1036
      %v1038 = vpop.f32.mrb[0].mxu0
      %1039 = vmatprep.mubr.f32.mxu0 %v222
      %1040 = vmatmul.mubr.f32.gmra.mrb[0].mxu0 %v221
      %v1041 = vpop.f32.mrb[0].mxu0
      %v1042 = vadd.f32 %v737, %v1041
      %v1043 = vpop.f32.mrb[0].mxu0
      %1044 = vmatprep.mubr.f32.mxu0 %v229
      %1045 = vmatmul.mubr.f32.gmra.mrb[0].mxu0 %v228
      %v1046 = vpop.f32.mrb[0].mxu0
      %v1047 = vadd.f32 %v742, %v1046
      %v1048 = vpop.f32.mrb[0].mxu0
      %1049 = vmatprep.mubr.f32.mxu0 %v236
      %1050 = vmatmul.mubr.f32.gmra.mrb[0].mxu0 %v235
      %v1051 = vpop.f32.mrb[0].mxu0
      %v1052 = vadd.f32 %v747, %v1051
      %v1053 = vpop.f32.mrb[0].mxu0
      %1054 = vmatprep.mubr.f32.mxu0 %v243
      %1055 = vmatmul.mubr.f32.gmra.mrb[0].mxu0 %v242
      %v1056 = vpop.f32.mrb[0].mxu0
      %v1057 = vadd.f32 %v752, %v1056
      %v1058 = vpop.f32.mrb[0].mxu0
      %1059 = vmatprep.mubr.f32.mxu0 %v250
      %1060 = vmatmul.mubr.f32.gmra.mrb[0].mxu0 %v249
      %v1061 = vpop.f32.mrb[0].mxu0
      %v1062 = vadd.f32 %v757, %v1061
      %v1063 = vpop.f32.mrb[0].mxu0
      %1064 = vmatprep.mubr.f32.mxu0 %v257
      %1065 = vmatmul.mubr.f32.gmra.mrb[0].mxu0 %v256
      %v1066 = vpop.f32.mrb[0].mxu0
      %v1067 = vadd.f32 %v762, %v1066
      %v1068 = vpop.f32.mrb[0].mxu0
      %1069 = vmatprep.mubr.f32.mxu0 %v264
      %1070 = vmatmul.mubr.f32.gmra.mrb[0].mxu0 %v263
      %v1071 = vpop.f32.mrb[0].mxu0
      %v1072 = vadd.f32 %v767, %v1071
      %v1073 = vpop.f32.mrb[0].mxu0
      %1074 = vmatprep.mubr.f32.mxu0 %v271
      %1075 = vmatmul.mubr.f32.gmra.mrb[0].mxu0 %v270
      %v1076 = vpop.f32.mrb[0].mxu0
      %v1077 = vadd.f32 %v772, %v1076
      %v1078 = vpop.f32.mrb[0].mxu0
      %1079 = vmatprep.mubr.f32.mxu0 %v278
      %1080 = vmatmul.mubr.f32.gmra.mrb[0].mxu0 %v277
      %v1081 = vpop.f32.mrb[0].mxu0
      %v1082 = vadd.f32 %v777, %v1081
      %v1083 = vpop.f32.mrb[0].mxu0
      %1084 = vmatprep.mubr.f32.mxu0 %v285
      %1085 = vmatmul.mubr.f32.gmra.mrb[0].mxu0 %v284
      %v1086 = vpop.f32.mrb[0].mxu0
      %v1087 = vadd.f32 %v782, %v1086
      %v1088 = vpop.f32.mrb[0].mxu0
      %1089 = vmatprep.mubr.f32.mxu0 %v292
      %1090 = vmatmul.mubr.f32.gmra.mrb[0].mxu0 %v291
      %v1091 = vpop.f32.mrb[0].mxu0
      %v1092 = vadd.f32 %v787, %v1091
      %v1093 = vpop.f32.mrb[0].mxu0
      %1094 = vmatprep.mubr.f32.mxu0 %v299
      %1095 = vmatmul.mubr.f32.gmra.mrb[0].mxu0 %v298
      %v1096 = vpop.f32.mrb[0].mxu0
      %v1097 = vadd.f32 %v792, %v1096
      %v1098 = vpop.f32.mrb[0].mxu0
      %1099 = vmatprep.mubr.f32.mxu0 %v306
      %1100 = vmatmul.mubr.f32.gmra.mrb[0].mxu0 %v305
      %v1101 = vpop.f32.mrb[0].mxu0
      %v1102 = vadd.f32 %v797, %v1101
      %v1103 = vpop.f32.mrb[0].mxu0
      %1104 = vmatprep.mubr.f32.mxu0 %v313
      %1105 = vmatmul.mubr.f32.gmra.mrb[0].mxu0 %v312
      %v1106 = vpop.f32.mrb[0].mxu0
      %v1107 = vadd.f32 %v802, %v1106
      %v1108 = vpop.f32.mrb[0].mxu0
      %1109 = vmatprep.mubr.f32.mxu0 %v320
      %1110 = vmatmul.mubr.f32.gmra.mrb[0].mxu0 %v319
      %v1111 = vpop.f32.mrb[0].mxu0
      %v1112 = vadd.f32 %v807, %v1111
      %v1113 = vpop.f32.mrb[0].mxu0
      %1114 = vmatprep.mubr.f32.mxu0 %v327
      %1115 = vmatmul.mubr.f32.gmra.mrb[0].mxu0 %v326
      %v1116 = vpop.f32.mrb[0].mxu0
      %v1117 = vadd.f32 %v812, %v1116
      %v1118 = vpop.f32.mrb[0].mxu0
      %1119 = vmatprep.mubr.f32.mxu0 %v334
      %1120 = vmatmul.mubr.f32.gmra.mrb[0].mxu0 %v333
      %v1121 = vpop.f32.mrb[0].mxu0
      %v1122 = vadd.f32 %v817, %v1121
      %v1123 = vpop.f32.mrb[0].mxu0
      %1124 = vmatprep.mubr.f32.mxu0 %v341
      %1125 = vmatmul.mubr.f32.gmra.mrb[0].mxu0 %v340
      %v1126 = vpop.f32.mrb[0].mxu0
      %v1127 = vadd.f32 %v822, %v1126
      %v1128 = vpop.f32.mrb[0].mxu0
      %1129 = vmatprep.mubr.f32.mxu0 %v348
      %1130 = vmatmul.mubr.f32.gmra.mrb[0].mxu0 %v347
      %v1131 = vpop.f32.mrb[0].mxu0
      %v1132 = vadd.f32 %v827, %v1131
      %v1133 = vpop.f32.mrb[0].mxu0
      %1134 = vmatprep.mubr.f32.mxu0 %v355
      %1135 = vmatmul.mubr.f32.gmra.mrb[0].mxu0 %v354
      %v1136 = vpop.f32.mrb[0].mxu0
      %v1137 = vadd.f32 %v832, %v1136
      %v1138 = vpop.f32.mrb[0].mxu0
      %1139 = vmatprep.mubr.f32.mxu0 %v362
      %1140 = vmatmul.mubr.f32.gmra.mrb[0].mxu0 %v361
      %v1141 = vpop.f32.mrb[0].mxu0
      %v1142 = vadd.f32 %v837, %v1141
      %v1143 = vpop.f32.mrb[0].mxu0
      %1144 = vmatprep.mubr.f32.mxu0 %v369
      %1145 = vmatmul.mubr.f32.gmra.mrb[0].mxu0 %v368
      %v1146 = vpop.f32.mrb[0].mxu0
      %v1147 = vadd.f32 %v842, %v1146
      %v1148 = vpop.f32.mrb[0].mxu0
      %1149 = vmatprep.mubr.f32.mxu0 %v376
      %1150 = vmatmul.mubr.f32.gmra.mrb[0].mxu0 %v375
      %v1151 = vpop.f32.mrb[0].mxu0
      %v1152 = vadd.f32 %v847, %v1151
      %v1153 = vpop.f32.mrb[0].mxu0
      %1154 = vmatprep.mubr.f32.mxu0 %v383
      %1155 = vmatmul.mubr.f32.gmra.mrb[0].mxu0 %v382
      %v1156 = vpop.f32.mrb[0].mxu0
      %v1157 = vadd.f32 %v852, %v1156
      %v1158 = vpop.f32.mrb[0].mxu0
      %1159 = vmatprep.mubr.f32.mxu0 %v390
      %1160 = vmatmul.mubr.f32.gmra.mrb[0].mxu0 %v389
      %v1161 = vpop.f32.mrb[0].mxu0
      %v1162 = vadd.f32 %v857, %v1161
      %v1163 = vpop.f32.mrb[0].mxu0
      %1164 = vmatprep.mubr.f32.mxu0 %v397
      %1165 = vmatmul.mubr.f32.gmra.mrb[0].mxu0 %v396
      %v1166 = vpop.f32.mrb[0].mxu0
      %v1167 = vadd.f32 %v862, %v1166
      %v1168 = vpop.f32.mrb[0].mxu0
      %1169 = vmatprep.mubr.f32.mxu0 %v404
      %1170 = vmatmul.mubr.f32.gmra.mrb[0].mxu0 %v403
      %v1171 = vpop.f32.mrb[0].mxu0
      %v1172 = vadd.f32 %v867, %v1171
      %v1173 = vpop.f32.mrb[0].mxu0
      %1174 = vmatprep.mubr.f32.mxu0 %v411
      %1175 = vmatmul.mubr.f32.gmra.mrb[0].mxu0 %v410
      %v1176 = vpop.f32.mrb[0].mxu0
      %v1177 = vadd.f32 %v872, %v1176
      %v1178 = vpop.f32.mrb[0].mxu0
      %1179 = vmatprep.mubr.f32.mxu0 %v418
      %1180 = vmatmul.mubr.f32.gmra.mrb[0].mxu0 %v417
      %v1181 = vpop.f32.mrb[0].mxu0
      %v1182 = vadd.f32 %v877, %v1181
      %v1183 = vpop.f32.mrb[0].mxu0
      %1184 = vmatprep.mubr.f32.mxu0 %v425
      %1185 = vmatmul.mubr.f32.gmra.mrb[0].mxu0 %v424
      %v1186 = vpop.f32.mrb[0].mxu0
      %v1187 = vadd.f32 %v882, %v1186
      %v1188 = vpop.f32.mrb[0].mxu0
      %1189 = vmatprep.mubr.f32.mxu0 %v432
      %1190 = vmatmul.mubr.f32.gmra.mrb[0].mxu0 %v431
      %v1191 = vpop.f32.mrb[0].mxu0
      %v1192 = vadd.f32 %v887, %v1191
      %v1193 = vpop.f32.mrb[0].mxu0
      %1194 = vmatprep.mubr.f32.mxu0 %v439
      %1195 = vmatmul.mubr.f32.gmra.mrb[0].mxu0 %v438
      %v1196 = vpop.f32.mrb[0].mxu0
      %v1197 = vadd.f32 %v892, %v1196
      %v1198 = vpop.f32.mrb[0].mxu0
      %1199 = vmatprep.mubr.f32.mxu0 %v446
      %1200 = vmatmul.mubr.f32.gmra.mrb[0].mxu0 %v445
      %v1201 = vpop.f32.mrb[0].mxu0
      %v1202 = vadd.f32 %v897, %v1201
      %v1203 = vpop.f32.mrb[0].mxu0
      %1204 = vmatprep.mubr.f32.mxu0 %v453
      %1205 = vmatmul.mubr.f32.gmra.mrb[0].mxu0 %v452
      %v1206 = vpop.f32.mrb[0].mxu0
      %v1207 = vadd.f32 %v902, %v1206
      %v1208 = vpop.f32.mrb[0].mxu0
      %1209 = vmatprep.mubr.f32.mxu0 %v460
      %1210 = vmatmul.mubr.f32.gmra.mrb[0].mxu0 %v459
      %v1211 = vpop.f32.mrb[0].mxu0
      %v1212 = vadd.f32 %v907, %v1211
      %v1213 = vpop.f32.mrb[0].mxu0
      %1214 = vmatprep.mubr.f32.mxu0 %v467
      %1215 = vmatmul.mubr.f32.gmra.mrb[0].mxu0 %v466
      %v1216 = vpop.f32.mrb[0].mxu0
      %v1217 = vadd.f32 %v912, %v1216
      %v1218 = vpop.f32.mrb[0].mxu0
      %1219 = vmatprep.mubr.f32.mxu0 %v474
      %1220 = vmatmul.mubr.f32.gmra.mrb[0].mxu0 %v473
      %v1221 = vpop.f32.mrb[0].mxu0
      %v1222 = vadd.f32 %v917, %v1221
      %v1223 = vpop.f32.mrb[0].mxu0
      %1224 = vmatprep.mubr.f32.mxu0 %v481
      %1225 = vmatmul.mubr.f32.gmra.mrb[0].mxu0 %v480
      %v1226 = vpop.f32.mrb[0].mxu0
      %v1227 = vadd.f32 %v922, %v1226
      %v1228 = vpop.f32.mrb[0].mxu0
      %1229 = vmatprep.mubr.f32.mxu0 %v488
      %1230 = vmatmul.mubr.f32.gmra.mrb[0].mxu0 %v487
      %v1231 = vpop.f32.mrb[0].mxu0
      %v1232 = vadd.f32 %v927, %v1231
      %v1233 = vpop.f32.mrb[0].mxu0
      %1234 = vmatprep.mubr.f32.mxu0 %v495
      %1235 = vmatmul.mubr.f32.gmra.mrb[0].mxu0 %v494
      %v1236 = vpop.f32.mrb[0].mxu0
      %v1237 = vadd.f32 %v932, %v1236
      %v1238 = vpop.f32.mrb[0].mxu0
      %1239 = vmatprep.mubr.f32.mxu0 %v502
      %1240 = vmatmul.mubr.f32.gmra.mrb[0].mxu0 %v501
      %v1241 = vpop.f32.mrb[0].mxu0
      %v1242 = vadd.f32 %v937, %v1241
      %v1243 = vpop.f32.mrb[0].mxu0
      %1244 = vmatprep.mubr.f32.mxu0 %v509
      %1245 = vmatmul.mubr.f32.gmra.mrb[0].mxu0 %v508
      %v1246 = vpop.f32.mrb[0].mxu0
      %v1247 = vadd.f32 %v942, %v1246
      %v1248 = vpop.f32.mrb[0].mxu0
      %1249 = vmatprep.mubr.f32.mxu0 %v516
      %1250 = vmatmul.mubr.f32.gmra.mrb[0].mxu0 %v515
      %v1251 = vpop.f32.mrb[0].mxu0
      %v1252 = vadd.f32 %v947, %v1251
      %v1253 = vpop.f32.mrb[0].mxu0
      %1254 = vmatprep.mubr.f32.mxu0 %v523
      %1255 = vmatmul.mubr.f32.gmra.mrb[0].mxu0 %v522
      %v1256 = vpop.f32.mrb[0].mxu0
      %v1257 = vadd.f32 %v952, %v1256
      %v1258 = vpop.f32.mrb[0].mxu0
      %1259 = vmatprep.mubr.f32.mxu0 %v530
      %1260 = vmatmul.mubr.f32.gmra.mrb[0].mxu0 %v529
      %v1261 = vpop.f32.mrb[0].mxu0
      %v1262 = vadd.f32 %v957, %v1261
      %v1263 = vpop.f32.mrb[0].mxu0
      %1264 = vmatprep.mubr.f32.mxu0 %v537
      %1265 = vmatmul.mubr.f32.gmra.mrb[0].mxu0 %v536
      %v1266 = vpop.f32.mrb[0].mxu0
      %v1267 = vadd.f32 %v962, %v1266
      %v1268 = vpop.f32.mrb[0].mxu0
      %1269 = vdwg.mxu0
      %1270 = vmatprep.subr.mxu0 0.0
      %1271 = vmatpush1.msra.mxu0 %v605
      %1272 = vmatprep.subr.mxu0 0.0
      %1273 = vmatpush1.msra.mxu0 %v606
      %1274 = vmatprep.subr.mxu0 0.0
      %1275 = vmatpush1.msra.mxu0 %v607
      %1276 = vmatprep.subr.mxu0 0.0
      %1277 = vmatpush1.msra.mxu0 %v608
      %1278 = vmatprep.subr.mxu0 0.0
      %1279 = vmatpush1.msra.mxu0 %v609
      %1280 = vmatprep.subr.mxu0 0.0
      %1281 = vmatpush1.msra.mxu0 %v610
      %1282 = vmatprep.subr.mxu0 0.0
      %1283 = vmatpush1.msra.mxu0 %v611
      %1284 = vmatprep.subr.mxu0 0.0
      %1285 = vmatpush1.msra.mxu0 %v612
      %1286 = vmatprep.subr.mxu0 0.0
      %1287 = vmatpush1.msra.mxu0 %v613
      %1288 = vmatprep.subr.mxu0 0.0
      %1289 = vmatpush1.msra.mxu0 %v614
      %1290 = vmatprep.subr.mxu0 0.0
      %1291 = vmatpush1.msra.mxu0 %v615
      %1292 = vmatprep.subr.mxu0 0.0
      %1293 = vmatpush1.msra.mxu0 %v616
      %1294 = vmatprep.subr.mxu0 0.0
      %1295 = vmatpush1.msra.mxu0 %v617
      %1296 = vmatprep.subr.mxu0 0.0
      %1297 = vmatpush1.msra.mxu0 %v618
      %1298 = vmatprep.subr.mxu0 0.0
      %1299 = vmatpush1.msra.mxu0 %v619
      %1300 = vmatprep.subr.mxu0 0.0
      %1301 = vmatpush1.msra.mxu0 %v620
      %1302 = vmatprep.subr.mxu0 0.0
      %1303 = vmatpush1.msra.mxu0 %v621
      %1304 = vmatprep.subr.mxu0 0.0
      %1305 = vmatpush1.msra.mxu0 %v622
      %1306 = vmatprep.subr.mxu0 0.0
      %1307 = vmatpush1.msra.mxu0 %v623
      %1308 = vmatprep.subr.mxu0 0.0
      %1309 = vmatpush1.msra.mxu0 %v624
      %1310 = vmatprep.subr.mxu0 0.0
      %1311 = vmatpush1.msra.mxu0 %v625
      %1312 = vmatprep.subr.mxu0 0.0
      %1313 = vmatpush1.msra.mxu0 %v626
      %1314 = vmatprep.subr.mxu0 0.0
      %1315 = vmatpush1.msra.mxu0 %v627
      %1316 = vmatprep.subr.mxu0 0.0
      %1317 = vmatpush1.msra.mxu0 %v628
      %1318 = vmatprep.subr.mxu0 0.0
      %1319 = vmatpush1.msra.mxu0 %v629
      %1320 = vmatprep.subr.mxu0 0.0
      %1321 = vmatpush1.msra.mxu0 %v630
      %1322 = vmatprep.subr.mxu0 0.0
      %1323 = vmatpush1.msra.mxu0 %v631
      %1324 = vmatprep.subr.mxu0 0.0
      %1325 = vmatpush1.msra.mxu0 %v632
      %1326 = vmatprep.subr.mxu0 0.0
      %1327 = vmatpush1.msra.mxu0 %v633
      %1328 = vmatprep.subr.mxu0 0.0
      %1329 = vmatpush1.msra.mxu0 %v634
      %1330 = vmatprep.subr.mxu0 0.0
      %1331 = vmatpush1.msra.mxu0 %v635
      %1332 = vmatprep.subr.mxu0 0.0
      %1333 = vmatpush1.msra.mxu0 %v636
      %1334 = vmatprep.mubr.f32.mxu0 %v210
      %1335 = vmatmul.mubr.f32.gmra.mrb[0].mxu0 %v209
      %v1336 = vpop.f32.mrb[0].mxu0
      %v1337 = vadd.f32 %v1032, %v1336
      %v1338 = vpop.f32.mrb[0].mxu0
      %1339 = vmatprep.mubr.f32.mxu0 %v217
      %1340 = vmatmul.mubr.f32.gmra.mrb[0].mxu0 %v216
      %v1341 = vpop.f32.mrb[0].mxu0
      %v1342 = vadd.f32 %v1037, %v1341
      %v1343 = vpop.f32.mrb[0].mxu0
      %1344 = vmatprep.mubr.f32.mxu0 %v224
      %1345 = vmatmul.mubr.f32.gmra.mrb[0].mxu0 %v223
      %v1346 = vpop.f32.mrb[0].mxu0
      %v1347 = vadd.f32 %v1042, %v1346
      %v1348 = vpop.f32.mrb[0].mxu0
      %1349 = vmatprep.mubr.f32.mxu0 %v231
      %1350 = vmatmul.mubr.f32.gmra.mrb[0].mxu0 %v230
      %v1351 = vpop.f32.mrb[0].mxu0
      %v1352 = vadd.f32 %v1047, %v1351
      %v1353 = vpop.f32.mrb[0].mxu0
      %1354 = vmatprep.mubr.f32.mxu0 %v238
      %1355 = vmatmul.mubr.f32.gmra.mrb[0].mxu0 %v237
      %v1356 = vpop.f32.mrb[0].mxu0
      %v1357 = vadd.f32 %v1052, %v1356
      %v1358 = vpop.f32.mrb[0].mxu0
      %1359 = vmatprep.mubr.f32.mxu0 %v245
      %1360 = vmatmul.mubr.f32.gmra.mrb[0].mxu0 %v244
      %v1361 = vpop.f32.mrb[0].mxu0
      %v1362 = vadd.f32 %v1057, %v1361
      %v1363 = vpop.f32.mrb[0].mxu0
      %1364 = vmatprep.mubr.f32.mxu0 %v252
      %1365 = vmatmul.mubr.f32.gmra.mrb[0].mxu0 %v251
      %v1366 = vpop.f32.mrb[0].mxu0
      %v1367 = vadd.f32 %v1062, %v1366
      %v1368 = vpop.f32.mrb[0].mxu0
      %1369 = vmatprep.mubr.f32.mxu0 %v259
      %1370 = vmatmul.mubr.f32.gmra.mrb[0].mxu0 %v258
      %v1371 = vpop.f32.mrb[0].mxu0
      %v1372 = vadd.f32 %v1067, %v1371
      %v1373 = vpop.f32.mrb[0].mxu0
      %1374 = vmatprep.mubr.f32.mxu0 %v266
      %1375 = vmatmul.mubr.f32.gmra.mrb[0].mxu0 %v265
      %v1376 = vpop.f32.mrb[0].mxu0
      %v1377 = vadd.f32 %v1072, %v1376
      %v1378 = vpop.f32.mrb[0].mxu0
      %1379 = vmatprep.mubr.f32.mxu0 %v273
      %1380 = vmatmul.mubr.f32.gmra.mrb[0].mxu0 %v272
      %v1381 = vpop.f32.mrb[0].mxu0
      %v1382 = vadd.f32 %v1077, %v1381
      %v1383 = vpop.f32.mrb[0].mxu0
      %1384 = vmatprep.mubr.f32.mxu0 %v280
      %1385 = vmatmul.mubr.f32.gmra.mrb[0].mxu0 %v279
      %v1386 = vpop.f32.mrb[0].mxu0
      %v1387 = vadd.f32 %v1082, %v1386
      %v1388 = vpop.f32.mrb[0].mxu0
      %1389 = vmatprep.mubr.f32.mxu0 %v287
      %1390 = vmatmul.mubr.f32.gmra.mrb[0].mxu0 %v286
      %v1391 = vpop.f32.mrb[0].mxu0
      %v1392 = vadd.f32 %v1087, %v1391
      %v1393 = vpop.f32.mrb[0].mxu0
      %1394 = vmatprep.mubr.f32.mxu0 %v294
      %1395 = vmatmul.mubr.f32.gmra.mrb[0].mxu0 %v293
      %v1396 = vpop.f32.mrb[0].mxu0
      %v1397 = vadd.f32 %v1092, %v1396
      %v1398 = vpop.f32.mrb[0].mxu0
      %1399 = vmatprep.mubr.f32.mxu0 %v301
      %1400 = vmatmul.mubr.f32.gmra.mrb[0].mxu0 %v300
      %v1401 = vpop.f32.mrb[0].mxu0
      %v1402 = vadd.f32 %v1097, %v1401
      %v1403 = vpop.f32.mrb[0].mxu0
      %1404 = vmatprep.mubr.f32.mxu0 %v308
      %1405 = vmatmul.mubr.f32.gmra.mrb[0].mxu0 %v307
      %v1406 = vpop.f32.mrb[0].mxu0
      %v1407 = vadd.f32 %v1102, %v1406
      %v1408 = vpop.f32.mrb[0].mxu0
      %1409 = vmatprep.mubr.f32.mxu0 %v315
      %1410 = vmatmul.mubr.f32.gmra.mrb[0].mxu0 %v314
      %v1411 = vpop.f32.mrb[0].mxu0
      %v1412 = vadd.f32 %v1107, %v1411
      %v1413 = vpop.f32.mrb[0].mxu0
      %1414 = vmatprep.mubr.f32.mxu0 %v322
      %1415 = vmatmul.mubr.f32.gmra.mrb[0].mxu0 %v321
      %v1416 = vpop.f32.mrb[0].mxu0
      %v1417 = vadd.f32 %v1112, %v1416
      %v1418 = vpop.f32.mrb[0].mxu0
      %1419 = vmatprep.mubr.f32.mxu0 %v329
      %1420 = vmatmul.mubr.f32.gmra.mrb[0].mxu0 %v328
      %v1421 = vpop.f32.mrb[0].mxu0
      %v1422 = vadd.f32 %v1117, %v1421
      %v1423 = vpop.f32.mrb[0].mxu0
      %1424 = vmatprep.mubr.f32.mxu0 %v336
      %1425 = vmatmul.mubr.f32.gmra.mrb[0].mxu0 %v335
      %v1426 = vpop.f32.mrb[0].mxu0
      %v1427 = vadd.f32 %v1122, %v1426
      %v1428 = vpop.f32.mrb[0].mxu0
      %1429 = vmatprep.mubr.f32.mxu0 %v343
      %1430 = vmatmul.mubr.f32.gmra.mrb[0].mxu0 %v342
      %v1431 = vpop.f32.mrb[0].mxu0
      %v1432 = vadd.f32 %v1127, %v1431
      %v1433 = vpop.f32.mrb[0].mxu0
      %1434 = vmatprep.mubr.f32.mxu0 %v350
      %1435 = vmatmul.mubr.f32.gmra.mrb[0].mxu0 %v349
      %v1436 = vpop.f32.mrb[0].mxu0
      %v1437 = vadd.f32 %v1132, %v1436
      %v1438 = vpop.f32.mrb[0].mxu0
      %1439 = vmatprep.mubr.f32.mxu0 %v357
      %1440 = vmatmul.mubr.f32.gmra.mrb[0].mxu0 %v356
      %v1441 = vpop.f32.mrb[0].mxu0
      %v1442 = vadd.f32 %v1137, %v1441
      %v1443 = vpop.f32.mrb[0].mxu0
      %1444 = vmatprep.mubr.f32.mxu0 %v364
      %1445 = vmatmul.mubr.f32.gmra.mrb[0].mxu0 %v363
      %v1446 = vpop.f32.mrb[0].mxu0
      %v1447 = vadd.f32 %v1142, %v1446
      %v1448 = vpop.f32.mrb[0].mxu0
      %1449 = vmatprep.mubr.f32.mxu0 %v371
      %1450 = vmatmul.mubr.f32.gmra.mrb[0].mxu0 %v370
      %v1451 = vpop.f32.mrb[0].mxu0
      %v1452 = vadd.f32 %v1147, %v1451
      %v1453 = vpop.f32.mrb[0].mxu0
      %1454 = vmatprep.mubr.f32.mxu0 %v378
      %1455 = vmatmul.mubr.f32.gmra.mrb[0].mxu0 %v377
      %v1456 = vpop.f32.mrb[0].mxu0
      %v1457 = vadd.f32 %v1152, %v1456
      %v1458 = vpop.f32.mrb[0].mxu0
      %1459 = vmatprep.mubr.f32.mxu0 %v385
      %1460 = vmatmul.mubr.f32.gmra.mrb[0].mxu0 %v384
      %v1461 = vpop.f32.mrb[0].mxu0
      %v1462 = vadd.f32 %v1157, %v1461
      %v1463 = vpop.f32.mrb[0].mxu0
      %1464 = vmatprep.mubr.f32.mxu0 %v392
      %1465 = vmatmul.mubr.f32.gmra.mrb[0].mxu0 %v391
      %v1466 = vpop.f32.mrb[0].mxu0
      %v1467 = vadd.f32 %v1162, %v1466
      %v1468 = vpop.f32.mrb[0].mxu0
      %1469 = vmatprep.mubr.f32.mxu0 %v399
      %1470 = vmatmul.mubr.f32.gmra.mrb[0].mxu0 %v398
      %v1471 = vpop.f32.mrb[0].mxu0
      %v1472 = vadd.f32 %v1167, %v1471
      %v1473 = vpop.f32.mrb[0].mxu0
      %1474 = vmatprep.mubr.f32.mxu0 %v406
      %1475 = vmatmul.mubr.f32.gmra.mrb[0].mxu0 %v405
      %v1476 = vpop.f32.mrb[0].mxu0
      %v1477 = vadd.f32 %v1172, %v1476
      %v1478 = vpop.f32.mrb[0].mxu0
      %1479 = vmatprep.mubr.f32.mxu0 %v413
      %1480 = vmatmul.mubr.f32.gmra.mrb[0].mxu0 %v412
      %v1481 = vpop.f32.mrb[0].mxu0
      %v1482 = vadd.f32 %v1177, %v1481
      %v1483 = vpop.f32.mrb[0].mxu0
      %1484 = vmatprep.mubr.f32.mxu0 %v420
      %1485 = vmatmul.mubr.f32.gmra.mrb[0].mxu0 %v419
      %v1486 = vpop.f32.mrb[0].mxu0
      %v1487 = vadd.f32 %v1182, %v1486
      %v1488 = vpop.f32.mrb[0].mxu0
      %1489 = vmatprep.mubr.f32.mxu0 %v427
      %1490 = vmatmul.mubr.f32.gmra.mrb[0].mxu0 %v426
      %v1491 = vpop.f32.mrb[0].mxu0
      %v1492 = vadd.f32 %v1187, %v1491
      %v1493 = vpop.f32.mrb[0].mxu0
      %1494 = vmatprep.mubr.f32.mxu0 %v434
      %1495 = vmatmul.mubr.f32.gmra.mrb[0].mxu0 %v433
      %v1496 = vpop.f32.mrb[0].mxu0
      %v1497 = vadd.f32 %v1192, %v1496
      %v1498 = vpop.f32.mrb[0].mxu0
      %1499 = vmatprep.mubr.f32.mxu0 %v441
      %1500 = vmatmul.mubr.f32.gmra.mrb[0].mxu0 %v440
      %v1501 = vpop.f32.mrb[0].mxu0
      %v1502 = vadd.f32 %v1197, %v1501
      %v1503 = vpop.f32.mrb[0].mxu0
      %1504 = vmatprep.mubr.f32.mxu0 %v448
      %1505 = vmatmul.mubr.f32.gmra.mrb[0].mxu0 %v447
      %v1506 = vpop.f32.mrb[0].mxu0
      %v1507 = vadd.f32 %v1202, %v1506
      %v1508 = vpop.f32.mrb[0].mxu0
      %1509 = vmatprep.mubr.f32.mxu0 %v455
      %1510 = vmatmul.mubr.f32.gmra.mrb[0].mxu0 %v454
      %v1511 = vpop.f32.mrb[0].mxu0
      %v1512 = vadd.f32 %v1207, %v1511
      %v1513 = vpop.f32.mrb[0].mxu0
      %1514 = vmatprep.mubr.f32.mxu0 %v462
      %1515 = vmatmul.mubr.f32.gmra.mrb[0].mxu0 %v461
      %v1516 = vpop.f32.mrb[0].mxu0
      %v1517 = vadd.f32 %v1212, %v1516
      %v1518 = vpop.f32.mrb[0].mxu0
      %1519 = vmatprep.mubr.f32.mxu0 %v469
      %1520 = vmatmul.mubr.f32.gmra.mrb[0].mxu0 %v468
      %v1521 = vpop.f32.mrb[0].mxu0
      %v1522 = vadd.f32 %v1217, %v1521
      %v1523 = vpop.f32.mrb[0].mxu0
      %1524 = vmatprep.mubr.f32.mxu0 %v476
      %1525 = vmatmul.mubr.f32.gmra.mrb[0].mxu0 %v475
      %v1526 = vpop.f32.mrb[0].mxu0
      %v1527 = vadd.f32 %v1222, %v1526
      %v1528 = vpop.f32.mrb[0].mxu0
      %1529 = vmatprep.mubr.f32.mxu0 %v483
      %1530 = vmatmul.mubr.f32.gmra.mrb[0].mxu0 %v482
      %v1531 = vpop.f32.mrb[0].mxu0
      %v1532 = vadd.f32 %v1227, %v1531
      %v1533 = vpop.f32.mrb[0].mxu0
      %1534 = vmatprep.mubr.f32.mxu0 %v490
      %1535 = vmatmul.mubr.f32.gmra.mrb[0].mxu0 %v489
      %v1536 = vpop.f32.mrb[0].mxu0
      %v1537 = vadd.f32 %v1232, %v1536
      %v1538 = vpop.f32.mrb[0].mxu0
      %1539 = vmatprep.mubr.f32.mxu0 %v497
      %1540 = vmatmul.mubr.f32.gmra.mrb[0].mxu0 %v496
      %v1541 = vpop.f32.mrb[0].mxu0
      %v1542 = vadd.f32 %v1237, %v1541
      %v1543 = vpop.f32.mrb[0].mxu0
      %1544 = vmatprep.mubr.f32.mxu0 %v504
      %1545 = vmatmul.mubr.f32.gmra.mrb[0].mxu0 %v503
      %v1546 = vpop.f32.mrb[0].mxu0
      %v1547 = vadd.f32 %v1242, %v1546
      %v1548 = vpop.f32.mrb[0].mxu0
      %1549 = vmatprep.mubr.f32.mxu0 %v511
      %1550 = vmatmul.mubr.f32.gmra.mrb[0].mxu0 %v510
      %v1551 = vpop.f32.mrb[0].mxu0
      %v1552 = vadd.f32 %v1247, %v1551
      %v1553 = vpop.f32.mrb[0].mxu0
      %1554 = vmatprep.mubr.f32.mxu0 %v518
      %1555 = vmatmul.mubr.f32.gmra.mrb[0].mxu0 %v517
      %v1556 = vpop.f32.mrb[0].mxu0
      %v1557 = vadd.f32 %v1252, %v1556
      %v1558 = vpop.f32.mrb[0].mxu0
      %1559 = vmatprep.mubr.f32.mxu0 %v525
      %1560 = vmatmul.mubr.f32.gmra.mrb[0].mxu0 %v524
      %v1561 = vpop.f32.mrb[0].mxu0
      %v1562 = vadd.f32 %v1257, %v1561
      %v1563 = vpop.f32.mrb[0].mxu0
      %1564 = vmatprep.mubr.f32.mxu0 %v532
      %1565 = vmatmul.mubr.f32.gmra.mrb[0].mxu0 %v531
      %v1566 = vpop.f32.mrb[0].mxu0
      %v1567 = vadd.f32 %v1262, %v1566
      %v1568 = vpop.f32.mrb[0].mxu0
      %1569 = vmatprep.mubr.f32.mxu0 %v539
      %1570 = vmatmul.mubr.f32.gmra.mrb[0].mxu0 %v538
      %v1571 = vpop.f32.mrb[0].mxu0
      %v1572 = vadd.f32 %v1267, %v1571
      %v1573 = vpop.f32.mrb[0].mxu0
      %1574 = vdwg.mxu0
      %1575 = vmatprep.subr.mxu0 0.0
      %1576 = vmatpush1.msra.mxu0 %v637
      %1577 = vmatprep.subr.mxu0 0.0
      %1578 = vmatpush1.msra.mxu0 %v638
      %1579 = vmatprep.subr.mxu0 0.0
      %1580 = vmatpush1.msra.mxu0 %v639
      %1581 = vmatprep.subr.mxu0 0.0
      %1582 = vmatpush1.msra.mxu0 %v640
      %1583 = vmatprep.subr.mxu0 0.0
      %1584 = vmatpush1.msra.mxu0 %v641
      %1585 = vmatprep.subr.mxu0 0.0
      %1586 = vmatpush1.msra.mxu0 %v642
      %1587 = vmatprep.subr.mxu0 0.0
      %1588 = vmatpush1.msra.mxu0 %v643
      %1589 = vmatprep.subr.mxu0 0.0
      %1590 = vmatpush1.msra.mxu0 %v644
      %1591 = vmatprep.subr.mxu0 0.0
      %1592 = vmatpush1.msra.mxu0 %v645
      %1593 = vmatprep.subr.mxu0 0.0
      %1594 = vmatpush1.msra.mxu0 %v646
      %1595 = vmatprep.subr.mxu0 0.0
      %1596 = vmatpush1.msra.mxu0 %v647
      %1597 = vmatprep.subr.mxu0 0.0
      %1598 = vmatpush1.msra.mxu0 %v648
      %1599 = vmatprep.subr.mxu0 0.0
      %1600 = vmatpush1.msra.mxu0 %v649
      %1601 = vmatprep.subr.mxu0 0.0
      %1602 = vmatpush1.msra.mxu0 %v650
      %1603 = vmatprep.subr.mxu0 0.0
      %1604 = vmatpush1.msra.mxu0 %v651
      %1605 = vmatprep.subr.mxu0 0.0
      %1606 = vmatpush1.msra.mxu0 %v652
      %1607 = vmatprep.subr.mxu0 0.0
      %1608 = vmatpush1.msra.mxu0 0.0
      %1609 = vmatprep.subr.mxu0 0.0
      %1610 = vmatpush1.msra.mxu0 0.0
      %1611 = vmatprep.subr.mxu0 0.0
      %1612 = vmatpush1.msra.mxu0 0.0
      %1613 = vmatprep.subr.mxu0 0.0
      %1614 = vmatpush1.msra.mxu0 0.0
      %1615 = vmatprep.subr.mxu0 0.0
      %1616 = vmatpush1.msra.mxu0 0.0
      %1617 = vmatprep.subr.mxu0 0.0
      %1618 = vmatpush1.msra.mxu0 0.0
      %1619 = vmatprep.subr.mxu0 0.0
      %1620 = vmatpush1.msra.mxu0 0.0
      %1621 = vmatprep.subr.mxu0 0.0
      %1622 = vmatpush1.msra.mxu0 0.0
      %1623 = vmatprep.subr.mxu0 0.0
      %1624 = vmatpush1.msra.mxu0 0.0
      %1625 = vmatprep.subr.mxu0 0.0
      %1626 = vmatpush1.msra.mxu0 0.0
      %1627 = vmatprep.subr.mxu0 0.0
      %1628 = vmatpush1.msra.mxu0 0.0
      %1629 = vmatprep.subr.mxu0 0.0
      %1630 = vmatpush1.msra.mxu0 0.0
      %1631 = vmatprep.subr.mxu0 0.0
      %1632 = vmatpush1.msra.mxu0 0.0
      %1633 = vmatprep.subr.mxu0 0.0
      %1634 = vmatpush1.msra.mxu0 0.0
      %1635 = vmatprep.subr.mxu0 0.0
      %1636 = vmatpush1.msra.mxu0 0.0
      %1637 = vmatprep.subr.mxu0 0.0
      %1638 = vmatpush1.msra.mxu0 0.0
      %1639 = vmatprep.mubr.f32.mxu0 0.0
      %1640 = vmatmul.mubr.f32.gmra.mrb[0].mxu0 %v211
      %v1641 = vpop.f32.mrb[0].mxu0
      %v1642 = vadd.f32 %v1337, %v1641
      %v1643 = vpop.f32.mrb[0].mxu0
      %1644 = vmatprep.mubr.f32.mxu0 0.0
      %1645 = vmatmul.mubr.f32.gmra.mrb[0].mxu0 %v218
      %v1646 = vpop.f32.mrb[0].mxu0
      %v1647 = vadd.f32 %v1342, %v1646
      %v1648 = vpop.f32.mrb[0].mxu0
      %1649 = vmatprep.mubr.f32.mxu0 0.0
      %1650 = vmatmul.mubr.f32.gmra.mrb[0].mxu0 %v225
      %v1651 = vpop.f32.mrb[0].mxu0
      %v1652 = vadd.f32 %v1347, %v1651
      %v1653 = vpop.f32.mrb[0].mxu0
      %1654 = vmatprep.mubr.f32.mxu0 0.0
      %1655 = vmatmul.mubr.f32.gmra.mrb[0].mxu0 %v232
      %v1656 = vpop.f32.mrb[0].mxu0
      %v1657 = vadd.f32 %v1352, %v1656
      %v1658 = vpop.f32.mrb[0].mxu0
      %1659 = vmatprep.mubr.f32.mxu0 0.0
      %1660 = vmatmul.mubr.f32.gmra.mrb[0].mxu0 %v239
      %v1661 = vpop.f32.mrb[0].mxu0
      %v1662 = vadd.f32 %v1357, %v1661
      %v1663 = vpop.f32.mrb[0].mxu0
      %1664 = vmatprep.mubr.f32.mxu0 0.0
      %1665 = vmatmul.mubr.f32.gmra.mrb[0].mxu0 %v246
      %v1666 = vpop.f32.mrb[0].mxu0
      %v1667 = vadd.f32 %v1362, %v1666
      %v1668 = vpop.f32.mrb[0].mxu0
      %1669 = vmatprep.mubr.f32.mxu0 0.0
      %1670 = vmatmul.mubr.f32.gmra.mrb[0].mxu0 %v253
      %v1671 = vpop.f32.mrb[0].mxu0
      %v1672 = vadd.f32 %v1367, %v1671
      %v1673 = vpop.f32.mrb[0].mxu0
      %1674 = vmatprep.mubr.f32.mxu0 0.0
      %1675 = vmatmul.mubr.f32.gmra.mrb[0].mxu0 %v260
      %v1676 = vpop.f32.mrb[0].mxu0
      %v1677 = vadd.f32 %v1372, %v1676
      %v1678 = vpop.f32.mrb[0].mxu0
      %1679 = vmatprep.mubr.f32.mxu0 0.0
      %1680 = vmatmul.mubr.f32.gmra.mrb[0].mxu0 %v267
      %v1681 = vpop.f32.mrb[0].mxu0
      %v1682 = vadd.f32 %v1377, %v1681
      %v1683 = vpop.f32.mrb[0].mxu0
      %1684 = vmatprep.mubr.f32.mxu0 0.0
      %1685 = vmatmul.mubr.f32.gmra.mrb[0].mxu0 %v274
      %v1686 = vpop.f32.mrb[0].mxu0
      %v1687 = vadd.f32 %v1382, %v1686
      %v1688 = vpop.f32.mrb[0].mxu0
      %1689 = vmatprep.mubr.f32.mxu0 0.0
      %1690 = vmatmul.mubr.f32.gmra.mrb[0].mxu0 %v281
      %v1691 = vpop.f32.mrb[0].mxu0
      %v1692 = vadd.f32 %v1387, %v1691
      %v1693 = vpop.f32.mrb[0].mxu0
      %1694 = vmatprep.mubr.f32.mxu0 0.0
      %1695 = vmatmul.mubr.f32.gmra.mrb[0].mxu0 %v288
      %v1696 = vpop.f32.mrb[0].mxu0
      %v1697 = vadd.f32 %v1392, %v1696
      %v1698 = vpop.f32.mrb[0].mxu0
      %1699 = vmatprep.mubr.f32.mxu0 0.0
      %1700 = vmatmul.mubr.f32.gmra.mrb[0].mxu0 %v295
      %v1701 = vpop.f32.mrb[0].mxu0
      %v1702 = vadd.f32 %v1397, %v1701
      %v1703 = vpop.f32.mrb[0].mxu0
      %1704 = vmatprep.mubr.f32.mxu0 0.0
      %1705 = vmatmul.mubr.f32.gmra.mrb[0].mxu0 %v302
      %v1706 = vpop.f32.mrb[0].mxu0
      %v1707 = vadd.f32 %v1402, %v1706
      %v1708 = vpop.f32.mrb[0].mxu0
      %1709 = vmatprep.mubr.f32.mxu0 0.0
      %1710 = vmatmul.mubr.f32.gmra.mrb[0].mxu0 %v309
      %v1711 = vpop.f32.mrb[0].mxu0
      %v1712 = vadd.f32 %v1407, %v1711
      %v1713 = vpop.f32.mrb[0].mxu0
      %1714 = vmatprep.mubr.f32.mxu0 0.0
      %1715 = vmatmul.mubr.f32.gmra.mrb[0].mxu0 %v316
      %v1716 = vpop.f32.mrb[0].mxu0
      %v1717 = vadd.f32 %v1412, %v1716
      %v1718 = vpop.f32.mrb[0].mxu0
      %1719 = vmatprep.mubr.f32.mxu0 0.0
      %1720 = vmatmul.mubr.f32.gmra.mrb[0].mxu0 %v323
      %v1721 = vpop.f32.mrb[0].mxu0
      %v1722 = vadd.f32 %v1417, %v1721
      %v1723 = vpop.f32.mrb[0].mxu0
      %1724 = vmatprep.mubr.f32.mxu0 0.0
      %1725 = vmatmul.mubr.f32.gmra.mrb[0].mxu0 %v330
      %v1726 = vpop.f32.mrb[0].mxu0
      %v1727 = vadd.f32 %v1422, %v1726
      %v1728 = vpop.f32.mrb[0].mxu0
      %1729 = vmatprep.mubr.f32.mxu0 0.0
      %1730 = vmatmul.mubr.f32.gmra.mrb[0].mxu0 %v337
      %v1731 = vpop.f32.mrb[0].mxu0
      %v1732 = vadd.f32 %v1427, %v1731
      %v1733 = vpop.f32.mrb[0].mxu0
      %1734 = vmatprep.mubr.f32.mxu0 0.0
      %1735 = vmatmul.mubr.f32.gmra.mrb[0].mxu0 %v344
      %v1736 = vpop.f32.mrb[0].mxu0
      %v1737 = vadd.f32 %v1432, %v1736
      %v1738 = vpop.f32.mrb[0].mxu0
      %1739 = vmatprep.mubr.f32.mxu0 0.0
      %1740 = vmatmul.mubr.f32.gmra.mrb[0].mxu0 %v351
      %v1741 = vpop.f32.mrb[0].mxu0
      %v1742 = vadd.f32 %v1437, %v1741
      %v1743 = vpop.f32.mrb[0].mxu0
      %1744 = vmatprep.mubr.f32.mxu0 0.0
      %1745 = vmatmul.mubr.f32.gmra.mrb[0].mxu0 %v358
      %v1746 = vpop.f32.mrb[0].mxu0
      %v1747 = vadd.f32 %v1442, %v1746
      %v1748 = vpop.f32.mrb[0].mxu0
      %1749 = vmatprep.mubr.f32.mxu0 0.0
      %1750 = vmatmul.mubr.f32.gmra.mrb[0].mxu0 %v365
      %v1751 = vpop.f32.mrb[0].mxu0
      %v1752 = vadd.f32 %v1447, %v1751
      %v1753 = vpop.f32.mrb[0].mxu0
      %1754 = vmatprep.mubr.f32.mxu0 0.0
      %1755 = vmatmul.mubr.f32.gmra.mrb[0].mxu0 %v372
      %v1756 = vpop.f32.mrb[0].mxu0
      %v1757 = vadd.f32 %v1452, %v1756
      %v1758 = vpop.f32.mrb[0].mxu0
      %1759 = vmatprep.mubr.f32.mxu0 0.0
      %1760 = vmatmul.mubr.f32.gmra.mrb[0].mxu0 %v379
      %v1761 = vpop.f32.mrb[0].mxu0
      %v1762 = vadd.f32 %v1457, %v1761
      %v1763 = vpop.f32.mrb[0].mxu0
      %1764 = vmatprep.mubr.f32.mxu0 0.0
      %1765 = vmatmul.mubr.f32.gmra.mrb[0].mxu0 %v386
      %v1766 = vpop.f32.mrb[0].mxu0
      %v1767 = vadd.f32 %v1462, %v1766
      %v1768 = vpop.f32.mrb[0].mxu0
      %1769 = vmatprep.mubr.f32.mxu0 0.0
      %1770 = vmatmul.mubr.f32.gmra.mrb[0].mxu0 %v393
      %v1771 = vpop.f32.mrb[0].mxu0
      %v1772 = vadd.f32 %v1467, %v1771
      %v1773 = vpop.f32.mrb[0].mxu0
      %1774 = vmatprep.mubr.f32.mxu0 0.0
      %1775 = vmatmul.mubr.f32.gmra.mrb[0].mxu0 %v400
      %v1776 = vpop.f32.mrb[0].mxu0
      %v1777 = vadd.f32 %v1472, %v1776
      %v1778 = vpop.f32.mrb[0].mxu0
      %1779 = vmatprep.mubr.f32.mxu0 0.0
      %1780 = vmatmul.mubr.f32.gmra.mrb[0].mxu0 %v407
      %v1781 = vpop.f32.mrb[0].mxu0
      %v1782 = vadd.f32 %v1477, %v1781
      %v1783 = vpop.f32.mrb[0].mxu0
      %1784 = vmatprep.mubr.f32.mxu0 0.0
      %1785 = vmatmul.mubr.f32.gmra.mrb[0].mxu0 %v414
      %v1786 = vpop.f32.mrb[0].mxu0
      %v1787 = vadd.f32 %v1482, %v1786
      %v1788 = vpop.f32.mrb[0].mxu0
      %1789 = vmatprep.mubr.f32.mxu0 0.0
      %1790 = vmatmul.mubr.f32.gmra.mrb[0].mxu0 %v421
      %v1791 = vpop.f32.mrb[0].mxu0
      %v1792 = vadd.f32 %v1487, %v1791
      %v1793 = vpop.f32.mrb[0].mxu0
      %1794 = vmatprep.mubr.f32.mxu0 0.0
      %1795 = vmatmul.mubr.f32.gmra.mrb[0].mxu0 %v428
      %v1796 = vpop.f32.mrb[0].mxu0
      %v1797 = vadd.f32 %v1492, %v1796
      %v1798 = vpop.f32.mrb[0].mxu0
      %1799 = vmatprep.mubr.f32.mxu0 0.0
      %1800 = vmatmul.mubr.f32.gmra.mrb[0].mxu0 %v435
      %v1801 = vpop.f32.mrb[0].mxu0
      %v1802 = vadd.f32 %v1497, %v1801
      %v1803 = vpop.f32.mrb[0].mxu0
      %1804 = vmatprep.mubr.f32.mxu0 0.0
      %1805 = vmatmul.mubr.f32.gmra.mrb[0].mxu0 %v442
      %v1806 = vpop.f32.mrb[0].mxu0
      %v1807 = vadd.f32 %v1502, %v1806
      %v1808 = vpop.f32.mrb[0].mxu0
      %1809 = vmatprep.mubr.f32.mxu0 0.0
      %1810 = vmatmul.mubr.f32.gmra.mrb[0].mxu0 %v449
      %v1811 = vpop.f32.mrb[0].mxu0
      %v1812 = vadd.f32 %v1507, %v1811
      %v1813 = vpop.f32.mrb[0].mxu0
      %1814 = vmatprep.mubr.f32.mxu0 0.0
      %1815 = vmatmul.mubr.f32.gmra.mrb[0].mxu0 %v456
      %v1816 = vpop.f32.mrb[0].mxu0
      %v1817 = vadd.f32 %v1512, %v1816
      %v1818 = vpop.f32.mrb[0].mxu0
      %1819 = vmatprep.mubr.f32.mxu0 0.0
      %1820 = vmatmul.mubr.f32.gmra.mrb[0].mxu0 %v463
      %v1821 = vpop.f32.mrb[0].mxu0
      %v1822 = vadd.f32 %v1517, %v1821
      %v1823 = vpop.f32.mrb[0].mxu0
      %1824 = vmatprep.mubr.f32.mxu0 0.0
      %1825 = vmatmul.mubr.f32.gmra.mrb[0].mxu0 %v470
      %v1826 = vpop.f32.mrb[0].mxu0
      %v1827 = vadd.f32 %v1522, %v1826
      %v1828 = vpop.f32.mrb[0].mxu0
      %1829 = vmatprep.mubr.f32.mxu0 0.0
      %1830 = vmatmul.mubr.f32.gmra.mrb[0].mxu0 %v477
      %v1831 = vpop.f32.mrb[0].mxu0
      %v1832 = vadd.f32 %v1527, %v1831
      %v1833 = vpop.f32.mrb[0].mxu0
      %1834 = vmatprep.mubr.f32.mxu0 0.0
      %1835 = vmatmul.mubr.f32.gmra.mrb[0].mxu0 %v484
      %v1836 = vpop.f32.mrb[0].mxu0
      %v1837 = vadd.f32 %v1532, %v1836
      %v1838 = vpop.f32.mrb[0].mxu0
      %1839 = vmatprep.mubr.f32.mxu0 0.0
      %1840 = vmatmul.mubr.f32.gmra.mrb[0].mxu0 %v491
      %v1841 = vpop.f32.mrb[0].mxu0
      %v1842 = vadd.f32 %v1537, %v1841
      %v1843 = vpop.f32.mrb[0].mxu0
      %1844 = vmatprep.mubr.f32.mxu0 0.0
      %1845 = vmatmul.mubr.f32.gmra.mrb[0].mxu0 %v498
      %v1846 = vpop.f32.mrb[0].mxu0
      %v1847 = vadd.f32 %v1542, %v1846
      %v1848 = vpop.f32.mrb[0].mxu0
      %1849 = vmatprep.mubr.f32.mxu0 0.0
      %1850 = vmatmul.mubr.f32.gmra.mrb[0].mxu0 %v505
      %v1851 = vpop.f32.mrb[0].mxu0
      %v1852 = vadd.f32 %v1547, %v1851
      %v1853 = vpop.f32.mrb[0].mxu0
      %1854 = vmatprep.mubr.f32.mxu0 0.0
      %1855 = vmatmul.mubr.f32.gmra.mrb[0].mxu0 %v512
      %v1856 = vpop.f32.mrb[0].mxu0
      %v1857 = vadd.f32 %v1552, %v1856
      %v1858 = vpop.f32.mrb[0].mxu0
      %1859 = vmatprep.mubr.f32.mxu0 0.0
      %1860 = vmatmul.mubr.f32.gmra.mrb[0].mxu0 %v519
      %v1861 = vpop.f32.mrb[0].mxu0
      %v1862 = vadd.f32 %v1557, %v1861
      %v1863 = vpop.f32.mrb[0].mxu0
      %1864 = vmatprep.mubr.f32.mxu0 0.0
      %1865 = vmatmul.mubr.f32.gmra.mrb[0].mxu0 %v526
      %v1866 = vpop.f32.mrb[0].mxu0
      %v1867 = vadd.f32 %v1562, %v1866
      %v1868 = vpop.f32.mrb[0].mxu0
      %1869 = vmatprep.mubr.f32.mxu0 0.0
      %1870 = vmatmul.mubr.f32.gmra.mrb[0].mxu0 %v533
      %v1871 = vpop.f32.mrb[0].mxu0
      %v1872 = vadd.f32 %v1567, %v1871
      %v1873 = vpop.f32.mrb[0].mxu0
      %1874 = vmatprep.mubr.f32.mxu0 0.0
      %1875 = vmatmul.mubr.f32.gmra.mrb[0].mxu0 %v540
      %v1876 = vpop.f32.mrb[0].mxu0
      %v1877 = vadd.f32 %v1572, %v1876
      %v1878 = vpop.f32.mrb[0].mxu0
      %1879 = vdwg.mxu0
      %v1880 = vmax.f32 %v1642, 0.0
      %v1881 = vmax.f32 %v1647, 0.0
      %v1882 = vmax.f32 %v1652, 0.0
      %v1883 = vmax.f32 %v1657, 0.0
      %v1884 = vmax.f32 %v1662, 0.0
      %v1885 = vmax.f32 %v1667, 0.0
      %v1886 = vmax.f32 %v1672, 0.0
      %v1887 = vmax.f32 %v1677, 0.0
      %v1888 = vmax.f32 %v1682, 0.0
      %v1889 = vmax.f32 %v1687, 0.0
      %v1890 = vmax.f32 %v1692, 0.0
      %v1891 = vmax.f32 %v1697, 0.0
      %v1892 = vmax.f32 %v1702, 0.0
      %v1893 = vmax.f32 %v1707, 0.0
      %v1894 = vmax.f32 %v1712, 0.0
      %v1895 = vmax.f32 %v1717, 0.0
      %v1896 = vmax.f32 %v1722, 0.0
      %v1897 = vmax.f32 %v1727, 0.0
      %v1898 = vmax.f32 %v1732, 0.0
      %v1899 = vmax.f32 %v1737, 0.0
      %v1900 = vmax.f32 %v1742, 0.0
      %v1901 = vmax.f32 %v1747, 0.0
      %v1902 = vmax.f32 %v1752, 0.0
      %v1903 = vmax.f32 %v1757, 0.0
      %v1904 = vmax.f32 %v1762, 0.0
      %v1905 = vmax.f32 %v1767, 0.0
      %v1906 = vmax.f32 %v1772, 0.0
      %v1907 = vmax.f32 %v1777, 0.0
      %v1908 = vmax.f32 %v1782, 0.0
      %v1909 = vmax.f32 %v1787, 0.0
      %v1910 = vmax.f32 %v1792, 0.0
      %v1911 = vmax.f32 %v1797, 0.0
      %v1912 = vmax.f32 %v1802, 0.0
      %v1913 = vmax.f32 %v1807, 0.0
      %v1914 = vmax.f32 %v1812, 0.0
      %v1915 = vmax.f32 %v1817, 0.0
      %v1916 = vmax.f32 %v1822, 0.0
      %v1917 = vmax.f32 %v1827, 0.0
      %v1918 = vmax.f32 %v1832, 0.0
      %v1919 = vmax.f32 %v1837, 0.0
      %v1920 = vmax.f32 %v1842, 0.0
      %v1921 = vmax.f32 %v1847, 0.0
      %v1922 = vmax.f32 %v1852, 0.0
      %v1923 = vmax.f32 %v1857, 0.0
      %v1924 = vmax.f32 %v1862, 0.0
      %v1925 = vmax.f32 %v1867, 0.0
      %v1926 = vmax.f32 %v1872, 0.0
      %v1927 = vmax.f32 %v1877, 0.0
      %vm1928 = vcmask 261120
      %1929 = vst.msk [vmem:[%s204] sm:$0xff] %vm1928, %v1880
      %1930 = vst.msk [vmem:[%s204 + $0x8] sm:$0xff] %vm1928, %v1881
      %1931 = vst.msk [vmem:[%s204 + $0x10] sm:$0xff] %vm1928, %v1882
      %1932 = vst.msk [vmem:[%s204 + $0x18] sm:$0xff] %vm1928, %v1883
      %1933 = vst.msk [vmem:[%s204 + $0x20] sm:$0xff] %vm1928, %v1884
      %1934 = vst.msk [vmem:[%s204 + $0x28] sm:$0xff] %vm1928, %v1885
      %1935 = vst.msk [vmem:[%s204 + $0x30] sm:$0xff] %vm1928, %v1886
      %1936 = vst.msk [vmem:[%s204 + $0x38] sm:$0xff] %vm1928, %v1887
      %1937 = vst.msk [vmem:[%s204 + $0x40] sm:$0xff] %vm1928, %v1888
      %1938 = vst.msk [vmem:[%s204 + $0x48] sm:$0xff] %vm1928, %v1889
      %1939 = vst.msk [vmem:[%s204 + $0x50] sm:$0xff] %vm1928, %v1890
      %1940 = vst.msk [vmem:[%s204 + $0x58] sm:$0xff] %vm1928, %v1891
      %1941 = vst.msk [vmem:[%s204 + $0x60] sm:$0xff] %vm1928, %v1892
      %1942 = vst.msk [vmem:[%s204 + $0x68] sm:$0xff] %vm1928, %v1893
      %1943 = vst.msk [vmem:[%s204 + $0x70] sm:$0xff] %vm1928, %v1894
      %1944 = vst.msk [vmem:[%s204 + $0x78] sm:$0xff] %vm1928, %v1895
      %1945 = vst.msk [vmem:[%s204 + $0x80] sm:$0xff] %vm1928, %v1896
      %1946 = vst.msk [vmem:[%s204 + $0x88] sm:$0xff] %vm1928, %v1897
      %1947 = vst.msk [vmem:[%s204 + $0x90] sm:$0xff] %vm1928, %v1898
      %1948 = vst.msk [vmem:[%s204 + $0x98] sm:$0xff] %vm1928, %v1899
      %1949 = vst.msk [vmem:[%s204 + $0xa0] sm:$0xff] %vm1928, %v1900
      %1950 = vst.msk [vmem:[%s204 + $0xa8] sm:$0xff] %vm1928, %v1901
      %1951 = vst.msk [vmem:[%s204 + $0xb0] sm:$0xff] %vm1928, %v1902
      %1952 = vst.msk [vmem:[%s204 + $0xb8] sm:$0xff] %vm1928, %v1903
      %1953 = vst.msk [vmem:[%s204 + $0xc0] sm:$0xff] %vm1928, %v1904
      %1954 = vst.msk [vmem:[%s204 + $0xc8] sm:$0xff] %vm1928, %v1905
      %1955 = vst.msk [vmem:[%s204 + $0xd0] sm:$0xff] %vm1928, %v1906
      %1956 = vst.msk [vmem:[%s204 + $0xd8] sm:$0xff] %vm1928, %v1907
      %1957 = vst.msk [vmem:[%s204 + $0xe0] sm:$0xff] %vm1928, %v1908
      %1958 = vst.msk [vmem:[%s204 + $0xe8] sm:$0xff] %vm1928, %v1909
      %1959 = vst.msk [vmem:[%s204 + $0xf0] sm:$0xff] %vm1928, %v1910
      %1960 = vst.msk [vmem:[%s204 + $0xf8] sm:$0xff] %vm1928, %v1911
      %1961 = vst.msk [vmem:[%s204 + $0x100] sm:$0xff] %vm1928, %v1912
      %1962 = vst.msk [vmem:[%s204 + $0x108] sm:$0xff] %vm1928, %v1913
      %1963 = vst.msk [vmem:[%s204 + $0x110] sm:$0xff] %vm1928, %v1914
      %1964 = vst.msk [vmem:[%s204 + $0x118] sm:$0xff] %vm1928, %v1915
      %1965 = vst.msk [vmem:[%s204 + $0x120] sm:$0xff] %vm1928, %v1916
      %1966 = vst.msk [vmem:[%s204 + $0x128] sm:$0xff] %vm1928, %v1917
      %1967 = vst.msk [vmem:[%s204 + $0x130] sm:$0xff] %vm1928, %v1918
      %1968 = vst.msk [vmem:[%s204 + $0x138] sm:$0xff] %vm1928, %v1919
      %1969 = vst.msk [vmem:[%s204 + $0x140] sm:$0xff] %vm1928, %v1920
      %1970 = vst.msk [vmem:[%s204 + $0x148] sm:$0xff] %vm1928, %v1921
      %1971 = vst.msk [vmem:[%s204 + $0x150] sm:$0xff] %vm1928, %v1922
      %1972 = vst.msk [vmem:[%s204 + $0x158] sm:$0xff] %vm1928, %v1923
      %1973 = vst.msk [vmem:[%s204 + $0x160] sm:$0xff] %vm1928, %v1924
      %1974 = vst.msk [vmem:[%s204 + $0x168] sm:$0xff] %vm1928, %v1925
      %1975 = vst.msk [vmem:[%s204 + $0x170] sm:$0xff] %vm1928, %v1926
      %1976 = vst.msk [vmem:[%s204 + $0x178] sm:$0xff] %vm1928, %v1927
      %p1977 = scmp.lt.s32.totalorder %s14, 2
      %s1978 = scalar_select %p1977, %s14, 2
      %s1979 = smul.addr %s1978, 48
      %s1980 = smul.addr %s1979, 8
      %s1981 = scalar_lea.vmem %s3, %s1980
      // Predicated region
      $region33: #{forward.10} parent=31 // pred_check
        %p1982 = pneg %p110
      $region34: #{forward.10} parent=31 // pred_check_branch
        %1984 = sbr.rel (%p1982) target = $region36
      $region35: #{forward.10} parent=31 // pred_region
        _
      $region36: #{forward.10} parent=31 // pred_fallthru
        _
    $region32: #{forward.10} parent=5 // pred_fallthru
      _
    %p1985 = scmp.le.s32.totalorder 2, %s9
    // Predicated region
    $region37: #{forward.10} parent=5 // pred_check
      %p1986 = pneg %p1985
    $region38: #{forward.10} parent=5 // pred_check_branch
      %1988 = sbr.rel (%p1986) target = $region40
    $region39: #{forward.10} parent=5 // pred_region
      %s1989 = ssub.s32 %s9, 2
      // Predicated region
      $region41: #{forward.10} parent=39 // pred_check
        %p1990 = pneg %p116
      $region42: #{forward.10} parent=39 // pred_check_branch
        %1992 = sbr.rel (%p1990) target = $region44
      $region43: #{forward.10} parent=39 // pred_region
        %p1993 = scmp.lt.s32.totalorder %s15, 2
        %s1994 = scalar_select %p1993, %s15, 2
        %s1995 = smul.addr %s1994, 48
        %s1996 = smul.addr %s1995, 8
        %s1997 = scalar_lea.vmem %s3, %s1996
      $region44: #{forward.10} parent=39 // pred_fallthru
        _
    $region40: #{forward.10} parent=5 // pred_fallthru
      _
  $region6: #{forward.10} parent=0 // loop_footer
    %s13 = sadd.s32 1, %s9
  $region7: #{forward.10} parent=0 // loop_footer_branch
    %8 = sbr.rel target = $region3
  $region8: #{forward.10} parent=0 // loop_exit
    _

// kernel: forward.12
$region0: #{forward.12}
  #allocation0 [shape = 'u32[]', space=smem, size = 0x4, offset = 0x4, fixed_abs, tag = 'smem constant byte address 0x4 - core index']
  #allocation1 [shape = 'u32[144,128]{1,0:T(1,128)}', space=vmem, size = 0x12000, scoped, tag = 'internal scratch']
  %s0 = inlined_call_operand.vmem [shape: f32[3,72,896], index: 0, kind: input, shape index: {}]
  %s1 = inlined_call_operand.vmem [shape: f32[3,896,64], index: 1, kind: input, shape index: {}]
  %s2 = inlined_call_operand.vmem [shape: f32[3,1,64], index: 2, kind: input, shape index: {}]
  %s3 = inlined_call_operand.vmem [shape: f32[3,72,64], index: 3, kind: output, shape index: {}]
  %s4 = sld [smem:[#allocation0]]
  $region45: #{forward.12} parent=0
    _
  %s6 = ssub.s32 1, %s4
  %s7 = scalar_select 0, %s6, %s4
  loop: start=0, step=1, limit=5
  $region2: #{forward.12} parent=0 // loop_pre_header
    _
  $region3: #{forward.12} parent=0 // loop_header
    %s9 = sphi 0, %s13
    %p10 = scmp.ge.s32.totalorder %s9, 5
    %s19 = sphi 0, %s21
    %s22 = sphi 0, %s19
    %s23 = sphi 0, %s22
    %s39 = sphi 0, %s23
    %s45 = sphi 0, %s47
    %s48 = sphi 0, %s45
    %s49 = sphi 0, %s48
    %s65 = sphi 0, %s49
    %s71 = sphi 0, %s73
    %s74 = sphi 0, %s71
    %s75 = sphi 0, %s74
    %s91 = sphi 0, %s75
    %s97 = sphi 0, %s99
    %s100 = sphi 0, %s97
    %s101 = sphi 0, %s100
    %s117 = sphi 0, %s101
  $region4: #{forward.12} parent=0 // loop_header_branch
    %12 = sbr.rel (%p10) target = $region8
  $region5: #{forward.12} parent=0 // loop_body
    %s14 = ssub.s32 %s9, 1
    %s15 = ssub.s32 %s9, 2
    %s16 = sadd.s32 %s9, 1
    %s17 = ssub.s32 %s9, %s16
    %p18 = scmp.eq.s32.totalorder %s17, 0
    %s20 = sadd.s32 %s19, 1
    %s21 = scalar_select %p18, %s19, %s20
    %p24 = pneg %p18
    %p25 = scmp.eq.s32.totalorder %s9, 2
    %p26 = por %p24, %p25
    %p27 = scmp.ne.s32.totalorder %s19, %s22
    %p28 = scmp.eq.s32.totalorder %s9, 0
    %p29 = por %p27, %p28
    %p30 = scmp.ne.s32.totalorder %s19, %s22
    %p31 = scmp.eq.s32.totalorder %s14, 2
    %p32 = por %p30, %p31
    %p33 = scmp.ne.s32.totalorder %s22, %s23
    %p34 = scmp.eq.s32.totalorder %s14, 0
    %p35 = por %p33, %p34
    %p36 = scmp.ne.s32.totalorder %s22, %s23
    %p37 = scmp.eq.s32.totalorder %s15, 2
    %p38 = por %p36, %p37
    %p40 = scmp.ne.s32.totalorder %s23, %s39
    %p41 = scmp.eq.s32.totalorder %s15, 0
    %p42 = por %p40, %p41
    %s43 = ssub.s32 %s9, %s16
    %p44 = scmp.eq.s32.totalorder %s43, 0
    %s46 = sadd.s32 %s45, 1
    %s47 = scalar_select %p44, %s45, %s46
    %p50 = pneg %p44
    %p51 = scmp.eq.s32.totalorder %s9, 2
    %p52 = por %p50, %p51
    %p53 = scmp.ne.s32.totalorder %s45, %s48
    %p54 = scmp.eq.s32.totalorder %s9, 0
    %p55 = por %p53, %p54
    %p56 = scmp.ne.s32.totalorder %s45, %s48
    %p57 = scmp.eq.s32.totalorder %s14, 2
    %p58 = por %p56, %p57
    %p59 = scmp.ne.s32.totalorder %s48, %s49
    %p60 = scmp.eq.s32.totalorder %s14, 0
    %p61 = por %p59, %p60
    %p62 = scmp.ne.s32.totalorder %s48, %s49
    %p63 = scmp.eq.s32.totalorder %s15, 2
    %p64 = por %p62, %p63
    %p66 = scmp.ne.s32.totalorder %s49, %s65
    %p67 = scmp.eq.s32.totalorder %s15, 0
    %p68 = por %p66, %p67
    %s69 = ssub.s32 %s9, %s16
    %p70 = scmp.eq.s32.totalorder %s69, 0
    %s72 = sadd.s32 %s71, 1
    %s73 = scalar_select %p70, %s71, %s72
    %p76 = pneg %p70
    %p77 = scmp.eq.s32.totalorder %s9, 2
    %p78 = por %p76, %p77
    %p79 = scmp.ne.s32.totalorder %s71, %s74
    %p80 = scmp.eq.s32.totalorder %s9, 0
    %p81 = por %p79, %p80
    %p82 = scmp.ne.s32.totalorder %s71, %s74
    %p83 = scmp.eq.s32.totalorder %s14, 2
    %p84 = por %p82, %p83
    %p85 = scmp.ne.s32.totalorder %s74, %s75
    %p86 = scmp.eq.s32.totalorder %s14, 0
    %p87 = por %p85, %p86
    %p88 = scmp.ne.s32.totalorder %s74, %s75
    %p89 = scmp.eq.s32.totalorder %s15, 2
    %p90 = por %p88, %p89
    %p92 = scmp.ne.s32.totalorder %s75, %s91
    %p93 = scmp.eq.s32.totalorder %s15, 0
    %p94 = por %p92, %p93
    %s95 = ssub.s32 %s9, %s16
    %p96 = scmp.eq.s32.totalorder %s95, 0
    %s98 = sadd.s32 %s97, 1
    %s99 = scalar_select %p96, %s97, %s98
    %p102 = pneg %p96
    %p103 = scmp.eq.s32.totalorder %s9, 2
    %p104 = por %p102, %p103
    %p105 = scmp.ne.s32.totalorder %s97, %s100
    %p106 = scmp.eq.s32.totalorder %s9, 0
    %p107 = por %p105, %p106
    %p108 = scmp.ne.s32.totalorder %s97, %s100
    %p109 = scmp.eq.s32.totalorder %s14, 2
    %p110 = por %p108, %p109
    %p111 = scmp.ne.s32.totalorder %s100, %s101
    %p112 = scmp.eq.s32.totalorder %s14, 0
    %p113 = por %p111, %p112
    %p114 = scmp.ne.s32.totalorder %s100, %s101
    %p115 = scmp.eq.s32.totalorder %s15, 2
    %p116 = por %p114, %p115
    %p118 = scmp.ne.s32.totalorder %s101, %s117
    %p119 = scmp.eq.s32.totalorder %s15, 0
    %p120 = por %p118, %p119
    %p121 = scmp.le.s32.totalorder 1, %s9
    %p122 = scmp.lt.s32.totalorder %s9, 4
    %p123 = pnand %p121, %p122
    %p124 = pneg %p123
    // Predicated region
    $region9: #{forward.12} parent=5 // pred_check
      _
    $region10: #{forward.12} parent=5 // pred_check_branch
      %126 = sbr.rel (%p123) target = $region12
    $region11: #{forward.12} parent=5 // pred_region
      %s127 = ssub.s32 %s9, 1
    $region12: #{forward.12} parent=5 // pred_fallthru
      _
    %p128 = scmp.lt.s32.totalorder %s9, 3
    // Predicated region
    $region13: #{forward.12} parent=5 // pred_check
      %p129 = pneg %p128
    $region14: #{forward.12} parent=5 // pred_check_branch
      %131 = sbr.rel (%p129) target = $region16
    $region15: #{forward.12} parent=5 // pred_region
      // Predicated region
      $region17: #{forward.12} parent=15 // pred_check
        %p132 = pneg %p29
      $region18: #{forward.12} parent=15 // pred_check_branch
        %134 = sbr.rel (%p132) target = $region20
      $region19: #{forward.12} parent=15 // pred_region
        %p135 = scmp.lt.s32.totalorder %s9, 2
        %s136 = scalar_select %p135, %s9, 2
        %s137 = smul.addr %s136, 63
        %s138 = smul.addr %s137, 8
        %s139 = scalar_lea.vmem %s0, %s138
      $region20: #{forward.12} parent=15 // pred_fallthru
        _
      // Predicated region
      $region21: #{forward.12} parent=15 // pred_check
        %p140 = pneg %p55
      $region22: #{forward.12} parent=15 // pred_check_branch
        %142 = sbr.rel (%p140) target = $region24
      $region23: #{forward.12} parent=15 // pred_region
        %p143 = scmp.lt.s32.totalorder %s9, 2
        %s144 = scalar_select %p143, %s9, 2
        %s145 = smul.addr %s144, 112
        %s146 = smul.addr %s145, 8
        %s147 = scalar_lea.vmem %s1, %s146
      $region24: #{forward.12} parent=15 // pred_fallthru
        _
      // Predicated region
      $region25: #{forward.12} parent=15 // pred_check
        %p148 = pneg %p81
      $region26: #{forward.12} parent=15 // pred_check_branch
        %150 = sbr.rel (%p148) target = $region28
      $region27: #{forward.12} parent=15 // pred_region
        %p151 = scmp.lt.s32.totalorder %s9, 2
        %s152 = scalar_select %p151, %s9, 2
        %s153 = scalar_lea.vmem %s2, %s152
      $region28: #{forward.12} parent=15 // pred_fallthru
        _
    $region16: #{forward.12} parent=5 // pred_fallthru
      _
    %p154 = scmp.le.s32.totalorder 1, %s9
    %p155 = scmp.lt.s32.totalorder %s9, 4
    %p156 = pnand %p154, %p155
    %p157 = pneg %p156
    // Predicated region
    $region29: #{forward.12} parent=5 // pred_check
      _
    $region30: #{forward.12} parent=5 // pred_check_branch
      %159 = sbr.rel (%p156) target = $region32
    $region31: #{forward.12} parent=5 // pred_region
      %s160 = ssub.s32 %s9, 1
      %p161 = scmp.lt.s32.totalorder %s14, 2
      %s162 = scalar_select %p161, %s14, 2
      %s163 = smul.addr %s162, 63
      %s164 = smul.addr %s163, 8
      %s165 = scalar_lea.vmem %s0, %s164
      %p166 = pneg %p35
      %p167 = pneg %p32
      %p168 = scmp.lt.s32.totalorder %s14, 2
      %s169 = scalar_select %p168, %s14, 2
      %s170 = smul.addr %s169, 112
      %s171 = smul.addr %s170, 8
      %s172 = scalar_lea.vmem %s1, %s171
      %p173 = pneg %p61
      %p174 = pneg %p58
      %p175 = scmp.lt.s32.totalorder %s14, 2
      %s176 = scalar_select %p175, %s14, 2
      %s177 = scalar_lea.vmem %s2, %s176
      %p178 = pneg %p87
      %p179 = pneg %p84
      %p180 = pneg %p113
      %p181 = pneg %p110
      %p182 = scmp.lt.s32.totalorder %s14, 2
      %s183 = scalar_select %p182, %s14, 2
      %s184 = smul.addr %s183, 9
      %s185 = smul.addr %s184, 8
      %s186 = scalar_lea.vmem %s3, %s185
      %p187 = scmp.lt.s32.totalorder %s14, 2
      %s188 = scalar_select %p187, %s14, 2
      %s189 = smul.addr %s188, 63
      %s190 = smul.addr %s189, 8
      %s191 = scalar_lea.vmem %s0, %s190
      %p192 = scmp.lt.s32.totalorder %s14, 2
      %s193 = scalar_select %p192, %s14, 2
      %s194 = smul.addr %s193, 112
      %s195 = smul.addr %s194, 8
      %s196 = scalar_lea.vmem %s1, %s195
      %p197 = scmp.lt.s32.totalorder %s14, 2
      %s198 = scalar_select %p197, %s14, 2
      %s199 = scalar_lea.vmem %s2, %s198
      %p200 = scmp.lt.s32.totalorder %s14, 2
      %s201 = scalar_select %p200, %s14, 2
      %s202 = smul.addr %s201, 9
      %s203 = smul.addr %s202, 8
      %s204 = scalar_lea.vmem %s3, %s203
      %v205 = vld [vmem:[%s191] sm:$0xff]
      %v206 = vld [vmem:[%s191 + $0x8] sm:$0xff]
      %v207 = vld [vmem:[%s191 + $0x10] sm:$0xff]
      %v208 = vld [vmem:[%s191 + $0x18] sm:$0xff]
      %v209 = vld [vmem:[%s191 + $0x20] sm:$0xff]
      %v210 = vld [vmem:[%s191 + $0x28] sm:$0xff]
      %v211 = vld [vmem:[%s191 + $0x30] sm:$0xff]
      %v212 = vld [vmem:[%s191 + $0x38] sm:$0xff]
      %v213 = vld [vmem:[%s191 + $0x40] sm:$0xff]
      %v214 = vld [vmem:[%s191 + $0x48] sm:$0xff]
      %v215 = vld [vmem:[%s191 + $0x50] sm:$0xff]
      %v216 = vld [vmem:[%s191 + $0x58] sm:$0xff]
      %v217 = vld [vmem:[%s191 + $0x60] sm:$0xff]
      %v218 = vld [vmem:[%s191 + $0x68] sm:$0xff]
      %v219 = vld [vmem:[%s191 + $0x70] sm:$0xff]
      %v220 = vld [vmem:[%s191 + $0x78] sm:$0xff]
      %v221 = vld [vmem:[%s191 + $0x80] sm:$0xff]
      %v222 = vld [vmem:[%s191 + $0x88] sm:$0xff]
      %v223 = vld [vmem:[%s191 + $0x90] sm:$0xff]
      %v224 = vld [vmem:[%s191 + $0x98] sm:$0xff]
      %v225 = vld [vmem:[%s191 + $0xa0] sm:$0xff]
      %v226 = vld [vmem:[%s191 + $0xa8] sm:$0xff]
      %v227 = vld [vmem:[%s191 + $0xb0] sm:$0xff]
      %v228 = vld [vmem:[%s191 + $0xb8] sm:$0xff]
      %v229 = vld [vmem:[%s191 + $0xc0] sm:$0xff]
      %v230 = vld [vmem:[%s191 + $0xc8] sm:$0xff]
      %v231 = vld [vmem:[%s191 + $0xd0] sm:$0xff]
      %v232 = vld [vmem:[%s191 + $0xd8] sm:$0xff]
      %v233 = vld [vmem:[%s191 + $0xe0] sm:$0xff]
      %v234 = vld [vmem:[%s191 + $0xe8] sm:$0xff]
      %v235 = vld [vmem:[%s191 + $0xf0] sm:$0xff]
      %v236 = vld [vmem:[%s191 + $0xf8] sm:$0xff]
      %v237 = vld [vmem:[%s191 + $0x100] sm:$0xff]
      %v238 = vld [vmem:[%s191 + $0x108] sm:$0xff]
      %v239 = vld [vmem:[%s191 + $0x110] sm:$0xff]
      %v240 = vld [vmem:[%s191 + $0x118] sm:$0xff]
      %v241 = vld [vmem:[%s191 + $0x120] sm:$0xff]
      %v242 = vld [vmem:[%s191 + $0x128] sm:$0xff]
      %v243 = vld [vmem:[%s191 + $0x130] sm:$0xff]
      %v244 = vld [vmem:[%s191 + $0x138] sm:$0xff]
      %v245 = vld [vmem:[%s191 + $0x140] sm:$0xff]
      %v246 = vld [vmem:[%s191 + $0x148] sm:$0xff]
      %v247 = vld [vmem:[%s191 + $0x150] sm:$0xff]
      %v248 = vld [vmem:[%s191 + $0x158] sm:$0xff]
      %v249 = vld [vmem:[%s191 + $0x160] sm:$0xff]
      %v250 = vld [vmem:[%s191 + $0x168] sm:$0xff]
      %v251 = vld [vmem:[%s191 + $0x170] sm:$0xff]
      %v252 = vld [vmem:[%s191 + $0x178] sm:$0xff]
      %v253 = vld [vmem:[%s191 + $0x180] sm:$0xff]
      %v254 = vld [vmem:[%s191 + $0x188] sm:$0xff]
      %v255 = vld [vmem:[%s191 + $0x190] sm:$0xff]
      %v256 = vld [vmem:[%s191 + $0x198] sm:$0xff]
      %v257 = vld [vmem:[%s191 + $0x1a0] sm:$0xff]
      %v258 = vld [vmem:[%s191 + $0x1a8] sm:$0xff]
      %v259 = vld [vmem:[%s191 + $0x1b0] sm:$0xff]
      %v260 = vld [vmem:[%s191 + $0x1b8] sm:$0xff]
      %v261 = vld [vmem:[%s191 + $0x1c0] sm:$0xff]
      %v262 = vld [vmem:[%s191 + $0x1c8] sm:$0xff]
      %v263 = vld [vmem:[%s191 + $0x1d0] sm:$0xff]
      %v264 = vld [vmem:[%s191 + $0x1d8] sm:$0xff]
      %v265 = vld [vmem:[%s191 + $0x1e0] sm:$0xff]
      %v266 = vld [vmem:[%s191 + $0x1e8] sm:$0xff]
      %v267 = vld [vmem:[%s191 + $0x1f0] sm:$0xff]
      %v268 = vld [vmem:[%s196] sm:$0xff]
      %v269 = vld [vmem:[%s196 + $0x8] sm:$0xff]
      %v270 = vld [vmem:[%s196 + $0x10] sm:$0xff]
      %v271 = vld [vmem:[%s196 + $0x18] sm:$0xff]
      %v272 = vld [vmem:[%s196 + $0x20] sm:$0xff]
      %v273 = vld [vmem:[%s196 + $0x28] sm:$0xff]
      %v274 = vld [vmem:[%s196 + $0x30] sm:$0xff]
      %v275 = vld [vmem:[%s196 + $0x38] sm:$0xff]
      %v276 = vld [vmem:[%s196 + $0x40] sm:$0xff]
      %v277 = vld [vmem:[%s196 + $0x48] sm:$0xff]
      %v278 = vld [vmem:[%s196 + $0x50] sm:$0xff]
      %v279 = vld [vmem:[%s196 + $0x58] sm:$0xff]
      %v280 = vld [vmem:[%s196 + $0x60] sm:$0xff]
      %v281 = vld [vmem:[%s196 + $0x68] sm:$0xff]
      %v282 = vld [vmem:[%s196 + $0x70] sm:$0xff]
      %v283 = vld [vmem:[%s196 + $0x78] sm:$0xff]
      %v284 = vld [vmem:[%s196 + $0x80] sm:$0xff]
      %v285 = vld [vmem:[%s196 + $0x88] sm:$0xff]
      %v286 = vld [vmem:[%s196 + $0x90] sm:$0xff]
      %v287 = vld [vmem:[%s196 + $0x98] sm:$0xff]
      %v288 = vld [vmem:[%s196 + $0xa0] sm:$0xff]
      %v289 = vld [vmem:[%s196 + $0xa8] sm:$0xff]
      %v290 = vld [vmem:[%s196 + $0xb0] sm:$0xff]
      %v291 = vld [vmem:[%s196 + $0xb8] sm:$0xff]
      %v292 = vld [vmem:[%s196 + $0xc0] sm:$0xff]
      %v293 = vld [vmem:[%s196 + $0xc8] sm:$0xff]
      %v294 = vld [vmem:[%s196 + $0xd0] sm:$0xff]
      %v295 = vld [vmem:[%s196 + $0xd8] sm:$0xff]
      %v296 = vld [vmem:[%s196 + $0xe0] sm:$0xff]
      %v297 = vld [vmem:[%s196 + $0xe8] sm:$0xff]
      %v298 = vld [vmem:[%s196 + $0xf0] sm:$0xff]
      %v299 = vld [vmem:[%s196 + $0xf8] sm:$0xff]
      %v300 = vld [vmem:[%s196 + $0x100] sm:$0xff]
      %v301 = vld [vmem:[%s196 + $0x108] sm:$0xff]
      %v302 = vld [vmem:[%s196 + $0x110] sm:$0xff]
      %v303 = vld [vmem:[%s196 + $0x118] sm:$0xff]
      %v304 = vld [vmem:[%s196 + $0x120] sm:$0xff]
      %v305 = vld [vmem:[%s196 + $0x128] sm:$0xff]
      %v306 = vld [vmem:[%s196 + $0x130] sm:$0xff]
      %v307 = vld [vmem:[%s196 + $0x138] sm:$0xff]
      %v308 = vld [vmem:[%s196 + $0x140] sm:$0xff]
      %v309 = vld [vmem:[%s196 + $0x148] sm:$0xff]
      %v310 = vld [vmem:[%s196 + $0x150] sm:$0xff]
      %v311 = vld [vmem:[%s196 + $0x158] sm:$0xff]
      %v312 = vld [vmem:[%s196 + $0x160] sm:$0xff]
      %v313 = vld [vmem:[%s196 + $0x168] sm:$0xff]
      %v314 = vld [vmem:[%s196 + $0x170] sm:$0xff]
      %v315 = vld [vmem:[%s196 + $0x178] sm:$0xff]
      %v316 = vld [vmem:[%s196 + $0x180] sm:$0xff]
      %v317 = vld [vmem:[%s196 + $0x188] sm:$0xff]
      %v318 = vld [vmem:[%s196 + $0x190] sm:$0xff]
      %v319 = vld [vmem:[%s196 + $0x198] sm:$0xff]
      %v320 = vld [vmem:[%s196 + $0x1a0] sm:$0xff]
      %v321 = vld [vmem:[%s196 + $0x1a8] sm:$0xff]
      %v322 = vld [vmem:[%s196 + $0x1b0] sm:$0xff]
      %v323 = vld [vmem:[%s196 + $0x1b8] sm:$0xff]
      %v324 = vld [vmem:[%s196 + $0x1c0] sm:$0xff]
      %v325 = vld [vmem:[%s196 + $0x1c8] sm:$0xff]
      %v326 = vld [vmem:[%s196 + $0x1d0] sm:$0xff]
      %v327 = vld [vmem:[%s196 + $0x1d8] sm:$0xff]
      %v328 = vld [vmem:[%s196 + $0x1e0] sm:$0xff]
      %v329 = vld [vmem:[%s196 + $0x1e8] sm:$0xff]
      %v330 = vld [vmem:[%s196 + $0x1f0] sm:$0xff]
      %v331 = vld [vmem:[%s196 + $0x1f8] sm:$0xff]
      %v332 = vld [vmem:[%s196 + $0x200] sm:$0xff]
      %v333 = vld [vmem:[%s196 + $0x208] sm:$0xff]
      %v334 = vld [vmem:[%s196 + $0x210] sm:$0xff]
      %v335 = vld [vmem:[%s196 + $0x218] sm:$0xff]
      %v336 = vld [vmem:[%s196 + $0x220] sm:$0xff]
      %v337 = vld [vmem:[%s196 + $0x228] sm:$0xff]
      %v338 = vld [vmem:[%s196 + $0x230] sm:$0xff]
      %v339 = vld [vmem:[%s196 + $0x238] sm:$0xff]
      %v340 = vld [vmem:[%s196 + $0x240] sm:$0xff]
      %v341 = vld [vmem:[%s196 + $0x248] sm:$0xff]
      %v342 = vld [vmem:[%s196 + $0x250] sm:$0xff]
      %v343 = vld [vmem:[%s196 + $0x258] sm:$0xff]
      %v344 = vld [vmem:[%s196 + $0x260] sm:$0xff]
      %v345 = vld [vmem:[%s196 + $0x268] sm:$0xff]
      %v346 = vld [vmem:[%s196 + $0x270] sm:$0xff]
      %v347 = vld [vmem:[%s196 + $0x278] sm:$0xff]
      %v348 = vld [vmem:[%s196 + $0x280] sm:$0xff]
      %v349 = vld [vmem:[%s196 + $0x288] sm:$0xff]
      %v350 = vld [vmem:[%s196 + $0x290] sm:$0xff]
      %v351 = vld [vmem:[%s196 + $0x298] sm:$0xff]
      %v352 = vld [vmem:[%s196 + $0x2a0] sm:$0xff]
      %v353 = vld [vmem:[%s196 + $0x2a8] sm:$0xff]
      %v354 = vld [vmem:[%s196 + $0x2b0] sm:$0xff]
      %v355 = vld [vmem:[%s196 + $0x2b8] sm:$0xff]
      %v356 = vld [vmem:[%s196 + $0x2c0] sm:$0xff]
      %v357 = vld [vmem:[%s196 + $0x2c8] sm:$0xff]
      %v358 = vld [vmem:[%s196 + $0x2d0] sm:$0xff]
      %v359 = vld [vmem:[%s196 + $0x2d8] sm:$0xff]
      %v360 = vld [vmem:[%s196 + $0x2e0] sm:$0xff]
      %v361 = vld [vmem:[%s196 + $0x2e8] sm:$0xff]
      %v362 = vld [vmem:[%s196 + $0x2f0] sm:$0xff]
      %v363 = vld [vmem:[%s196 + $0x2f8] sm:$0xff]
      %v364 = vld [vmem:[%s196 + $0x300] sm:$0xff]
      %v365 = vld [vmem:[%s196 + $0x308] sm:$0xff]
      %v366 = vld [vmem:[%s196 + $0x310] sm:$0xff]
      %v367 = vld [vmem:[%s196 + $0x318] sm:$0xff]
      %v368 = vld [vmem:[%s196 + $0x320] sm:$0xff]
      %v369 = vld [vmem:[%s196 + $0x328] sm:$0xff]
      %v370 = vld [vmem:[%s196 + $0x330] sm:$0xff]
      %v371 = vld [vmem:[%s196 + $0x338] sm:$0xff]
      %v372 = vld [vmem:[%s196 + $0x340] sm:$0xff]
      %v373 = vld [vmem:[%s196 + $0x348] sm:$0xff]
      %v374 = vld [vmem:[%s196 + $0x350] sm:$0xff]
      %v375 = vld [vmem:[%s196 + $0x358] sm:$0xff]
      %v376 = vld [vmem:[%s196 + $0x360] sm:$0xff]
      %v377 = vld [vmem:[%s196 + $0x368] sm:$0xff]
      %v378 = vld [vmem:[%s196 + $0x370] sm:$0xff]
      %v379 = vld [vmem:[%s196 + $0x378] sm:$0xff]
      %v380 = vld [vmem:[%s199] sm:$0x1]
      %v382 = vlaneseq
      %v383 = vshrl.u32 %v382, 7
      %v384 = vsub.s32 0, %v383
      %v385 = vrot.slane %v380, %v384
      %387 = vmatprep.subr.mxu0 0.0
      %388 = vmatpush1.msra.mxu0 %v268
      %389 = vmatprep.subr.mxu0 0.0
      %390 = vmatpush1.msra.mxu0 %v269
      %391 = vmatprep.subr.mxu0 0.0
      %392 = vmatpush1.msra.mxu0 %v270
      %393 = vmatprep.subr.mxu0 0.0
      %394 = vmatpush1.msra.mxu0 %v271
      %395 = vmatprep.subr.mxu0 0.0
      %396 = vmatpush1.msra.mxu0 %v272
      %397 = vmatprep.subr.mxu0 0.0
      %398 = vmatpush1.msra.mxu0 %v273
      %399 = vmatprep.subr.mxu0 0.0
      %400 = vmatpush1.msra.mxu0 %v274
      %401 = vmatprep.subr.mxu0 0.0
      %402 = vmatpush1.msra.mxu0 %v275
      %403 = vmatprep.subr.mxu0 0.0
      %404 = vmatpush1.msra.mxu0 %v276
      %405 = vmatprep.subr.mxu0 0.0
      %406 = vmatpush1.msra.mxu0 %v277
      %407 = vmatprep.subr.mxu0 0.0
      %408 = vmatpush1.msra.mxu0 %v278
      %409 = vmatprep.subr.mxu0 0.0
      %410 = vmatpush1.msra.mxu0 %v279
      %411 = vmatprep.subr.mxu0 0.0
      %412 = vmatpush1.msra.mxu0 %v280
      %413 = vmatprep.subr.mxu0 0.0
      %414 = vmatpush1.msra.mxu0 %v281
      %415 = vmatprep.subr.mxu0 0.0
      %416 = vmatpush1.msra.mxu0 %v282
      %417 = vmatprep.subr.mxu0 0.0
      %418 = vmatpush1.msra.mxu0 %v283
      %419 = vmatprep.subr.mxu0 0.0
      %420 = vmatpush1.msra.mxu0 %v284
      %421 = vmatprep.subr.mxu0 0.0
      %422 = vmatpush1.msra.mxu0 %v285
      %423 = vmatprep.subr.mxu0 0.0
      %424 = vmatpush1.msra.mxu0 %v286
      %425 = vmatprep.subr.mxu0 0.0
      %426 = vmatpush1.msra.mxu0 %v287
      %427 = vmatprep.subr.mxu0 0.0
      %428 = vmatpush1.msra.mxu0 %v288
      %429 = vmatprep.subr.mxu0 0.0
      %430 = vmatpush1.msra.mxu0 %v289
      %431 = vmatprep.subr.mxu0 0.0
      %432 = vmatpush1.msra.mxu0 %v290
      %433 = vmatprep.subr.mxu0 0.0
      %434 = vmatpush1.msra.mxu0 %v291
      %435 = vmatprep.subr.mxu0 0.0
      %436 = vmatpush1.msra.mxu0 %v292
      %437 = vmatprep.subr.mxu0 0.0
      %438 = vmatpush1.msra.mxu0 %v293
      %439 = vmatprep.subr.mxu0 0.0
      %440 = vmatpush1.msra.mxu0 %v294
      %441 = vmatprep.subr.mxu0 0.0
      %442 = vmatpush1.msra.mxu0 %v295
      %443 = vmatprep.subr.mxu0 0.0
      %444 = vmatpush1.msra.mxu0 %v296
      %445 = vmatprep.subr.mxu0 0.0
      %446 = vmatpush1.msra.mxu0 %v297
      %447 = vmatprep.subr.mxu0 0.0
      %448 = vmatpush1.msra.mxu0 %v298
      %449 = vmatprep.subr.mxu0 0.0
      %450 = vmatpush1.msra.mxu0 %v299
      %451 = vmatprep.mubr.f32.mxu0 %v206
      %452 = vmatmul.mubr.f32.gmra.mrb[0].mxu0 %v205
      %v453 = vpop.f32.mrb[0].mxu0
      %v454 = vadd.f32 %v385, %v453
      %v455 = vpop.f32.mrb[0].mxu0
      %456 = vmatprep.mubr.f32.mxu0 %v213
      %457 = vmatmul.mubr.f32.gmra.mrb[0].mxu0 %v212
      %v458 = vpop.f32.mrb[0].mxu0
      %v459 = vadd.f32 %v385, %v458
      %v460 = vpop.f32.mrb[0].mxu0
      %461 = vmatprep.mubr.f32.mxu0 %v220
      %462 = vmatmul.mubr.f32.gmra.mrb[0].mxu0 %v219
      %v463 = vpop.f32.mrb[0].mxu0
      %v464 = vadd.f32 %v385, %v463
      %v465 = vpop.f32.mrb[0].mxu0
      %466 = vmatprep.mubr.f32.mxu0 %v227
      %467 = vmatmul.mubr.f32.gmra.mrb[0].mxu0 %v226
      %v468 = vpop.f32.mrb[0].mxu0
      %v469 = vadd.f32 %v385, %v468
      %v470 = vpop.f32.mrb[0].mxu0
      %471 = vmatprep.mubr.f32.mxu0 %v234
      %472 = vmatmul.mubr.f32.gmra.mrb[0].mxu0 %v233
      %v473 = vpop.f32.mrb[0].mxu0
      %v474 = vadd.f32 %v385, %v473
      %v475 = vpop.f32.mrb[0].mxu0
      %476 = vmatprep.mubr.f32.mxu0 %v241
      %477 = vmatmul.mubr.f32.gmra.mrb[0].mxu0 %v240
      %v478 = vpop.f32.mrb[0].mxu0
      %v479 = vadd.f32 %v385, %v478
      %v480 = vpop.f32.mrb[0].mxu0
      %481 = vmatprep.mubr.f32.mxu0 %v248
      %482 = vmatmul.mubr.f32.gmra.mrb[0].mxu0 %v247
      %v483 = vpop.f32.mrb[0].mxu0
      %v484 = vadd.f32 %v385, %v483
      %v485 = vpop.f32.mrb[0].mxu0
      %486 = vmatprep.mubr.f32.mxu0 %v255
      %487 = vmatmul.mubr.f32.gmra.mrb[0].mxu0 %v254
      %v488 = vpop.f32.mrb[0].mxu0
      %v489 = vadd.f32 %v385, %v488
      %v490 = vpop.f32.mrb[0].mxu0
      %491 = vmatprep.mubr.f32.mxu0 %v262
      %492 = vmatmul.mubr.f32.gmra.mrb[0].mxu0 %v261
      %v493 = vpop.f32.mrb[0].mxu0
      %v494 = vadd.f32 %v385, %v493
      %v495 = vpop.f32.mrb[0].mxu0
      %496 = vdwg.mxu0
      %497 = vmatprep.subr.mxu0 0.0
      %498 = vmatpush1.msra.mxu0 %v300
      %499 = vmatprep.subr.mxu0 0.0
      %500 = vmatpush1.msra.mxu0 %v301
      %501 = vmatprep.subr.mxu0 0.0
      %502 = vmatpush1.msra.mxu0 %v302
      %503 = vmatprep.subr.mxu0 0.0
      %504 = vmatpush1.msra.mxu0 %v303
      %505 = vmatprep.subr.mxu0 0.0
      %506 = vmatpush1.msra.mxu0 %v304
      %507 = vmatprep.subr.mxu0 0.0
      %508 = vmatpush1.msra.mxu0 %v305
      %509 = vmatprep.subr.mxu0 0.0
      %510 = vmatpush1.msra.mxu0 %v306
      %511 = vmatprep.subr.mxu0 0.0
      %512 = vmatpush1.msra.mxu0 %v307
      %513 = vmatprep.subr.mxu0 0.0
      %514 = vmatpush1.msra.mxu0 %v308
      %515 = vmatprep.subr.mxu0 0.0
      %516 = vmatpush1.msra.mxu0 %v309
      %517 = vmatprep.subr.mxu0 0.0
      %518 = vmatpush1.msra.mxu0 %v310
      %519 = vmatprep.subr.mxu0 0.0
      %520 = vmatpush1.msra.mxu0 %v311
      %521 = vmatprep.subr.mxu0 0.0
      %522 = vmatpush1.msra.mxu0 %v312
      %523 = vmatprep.subr.mxu0 0.0
      %524 = vmatpush1.msra.mxu0 %v313
      %525 = vmatprep.subr.mxu0 0.0
      %526 = vmatpush1.msra.mxu0 %v314
      %527 = vmatprep.subr.mxu0 0.0
      %528 = vmatpush1.msra.mxu0 %v315
      %529 = vmatprep.subr.mxu0 0.0
      %530 = vmatpush1.msra.mxu0 %v316
      %531 = vmatprep.subr.mxu0 0.0
      %532 = vmatpush1.msra.mxu0 %v317
      %533 = vmatprep.subr.mxu0 0.0
      %534 = vmatpush1.msra.mxu0 %v318
      %535 = vmatprep.subr.mxu0 0.0
      %536 = vmatpush1.msra.mxu0 %v319
      %537 = vmatprep.subr.mxu0 0.0
      %538 = vmatpush1.msra.mxu0 %v320
      %539 = vmatprep.subr.mxu0 0.0
      %540 = vmatpush1.msra.mxu0 %v321
      %541 = vmatprep.subr.mxu0 0.0
      %542 = vmatpush1.msra.mxu0 %v322
      %543 = vmatprep.subr.mxu0 0.0
      %544 = vmatpush1.msra.mxu0 %v323
      %545 = vmatprep.subr.mxu0 0.0
      %546 = vmatpush1.msra.mxu0 %v324
      %547 = vmatprep.subr.mxu0 0.0
      %548 = vmatpush1.msra.mxu0 %v325
      %549 = vmatprep.subr.mxu0 0.0
      %550 = vmatpush1.msra.mxu0 %v326
      %551 = vmatprep.subr.mxu0 0.0
      %552 = vmatpush1.msra.mxu0 %v327
      %553 = vmatprep.subr.mxu0 0.0
      %554 = vmatpush1.msra.mxu0 %v328
      %555 = vmatprep.subr.mxu0 0.0
      %556 = vmatpush1.msra.mxu0 %v329
      %557 = vmatprep.subr.mxu0 0.0
      %558 = vmatpush1.msra.mxu0 %v330
      %559 = vmatprep.subr.mxu0 0.0
      %560 = vmatpush1.msra.mxu0 %v331
      %561 = vmatprep.mubr.f32.mxu0 %v208
      %562 = vmatmul.mubr.f32.gmra.mrb[0].mxu0 %v207
      %v563 = vpop.f32.mrb[0].mxu0
      %v564 = vadd.f32 %v454, %v563
      %v565 = vpop.f32.mrb[0].mxu0
      %566 = vmatprep.mubr.f32.mxu0 %v215
      %567 = vmatmul.mubr.f32.gmra.mrb[0].mxu0 %v214
      %v568 = vpop.f32.mrb[0].mxu0
      %v569 = vadd.f32 %v459, %v568
      %v570 = vpop.f32.mrb[0].mxu0
      %571 = vmatprep.mubr.f32.mxu0 %v222
      %572 = vmatmul.mubr.f32.gmra.mrb[0].mxu0 %v221
      %v573 = vpop.f32.mrb[0].mxu0
      %v574 = vadd.f32 %v464, %v573
      %v575 = vpop.f32.mrb[0].mxu0
      %576 = vmatprep.mubr.f32.mxu0 %v229
      %577 = vmatmul.mubr.f32.gmra.mrb[0].mxu0 %v228
      %v578 = vpop.f32.mrb[0].mxu0
      %v579 = vadd.f32 %v469, %v578
      %v580 = vpop.f32.mrb[0].mxu0
      %581 = vmatprep.mubr.f32.mxu0 %v236
      %582 = vmatmul.mubr.f32.gmra.mrb[0].mxu0 %v235
      %v583 = vpop.f32.mrb[0].mxu0
      %v584 = vadd.f32 %v474, %v583
      %v585 = vpop.f32.mrb[0].mxu0
      %586 = vmatprep.mubr.f32.mxu0 %v243
      %587 = vmatmul.mubr.f32.gmra.mrb[0].mxu0 %v242
      %v588 = vpop.f32.mrb[0].mxu0
      %v589 = vadd.f32 %v479, %v588
      %v590 = vpop.f32.mrb[0].mxu0
      %591 = vmatprep.mubr.f32.mxu0 %v250
      %592 = vmatmul.mubr.f32.gmra.mrb[0].mxu0 %v249
      %v593 = vpop.f32.mrb[0].mxu0
      %v594 = vadd.f32 %v484, %v593
      %v595 = vpop.f32.mrb[0].mxu0
      %596 = vmatprep.mubr.f32.mxu0 %v257
      %597 = vmatmul.mubr.f32.gmra.mrb[0].mxu0 %v256
      %v598 = vpop.f32.mrb[0].mxu0
      %v599 = vadd.f32 %v489, %v598
      %v600 = vpop.f32.mrb[0].mxu0
      %601 = vmatprep.mubr.f32.mxu0 %v264
      %602 = vmatmul.mubr.f32.gmra.mrb[0].mxu0 %v263
      %v603 = vpop.f32.mrb[0].mxu0
      %v604 = vadd.f32 %v494, %v603
      %v605 = vpop.f32.mrb[0].mxu0
      %606 = vdwg.mxu0
      %607 = vmatprep.subr.mxu0 0.0
      %608 = vmatpush1.msra.mxu0 %v332
      %609 = vmatprep.subr.mxu0 0.0
      %610 = vmatpush1.msra.mxu0 %v333
      %611 = vmatprep.subr.mxu0 0.0
      %612 = vmatpush1.msra.mxu0 %v334
      %613 = vmatprep.subr.mxu0 0.0
      %614 = vmatpush1.msra.mxu0 %v335
      %615 = vmatprep.subr.mxu0 0.0
      %616 = vmatpush1.msra.mxu0 %v336
      %617 = vmatprep.subr.mxu0 0.0
      %618 = vmatpush1.msra.mxu0 %v337
      %619 = vmatprep.subr.mxu0 0.0
      %620 = vmatpush1.msra.mxu0 %v338
      %621 = vmatprep.subr.mxu0 0.0
      %622 = vmatpush1.msra.mxu0 %v339
      %623 = vmatprep.subr.mxu0 0.0
      %624 = vmatpush1.msra.mxu0 %v340
      %625 = vmatprep.subr.mxu0 0.0
      %626 = vmatpush1.msra.mxu0 %v341
      %627 = vmatprep.subr.mxu0 0.0
      %628 = vmatpush1.msra.mxu0 %v342
      %629 = vmatprep.subr.mxu0 0.0
      %630 = vmatpush1.msra.mxu0 %v343
      %631 = vmatprep.subr.mxu0 0.0
      %632 = vmatpush1.msra.mxu0 %v344
      %633 = vmatprep.subr.mxu0 0.0
      %634 = vmatpush1.msra.mxu0 %v345
      %635 = vmatprep.subr.mxu0 0.0
      %636 = vmatpush1.msra.mxu0 %v346
      %637 = vmatprep.subr.mxu0 0.0
      %638 = vmatpush1.msra.mxu0 %v347
      %639 = vmatprep.subr.mxu0 0.0
      %640 = vmatpush1.msra.mxu0 %v348
      %641 = vmatprep.subr.mxu0 0.0
      %642 = vmatpush1.msra.mxu0 %v349
      %643 = vmatprep.subr.mxu0 0.0
      %644 = vmatpush1.msra.mxu0 %v350
      %645 = vmatprep.subr.mxu0 0.0
      %646 = vmatpush1.msra.mxu0 %v351
      %647 = vmatprep.subr.mxu0 0.0
      %648 = vmatpush1.msra.mxu0 %v352
      %649 = vmatprep.subr.mxu0 0.0
      %650 = vmatpush1.msra.mxu0 %v353
      %651 = vmatprep.subr.mxu0 0.0
      %652 = vmatpush1.msra.mxu0 %v354
      %653 = vmatprep.subr.mxu0 0.0
      %654 = vmatpush1.msra.mxu0 %v355
      %655 = vmatprep.subr.mxu0 0.0
      %656 = vmatpush1.msra.mxu0 %v356
      %657 = vmatprep.subr.mxu0 0.0
      %658 = vmatpush1.msra.mxu0 %v357
      %659 = vmatprep.subr.mxu0 0.0
      %660 = vmatpush1.msra.mxu0 %v358
      %661 = vmatprep.subr.mxu0 0.0
      %662 = vmatpush1.msra.mxu0 %v359
      %663 = vmatprep.subr.mxu0 0.0
      %664 = vmatpush1.msra.mxu0 %v360
      %665 = vmatprep.subr.mxu0 0.0
      %666 = vmatpush1.msra.mxu0 %v361
      %667 = vmatprep.subr.mxu0 0.0
      %668 = vmatpush1.msra.mxu0 %v362
      %669 = vmatprep.subr.mxu0 0.0
      %670 = vmatpush1.msra.mxu0 %v363
      %671 = vmatprep.mubr.f32.mxu0 %v210
      %672 = vmatmul.mubr.f32.gmra.mrb[0].mxu0 %v209
      %v673 = vpop.f32.mrb[0].mxu0
      %v674 = vadd.f32 %v564, %v673
      %v675 = vpop.f32.mrb[0].mxu0
      %676 = vmatprep.mubr.f32.mxu0 %v217
      %677 = vmatmul.mubr.f32.gmra.mrb[0].mxu0 %v216
      %v678 = vpop.f32.mrb[0].mxu0
      %v679 = vadd.f32 %v569, %v678
      %v680 = vpop.f32.mrb[0].mxu0
      %681 = vmatprep.mubr.f32.mxu0 %v224
      %682 = vmatmul.mubr.f32.gmra.mrb[0].mxu0 %v223
      %v683 = vpop.f32.mrb[0].mxu0
      %v684 = vadd.f32 %v574, %v683
      %v685 = vpop.f32.mrb[0].mxu0
      %686 = vmatprep.mubr.f32.mxu0 %v231
      %687 = vmatmul.mubr.f32.gmra.mrb[0].mxu0 %v230
      %v688 = vpop.f32.mrb[0].mxu0
      %v689 = vadd.f32 %v579, %v688
      %v690 = vpop.f32.mrb[0].mxu0
      %691 = vmatprep.mubr.f32.mxu0 %v238
      %692 = vmatmul.mubr.f32.gmra.mrb[0].mxu0 %v237
      %v693 = vpop.f32.mrb[0].mxu0
      %v694 = vadd.f32 %v584, %v693
      %v695 = vpop.f32.mrb[0].mxu0
      %696 = vmatprep.mubr.f32.mxu0 %v245
      %697 = vmatmul.mubr.f32.gmra.mrb[0].mxu0 %v244
      %v698 = vpop.f32.mrb[0].mxu0
      %v699 = vadd.f32 %v589, %v698
      %v700 = vpop.f32.mrb[0].mxu0
      %701 = vmatprep.mubr.f32.mxu0 %v252
      %702 = vmatmul.mubr.f32.gmra.mrb[0].mxu0 %v251
      %v703 = vpop.f32.mrb[0].mxu0
      %v704 = vadd.f32 %v594, %v703
      %v705 = vpop.f32.mrb[0].mxu0
      %706 = vmatprep.mubr.f32.mxu0 %v259
      %707 = vmatmul.mubr.f32.gmra.mrb[0].mxu0 %v258
      %v708 = vpop.f32.mrb[0].mxu0
      %v709 = vadd.f32 %v599, %v708
      %v710 = vpop.f32.mrb[0].mxu0
      %711 = vmatprep.mubr.f32.mxu0 %v266
      %712 = vmatmul.mubr.f32.gmra.mrb[0].mxu0 %v265
      %v713 = vpop.f32.mrb[0].mxu0
      %v714 = vadd.f32 %v604, %v713
      %v715 = vpop.f32.mrb[0].mxu0
      %716 = vdwg.mxu0
      %717 = vmatprep.subr.mxu0 0.0
      %718 = vmatpush1.msra.mxu0 %v364
      %719 = vmatprep.subr.mxu0 0.0
      %720 = vmatpush1.msra.mxu0 %v365
      %721 = vmatprep.subr.mxu0 0.0
      %722 = vmatpush1.msra.mxu0 %v366
      %723 = vmatprep.subr.mxu0 0.0
      %724 = vmatpush1.msra.mxu0 %v367
      %725 = vmatprep.subr.mxu0 0.0
      %726 = vmatpush1.msra.mxu0 %v368
      %727 = vmatprep.subr.mxu0 0.0
      %728 = vmatpush1.msra.mxu0 %v369
      %729 = vmatprep.subr.mxu0 0.0
      %730 = vmatpush1.msra.mxu0 %v370
      %731 = vmatprep.subr.mxu0 0.0
      %732 = vmatpush1.msra.mxu0 %v371
      %733 = vmatprep.subr.mxu0 0.0
      %734 = vmatpush1.msra.mxu0 %v372
      %735 = vmatprep.subr.mxu0 0.0
      %736 = vmatpush1.msra.mxu0 %v373
      %737 = vmatprep.subr.mxu0 0.0
      %738 = vmatpush1.msra.mxu0 %v374
      %739 = vmatprep.subr.mxu0 0.0
      %740 = vmatpush1.msra.mxu0 %v375
      %741 = vmatprep.subr.mxu0 0.0
      %742 = vmatpush1.msra.mxu0 %v376
      %743 = vmatprep.subr.mxu0 0.0
      %744 = vmatpush1.msra.mxu0 %v377
      %745 = vmatprep.subr.mxu0 0.0
      %746 = vmatpush1.msra.mxu0 %v378
      %747 = vmatprep.subr.mxu0 0.0
      %748 = vmatpush1.msra.mxu0 %v379
      %749 = vmatprep.subr.mxu0 0.0
      %750 = vmatpush1.msra.mxu0 0.0
      %751 = vmatprep.subr.mxu0 0.0
      %752 = vmatpush1.msra.mxu0 0.0
      %753 = vmatprep.subr.mxu0 0.0
      %754 = vmatpush1.msra.mxu0 0.0
      %755 = vmatprep.subr.mxu0 0.0
      %756 = vmatpush1.msra.mxu0 0.0
      %757 = vmatprep.subr.mxu0 0.0
      %758 = vmatpush1.msra.mxu0 0.0
      %759 = vmatprep.subr.mxu0 0.0
      %760 = vmatpush1.msra.mxu0 0.0
      %761 = vmatprep.subr.mxu0 0.0
      %762 = vmatpush1.msra.mxu0 0.0
      %763 = vmatprep.subr.mxu0 0.0
      %764 = vmatpush1.msra.mxu0 0.0
      %765 = vmatprep.subr.mxu0 0.0
      %766 = vmatpush1.msra.mxu0 0.0
      %767 = vmatprep.subr.mxu0 0.0
      %768 = vmatpush1.msra.mxu0 0.0
      %769 = vmatprep.subr.mxu0 0.0
      %770 = vmatpush1.msra.mxu0 0.0
      %771 = vmatprep.subr.mxu0 0.0
      %772 = vmatpush1.msra.mxu0 0.0
      %773 = vmatprep.subr.mxu0 0.0
      %774 = vmatpush1.msra.mxu0 0.0
      %775 = vmatprep.subr.mxu0 0.0
      %776 = vmatpush1.msra.mxu0 0.0
      %777 = vmatprep.subr.mxu0 0.0
      %778 = vmatpush1.msra.mxu0 0.0
      %779 = vmatprep.subr.mxu0 0.0
      %780 = vmatpush1.msra.mxu0 0.0
      %781 = vmatprep.mubr.f32.mxu0 0.0
      %782 = vmatmul.mubr.f32.gmra.mrb[0].mxu0 %v211
      %v783 = vpop.f32.mrb[0].mxu0
      %v784 = vadd.f32 %v674, %v783
      %v785 = vpop.f32.mrb[0].mxu0
      %786 = vmatprep.mubr.f32.mxu0 0.0
      %787 = vmatmul.mubr.f32.gmra.mrb[0].mxu0 %v218
      %v788 = vpop.f32.mrb[0].mxu0
      %v789 = vadd.f32 %v679, %v788
      %v790 = vpop.f32.mrb[0].mxu0
      %791 = vmatprep.mubr.f32.mxu0 0.0
      %792 = vmatmul.mubr.f32.gmra.mrb[0].mxu0 %v225
      %v793 = vpop.f32.mrb[0].mxu0
      %v794 = vadd.f32 %v684, %v793
      %v795 = vpop.f32.mrb[0].mxu0
      %796 = vmatprep.mubr.f32.mxu0 0.0
      %797 = vmatmul.mubr.f32.gmra.mrb[0].mxu0 %v232
      %v798 = vpop.f32.mrb[0].mxu0
      %v799 = vadd.f32 %v689, %v798
      %v800 = vpop.f32.mrb[0].mxu0
      %801 = vmatprep.mubr.f32.mxu0 0.0
      %802 = vmatmul.mubr.f32.gmra.mrb[0].mxu0 %v239
      %v803 = vpop.f32.mrb[0].mxu0
      %v804 = vadd.f32 %v694, %v803
      %v805 = vpop.f32.mrb[0].mxu0
      %806 = vmatprep.mubr.f32.mxu0 0.0
      %807 = vmatmul.mubr.f32.gmra.mrb[0].mxu0 %v246
      %v808 = vpop.f32.mrb[0].mxu0
      %v809 = vadd.f32 %v699, %v808
      %v810 = vpop.f32.mrb[0].mxu0
      %811 = vmatprep.mubr.f32.mxu0 0.0
      %812 = vmatmul.mubr.f32.gmra.mrb[0].mxu0 %v253
      %v813 = vpop.f32.mrb[0].mxu0
      %v814 = vadd.f32 %v704, %v813
      %v815 = vpop.f32.mrb[0].mxu0
      %816 = vmatprep.mubr.f32.mxu0 0.0
      %817 = vmatmul.mubr.f32.gmra.mrb[0].mxu0 %v260
      %v818 = vpop.f32.mrb[0].mxu0
      %v819 = vadd.f32 %v709, %v818
      %v820 = vpop.f32.mrb[0].mxu0
      %821 = vmatprep.mubr.f32.mxu0 0.0
      %822 = vmatmul.mubr.f32.gmra.mrb[0].mxu0 %v267
      %v823 = vpop.f32.mrb[0].mxu0
      %v824 = vadd.f32 %v714, %v823
      %v825 = vpop.f32.mrb[0].mxu0
      %826 = vdwg.mxu0
      %v827 = vmax.f32 %v784, 0.0
      %v828 = vmax.f32 %v789, 0.0
      %v829 = vmax.f32 %v794, 0.0
      %v830 = vmax.f32 %v799, 0.0
      %v831 = vmax.f32 %v804, 0.0
      %v832 = vmax.f32 %v809, 0.0
      %v833 = vmax.f32 %v814, 0.0
      %v834 = vmax.f32 %v819, 0.0
      %v835 = vmax.f32 %v824, 0.0
      %vm836 = vcmask 523264
      %837 = vst.msk [vmem:[%s204] sm:$0xff] %vm836, %v827
      %838 = vst.msk [vmem:[%s204 + $0x8] sm:$0xff] %vm836, %v828
      %839 = vst.msk [vmem:[%s204 + $0x10] sm:$0xff] %vm836, %v829
      %840 = vst.msk [vmem:[%s204 + $0x18] sm:$0xff] %vm836, %v830
      %841 = vst.msk [vmem:[%s204 + $0x20] sm:$0xff] %vm836, %v831
      %842 = vst.msk [vmem:[%s204 + $0x28] sm:$0xff] %vm836, %v832
      %843 = vst.msk [vmem:[%s204 + $0x30] sm:$0xff] %vm836, %v833
      %844 = vst.msk [vmem:[%s204 + $0x38] sm:$0xff] %vm836, %v834
      %845 = vst.msk [vmem:[%s204 + $0x40] sm:$0xff] %vm836, %v835
      %p846 = scmp.lt.s32.totalorder %s14, 2
      %s847 = scalar_select %p846, %s14, 2
      %s848 = smul.addr %s847, 9
      %s849 = smul.addr %s848, 8
      %s850 = scalar_lea.vmem %s3, %s849
      // Predicated region
      $region33: #{forward.12} parent=31 // pred_check
        %p851 = pneg %p110
      $region34: #{forward.12} parent=31 // pred_check_branch
        %853 = sbr.rel (%p851) target = $region36
      $region35: #{forward.12} parent=31 // pred_region
        _
      $region36: #{forward.12} parent=31 // pred_fallthru
        _
    $region32: #{forward.12} parent=5 // pred_fallthru
      _
    %p854 = scmp.le.s32.totalorder 2, %s9
    // Predicated region
    $region37: #{forward.12} parent=5 // pred_check
      %p855 = pneg %p854
    $region38: #{forward.12} parent=5 // pred_check_branch
      %857 = sbr.rel (%p855) target = $region40
    $region39: #{forward.12} parent=5 // pred_region
      %s858 = ssub.s32 %s9, 2
      // Predicated region
      $region41: #{forward.12} parent=39 // pred_check
        %p859 = pneg %p116
      $region42: #{forward.12} parent=39 // pred_check_branch
        %861 = sbr.rel (%p859) target = $region44
      $region43: #{forward.12} parent=39 // pred_region
        %p862 = scmp.lt.s32.totalorder %s15, 2
        %s863 = scalar_select %p862, %s15, 2
        %s864 = smul.addr %s863, 9
        %s865 = smul.addr %s864, 8
        %s866 = scalar_lea.vmem %s3, %s865
      $region44: #{forward.12} parent=39 // pred_fallthru
        _
    $region40: #{forward.12} parent=5 // pred_fallthru
      _
  $region6: #{forward.12} parent=0 // loop_footer
    %s13 = sadd.s32 1, %s9
  $region7: #{forward.12} parent=0 // loop_footer_branch
    %8 = sbr.rel target = $region3
  $region8: #{forward.12} parent=0 // loop_exit
    _

// kernel: squeeze.5
$region0: #{squeeze.5}
  %s0 = inlined_call_operand.vmem [shape: f32[1,72,64], index: 0, kind: input, shape index: {}]
  %s1 = inlined_call_operand.vmem [shape: f32[2,6,6,64], index: 1, kind: output, shape index: {}]
  %v2 = vld [vmem:[%s0] sm:$0xff]
  %vm3 = vcmask 523264
  %4 = vst.msk [vmem:[%s1] sm:$0x3f] %vm3, %v2
  %s5 = scalar_lea.vmem %s1, 2
  %6 = vst.msk [vmem:[%s5] sm:$0xc0] %vm3, %v2
  %s7 = scalar_lea.vmem %s0, 8
  %v8 = vld [vmem:[%s7] sm:$0xff]
  %vm9 = vcmask 523264
  %s10 = scalar_lea.vmem %s1, 10
  %11 = vst.msk [vmem:[%s10] sm:$0xf] %vm9, %v8
  %s12 = scalar_lea.vmem %s1, 12
  %13 = vst.msk [vmem:[%s12] sm:$0xf0] %vm9, %v8
  %s14 = scalar_lea.vmem %s0, 16
  %v15 = vld [vmem:[%s14] sm:$0xff]
  %vm16 = vcmask 523264
  %s17 = scalar_lea.vmem %s1, 20
  %18 = vst.msk [vmem:[%s17] sm:$0x3] %vm16, %v15
  %s19 = scalar_lea.vmem %s1, 22
  %20 = vst.msk [vmem:[%s19] sm:$0xfc] %vm16, %v15
  %s21 = scalar_lea.vmem %s0, 24
  %v22 = vld [vmem:[%s21] sm:$0xff]
  %vm23 = vcmask 523264
  %s24 = scalar_lea.vmem %s1, 32
  %25 = vst.msk [vmem:[%s24] sm:$0x3f] %vm23, %v22
  %s26 = scalar_lea.vmem %s1, 34
  %27 = vst.msk [vmem:[%s26] sm:$0xc0] %vm23, %v22
  %s28 = scalar_lea.vmem %s0, 32
  %v29 = vld [vmem:[%s28] sm:$0xff]
  %vm30 = vcmask 523264
  %s31 = scalar_lea.vmem %s1, 42
  %32 = vst.msk [vmem:[%s31] sm:$0xf] %vm30, %v29
  %s33 = scalar_lea.vmem %s1, 44
  %34 = vst.msk [vmem:[%s33] sm:$0xf0] %vm30, %v29
  %s35 = scalar_lea.vmem %s0, 40
  %v36 = vld [vmem:[%s35] sm:$0xff]
  %vm37 = vcmask 523264
  %s38 = scalar_lea.vmem %s1, 52
  %39 = vst.msk [vmem:[%s38] sm:$0x3] %vm37, %v36
  %s40 = scalar_lea.vmem %s1, 54
  %41 = vst.msk [vmem:[%s40] sm:$0xfc] %vm37, %v36
  %s42 = scalar_lea.vmem %s0, 48
  %v43 = vld [vmem:[%s42] sm:$0xff]
  %vm44 = vcmask 523264
  %s45 = scalar_lea.vmem %s1, 64
  %46 = vst.msk [vmem:[%s45] sm:$0x3f] %vm44, %v43
  %s47 = scalar_lea.vmem %s1, 66
  %48 = vst.msk [vmem:[%s47] sm:$0xc0] %vm44, %v43
  %s49 = scalar_lea.vmem %s0, 56
  %v50 = vld [vmem:[%s49] sm:$0xff]
  %vm51 = vcmask 523264
  %s52 = scalar_lea.vmem %s1, 74
  %53 = vst.msk [vmem:[%s52] sm:$0xf] %vm51, %v50
  %s54 = scalar_lea.vmem %s1, 76
  %55 = vst.msk [vmem:[%s54] sm:$0xf0] %vm51, %v50
  %s56 = scalar_lea.vmem %s0, 64
  %v57 = vld [vmem:[%s56] sm:$0xff]
  %vm58 = vcmask 523264
  %s59 = scalar_lea.vmem %s1, 84
  %60 = vst.msk [vmem:[%s59] sm:$0x3] %vm58, %v57
  %s61 = scalar_lea.vmem %s1, 86
  %62 = vst.msk [vmem:[%s61] sm:$0xfc] %vm58, %v57

// kernel: forward.13
$region0: #{forward.13}
  #allocation0 [shape = 'u32[]', space=smem, size = 0x4, offset = 0x4, fixed_abs, tag = 'smem constant byte address 0x4 - core index']
  #allocation1 [shape = 'u32[144,128]{1,0:T(1,128)}', space=vmem, size = 0x12000, scoped, tag = 'internal scratch']
  %s0 = inlined_call_operand.vmem [shape: f32[1,32,1792], index: 0, kind: input, shape index: {}]
  %s1 = inlined_call_operand.vmem [shape: f32[1,1792,32], index: 1, kind: input, shape index: {}]
  %s2 = inlined_call_operand.vmem [shape: f32[1,1,32], index: 2, kind: input, shape index: {}]
  %s3 = inlined_call_operand.vmem [shape: f32[1,32,32], index: 3, kind: output, shape index: {}]
  %s4 = sld [smem:[#allocation0]]
  $region22: #{forward.13} parent=0
    _
  %s6 = ssub.s32 1, %s4
  %s7 = scalar_select 0, %s6, %s4
  // Predicated region
  $region2: #{forward.13} parent=0 // pred_check
    _
  $region3: #{forward.13} parent=0 // pred_check_branch
    %9 = sbr.rel (0) target = $region5
  $region4: #{forward.13} parent=0 // pred_region
    _
  $region5: #{forward.13} parent=0 // pred_fallthru
    _
  // Predicated region
  $region6: #{forward.13} parent=0 // pred_check
    _
  $region7: #{forward.13} parent=0 // pred_check_branch
    %11 = sbr.rel (0) target = $region9
  $region8: #{forward.13} parent=0 // pred_region
    _
  $region9: #{forward.13} parent=0 // pred_fallthru
    _
  // Predicated region
  $region10: #{forward.13} parent=0 // pred_check
    _
  $region11: #{forward.13} parent=0 // pred_check_branch
    %13 = sbr.rel (0) target = $region13
  $region12: #{forward.13} parent=0 // pred_region
    _
  $region13: #{forward.13} parent=0 // pred_fallthru
    _
  %v14 = vld [vmem:[%s0] sm:$0xff]
  %v15 = vld [vmem:[%s0 + $0x8] sm:$0xff]
  %v16 = vld [vmem:[%s0 + $0x10] sm:$0xff]
  %v17 = vld [vmem:[%s0 + $0x18] sm:$0xff]
  %v18 = vld [vmem:[%s0 + $0x20] sm:$0xff]
  %v19 = vld [vmem:[%s0 + $0x28] sm:$0xff]
  %v20 = vld [vmem:[%s0 + $0x30] sm:$0xff]
  %v21 = vld [vmem:[%s0 + $0x38] sm:$0xff]
  %v22 = vld [vmem:[%s0 + $0x40] sm:$0xff]
  %v23 = vld [vmem:[%s0 + $0x48] sm:$0xff]
  %v24 = vld [vmem:[%s0 + $0x50] sm:$0xff]
  %v25 = vld [vmem:[%s0 + $0x58] sm:$0xff]
  %v26 = vld [vmem:[%s0 + $0x60] sm:$0xff]
  %v27 = vld [vmem:[%s0 + $0x68] sm:$0xff]
  %v28 = vld [vmem:[%s0 + $0x70] sm:$0xff]
  %v29 = vld [vmem:[%s0 + $0x78] sm:$0xff]
  %v30 = vld [vmem:[%s0 + $0x80] sm:$0xff]
  %v31 = vld [vmem:[%s0 + $0x88] sm:$0xff]
  %v32 = vld [vmem:[%s0 + $0x90] sm:$0xff]
  %v33 = vld [vmem:[%s0 + $0x98] sm:$0xff]
  %v34 = vld [vmem:[%s0 + $0xa0] sm:$0xff]
  %v35 = vld [vmem:[%s0 + $0xa8] sm:$0xff]
  %v36 = vld [vmem:[%s0 + $0xb0] sm:$0xff]
  %v37 = vld [vmem:[%s0 + $0xb8] sm:$0xff]
  %v38 = vld [vmem:[%s0 + $0xc0] sm:$0xff]
  %v39 = vld [vmem:[%s0 + $0xc8] sm:$0xff]
  %v40 = vld [vmem:[%s0 + $0xd0] sm:$0xff]
  %v41 = vld [vmem:[%s0 + $0xd8] sm:$0xff]
  %v42 = vld [vmem:[%s0 + $0xe0] sm:$0xff]
  %v43 = vld [vmem:[%s0 + $0xe8] sm:$0xff]
  %v44 = vld [vmem:[%s0 + $0xf0] sm:$0xff]
  %v45 = vld [vmem:[%s0 + $0xf8] sm:$0xff]
  %v46 = vld [vmem:[%s0 + $0x100] sm:$0xff]
  %v47 = vld [vmem:[%s0 + $0x108] sm:$0xff]
  %v48 = vld [vmem:[%s0 + $0x110] sm:$0xff]
  %v49 = vld [vmem:[%s0 + $0x118] sm:$0xff]
  %v50 = vld [vmem:[%s0 + $0x120] sm:$0xff]
  %v51 = vld [vmem:[%s0 + $0x128] sm:$0xff]
  %v52 = vld [vmem:[%s0 + $0x130] sm:$0xff]
  %v53 = vld [vmem:[%s0 + $0x138] sm:$0xff]
  %v54 = vld [vmem:[%s0 + $0x140] sm:$0xff]
  %v55 = vld [vmem:[%s0 + $0x148] sm:$0xff]
  %v56 = vld [vmem:[%s0 + $0x150] sm:$0xff]
  %v57 = vld [vmem:[%s0 + $0x158] sm:$0xff]
  %v58 = vld [vmem:[%s0 + $0x160] sm:$0xff]
  %v59 = vld [vmem:[%s0 + $0x168] sm:$0xff]
  %v60 = vld [vmem:[%s0 + $0x170] sm:$0xff]
  %v61 = vld [vmem:[%s0 + $0x178] sm:$0xff]
  %v62 = vld [vmem:[%s0 + $0x180] sm:$0xff]
  %v63 = vld [vmem:[%s0 + $0x188] sm:$0xff]
  %v64 = vld [vmem:[%s0 + $0x190] sm:$0xff]
  %v65 = vld [vmem:[%s0 + $0x198] sm:$0xff]
  %v66 = vld [vmem:[%s0 + $0x1a0] sm:$0xff]
  %v67 = vld [vmem:[%s0 + $0x1a8] sm:$0xff]
  %v68 = vld [vmem:[%s0 + $0x1b0] sm:$0xff]
  %v69 = vld [vmem:[%s0 + $0x1b8] sm:$0xff]
  %v70 = vld [vmem:[%s1] sm:$0xff]
  %v71 = vld [vmem:[%s1 + $0x8] sm:$0xff]
  %v72 = vld [vmem:[%s1 + $0x10] sm:$0xff]
  %v73 = vld [vmem:[%s1 + $0x18] sm:$0xff]
  %v74 = vld [vmem:[%s1 + $0x20] sm:$0xff]
  %v75 = vld [vmem:[%s1 + $0x28] sm:$0xff]
  %v76 = vld [vmem:[%s1 + $0x30] sm:$0xff]
  %v77 = vld [vmem:[%s1 + $0x38] sm:$0xff]
  %v78 = vld [vmem:[%s1 + $0x40] sm:$0xff]
  %v79 = vld [vmem:[%s1 + $0x48] sm:$0xff]
  %v80 = vld [vmem:[%s1 + $0x50] sm:$0xff]
  %v81 = vld [vmem:[%s1 + $0x58] sm:$0xff]
  %v82 = vld [vmem:[%s1 + $0x60] sm:$0xff]
  %v83 = vld [vmem:[%s1 + $0x68] sm:$0xff]
  %v84 = vld [vmem:[%s1 + $0x70] sm:$0xff]
  %v85 = vld [vmem:[%s1 + $0x78] sm:$0xff]
  %v86 = vld [vmem:[%s1 + $0x80] sm:$0xff]
  %v87 = vld [vmem:[%s1 + $0x88] sm:$0xff]
  %v88 = vld [vmem:[%s1 + $0x90] sm:$0xff]
  %v89 = vld [vmem:[%s1 + $0x98] sm:$0xff]
  %v90 = vld [vmem:[%s1 + $0xa0] sm:$0xff]
  %v91 = vld [vmem:[%s1 + $0xa8] sm:$0xff]
  %v92 = vld [vmem:[%s1 + $0xb0] sm:$0xff]
  %v93 = vld [vmem:[%s1 + $0xb8] sm:$0xff]
  %v94 = vld [vmem:[%s1 + $0xc0] sm:$0xff]
  %v95 = vld [vmem:[%s1 + $0xc8] sm:$0xff]
  %v96 = vld [vmem:[%s1 + $0xd0] sm:$0xff]
  %v97 = vld [vmem:[%s1 + $0xd8] sm:$0xff]
  %v98 = vld [vmem:[%s1 + $0xe0] sm:$0xff]
  %v99 = vld [vmem:[%s1 + $0xe8] sm:$0xff]
  %v100 = vld [vmem:[%s1 + $0xf0] sm:$0xff]
  %v101 = vld [vmem:[%s1 + $0xf8] sm:$0xff]
  %v102 = vld [vmem:[%s1 + $0x100] sm:$0xff]
  %v103 = vld [vmem:[%s1 + $0x108] sm:$0xff]
  %v104 = vld [vmem:[%s1 + $0x110] sm:$0xff]
  %v105 = vld [vmem:[%s1 + $0x118] sm:$0xff]
  %v106 = vld [vmem:[%s1 + $0x120] sm:$0xff]
  %v107 = vld [vmem:[%s1 + $0x128] sm:$0xff]
  %v108 = vld [vmem:[%s1 + $0x130] sm:$0xff]
  %v109 = vld [vmem:[%s1 + $0x138] sm:$0xff]
  %v110 = vld [vmem:[%s1 + $0x140] sm:$0xff]
  %v111 = vld [vmem:[%s1 + $0x148] sm:$0xff]
  %v112 = vld [vmem:[%s1 + $0x150] sm:$0xff]
  %v113 = vld [vmem:[%s1 + $0x158] sm:$0xff]
  %v114 = vld [vmem:[%s1 + $0x160] sm:$0xff]
  %v115 = vld [vmem:[%s1 + $0x168] sm:$0xff]
  %v116 = vld [vmem:[%s1 + $0x170] sm:$0xff]
  %v117 = vld [vmem:[%s1 + $0x178] sm:$0xff]
  %v118 = vld [vmem:[%s1 + $0x180] sm:$0xff]
  %v119 = vld [vmem:[%s1 + $0x188] sm:$0xff]
  %v120 = vld [vmem:[%s1 + $0x190] sm:$0xff]
  %v121 = vld [vmem:[%s1 + $0x198] sm:$0xff]
  %v122 = vld [vmem:[%s1 + $0x1a0] sm:$0xff]
  %v123 = vld [vmem:[%s1 + $0x1a8] sm:$0xff]
  %v124 = vld [vmem:[%s1 + $0x1b0] sm:$0xff]
  %v125 = vld [vmem:[%s1 + $0x1b8] sm:$0xff]
  %v126 = vld [vmem:[%s1 + $0x1c0] sm:$0xff]
  %v127 = vld [vmem:[%s1 + $0x1c8] sm:$0xff]
  %v128 = vld [vmem:[%s1 + $0x1d0] sm:$0xff]
  %v129 = vld [vmem:[%s1 + $0x1d8] sm:$0xff]
  %v130 = vld [vmem:[%s1 + $0x1e0] sm:$0xff]
  %v131 = vld [vmem:[%s1 + $0x1e8] sm:$0xff]
  %v132 = vld [vmem:[%s1 + $0x1f0] sm:$0xff]
  %v133 = vld [vmem:[%s1 + $0x1f8] sm:$0xff]
  %v134 = vld [vmem:[%s1 + $0x200] sm:$0xff]
  %v135 = vld [vmem:[%s1 + $0x208] sm:$0xff]
  %v136 = vld [vmem:[%s1 + $0x210] sm:$0xff]
  %v137 = vld [vmem:[%s1 + $0x218] sm:$0xff]
  %v138 = vld [vmem:[%s1 + $0x220] sm:$0xff]
  %v139 = vld [vmem:[%s1 + $0x228] sm:$0xff]
  %v140 = vld [vmem:[%s1 + $0x230] sm:$0xff]
  %v141 = vld [vmem:[%s1 + $0x238] sm:$0xff]
  %v142 = vld [vmem:[%s1 + $0x240] sm:$0xff]
  %v143 = vld [vmem:[%s1 + $0x248] sm:$0xff]
  %v144 = vld [vmem:[%s1 + $0x250] sm:$0xff]
  %v145 = vld [vmem:[%s1 + $0x258] sm:$0xff]
  %v146 = vld [vmem:[%s1 + $0x260] sm:$0xff]
  %v147 = vld [vmem:[%s1 + $0x268] sm:$0xff]
  %v148 = vld [vmem:[%s1 + $0x270] sm:$0xff]
  %v149 = vld [vmem:[%s1 + $0x278] sm:$0xff]
  %v150 = vld [vmem:[%s1 + $0x280] sm:$0xff]
  %v151 = vld [vmem:[%s1 + $0x288] sm:$0xff]
  %v152 = vld [vmem:[%s1 + $0x290] sm:$0xff]
  %v153 = vld [vmem:[%s1 + $0x298] sm:$0xff]
  %v154 = vld [vmem:[%s1 + $0x2a0] sm:$0xff]
  %v155 = vld [vmem:[%s1 + $0x2a8] sm:$0xff]
  %v156 = vld [vmem:[%s1 + $0x2b0] sm:$0xff]
  %v157 = vld [vmem:[%s1 + $0x2b8] sm:$0xff]
  %v158 = vld [vmem:[%s1 + $0x2c0] sm:$0xff]
  %v159 = vld [vmem:[%s1 + $0x2c8] sm:$0xff]
  %v160 = vld [vmem:[%s1 + $0x2d0] sm:$0xff]
  %v161 = vld [vmem:[%s1 + $0x2d8] sm:$0xff]
  %v162 = vld [vmem:[%s1 + $0x2e0] sm:$0xff]
  %v163 = vld [vmem:[%s1 + $0x2e8] sm:$0xff]
  %v164 = vld [vmem:[%s1 + $0x2f0] sm:$0xff]
  %v165 = vld [vmem:[%s1 + $0x2f8] sm:$0xff]
  %v166 = vld [vmem:[%s1 + $0x300] sm:$0xff]
  %v167 = vld [vmem:[%s1 + $0x308] sm:$0xff]
  %v168 = vld [vmem:[%s1 + $0x310] sm:$0xff]
  %v169 = vld [vmem:[%s1 + $0x318] sm:$0xff]
  %v170 = vld [vmem:[%s1 + $0x320] sm:$0xff]
  %v171 = vld [vmem:[%s1 + $0x328] sm:$0xff]
  %v172 = vld [vmem:[%s1 + $0x330] sm:$0xff]
  %v173 = vld [vmem:[%s1 + $0x338] sm:$0xff]
  %v174 = vld [vmem:[%s1 + $0x340] sm:$0xff]
  %v175 = vld [vmem:[%s1 + $0x348] sm:$0xff]
  %v176 = vld [vmem:[%s1 + $0x350] sm:$0xff]
  %v177 = vld [vmem:[%s1 + $0x358] sm:$0xff]
  %v178 = vld [vmem:[%s1 + $0x360] sm:$0xff]
  %v179 = vld [vmem:[%s1 + $0x368] sm:$0xff]
  %v180 = vld [vmem:[%s1 + $0x370] sm:$0xff]
  %v181 = vld [vmem:[%s1 + $0x378] sm:$0xff]
  %v182 = vld [vmem:[%s1 + $0x380] sm:$0xff]
  %v183 = vld [vmem:[%s1 + $0x388] sm:$0xff]
  %v184 = vld [vmem:[%s1 + $0x390] sm:$0xff]
  %v185 = vld [vmem:[%s1 + $0x398] sm:$0xff]
  %v186 = vld [vmem:[%s1 + $0x3a0] sm:$0xff]
  %v187 = vld [vmem:[%s1 + $0x3a8] sm:$0xff]
  %v188 = vld [vmem:[%s1 + $0x3b0] sm:$0xff]
  %v189 = vld [vmem:[%s1 + $0x3b8] sm:$0xff]
  %v190 = vld [vmem:[%s1 + $0x3c0] sm:$0xff]
  %v191 = vld [vmem:[%s1 + $0x3c8] sm:$0xff]
  %v192 = vld [vmem:[%s1 + $0x3d0] sm:$0xff]
  %v193 = vld [vmem:[%s1 + $0x3d8] sm:$0xff]
  %v194 = vld [vmem:[%s1 + $0x3e0] sm:$0xff]
  %v195 = vld [vmem:[%s1 + $0x3e8] sm:$0xff]
  %v196 = vld [vmem:[%s1 + $0x3f0] sm:$0xff]
  %v197 = vld [vmem:[%s1 + $0x3f8] sm:$0xff]
  %v198 = vld [vmem:[%s1 + $0x400] sm:$0xff]
  %v199 = vld [vmem:[%s1 + $0x408] sm:$0xff]
  %v200 = vld [vmem:[%s1 + $0x410] sm:$0xff]
  %v201 = vld [vmem:[%s1 + $0x418] sm:$0xff]
  %v202 = vld [vmem:[%s1 + $0x420] sm:$0xff]
  %v203 = vld [vmem:[%s1 + $0x428] sm:$0xff]
  %v204 = vld [vmem:[%s1 + $0x430] sm:$0xff]
  %v205 = vld [vmem:[%s1 + $0x438] sm:$0xff]
  %v206 = vld [vmem:[%s1 + $0x440] sm:$0xff]
  %v207 = vld [vmem:[%s1 + $0x448] sm:$0xff]
  %v208 = vld [vmem:[%s1 + $0x450] sm:$0xff]
  %v209 = vld [vmem:[%s1 + $0x458] sm:$0xff]
  %v210 = vld [vmem:[%s1 + $0x460] sm:$0xff]
  %v211 = vld [vmem:[%s1 + $0x468] sm:$0xff]
  %v212 = vld [vmem:[%s1 + $0x470] sm:$0xff]
  %v213 = vld [vmem:[%s1 + $0x478] sm:$0xff]
  %v214 = vld [vmem:[%s1 + $0x480] sm:$0xff]
  %v215 = vld [vmem:[%s1 + $0x488] sm:$0xff]
  %v216 = vld [vmem:[%s1 + $0x490] sm:$0xff]
  %v217 = vld [vmem:[%s1 + $0x498] sm:$0xff]
  %v218 = vld [vmem:[%s1 + $0x4a0] sm:$0xff]
  %v219 = vld [vmem:[%s1 + $0x4a8] sm:$0xff]
  %v220 = vld [vmem:[%s1 + $0x4b0] sm:$0xff]
  %v221 = vld [vmem:[%s1 + $0x4b8] sm:$0xff]
  %v222 = vld [vmem:[%s1 + $0x4c0] sm:$0xff]
  %v223 = vld [vmem:[%s1 + $0x4c8] sm:$0xff]
  %v224 = vld [vmem:[%s1 + $0x4d0] sm:$0xff]
  %v225 = vld [vmem:[%s1 + $0x4d8] sm:$0xff]
  %v226 = vld [vmem:[%s1 + $0x4e0] sm:$0xff]
  %v227 = vld [vmem:[%s1 + $0x4e8] sm:$0xff]
  %v228 = vld [vmem:[%s1 + $0x4f0] sm:$0xff]
  %v229 = vld [vmem:[%s1 + $0x4f8] sm:$0xff]
  %v230 = vld [vmem:[%s1 + $0x500] sm:$0xff]
  %v231 = vld [vmem:[%s1 + $0x508] sm:$0xff]
  %v232 = vld [vmem:[%s1 + $0x510] sm:$0xff]
  %v233 = vld [vmem:[%s1 + $0x518] sm:$0xff]
  %v234 = vld [vmem:[%s1 + $0x520] sm:$0xff]
  %v235 = vld [vmem:[%s1 + $0x528] sm:$0xff]
  %v236 = vld [vmem:[%s1 + $0x530] sm:$0xff]
  %v237 = vld [vmem:[%s1 + $0x538] sm:$0xff]
  %v238 = vld [vmem:[%s1 + $0x540] sm:$0xff]
  %v239 = vld [vmem:[%s1 + $0x548] sm:$0xff]
  %v240 = vld [vmem:[%s1 + $0x550] sm:$0xff]
  %v241 = vld [vmem:[%s1 + $0x558] sm:$0xff]
  %v242 = vld [vmem:[%s1 + $0x560] sm:$0xff]
  %v243 = vld [vmem:[%s1 + $0x568] sm:$0xff]
  %v244 = vld [vmem:[%s1 + $0x570] sm:$0xff]
  %v245 = vld [vmem:[%s1 + $0x578] sm:$0xff]
  %v246 = vld [vmem:[%s1 + $0x580] sm:$0xff]
  %v247 = vld [vmem:[%s1 + $0x588] sm:$0xff]
  %v248 = vld [vmem:[%s1 + $0x590] sm:$0xff]
  %v249 = vld [vmem:[%s1 + $0x598] sm:$0xff]
  %v250 = vld [vmem:[%s1 + $0x5a0] sm:$0xff]
  %v251 = vld [vmem:[%s1 + $0x5a8] sm:$0xff]
  %v252 = vld [vmem:[%s1 + $0x5b0] sm:$0xff]
  %v253 = vld [vmem:[%s1 + $0x5b8] sm:$0xff]
  %v254 = vld [vmem:[%s1 + $0x5c0] sm:$0xff]
  %v255 = vld [vmem:[%s1 + $0x5c8] sm:$0xff]
  %v256 = vld [vmem:[%s1 + $0x5d0] sm:$0xff]
  %v257 = vld [vmem:[%s1 + $0x5d8] sm:$0xff]
  %v258 = vld [vmem:[%s1 + $0x5e0] sm:$0xff]
  %v259 = vld [vmem:[%s1 + $0x5e8] sm:$0xff]
  %v260 = vld [vmem:[%s1 + $0x5f0] sm:$0xff]
  %v261 = vld [vmem:[%s1 + $0x5f8] sm:$0xff]
  %v262 = vld [vmem:[%s1 + $0x600] sm:$0xff]
  %v263 = vld [vmem:[%s1 + $0x608] sm:$0xff]
  %v264 = vld [vmem:[%s1 + $0x610] sm:$0xff]
  %v265 = vld [vmem:[%s1 + $0x618] sm:$0xff]
  %v266 = vld [vmem:[%s1 + $0x620] sm:$0xff]
  %v267 = vld [vmem:[%s1 + $0x628] sm:$0xff]
  %v268 = vld [vmem:[%s1 + $0x630] sm:$0xff]
  %v269 = vld [vmem:[%s1 + $0x638] sm:$0xff]
  %v270 = vld [vmem:[%s1 + $0x640] sm:$0xff]
  %v271 = vld [vmem:[%s1 + $0x648] sm:$0xff]
  %v272 = vld [vmem:[%s1 + $0x650] sm:$0xff]
  %v273 = vld [vmem:[%s1 + $0x658] sm:$0xff]
  %v274 = vld [vmem:[%s1 + $0x660] sm:$0xff]
  %v275 = vld [vmem:[%s1 + $0x668] sm:$0xff]
  %v276 = vld [vmem:[%s1 + $0x670] sm:$0xff]
  %v277 = vld [vmem:[%s1 + $0x678] sm:$0xff]
  %v278 = vld [vmem:[%s1 + $0x680] sm:$0xff]
  %v279 = vld [vmem:[%s1 + $0x688] sm:$0xff]
  %v280 = vld [vmem:[%s1 + $0x690] sm:$0xff]
  %v281 = vld [vmem:[%s1 + $0x698] sm:$0xff]
  %v282 = vld [vmem:[%s1 + $0x6a0] sm:$0xff]
  %v283 = vld [vmem:[%s1 + $0x6a8] sm:$0xff]
  %v284 = vld [vmem:[%s1 + $0x6b0] sm:$0xff]
  %v285 = vld [vmem:[%s1 + $0x6b8] sm:$0xff]
  %v286 = vld [vmem:[%s1 + $0x6c0] sm:$0xff]
  %v287 = vld [vmem:[%s1 + $0x6c8] sm:$0xff]
  %v288 = vld [vmem:[%s1 + $0x6d0] sm:$0xff]
  %v289 = vld [vmem:[%s1 + $0x6d8] sm:$0xff]
  %v290 = vld [vmem:[%s1 + $0x6e0] sm:$0xff]
  %v291 = vld [vmem:[%s1 + $0x6e8] sm:$0xff]
  %v292 = vld [vmem:[%s1 + $0x6f0] sm:$0xff]
  %v293 = vld [vmem:[%s1 + $0x6f8] sm:$0xff]
  %v294 = vld [vmem:[%s2] sm:$0x1]
  %v296 = vlaneseq
  %v297 = vshrl.u32 %v296, 7
  %v298 = vsub.s32 0, %v297
  %v299 = vrot.slane %v294, %v298
  %301 = vmatprep.subr.mxu0 0.0
  %302 = vmatpush1.msra.mxu0 %v70
  %303 = vmatprep.subr.mxu0 0.0
  %304 = vmatpush1.msra.mxu0 %v71
  %305 = vmatprep.subr.mxu0 0.0
  %306 = vmatpush1.msra.mxu0 %v72
  %307 = vmatprep.subr.mxu0 0.0
  %308 = vmatpush1.msra.mxu0 %v73
  %309 = vmatprep.subr.mxu0 0.0
  %310 = vmatpush1.msra.mxu0 %v74
  %311 = vmatprep.subr.mxu0 0.0
  %312 = vmatpush1.msra.mxu0 %v75
  %313 = vmatprep.subr.mxu0 0.0
  %314 = vmatpush1.msra.mxu0 %v76
  %315 = vmatprep.subr.mxu0 0.0
  %316 = vmatpush1.msra.mxu0 %v77
  %317 = vmatprep.subr.mxu0 0.0
  %318 = vmatpush1.msra.mxu0 %v78
  %319 = vmatprep.subr.mxu0 0.0
  %320 = vmatpush1.msra.mxu0 %v79
  %321 = vmatprep.subr.mxu0 0.0
  %322 = vmatpush1.msra.mxu0 %v80
  %323 = vmatprep.subr.mxu0 0.0
  %324 = vmatpush1.msra.mxu0 %v81
  %325 = vmatprep.subr.mxu0 0.0
  %326 = vmatpush1.msra.mxu0 %v82
  %327 = vmatprep.subr.mxu0 0.0
  %328 = vmatpush1.msra.mxu0 %v83
  %329 = vmatprep.subr.mxu0 0.0
  %330 = vmatpush1.msra.mxu0 %v84
  %331 = vmatprep.subr.mxu0 0.0
  %332 = vmatpush1.msra.mxu0 %v85
  %333 = vmatprep.subr.mxu0 0.0
  %334 = vmatpush1.msra.mxu0 %v86
  %335 = vmatprep.subr.mxu0 0.0
  %336 = vmatpush1.msra.mxu0 %v87
  %337 = vmatprep.subr.mxu0 0.0
  %338 = vmatpush1.msra.mxu0 %v88
  %339 = vmatprep.subr.mxu0 0.0
  %340 = vmatpush1.msra.mxu0 %v89
  %341 = vmatprep.subr.mxu0 0.0
  %342 = vmatpush1.msra.mxu0 %v90
  %343 = vmatprep.subr.mxu0 0.0
  %344 = vmatpush1.msra.mxu0 %v91
  %345 = vmatprep.subr.mxu0 0.0
  %346 = vmatpush1.msra.mxu0 %v92
  %347 = vmatprep.subr.mxu0 0.0
  %348 = vmatpush1.msra.mxu0 %v93
  %349 = vmatprep.subr.mxu0 0.0
  %350 = vmatpush1.msra.mxu0 %v94
  %351 = vmatprep.subr.mxu0 0.0
  %352 = vmatpush1.msra.mxu0 %v95
  %353 = vmatprep.subr.mxu0 0.0
  %354 = vmatpush1.msra.mxu0 %v96
  %355 = vmatprep.subr.mxu0 0.0
  %356 = vmatpush1.msra.mxu0 %v97
  %357 = vmatprep.subr.mxu0 0.0
  %358 = vmatpush1.msra.mxu0 %v98
  %359 = vmatprep.subr.mxu0 0.0
  %360 = vmatpush1.msra.mxu0 %v99
  %361 = vmatprep.subr.mxu0 0.0
  %362 = vmatpush1.msra.mxu0 %v100
  %363 = vmatprep.subr.mxu0 0.0
  %364 = vmatpush1.msra.mxu0 %v101
  %365 = vmatprep.mubr.f32.mxu0 %v15
  %366 = vmatmul.mubr.f32.gmra.mrb[0].mxu0 %v14
  %v367 = vpop.f32.mrb[0].mxu0
  %v368 = vadd.f32 %v299, %v367
  %v369 = vpop.f32.mrb[0].mxu0
  %370 = vmatprep.mubr.f32.mxu0 %v29
  %371 = vmatmul.mubr.f32.gmra.mrb[0].mxu0 %v28
  %v372 = vpop.f32.mrb[0].mxu0
  %v373 = vadd.f32 %v299, %v372
  %v374 = vpop.f32.mrb[0].mxu0
  %375 = vmatprep.mubr.f32.mxu0 %v43
  %376 = vmatmul.mubr.f32.gmra.mrb[0].mxu0 %v42
  %v377 = vpop.f32.mrb[0].mxu0
  %v378 = vadd.f32 %v299, %v377
  %v379 = vpop.f32.mrb[0].mxu0
  %380 = vmatprep.mubr.f32.mxu0 %v57
  %381 = vmatmul.mubr.f32.gmra.mrb[0].mxu0 %v56
  %v382 = vpop.f32.mrb[0].mxu0
  %v383 = vadd.f32 %v299, %v382
  %v384 = vpop.f32.mrb[0].mxu0
  %385 = vdwg.mxu0
  %386 = vmatprep.subr.mxu0 0.0
  %387 = vmatpush1.msra.mxu0 %v102
  %388 = vmatprep.subr.mxu0 0.0
  %389 = vmatpush1.msra.mxu0 %v103
  %390 = vmatprep.subr.mxu0 0.0
  %391 = vmatpush1.msra.mxu0 %v104
  %392 = vmatprep.subr.mxu0 0.0
  %393 = vmatpush1.msra.mxu0 %v105
  %394 = vmatprep.subr.mxu0 0.0
  %395 = vmatpush1.msra.mxu0 %v106
  %396 = vmatprep.subr.mxu0 0.0
  %397 = vmatpush1.msra.mxu0 %v107
  %398 = vmatprep.subr.mxu0 0.0
  %399 = vmatpush1.msra.mxu0 %v108
  %400 = vmatprep.subr.mxu0 0.0
  %401 = vmatpush1.msra.mxu0 %v109
  %402 = vmatprep.subr.mxu0 0.0
  %403 = vmatpush1.msra.mxu0 %v110
  %404 = vmatprep.subr.mxu0 0.0
  %405 = vmatpush1.msra.mxu0 %v111
  %406 = vmatprep.subr.mxu0 0.0
  %407 = vmatpush1.msra.mxu0 %v112
  %408 = vmatprep.subr.mxu0 0.0
  %409 = vmatpush1.msra.mxu0 %v113
  %410 = vmatprep.subr.mxu0 0.0
  %411 = vmatpush1.msra.mxu0 %v114
  %412 = vmatprep.subr.mxu0 0.0
  %413 = vmatpush1.msra.mxu0 %v115
  %414 = vmatprep.subr.mxu0 0.0
  %415 = vmatpush1.msra.mxu0 %v116
  %416 = vmatprep.subr.mxu0 0.0
  %417 = vmatpush1.msra.mxu0 %v117
  %418 = vmatprep.subr.mxu0 0.0
  %419 = vmatpush1.msra.mxu0 %v118
  %420 = vmatprep.subr.mxu0 0.0
  %421 = vmatpush1.msra.mxu0 %v119
  %422 = vmatprep.subr.mxu0 0.0
  %423 = vmatpush1.msra.mxu0 %v120
  %424 = vmatprep.subr.mxu0 0.0
  %425 = vmatpush1.msra.mxu0 %v121
  %426 = vmatprep.subr.mxu0 0.0
  %427 = vmatpush1.msra.mxu0 %v122
  %428 = vmatprep.subr.mxu0 0.0
  %429 = vmatpush1.msra.mxu0 %v123
  %430 = vmatprep.subr.mxu0 0.0
  %431 = vmatpush1.msra.mxu0 %v124
  %432 = vmatprep.subr.mxu0 0.0
  %433 = vmatpush1.msra.mxu0 %v125
  %434 = vmatprep.subr.mxu0 0.0
  %435 = vmatpush1.msra.mxu0 %v126
  %436 = vmatprep.subr.mxu0 0.0
  %437 = vmatpush1.msra.mxu0 %v127
  %438 = vmatprep.subr.mxu0 0.0
  %439 = vmatpush1.msra.mxu0 %v128
  %440 = vmatprep.subr.mxu0 0.0
  %441 = vmatpush1.msra.mxu0 %v129
  %442 = vmatprep.subr.mxu0 0.0
  %443 = vmatpush1.msra.mxu0 %v130
  %444 = vmatprep.subr.mxu0 0.0
  %445 = vmatpush1.msra.mxu0 %v131
  %446 = vmatprep.subr.mxu0 0.0
  %447 = vmatpush1.msra.mxu0 %v132
  %448 = vmatprep.subr.mxu0 0.0
  %449 = vmatpush1.msra.mxu0 %v133
  %450 = vmatprep.mubr.f32.mxu0 %v17
  %451 = vmatmul.mubr.f32.gmra.mrb[0].mxu0 %v16
  %v452 = vpop.f32.mrb[0].mxu0
  %v453 = vadd.f32 %v368, %v452
  %v454 = vpop.f32.mrb[0].mxu0
  %455 = vmatprep.mubr.f32.mxu0 %v31
  %456 = vmatmul.mubr.f32.gmra.mrb[0].mxu0 %v30
  %v457 = vpop.f32.mrb[0].mxu0
  %v458 = vadd.f32 %v373, %v457
  %v459 = vpop.f32.mrb[0].mxu0
  %460 = vmatprep.mubr.f32.mxu0 %v45
  %461 = vmatmul.mubr.f32.gmra.mrb[0].mxu0 %v44
  %v462 = vpop.f32.mrb[0].mxu0
  %v463 = vadd.f32 %v378, %v462
  %v464 = vpop.f32.mrb[0].mxu0
  %465 = vmatprep.mubr.f32.mxu0 %v59
  %466 = vmatmul.mubr.f32.gmra.mrb[0].mxu0 %v58
  %v467 = vpop.f32.mrb[0].mxu0
  %v468 = vadd.f32 %v383, %v467
  %v469 = vpop.f32.mrb[0].mxu0
  %470 = vdwg.mxu0
  %471 = vmatprep.subr.mxu0 0.0
  %472 = vmatpush1.msra.mxu0 %v134
  %473 = vmatprep.subr.mxu0 0.0
  %474 = vmatpush1.msra.mxu0 %v135
  %475 = vmatprep.subr.mxu0 0.0
  %476 = vmatpush1.msra.mxu0 %v136
  %477 = vmatprep.subr.mxu0 0.0
  %478 = vmatpush1.msra.mxu0 %v137
  %479 = vmatprep.subr.mxu0 0.0
  %480 = vmatpush1.msra.mxu0 %v138
  %481 = vmatprep.subr.mxu0 0.0
  %482 = vmatpush1.msra.mxu0 %v139
  %483 = vmatprep.subr.mxu0 0.0
  %484 = vmatpush1.msra.mxu0 %v140
  %485 = vmatprep.subr.mxu0 0.0
  %486 = vmatpush1.msra.mxu0 %v141
  %487 = vmatprep.subr.mxu0 0.0
  %488 = vmatpush1.msra.mxu0 %v142
  %489 = vmatprep.subr.mxu0 0.0
  %490 = vmatpush1.msra.mxu0 %v143
  %491 = vmatprep.subr.mxu0 0.0
  %492 = vmatpush1.msra.mxu0 %v144
  %493 = vmatprep.subr.mxu0 0.0
  %494 = vmatpush1.msra.mxu0 %v145
  %495 = vmatprep.subr.mxu0 0.0
  %496 = vmatpush1.msra.mxu0 %v146
  %497 = vmatprep.subr.mxu0 0.0
  %498 = vmatpush1.msra.mxu0 %v147
  %499 = vmatprep.subr.mxu0 0.0
  %500 = vmatpush1.msra.mxu0 %v148
  %501 = vmatprep.subr.mxu0 0.0
  %502 = vmatpush1.msra.mxu0 %v149
  %503 = vmatprep.subr.mxu0 0.0
  %504 = vmatpush1.msra.mxu0 %v150
  %505 = vmatprep.subr.mxu0 0.0
  %506 = vmatpush1.msra.mxu0 %v151
  %507 = vmatprep.subr.mxu0 0.0
  %508 = vmatpush1.msra.mxu0 %v152
  %509 = vmatprep.subr.mxu0 0.0
  %510 = vmatpush1.msra.mxu0 %v153
  %511 = vmatprep.subr.mxu0 0.0
  %512 = vmatpush1.msra.mxu0 %v154
  %513 = vmatprep.subr.mxu0 0.0
  %514 = vmatpush1.msra.mxu0 %v155
  %515 = vmatprep.subr.mxu0 0.0
  %516 = vmatpush1.msra.mxu0 %v156
  %517 = vmatprep.subr.mxu0 0.0
  %518 = vmatpush1.msra.mxu0 %v157
  %519 = vmatprep.subr.mxu0 0.0
  %520 = vmatpush1.msra.mxu0 %v158
  %521 = vmatprep.subr.mxu0 0.0
  %522 = vmatpush1.msra.mxu0 %v159
  %523 = vmatprep.subr.mxu0 0.0
  %524 = vmatpush1.msra.mxu0 %v160
  %525 = vmatprep.subr.mxu0 0.0
  %526 = vmatpush1.msra.mxu0 %v161
  %527 = vmatprep.subr.mxu0 0.0
  %528 = vmatpush1.msra.mxu0 %v162
  %529 = vmatprep.subr.mxu0 0.0
  %530 = vmatpush1.msra.mxu0 %v163
  %531 = vmatprep.subr.mxu0 0.0
  %532 = vmatpush1.msra.mxu0 %v164
  %533 = vmatprep.subr.mxu0 0.0
  %534 = vmatpush1.msra.mxu0 %v165
  %535 = vmatprep.mubr.f32.mxu0 %v19
  %536 = vmatmul.mubr.f32.gmra.mrb[0].mxu0 %v18
  %v537 = vpop.f32.mrb[0].mxu0
  %v538 = vadd.f32 %v453, %v537
  %v539 = vpop.f32.mrb[0].mxu0
  %540 = vmatprep.mubr.f32.mxu0 %v33
  %541 = vmatmul.mubr.f32.gmra.mrb[0].mxu0 %v32
  %v542 = vpop.f32.mrb[0].mxu0
  %v543 = vadd.f32 %v458, %v542
  %v544 = vpop.f32.mrb[0].mxu0
  %545 = vmatprep.mubr.f32.mxu0 %v47
  %546 = vmatmul.mubr.f32.gmra.mrb[0].mxu0 %v46
  %v547 = vpop.f32.mrb[0].mxu0
  %v548 = vadd.f32 %v463, %v547
  %v549 = vpop.f32.mrb[0].mxu0
  %550 = vmatprep.mubr.f32.mxu0 %v61
  %551 = vmatmul.mubr.f32.gmra.mrb[0].mxu0 %v60
  %v552 = vpop.f32.mrb[0].mxu0
  %v553 = vadd.f32 %v468, %v552
  %v554 = vpop.f32.mrb[0].mxu0
  %555 = vdwg.mxu0
  %556 = vmatprep.subr.mxu0 0.0
  %557 = vmatpush1.msra.mxu0 %v166
  %558 = vmatprep.subr.mxu0 0.0
  %559 = vmatpush1.msra.mxu0 %v167
  %560 = vmatprep.subr.mxu0 0.0
  %561 = vmatpush1.msra.mxu0 %v168
  %562 = vmatprep.subr.mxu0 0.0
  %563 = vmatpush1.msra.mxu0 %v169
  %564 = vmatprep.subr.mxu0 0.0
  %565 = vmatpush1.msra.mxu0 %v170
  %566 = vmatprep.subr.mxu0 0.0
  %567 = vmatpush1.msra.mxu0 %v171
  %568 = vmatprep.subr.mxu0 0.0
  %569 = vmatpush1.msra.mxu0 %v172
  %570 = vmatprep.subr.mxu0 0.0
  %571 = vmatpush1.msra.mxu0 %v173
  %572 = vmatprep.subr.mxu0 0.0
  %573 = vmatpush1.msra.mxu0 %v174
  %574 = vmatprep.subr.mxu0 0.0
  %575 = vmatpush1.msra.mxu0 %v175
  %576 = vmatprep.subr.mxu0 0.0
  %577 = vmatpush1.msra.mxu0 %v176
  %578 = vmatprep.subr.mxu0 0.0
  %579 = vmatpush1.msra.mxu0 %v177
  %580 = vmatprep.subr.mxu0 0.0
  %581 = vmatpush1.msra.mxu0 %v178
  %582 = vmatprep.subr.mxu0 0.0
  %583 = vmatpush1.msra.mxu0 %v179
  %584 = vmatprep.subr.mxu0 0.0
  %585 = vmatpush1.msra.mxu0 %v180
  %586 = vmatprep.subr.mxu0 0.0
  %587 = vmatpush1.msra.mxu0 %v181
  %588 = vmatprep.subr.mxu0 0.0
  %589 = vmatpush1.msra.mxu0 %v182
  %590 = vmatprep.subr.mxu0 0.0
  %591 = vmatpush1.msra.mxu0 %v183
  %592 = vmatprep.subr.mxu0 0.0
  %593 = vmatpush1.msra.mxu0 %v184
  %594 = vmatprep.subr.mxu0 0.0
  %595 = vmatpush1.msra.mxu0 %v185
  %596 = vmatprep.subr.mxu0 0.0
  %597 = vmatpush1.msra.mxu0 %v186
  %598 = vmatprep.subr.mxu0 0.0
  %599 = vmatpush1.msra.mxu0 %v187
  %600 = vmatprep.subr.mxu0 0.0
  %601 = vmatpush1.msra.mxu0 %v188
  %602 = vmatprep.subr.mxu0 0.0
  %603 = vmatpush1.msra.mxu0 %v189
  %604 = vmatprep.subr.mxu0 0.0
  %605 = vmatpush1.msra.mxu0 %v190
  %606 = vmatprep.subr.mxu0 0.0
  %607 = vmatpush1.msra.mxu0 %v191
  %608 = vmatprep.subr.mxu0 0.0
  %609 = vmatpush1.msra.mxu0 %v192
  %610 = vmatprep.subr.mxu0 0.0
  %611 = vmatpush1.msra.mxu0 %v193
  %612 = vmatprep.subr.mxu0 0.0
  %613 = vmatpush1.msra.mxu0 %v194
  %614 = vmatprep.subr.mxu0 0.0
  %615 = vmatpush1.msra.mxu0 %v195
  %616 = vmatprep.subr.mxu0 0.0
  %617 = vmatpush1.msra.mxu0 %v196
  %618 = vmatprep.subr.mxu0 0.0
  %619 = vmatpush1.msra.mxu0 %v197
  %620 = vmatprep.mubr.f32.mxu0 %v21
  %621 = vmatmul.mubr.f32.gmra.mrb[0].mxu0 %v20
  %v622 = vpop.f32.mrb[0].mxu0
  %v623 = vadd.f32 %v538, %v622
  %v624 = vpop.f32.mrb[0].mxu0
  %625 = vmatprep.mubr.f32.mxu0 %v35
  %626 = vmatmul.mubr.f32.gmra.mrb[0].mxu0 %v34
  %v627 = vpop.f32.mrb[0].mxu0
  %v628 = vadd.f32 %v543, %v627
  %v629 = vpop.f32.mrb[0].mxu0
  %630 = vmatprep.mubr.f32.mxu0 %v49
  %631 = vmatmul.mubr.f32.gmra.mrb[0].mxu0 %v48
  %v632 = vpop.f32.mrb[0].mxu0
  %v633 = vadd.f32 %v548, %v632
  %v634 = vpop.f32.mrb[0].mxu0
  %635 = vmatprep.mubr.f32.mxu0 %v63
  %636 = vmatmul.mubr.f32.gmra.mrb[0].mxu0 %v62
  %v637 = vpop.f32.mrb[0].mxu0
  %v638 = vadd.f32 %v553, %v637
  %v639 = vpop.f32.mrb[0].mxu0
  %640 = vdwg.mxu0
  %641 = vmatprep.subr.mxu0 0.0
  %642 = vmatpush1.msra.mxu0 %v198
  %643 = vmatprep.subr.mxu0 0.0
  %644 = vmatpush1.msra.mxu0 %v199
  %645 = vmatprep.subr.mxu0 0.0
  %646 = vmatpush1.msra.mxu0 %v200
  %647 = vmatprep.subr.mxu0 0.0
  %648 = vmatpush1.msra.mxu0 %v201
  %649 = vmatprep.subr.mxu0 0.0
  %650 = vmatpush1.msra.mxu0 %v202
  %651 = vmatprep.subr.mxu0 0.0
  %652 = vmatpush1.msra.mxu0 %v203
  %653 = vmatprep.subr.mxu0 0.0
  %654 = vmatpush1.msra.mxu0 %v204
  %655 = vmatprep.subr.mxu0 0.0
  %656 = vmatpush1.msra.mxu0 %v205
  %657 = vmatprep.subr.mxu0 0.0
  %658 = vmatpush1.msra.mxu0 %v206
  %659 = vmatprep.subr.mxu0 0.0
  %660 = vmatpush1.msra.mxu0 %v207
  %661 = vmatprep.subr.mxu0 0.0
  %662 = vmatpush1.msra.mxu0 %v208
  %663 = vmatprep.subr.mxu0 0.0
  %664 = vmatpush1.msra.mxu0 %v209
  %665 = vmatprep.subr.mxu0 0.0
  %666 = vmatpush1.msra.mxu0 %v210
  %667 = vmatprep.subr.mxu0 0.0
  %668 = vmatpush1.msra.mxu0 %v211
  %669 = vmatprep.subr.mxu0 0.0
  %670 = vmatpush1.msra.mxu0 %v212
  %671 = vmatprep.subr.mxu0 0.0
  %672 = vmatpush1.msra.mxu0 %v213
  %673 = vmatprep.subr.mxu0 0.0
  %674 = vmatpush1.msra.mxu0 %v214
  %675 = vmatprep.subr.mxu0 0.0
  %676 = vmatpush1.msra.mxu0 %v215
  %677 = vmatprep.subr.mxu0 0.0
  %678 = vmatpush1.msra.mxu0 %v216
  %679 = vmatprep.subr.mxu0 0.0
  %680 = vmatpush1.msra.mxu0 %v217
  %681 = vmatprep.subr.mxu0 0.0
  %682 = vmatpush1.msra.mxu0 %v218
  %683 = vmatprep.subr.mxu0 0.0
  %684 = vmatpush1.msra.mxu0 %v219
  %685 = vmatprep.subr.mxu0 0.0
  %686 = vmatpush1.msra.mxu0 %v220
  %687 = vmatprep.subr.mxu0 0.0
  %688 = vmatpush1.msra.mxu0 %v221
  %689 = vmatprep.subr.mxu0 0.0
  %690 = vmatpush1.msra.mxu0 %v222
  %691 = vmatprep.subr.mxu0 0.0
  %692 = vmatpush1.msra.mxu0 %v223
  %693 = vmatprep.subr.mxu0 0.0
  %694 = vmatpush1.msra.mxu0 %v224
  %695 = vmatprep.subr.mxu0 0.0
  %696 = vmatpush1.msra.mxu0 %v225
  %697 = vmatprep.subr.mxu0 0.0
  %698 = vmatpush1.msra.mxu0 %v226
  %699 = vmatprep.subr.mxu0 0.0
  %700 = vmatpush1.msra.mxu0 %v227
  %701 = vmatprep.subr.mxu0 0.0
  %702 = vmatpush1.msra.mxu0 %v228
  %703 = vmatprep.subr.mxu0 0.0
  %704 = vmatpush1.msra.mxu0 %v229
  %705 = vmatprep.mubr.f32.mxu0 %v23
  %706 = vmatmul.mubr.f32.gmra.mrb[0].mxu0 %v22
  %v707 = vpop.f32.mrb[0].mxu0
  %v708 = vadd.f32 %v623, %v707
  %v709 = vpop.f32.mrb[0].mxu0
  %710 = vmatprep.mubr.f32.mxu0 %v37
  %711 = vmatmul.mubr.f32.gmra.mrb[0].mxu0 %v36
  %v712 = vpop.f32.mrb[0].mxu0
  %v713 = vadd.f32 %v628, %v712
  %v714 = vpop.f32.mrb[0].mxu0
  %715 = vmatprep.mubr.f32.mxu0 %v51
  %716 = vmatmul.mubr.f32.gmra.mrb[0].mxu0 %v50
  %v717 = vpop.f32.mrb[0].mxu0
  %v718 = vadd.f32 %v633, %v717
  %v719 = vpop.f32.mrb[0].mxu0
  %720 = vmatprep.mubr.f32.mxu0 %v65
  %721 = vmatmul.mubr.f32.gmra.mrb[0].mxu0 %v64
  %v722 = vpop.f32.mrb[0].mxu0
  %v723 = vadd.f32 %v638, %v722
  %v724 = vpop.f32.mrb[0].mxu0
  %725 = vdwg.mxu0
  %726 = vmatprep.subr.mxu0 0.0
  %727 = vmatpush1.msra.mxu0 %v230
  %728 = vmatprep.subr.mxu0 0.0
  %729 = vmatpush1.msra.mxu0 %v231
  %730 = vmatprep.subr.mxu0 0.0
  %731 = vmatpush1.msra.mxu0 %v232
  %732 = vmatprep.subr.mxu0 0.0
  %733 = vmatpush1.msra.mxu0 %v233
  %734 = vmatprep.subr.mxu0 0.0
  %735 = vmatpush1.msra.mxu0 %v234
  %736 = vmatprep.subr.mxu0 0.0
  %737 = vmatpush1.msra.mxu0 %v235
  %738 = vmatprep.subr.mxu0 0.0
  %739 = vmatpush1.msra.mxu0 %v236
  %740 = vmatprep.subr.mxu0 0.0
  %741 = vmatpush1.msra.mxu0 %v237
  %742 = vmatprep.subr.mxu0 0.0
  %743 = vmatpush1.msra.mxu0 %v238
  %744 = vmatprep.subr.mxu0 0.0
  %745 = vmatpush1.msra.mxu0 %v239
  %746 = vmatprep.subr.mxu0 0.0
  %747 = vmatpush1.msra.mxu0 %v240
  %748 = vmatprep.subr.mxu0 0.0
  %749 = vmatpush1.msra.mxu0 %v241
  %750 = vmatprep.subr.mxu0 0.0
  %751 = vmatpush1.msra.mxu0 %v242
  %752 = vmatprep.subr.mxu0 0.0
  %753 = vmatpush1.msra.mxu0 %v243
  %754 = vmatprep.subr.mxu0 0.0
  %755 = vmatpush1.msra.mxu0 %v244
  %756 = vmatprep.subr.mxu0 0.0
  %757 = vmatpush1.msra.mxu0 %v245
  %758 = vmatprep.subr.mxu0 0.0
  %759 = vmatpush1.msra.mxu0 %v246
  %760 = vmatprep.subr.mxu0 0.0
  %761 = vmatpush1.msra.mxu0 %v247
  %762 = vmatprep.subr.mxu0 0.0
  %763 = vmatpush1.msra.mxu0 %v248
  %764 = vmatprep.subr.mxu0 0.0
  %765 = vmatpush1.msra.mxu0 %v249
  %766 = vmatprep.subr.mxu0 0.0
  %767 = vmatpush1.msra.mxu0 %v250
  %768 = vmatprep.subr.mxu0 0.0
  %769 = vmatpush1.msra.mxu0 %v251
  %770 = vmatprep.subr.mxu0 0.0
  %771 = vmatpush1.msra.mxu0 %v252
  %772 = vmatprep.subr.mxu0 0.0
  %773 = vmatpush1.msra.mxu0 %v253
  %774 = vmatprep.subr.mxu0 0.0
  %775 = vmatpush1.msra.mxu0 %v254
  %776 = vmatprep.subr.mxu0 0.0
  %777 = vmatpush1.msra.mxu0 %v255
  %778 = vmatprep.subr.mxu0 0.0
  %779 = vmatpush1.msra.mxu0 %v256
  %780 = vmatprep.subr.mxu0 0.0
  %781 = vmatpush1.msra.mxu0 %v257
  %782 = vmatprep.subr.mxu0 0.0
  %783 = vmatpush1.msra.mxu0 %v258
  %784 = vmatprep.subr.mxu0 0.0
  %785 = vmatpush1.msra.mxu0 %v259
  %786 = vmatprep.subr.mxu0 0.0
  %787 = vmatpush1.msra.mxu0 %v260
  %788 = vmatprep.subr.mxu0 0.0
  %789 = vmatpush1.msra.mxu0 %v261
  %790 = vmatprep.mubr.f32.mxu0 %v25
  %791 = vmatmul.mubr.f32.gmra.mrb[0].mxu0 %v24
  %v792 = vpop.f32.mrb[0].mxu0
  %v793 = vadd.f32 %v708, %v792
  %v794 = vpop.f32.mrb[0].mxu0
  %795 = vmatprep.mubr.f32.mxu0 %v39
  %796 = vmatmul.mubr.f32.gmra.mrb[0].mxu0 %v38
  %v797 = vpop.f32.mrb[0].mxu0
  %v798 = vadd.f32 %v713, %v797
  %v799 = vpop.f32.mrb[0].mxu0
  %800 = vmatprep.mubr.f32.mxu0 %v53
  %801 = vmatmul.mubr.f32.gmra.mrb[0].mxu0 %v52
  %v802 = vpop.f32.mrb[0].mxu0
  %v803 = vadd.f32 %v718, %v802
  %v804 = vpop.f32.mrb[0].mxu0
  %805 = vmatprep.mubr.f32.mxu0 %v67
  %806 = vmatmul.mubr.f32.gmra.mrb[0].mxu0 %v66
  %v807 = vpop.f32.mrb[0].mxu0
  %v808 = vadd.f32 %v723, %v807
  %v809 = vpop.f32.mrb[0].mxu0
  %810 = vdwg.mxu0
  %811 = vmatprep.subr.mxu0 0.0
  %812 = vmatpush1.msra.mxu0 %v262
  %813 = vmatprep.subr.mxu0 0.0
  %814 = vmatpush1.msra.mxu0 %v263
  %815 = vmatprep.subr.mxu0 0.0
  %816 = vmatpush1.msra.mxu0 %v264
  %817 = vmatprep.subr.mxu0 0.0
  %818 = vmatpush1.msra.mxu0 %v265
  %819 = vmatprep.subr.mxu0 0.0
  %820 = vmatpush1.msra.mxu0 %v266
  %821 = vmatprep.subr.mxu0 0.0
  %822 = vmatpush1.msra.mxu0 %v267
  %823 = vmatprep.subr.mxu0 0.0
  %824 = vmatpush1.msra.mxu0 %v268
  %825 = vmatprep.subr.mxu0 0.0
  %826 = vmatpush1.msra.mxu0 %v269
  %827 = vmatprep.subr.mxu0 0.0
  %828 = vmatpush1.msra.mxu0 %v270
  %829 = vmatprep.subr.mxu0 0.0
  %830 = vmatpush1.msra.mxu0 %v271
  %831 = vmatprep.subr.mxu0 0.0
  %832 = vmatpush1.msra.mxu0 %v272
  %833 = vmatprep.subr.mxu0 0.0
  %834 = vmatpush1.msra.mxu0 %v273
  %835 = vmatprep.subr.mxu0 0.0
  %836 = vmatpush1.msra.mxu0 %v274
  %837 = vmatprep.subr.mxu0 0.0
  %838 = vmatpush1.msra.mxu0 %v275
  %839 = vmatprep.subr.mxu0 0.0
  %840 = vmatpush1.msra.mxu0 %v276
  %841 = vmatprep.subr.mxu0 0.0
  %842 = vmatpush1.msra.mxu0 %v277
  %843 = vmatprep.subr.mxu0 0.0
  %844 = vmatpush1.msra.mxu0 %v278
  %845 = vmatprep.subr.mxu0 0.0
  %846 = vmatpush1.msra.mxu0 %v279
  %847 = vmatprep.subr.mxu0 0.0
  %848 = vmatpush1.msra.mxu0 %v280
  %849 = vmatprep.subr.mxu0 0.0
  %850 = vmatpush1.msra.mxu0 %v281
  %851 = vmatprep.subr.mxu0 0.0
  %852 = vmatpush1.msra.mxu0 %v282
  %853 = vmatprep.subr.mxu0 0.0
  %854 = vmatpush1.msra.mxu0 %v283
  %855 = vmatprep.subr.mxu0 0.0
  %856 = vmatpush1.msra.mxu0 %v284
  %857 = vmatprep.subr.mxu0 0.0
  %858 = vmatpush1.msra.mxu0 %v285
  %859 = vmatprep.subr.mxu0 0.0
  %860 = vmatpush1.msra.mxu0 %v286
  %861 = vmatprep.subr.mxu0 0.0
  %862 = vmatpush1.msra.mxu0 %v287
  %863 = vmatprep.subr.mxu0 0.0
  %864 = vmatpush1.msra.mxu0 %v288
  %865 = vmatprep.subr.mxu0 0.0
  %866 = vmatpush1.msra.mxu0 %v289
  %867 = vmatprep.subr.mxu0 0.0
  %868 = vmatpush1.msra.mxu0 %v290
  %869 = vmatprep.subr.mxu0 0.0
  %870 = vmatpush1.msra.mxu0 %v291
  %871 = vmatprep.subr.mxu0 0.0
  %872 = vmatpush1.msra.mxu0 %v292
  %873 = vmatprep.subr.mxu0 0.0
  %874 = vmatpush1.msra.mxu0 %v293
  %875 = vmatprep.mubr.f32.mxu0 %v27
  %876 = vmatmul.mubr.f32.gmra.mrb[0].mxu0 %v26
  %v877 = vpop.f32.mrb[0].mxu0
  %v878 = vadd.f32 %v793, %v877
  %v879 = vpop.f32.mrb[0].mxu0
  %880 = vmatprep.mubr.f32.mxu0 %v41
  %881 = vmatmul.mubr.f32.gmra.mrb[0].mxu0 %v40
  %v882 = vpop.f32.mrb[0].mxu0
  %v883 = vadd.f32 %v798, %v882
  %v884 = vpop.f32.mrb[0].mxu0
  %885 = vmatprep.mubr.f32.mxu0 %v55
  %886 = vmatmul.mubr.f32.gmra.mrb[0].mxu0 %v54
  %v887 = vpop.f32.mrb[0].mxu0
  %v888 = vadd.f32 %v803, %v887
  %v889 = vpop.f32.mrb[0].mxu0
  %890 = vmatprep.mubr.f32.mxu0 %v69
  %891 = vmatmul.mubr.f32.gmra.mrb[0].mxu0 %v68
  %v892 = vpop.f32.mrb[0].mxu0
  %v893 = vadd.f32 %v808, %v892
  %v894 = vpop.f32.mrb[0].mxu0
  %895 = vdwg.mxu0
  %v896 = vmax.f32 %v878, 0.0
  %v897 = vmax.f32 %v883, 0.0
  %v898 = vmax.f32 %v888, 0.0
  %v899 = vmax.f32 %v893, 0.0
  %vm900 = vcmask 261120
  %901 = vst.msk [vmem:[%s3] sm:$0xff] %vm900, %v896
  %902 = vst.msk [vmem:[%s3 + $0x8] sm:$0xff] %vm900, %v897
  %903 = vst.msk [vmem:[%s3 + $0x10] sm:$0xff] %vm900, %v898
  %904 = vst.msk [vmem:[%s3 + $0x18] sm:$0xff] %vm900, %v899
  // Predicated region
  $region14: #{forward.13} parent=0 // pred_check
    _
  $region15: #{forward.13} parent=0 // pred_check_branch
    %906 = sbr.rel (0) target = $region17
  $region16: #{forward.13} parent=0 // pred_region
    _
  $region17: #{forward.13} parent=0 // pred_fallthru
    _
  // Predicated region
  $region18: #{forward.13} parent=0 // pred_check
    _
  $region19: #{forward.13} parent=0 // pred_check_branch
    %908 = sbr.rel (0) target = $region21
  $region20: #{forward.13} parent=0 // pred_region
    _
  $region21: #{forward.13} parent=0 // pred_fallthru
    _

// kernel: forward.14
$region0: #{forward.14}
  #allocation0 [shape = 'u32[]', space=smem, size = 0x4, offset = 0x4, fixed_abs, tag = 'smem constant byte address 0x4 - core index']
  #allocation1 [shape = 'u32[144,128]{1,0:T(1,128)}', space=vmem, size = 0x12000, scoped, tag = 'internal scratch']
  %s0 = inlined_call_operand.vmem [shape: f32[1,8,384], index: 0, kind: input, shape index: {}]
  %s1 = inlined_call_operand.vmem [shape: f32[1,384,32], index: 1, kind: input, shape index: {}]
  %s2 = inlined_call_operand.vmem [shape: f32[1,1,32], index: 2, kind: input, shape index: {}]
  %s3 = inlined_call_operand.vmem [shape: f32[1,8,32], index: 3, kind: output, shape index: {}]
  %s4 = sld [smem:[#allocation0]]
  $region22: #{forward.14} parent=0
    _
  %s6 = ssub.s32 1, %s4
  %s7 = scalar_select 0, %s6, %s4
  // Predicated region
  $region2: #{forward.14} parent=0 // pred_check
    _
  $region3: #{forward.14} parent=0 // pred_check_branch
    %9 = sbr.rel (0) target = $region5
  $region4: #{forward.14} parent=0 // pred_region
    _
  $region5: #{forward.14} parent=0 // pred_fallthru
    _
  // Predicated region
  $region6: #{forward.14} parent=0 // pred_check
    _
  $region7: #{forward.14} parent=0 // pred_check_branch
    %11 = sbr.rel (0) target = $region9
  $region8: #{forward.14} parent=0 // pred_region
    _
  $region9: #{forward.14} parent=0 // pred_fallthru
    _
  // Predicated region
  $region10: #{forward.14} parent=0 // pred_check
    _
  $region11: #{forward.14} parent=0 // pred_check_branch
    %13 = sbr.rel (0) target = $region13
  $region12: #{forward.14} parent=0 // pred_region
    _
  $region13: #{forward.14} parent=0 // pred_fallthru
    _
  %v14 = vld [vmem:[%s0] sm:$0xff]
  %v15 = vld [vmem:[%s0 + $0x8] sm:$0xff]
  %v16 = vld [vmem:[%s0 + $0x10] sm:$0xff]
  %v17 = vld [vmem:[%s1] sm:$0xff]
  %v18 = vld [vmem:[%s1 + $0x8] sm:$0xff]
  %v19 = vld [vmem:[%s1 + $0x10] sm:$0xff]
  %v20 = vld [vmem:[%s1 + $0x18] sm:$0xff]
  %v21 = vld [vmem:[%s1 + $0x20] sm:$0xff]
  %v22 = vld [vmem:[%s1 + $0x28] sm:$0xff]
  %v23 = vld [vmem:[%s1 + $0x30] sm:$0xff]
  %v24 = vld [vmem:[%s1 + $0x38] sm:$0xff]
  %v25 = vld [vmem:[%s1 + $0x40] sm:$0xff]
  %v26 = vld [vmem:[%s1 + $0x48] sm:$0xff]
  %v27 = vld [vmem:[%s1 + $0x50] sm:$0xff]
  %v28 = vld [vmem:[%s1 + $0x58] sm:$0xff]
  %v29 = vld [vmem:[%s1 + $0x60] sm:$0xff]
  %v30 = vld [vmem:[%s1 + $0x68] sm:$0xff]
  %v31 = vld [vmem:[%s1 + $0x70] sm:$0xff]
  %v32 = vld [vmem:[%s1 + $0x78] sm:$0xff]
  %v33 = vld [vmem:[%s1 + $0x80] sm:$0xff]
  %v34 = vld [vmem:[%s1 + $0x88] sm:$0xff]
  %v35 = vld [vmem:[%s1 + $0x90] sm:$0xff]
  %v36 = vld [vmem:[%s1 + $0x98] sm:$0xff]
  %v37 = vld [vmem:[%s1 + $0xa0] sm:$0xff]
  %v38 = vld [vmem:[%s1 + $0xa8] sm:$0xff]
  %v39 = vld [vmem:[%s1 + $0xb0] sm:$0xff]
  %v40 = vld [vmem:[%s1 + $0xb8] sm:$0xff]
  %v41 = vld [vmem:[%s1 + $0xc0] sm:$0xff]
  %v42 = vld [vmem:[%s1 + $0xc8] sm:$0xff]
  %v43 = vld [vmem:[%s1 + $0xd0] sm:$0xff]
  %v44 = vld [vmem:[%s1 + $0xd8] sm:$0xff]
  %v45 = vld [vmem:[%s1 + $0xe0] sm:$0xff]
  %v46 = vld [vmem:[%s1 + $0xe8] sm:$0xff]
  %v47 = vld [vmem:[%s1 + $0xf0] sm:$0xff]
  %v48 = vld [vmem:[%s1 + $0xf8] sm:$0xff]
  %v49 = vld [vmem:[%s1 + $0x100] sm:$0xff]
  %v50 = vld [vmem:[%s1 + $0x108] sm:$0xff]
  %v51 = vld [vmem:[%s1 + $0x110] sm:$0xff]
  %v52 = vld [vmem:[%s1 + $0x118] sm:$0xff]
  %v53 = vld [vmem:[%s1 + $0x120] sm:$0xff]
  %v54 = vld [vmem:[%s1 + $0x128] sm:$0xff]
  %v55 = vld [vmem:[%s1 + $0x130] sm:$0xff]
  %v56 = vld [vmem:[%s1 + $0x138] sm:$0xff]
  %v57 = vld [vmem:[%s1 + $0x140] sm:$0xff]
  %v58 = vld [vmem:[%s1 + $0x148] sm:$0xff]
  %v59 = vld [vmem:[%s1 + $0x150] sm:$0xff]
  %v60 = vld [vmem:[%s1 + $0x158] sm:$0xff]
  %v61 = vld [vmem:[%s1 + $0x160] sm:$0xff]
  %v62 = vld [vmem:[%s1 + $0x168] sm:$0xff]
  %v63 = vld [vmem:[%s1 + $0x170] sm:$0xff]
  %v64 = vld [vmem:[%s1 + $0x178] sm:$0xff]
  %v65 = vld [vmem:[%s2] sm:$0x1]
  %v67 = vlaneseq
  %v68 = vshrl.u32 %v67, 7
  %v69 = vsub.s32 0, %v68
  %v70 = vrot.slane %v65, %v69
  %72 = vmatprep.subr.mxu0 0.0
  %73 = vmatpush1.msra.mxu0 %v17
  %74 = vmatprep.subr.mxu0 0.0
  %75 = vmatpush1.msra.mxu0 %v18
  %76 = vmatprep.subr.mxu0 0.0
  %77 = vmatpush1.msra.mxu0 %v19
  %78 = vmatprep.subr.mxu0 0.0
  %79 = vmatpush1.msra.mxu0 %v20
  %80 = vmatprep.subr.mxu0 0.0
  %81 = vmatpush1.msra.mxu0 %v21
  %82 = vmatprep.subr.mxu0 0.0
  %83 = vmatpush1.msra.mxu0 %v22
  %84 = vmatprep.subr.mxu0 0.0
  %85 = vmatpush1.msra.mxu0 %v23
  %86 = vmatprep.subr.mxu0 0.0
  %87 = vmatpush1.msra.mxu0 %v24
  %88 = vmatprep.subr.mxu0 0.0
  %89 = vmatpush1.msra.mxu0 %v25
  %90 = vmatprep.subr.mxu0 0.0
  %91 = vmatpush1.msra.mxu0 %v26
  %92 = vmatprep.subr.mxu0 0.0
  %93 = vmatpush1.msra.mxu0 %v27
  %94 = vmatprep.subr.mxu0 0.0
  %95 = vmatpush1.msra.mxu0 %v28
  %96 = vmatprep.subr.mxu0 0.0
  %97 = vmatpush1.msra.mxu0 %v29
  %98 = vmatprep.subr.mxu0 0.0
  %99 = vmatpush1.msra.mxu0 %v30
  %100 = vmatprep.subr.mxu0 0.0
  %101 = vmatpush1.msra.mxu0 %v31
  %102 = vmatprep.subr.mxu0 0.0
  %103 = vmatpush1.msra.mxu0 %v32
  %104 = vmatprep.subr.mxu0 0.0
  %105 = vmatpush1.msra.mxu0 %v33
  %106 = vmatprep.subr.mxu0 0.0
  %107 = vmatpush1.msra.mxu0 %v34
  %108 = vmatprep.subr.mxu0 0.0
  %109 = vmatpush1.msra.mxu0 %v35
  %110 = vmatprep.subr.mxu0 0.0
  %111 = vmatpush1.msra.mxu0 %v36
  %112 = vmatprep.subr.mxu0 0.0
  %113 = vmatpush1.msra.mxu0 %v37
  %114 = vmatprep.subr.mxu0 0.0
  %115 = vmatpush1.msra.mxu0 %v38
  %116 = vmatprep.subr.mxu0 0.0
  %117 = vmatpush1.msra.mxu0 %v39
  %118 = vmatprep.subr.mxu0 0.0
  %119 = vmatpush1.msra.mxu0 %v40
  %120 = vmatprep.subr.mxu0 0.0
  %121 = vmatpush1.msra.mxu0 %v41
  %122 = vmatprep.subr.mxu0 0.0
  %123 = vmatpush1.msra.mxu0 %v42
  %124 = vmatprep.subr.mxu0 0.0
  %125 = vmatpush1.msra.mxu0 %v43
  %126 = vmatprep.subr.mxu0 0.0
  %127 = vmatpush1.msra.mxu0 %v44
  %128 = vmatprep.subr.mxu0 0.0
  %129 = vmatpush1.msra.mxu0 %v45
  %130 = vmatprep.subr.mxu0 0.0
  %131 = vmatpush1.msra.mxu0 %v46
  %132 = vmatprep.subr.mxu0 0.0
  %133 = vmatpush1.msra.mxu0 %v47
  %134 = vmatprep.subr.mxu0 0.0
  %135 = vmatpush1.msra.mxu0 %v48
  %136 = vmatprep.mubr.f32.mxu0 %v15
  %137 = vmatmul.mubr.f32.gmra.mrb[0].mxu0 %v14
  %v138 = vpop.f32.mrb[0].mxu0
  %v139 = vadd.f32 %v70, %v138
  %v140 = vpop.f32.mrb[0].mxu0
  %141 = vdwg.mxu0
  %142 = vmatprep.subr.mxu0 0.0
  %143 = vmatpush1.msra.mxu0 %v49
  %144 = vmatprep.subr.mxu0 0.0
  %145 = vmatpush1.msra.mxu0 %v50
  %146 = vmatprep.subr.mxu0 0.0
  %147 = vmatpush1.msra.mxu0 %v51
  %148 = vmatprep.subr.mxu0 0.0
  %149 = vmatpush1.msra.mxu0 %v52
  %150 = vmatprep.subr.mxu0 0.0
  %151 = vmatpush1.msra.mxu0 %v53
  %152 = vmatprep.subr.mxu0 0.0
  %153 = vmatpush1.msra.mxu0 %v54
  %154 = vmatprep.subr.mxu0 0.0
  %155 = vmatpush1.msra.mxu0 %v55
  %156 = vmatprep.subr.mxu0 0.0
  %157 = vmatpush1.msra.mxu0 %v56
  %158 = vmatprep.subr.mxu0 0.0
  %159 = vmatpush1.msra.mxu0 %v57
  %160 = vmatprep.subr.mxu0 0.0
  %161 = vmatpush1.msra.mxu0 %v58
  %162 = vmatprep.subr.mxu0 0.0
  %163 = vmatpush1.msra.mxu0 %v59
  %164 = vmatprep.subr.mxu0 0.0
  %165 = vmatpush1.msra.mxu0 %v60
  %166 = vmatprep.subr.mxu0 0.0
  %167 = vmatpush1.msra.mxu0 %v61
  %168 = vmatprep.subr.mxu0 0.0
  %169 = vmatpush1.msra.mxu0 %v62
  %170 = vmatprep.subr.mxu0 0.0
  %171 = vmatpush1.msra.mxu0 %v63
  %172 = vmatprep.subr.mxu0 0.0
  %173 = vmatpush1.msra.mxu0 %v64
  %174 = vmatprep.subr.mxu0 0.0
  %175 = vmatpush1.msra.mxu0 0.0
  %176 = vmatprep.subr.mxu0 0.0
  %177 = vmatpush1.msra.mxu0 0.0
  %178 = vmatprep.subr.mxu0 0.0
  %179 = vmatpush1.msra.mxu0 0.0
  %180 = vmatprep.subr.mxu0 0.0
  %181 = vmatpush1.msra.mxu0 0.0
  %182 = vmatprep.subr.mxu0 0.0
  %183 = vmatpush1.msra.mxu0 0.0
  %184 = vmatprep.subr.mxu0 0.0
  %185 = vmatpush1.msra.mxu0 0.0
  %186 = vmatprep.subr.mxu0 0.0
  %187 = vmatpush1.msra.mxu0 0.0
  %188 = vmatprep.subr.mxu0 0.0
  %189 = vmatpush1.msra.mxu0 0.0
  %190 = vmatprep.subr.mxu0 0.0
  %191 = vmatpush1.msra.mxu0 0.0
  %192 = vmatprep.subr.mxu0 0.0
  %193 = vmatpush1.msra.mxu0 0.0
  %194 = vmatprep.subr.mxu0 0.0
  %195 = vmatpush1.msra.mxu0 0.0
  %196 = vmatprep.subr.mxu0 0.0
  %197 = vmatpush1.msra.mxu0 0.0
  %198 = vmatprep.subr.mxu0 0.0
  %199 = vmatpush1.msra.mxu0 0.0
  %200 = vmatprep.subr.mxu0 0.0
  %201 = vmatpush1.msra.mxu0 0.0
  %202 = vmatprep.subr.mxu0 0.0
  %203 = vmatpush1.msra.mxu0 0.0
  %204 = vmatprep.subr.mxu0 0.0
  %205 = vmatpush1.msra.mxu0 0.0
  %206 = vmatprep.mubr.f32.mxu0 0.0
  %207 = vmatmul.mubr.f32.gmra.mrb[0].mxu0 %v16
  %v208 = vpop.f32.mrb[0].mxu0
  %v209 = vadd.f32 %v139, %v208
  %v210 = vpop.f32.mrb[0].mxu0
  %211 = vdwg.mxu0
  %v212 = vmax.f32 %v209, 0.0
  %vm213 = vcmask 261120
  %214 = vst.msk [vmem:[%s3] sm:$0xff] %vm213, %v212
  // Predicated region
  $region14: #{forward.14} parent=0 // pred_check
    _
  $region15: #{forward.14} parent=0 // pred_check_branch
    %216 = sbr.rel (0) target = $region17
  $region16: #{forward.14} parent=0 // pred_region
    _
  $region17: #{forward.14} parent=0 // pred_fallthru
    _
  // Predicated region
  $region18: #{forward.14} parent=0 // pred_check
    _
  $region19: #{forward.14} parent=0 // pred_check_branch
    %218 = sbr.rel (0) target = $region21
  $region20: #{forward.14} parent=0 // pred_region
    _
  $region21: #{forward.14} parent=0 // pred_fallthru
    _

// kernel: forward.15
$region0: #{forward.15}
  #allocation0 [shape = 'u32[]', space=smem, size = 0x4, offset = 0x4, fixed_abs, tag = 'smem constant byte address 0x4 - core index']
  #allocation1 [shape = 'u32[144,128]{1,0:T(1,128)}', space=vmem, size = 0x12000, scoped, tag = 'internal scratch']
  #allocation2 [shape = 'f32[1,1]{1,0:T(1,128)S(1)}', space=vmem, size = 0x200, scoped, tag = 'scoped memory for forward.15']
  %s0 = inlined_call_operand.vmem [shape: f32[2,128], index: 0, kind: input, shape index: {}]
  %s1 = inlined_call_operand.vmem [shape: f32[128,128], index: 1, kind: input, shape index: {}]
  %s2 = inlined_call_operand.vmem [shape: f32[1,128], index: 2, kind: input, shape index: {}]
  %s3 = inlined_call_operand.vmem [shape: f32[128,1], index: 3, kind: input, shape index: {}]
  %s4 = inlined_call_operand.<no memory space> [shape: f32[1,1], index: 4, kind: input, shape index: {}]
  %s5 = inlined_call_operand.vmem [shape: f32[2,1], index: 5, kind: output, shape index: {}]
  %s6 = sld [smem:[#allocation0]]
  $region30: #{forward.15} parent=0
    _
  %s8 = ssub.s32 1, %s6
  %s9 = scalar_select 0, %s8, %s6
  %v10 = vstv %s4
  %11 = vst [vmem:[#allocation2] sm:$0x1] %v10
  // Predicated region
  $region2: #{forward.15} parent=0 // pred_check
    _
  $region3: #{forward.15} parent=0 // pred_check_branch
    %13 = sbr.rel (0) target = $region5
  $region4: #{forward.15} parent=0 // pred_region
    _
  $region5: #{forward.15} parent=0 // pred_fallthru
    _
  // Predicated region
  $region6: #{forward.15} parent=0 // pred_check
    _
  $region7: #{forward.15} parent=0 // pred_check_branch
    %15 = sbr.rel (0) target = $region9
  $region8: #{forward.15} parent=0 // pred_region
    _
  $region9: #{forward.15} parent=0 // pred_fallthru
    _
  // Predicated region
  $region10: #{forward.15} parent=0 // pred_check
    _
  $region11: #{forward.15} parent=0 // pred_check_branch
    %17 = sbr.rel (0) target = $region13
  $region12: #{forward.15} parent=0 // pred_region
    _
  $region13: #{forward.15} parent=0 // pred_fallthru
    _
  // Predicated region
  $region14: #{forward.15} parent=0 // pred_check
    _
  $region15: #{forward.15} parent=0 // pred_check_branch
    %19 = sbr.rel (0) target = $region17
  $region16: #{forward.15} parent=0 // pred_region
    _
  $region17: #{forward.15} parent=0 // pred_fallthru
    _
  // Predicated region
  $region18: #{forward.15} parent=0 // pred_check
    _
  $region19: #{forward.15} parent=0 // pred_check_branch
    %21 = sbr.rel (0) target = $region21
  $region20: #{forward.15} parent=0 // pred_region
    _
  $region21: #{forward.15} parent=0 // pred_fallthru
    _
  %v22 = vld [vmem:[%s0] sm:$0x3]
  %v23 = vld [vmem:[%s1] sm:$0xff]
  %v24 = vld [vmem:[%s1 + $0x8] sm:$0xff]
  %v25 = vld [vmem:[%s1 + $0x10] sm:$0xff]
  %v26 = vld [vmem:[%s1 + $0x18] sm:$0xff]
  %v27 = vld [vmem:[%s1 + $0x20] sm:$0xff]
  %v28 = vld [vmem:[%s1 + $0x28] sm:$0xff]
  %v29 = vld [vmem:[%s1 + $0x30] sm:$0xff]
  %v30 = vld [vmem:[%s1 + $0x38] sm:$0xff]
  %v31 = vld [vmem:[%s1 + $0x40] sm:$0xff]
  %v32 = vld [vmem:[%s1 + $0x48] sm:$0xff]
  %v33 = vld [vmem:[%s1 + $0x50] sm:$0xff]
  %v34 = vld [vmem:[%s1 + $0x58] sm:$0xff]
  %v35 = vld [vmem:[%s1 + $0x60] sm:$0xff]
  %v36 = vld [vmem:[%s1 + $0x68] sm:$0xff]
  %v37 = vld [vmem:[%s1 + $0x70] sm:$0xff]
  %v38 = vld [vmem:[%s1 + $0x78] sm:$0xff]
  %v39 = vld [vmem:[%s2] sm:$0x1]
  %v41 = vlaneseq
  %v42 = vshrl.u32 %v41, 7
  %v43 = vsub.s32 0, %v42
  %v44 = vrot.slane %v39, %v43
  %46 = vmatprep.subr.mxu0 0.0
  %47 = vmatpush1.msra.mxu0 %v23
  %48 = vmatprep.subr.mxu0 0.0
  %49 = vmatpush1.msra.mxu0 %v24
  %50 = vmatprep.subr.mxu0 0.0
  %51 = vmatpush1.msra.mxu0 %v25
  %52 = vmatprep.subr.mxu0 0.0
  %53 = vmatpush1.msra.mxu0 %v26
  %54 = vmatprep.subr.mxu0 0.0
  %55 = vmatpush1.msra.mxu0 %v27
  %56 = vmatprep.subr.mxu0 0.0
  %57 = vmatpush1.msra.mxu0 %v28
  %58 = vmatprep.subr.mxu0 0.0
  %59 = vmatpush1.msra.mxu0 %v29
  %60 = vmatprep.subr.mxu0 0.0
  %61 = vmatpush1.msra.mxu0 %v30
  %62 = vmatprep.subr.mxu0 0.0
  %63 = vmatpush1.msra.mxu0 %v31
  %64 = vmatprep.subr.mxu0 0.0
  %65 = vmatpush1.msra.mxu0 %v32
  %66 = vmatprep.subr.mxu0 0.0
  %67 = vmatpush1.msra.mxu0 %v33
  %68 = vmatprep.subr.mxu0 0.0
  %69 = vmatpush1.msra.mxu0 %v34
  %70 = vmatprep.subr.mxu0 0.0
  %71 = vmatpush1.msra.mxu0 %v35
  %72 = vmatprep.subr.mxu0 0.0
  %73 = vmatpush1.msra.mxu0 %v36
  %74 = vmatprep.subr.mxu0 0.0
  %75 = vmatpush1.msra.mxu0 %v37
  %76 = vmatprep.subr.mxu0 0.0
  %77 = vmatpush1.msra.mxu0 %v38
  %78 = vmatprep.subr.mxu0 0.0
  %79 = vmatpush1.msra.mxu0 0.0
  %80 = vmatprep.subr.mxu0 0.0
  %81 = vmatpush1.msra.mxu0 0.0
  %82 = vmatprep.subr.mxu0 0.0
  %83 = vmatpush1.msra.mxu0 0.0
  %84 = vmatprep.subr.mxu0 0.0
  %85 = vmatpush1.msra.mxu0 0.0
  %86 = vmatprep.subr.mxu0 0.0
  %87 = vmatpush1.msra.mxu0 0.0
  %88 = vmatprep.subr.mxu0 0.0
  %89 = vmatpush1.msra.mxu0 0.0
  %90 = vmatprep.subr.mxu0 0.0
  %91 = vmatpush1.msra.mxu0 0.0
  %92 = vmatprep.subr.mxu0 0.0
  %93 = vmatpush1.msra.mxu0 0.0
  %94 = vmatprep.subr.mxu0 0.0
  %95 = vmatpush1.msra.mxu0 0.0
  %96 = vmatprep.subr.mxu0 0.0
  %97 = vmatpush1.msra.mxu0 0.0
  %98 = vmatprep.subr.mxu0 0.0
  %99 = vmatpush1.msra.mxu0 0.0
  %100 = vmatprep.subr.mxu0 0.0
  %101 = vmatpush1.msra.mxu0 0.0
  %102 = vmatprep.subr.mxu0 0.0
  %103 = vmatpush1.msra.mxu0 0.0
  %104 = vmatprep.subr.mxu0 0.0
  %105 = vmatpush1.msra.mxu0 0.0
  %106 = vmatprep.subr.mxu0 0.0
  %107 = vmatpush1.msra.mxu0 0.0
  %108 = vmatprep.subr.mxu0 0.0
  %109 = vmatpush1.msra.mxu0 0.0
  %110 = vmatprep.mubr.f32.mxu0 0.0
  %111 = vmatmul.mubr.f32.gmra.mrb[0].mxu0 %v22
  %v112 = vpop.f32.mrb[0].mxu0
  %v113 = vadd.f32 %v44, %v112
  %v114 = vpop.f32.mrb[0].mxu0
  %115 = vdwg.mxu0
  %v116 = vmax.f32 %v113, 0.0
  %v117 = vld [vmem:[%s3] sm:$0xff]
  %v118 = vld [vmem:[%s3 + $0x8] sm:$0xff]
  %v119 = vld [vmem:[%s3 + $0x10] sm:$0xff]
  %v120 = vld [vmem:[%s3 + $0x18] sm:$0xff]
  %v121 = vld [vmem:[%s3 + $0x20] sm:$0xff]
  %v122 = vld [vmem:[%s3 + $0x28] sm:$0xff]
  %v123 = vld [vmem:[%s3 + $0x30] sm:$0xff]
  %v124 = vld [vmem:[%s3 + $0x38] sm:$0xff]
  %v125 = vld [vmem:[%s3 + $0x40] sm:$0xff]
  %v126 = vld [vmem:[%s3 + $0x48] sm:$0xff]
  %v127 = vld [vmem:[%s3 + $0x50] sm:$0xff]
  %v128 = vld [vmem:[%s3 + $0x58] sm:$0xff]
  %v129 = vld [vmem:[%s3 + $0x60] sm:$0xff]
  %v130 = vld [vmem:[%s3 + $0x68] sm:$0xff]
  %v131 = vld [vmem:[%s3 + $0x70] sm:$0xff]
  %v132 = vld [vmem:[%s3 + $0x78] sm:$0xff]
  %v133 = vld [vmem:[#allocation2] sm:$0x1]
  %v135 = vlaneseq
  %v136 = vshrl.u32 %v135, 7
  %v137 = vsub.s32 0, %v136
  %v138 = vrot.slane %v133, %v137
  %140 = vmatprep.subr.mxu0 0.0
  %141 = vmatpush1.msra.mxu0 %v117
  %142 = vmatprep.subr.mxu0 0.0
  %143 = vmatpush1.msra.mxu0 %v118
  %144 = vmatprep.subr.mxu0 0.0
  %145 = vmatpush1.msra.mxu0 %v119
  %146 = vmatprep.subr.mxu0 0.0
  %147 = vmatpush1.msra.mxu0 %v120
  %148 = vmatprep.subr.mxu0 0.0
  %149 = vmatpush1.msra.mxu0 %v121
  %150 = vmatprep.subr.mxu0 0.0
  %151 = vmatpush1.msra.mxu0 %v122
  %152 = vmatprep.subr.mxu0 0.0
  %153 = vmatpush1.msra.mxu0 %v123
  %154 = vmatprep.subr.mxu0 0.0
  %155 = vmatpush1.msra.mxu0 %v124
  %156 = vmatprep.subr.mxu0 0.0
  %157 = vmatpush1.msra.mxu0 %v125
  %158 = vmatprep.subr.mxu0 0.0
  %159 = vmatpush1.msra.mxu0 %v126
  %160 = vmatprep.subr.mxu0 0.0
  %161 = vmatpush1.msra.mxu0 %v127
  %162 = vmatprep.subr.mxu0 0.0
  %163 = vmatpush1.msra.mxu0 %v128
  %164 = vmatprep.subr.mxu0 0.0
  %165 = vmatpush1.msra.mxu0 %v129
  %166 = vmatprep.subr.mxu0 0.0
  %167 = vmatpush1.msra.mxu0 %v130
  %168 = vmatprep.subr.mxu0 0.0
  %169 = vmatpush1.msra.mxu0 %v131
  %170 = vmatprep.subr.mxu0 0.0
  %171 = vmatpush1.msra.mxu0 %v132
  %172 = vmatprep.subr.mxu0 0.0
  %173 = vmatpush1.msra.mxu0 0.0
  %174 = vmatprep.subr.mxu0 0.0
  %175 = vmatpush1.msra.mxu0 0.0
  %176 = vmatprep.subr.mxu0 0.0
  %177 = vmatpush1.msra.mxu0 0.0
  %178 = vmatprep.subr.mxu0 0.0
  %179 = vmatpush1.msra.mxu0 0.0
  %180 = vmatprep.subr.mxu0 0.0
  %181 = vmatpush1.msra.mxu0 0.0
  %182 = vmatprep.subr.mxu0 0.0
  %183 = vmatpush1.msra.mxu0 0.0
  %184 = vmatprep.subr.mxu0 0.0
  %185 = vmatpush1.msra.mxu0 0.0
  %186 = vmatprep.subr.mxu0 0.0
  %187 = vmatpush1.msra.mxu0 0.0
  %188 = vmatprep.subr.mxu0 0.0
  %189 = vmatpush1.msra.mxu0 0.0
  %190 = vmatprep.subr.mxu0 0.0
  %191 = vmatpush1.msra.mxu0 0.0
  %192 = vmatprep.subr.mxu0 0.0
  %193 = vmatpush1.msra.mxu0 0.0
  %194 = vmatprep.subr.mxu0 0.0
  %195 = vmatpush1.msra.mxu0 0.0
  %196 = vmatprep.subr.mxu0 0.0
  %197 = vmatpush1.msra.mxu0 0.0
  %198 = vmatprep.subr.mxu0 0.0
  %199 = vmatpush1.msra.mxu0 0.0
  %200 = vmatprep.subr.mxu0 0.0
  %201 = vmatpush1.msra.mxu0 0.0
  %202 = vmatprep.subr.mxu0 0.0
  %203 = vmatpush1.msra.mxu0 0.0
  %204 = vmatprep.mubr.f32.mxu0 0.0
  %205 = vmatmul.mubr.f32.gmra.mrb[0].mxu0 %v116
  %v206 = vpop.f32.mrb[0].mxu0
  %v207 = vadd.f32 %v138, %v206
  %v208 = vpop.f32.mrb[0].mxu0
  %209 = vdwg.mxu0
  %v210 = vmax.f32 %v207, 0.0
  %vm211 = vcmask 1024
  %212 = vst.msk [vmem:[%s5] sm:$0x3] %vm211, %v210
  // Predicated region
  $region22: #{forward.15} parent=0 // pred_check
    _
  $region23: #{forward.15} parent=0 // pred_check_branch
    %214 = sbr.rel (0) target = $region25
  $region24: #{forward.15} parent=0 // pred_region
    _
  $region25: #{forward.15} parent=0 // pred_fallthru
    _
  // Predicated region
  $region26: #{forward.15} parent=0 // pred_check
    _
  $region27: #{forward.15} parent=0 // pred_check_branch
    %216 = sbr.rel (0) target = $region29
  $region28: #{forward.15} parent=0 // pred_region
    _
  $region29: #{forward.15} parent=0 // pred_fallthru
    _

</llo_original>
